<compile_context>
chip_gen: v6e
topology: v6e:2x2x1
jax: 0.10.0
libtpu: 0.0.40
codegen_flags: <defaults>
</compile_context>

<pallas_src>
import functools

import jax
import jax.numpy as jnp
from jax.experimental import pallas as pl
from jax.experimental.pallas import tpu as pltpu


# --------------------------- compiler / VMEM helpers ------------------------

@functools.lru_cache(maxsize=None)
def _vmem_limit_bytes():
    # Generation-dependent scoped-VMEM budget: ~3/4 of physical, capped.
    # v5e/v6e (128 MiB) -> ~96 MiB; v7x (64 MiB) -> 48 MiB.
    cap = 128 * 1024 * 1024
    try:
        info = pltpu.get_tpu_info()
        cap = int(getattr(info, "vmem_capacity_bytes", cap)) or cap
    except Exception:
        pass
    return int(min(cap * 3 // 4, 100 * 1024 * 1024))


def _cparams(*sem):
    return pltpu.CompilerParams(dimension_semantics=sem,
                                vmem_limit_bytes=_vmem_limit_bytes())


def _pick_tp(P, row_bytes, budget):
    # Largest tile of the pixel axis whose double-buffered blocks fit the
    # budget (no ">=2 steps per batch" condition: total grid B*(P//TP) >= 2
    # already gives the pipeliner overlap).
    cands = [P] + [t for t in (16384, 8192, 4096, 2048, 1024, 512, 256, 128)
                   if t < P and P % t == 0]
    for t in cands:
        if 2 * t * row_bytes <= budget:
            return t
    return cands[-1]


# ------------------- packed per-channel vector table rows -------------------

(R_OPT_SCALE, R_OPT_SHIFT, R_OPT_SEGW, R_OPT_SEGB,
 R_SAR_SCALE, R_SAR_SHIFT, R_SAR_SEGW, R_SAR_SEGB,
 R_S1_B2, R_S1_WS, R_S1_BS,
 R_S2_B2, R_S2_WS, R_S2_BS,
 R_FFM_SCALE, R_FFM_SHIFT,
 R_SO_B2, R_SO_WS, R_SO_BS,
 R_HEAD_W, R_HEAD_B) = range(21)


# --------------------------- Kernel A: patch embed --------------------------

def _patch_embed_kernel(x_ref, w_ref, b_ref, out_ref):
    # One lane-dense [TP,K]@[K,2C] bf16 matmul; the two feature adds are
    # pre-folded into the weight halves (w0+w1 | w0+w2).  bf16 output store.
    y = jnp.dot(x_ref[0], w_ref[...], preferred_element_type=jnp.float32)
    out_ref[...] = (y + b_ref[...]).astype(out_ref.dtype)[None]


def patch_embed_fused(patches_bf16, w_cat_bf16, b_cat):
    B, P, K = patches_bf16.shape
    C2 = w_cat_bf16.shape[1]
    row_bytes = K * 2 + C2 * 2                       # bf16 in + bf16 out per pixel
    tp = _pick_tp(P, row_bytes, _vmem_limit_bytes() // 3)
    flops = 2 * B * P * K * C2
    bytes_acc = B * P * K * 2 + K * C2 * 2 + 4 * C2 + B * P * C2 * 2
    return pl.pallas_call(
        _patch_embed_kernel,
        out_shape=jax.ShapeDtypeStruct((B, P, C2), jnp.bfloat16),
        grid=(B, P // tp),
        in_specs=[
            pl.BlockSpec((1, tp, K), lambda b, p: (b, p, 0)),
            pl.BlockSpec((K, C2), lambda b, p: (0, 0)),
            pl.BlockSpec((1, C2), lambda b, p: (0, 0)),
        ],
        out_specs=pl.BlockSpec((1, tp, C2), lambda b, p: (b, p, 0)),
        compiler_params=_cparams("parallel", "parallel"),
        cost_estimate=pl.CostEstimate(flops=int(flops), transcendentals=0,
                                      bytes_accessed=int(bytes_acc)),
    )(patches_bf16, w_cat_bf16, b_cat)


# ------------- Kernel B: decode heads + FFM + seg heads + upsample ----------

def _decode_ffm_kernel(feats_ref, w_dec_ref, wse_ref, b1c_ref, w_ffm_ref,
                       vecs_ref, eh_ref, ew_ref,
                       dec_opt_ref, ups_ref, *, C, Cr):
    feats = feats_ref[0]                                         # [P, 2C] bf16

    def vrow(i):                                                 # [1, C]
        return vecs_ref[i:i + 1, :]

    def vscal(i):                                                # [1, 1]
        return vecs_ref[i:i + 1, :1]

    # --- two decode heads (conv1x1 + BN(eval) + ReLU) ---
    def dec_head(x_bf, hi, r_scale, r_shift):
        y = jnp.dot(x_bf, w_dec_ref[hi], preferred_element_type=jnp.float32)
        return jnp.maximum(y * vrow(r_scale) + vrow(r_shift), 0.0)  # [P, C] f32

    dec_o = dec_head(feats[:, :C], 0, R_OPT_SCALE, R_OPT_SHIFT)
    dec_s = dec_head(feats[:, C:], 1, R_SAR_SCALE, R_SAR_SHIFT)
    dec_opt_ref[...] = dec_o.astype(dec_opt_ref.dtype)[None]     # bf16 writeback

    # --- SCSE: x * cSE(x) + x * sSE(x) ---
    def scse(x, si, r_b2, r_ws, r_bs):
        w12 = wse_ref[si]                                        # [2Cr, C]
        w1t, w2 = w12[:Cr], w12[Cr:]
        b1 = b1c_ref[si * Cr:(si + 1) * Cr, :]                   # [Cr, 1]
        avg = jnp.mean(x, axis=0, keepdims=True)                 # [1, C]
        # cSE on VPU/XLU (broadcast-mul + lane/sublane reductions, no MXU).
        h = jnp.maximum(jnp.sum(avg * w1t, axis=-1, keepdims=True) + b1, 0.0)
        cse = jax.nn.sigmoid(jnp.sum(h * w2, axis=0, keepdims=True) + vrow(r_b2))
        # sSE: 1x1 conv to a single map == lane reduction.
        sse = jax.nn.sigmoid(jnp.sum(x * vrow(r_ws), axis=-1, keepdims=True)
                             + vscal(r_bs))                      # [P, 1]
        return x * (cse + sse)

    fsp = scse(dec_s, 0, R_S1_B2, R_S1_WS, R_S1_BS)              # scse_1(decode_sar)
    fcp = scse(dec_o, 1, R_S2_B2, R_S2_WS, R_S2_BS)              # scse_2(decode_opt)

    # concat + 1x1 conv as ONE 2C-deep bf16 matmul (fills 256-deep MXU), + BN + ReLU.
    lhs = jnp.concatenate([fsp, fcp], axis=-1).astype(jnp.bfloat16)    # [P, 2C]
    y = jnp.dot(lhs, w_ffm_ref[...], preferred_element_type=jnp.float32)
    feat = jnp.maximum(y * vrow(R_FFM_SCALE) + vrow(R_FFM_SHIFT), 0.0)
    feat_out = scse(feat, 2, R_SO_B2, R_SO_WS, R_SO_BS)

    # 1x1 seg heads (num_classes == 1): lane reductions, never N=1 matmuls.
    def seg(x, r_w, r_b):
        return jnp.sum(x * vrow(r_w), axis=-1, keepdims=True) + vscal(r_b)  # [P, 1]

    s_o = seg(dec_o, R_OPT_SEGW, R_OPT_SEGB)
    s_s = seg(dec_s, R_SAR_SEGW, R_SAR_SEGB)
    s_c = seg(feat_out, R_HEAD_W, R_HEAD_B)

    # Bilinear (align_corners=False) for all three maps fused as ONE bf16
    # matmul: [H,P] @ [P,3W]; the [P,1] maps never touch HBM and the store is
    # a lane-dense [H, 3W] slab.
    ew = ew_ref[...]                                             # [P, W] bf16
    rhs = jnp.concatenate([s_o.astype(jnp.bfloat16) * ew,
                           s_s.astype(jnp.bfloat16) * ew,
                           s_c.astype(jnp.bfloat16) * ew], axis=-1)     # [P, 3W]
    ups_ref[...] = jnp.dot(eh_ref[...], rhs,
                           preferred_element_type=jnp.float32)[None]    # [1, H, 3W]


def decode_ffm_fused(feats, w_dec, wse, b1c, w_ffm, vecs, Eh, Ew, C, Cr):
    B, P, C2 = feats.shape
    H, W = Eh.shape[0], Ew.shape[1]
    kern = functools.partial(_decode_ffm_kernel, C=C, Cr=Cr)
    flops = B * (2 * P * C * C * 2 + 2 * P * (2 * C) * C + 2 * H * P * 3 * W)
    trans = B * (3 * P + 3 * (C + Cr))
    bytes_acc = (B * P * C2 * 2 + B * P * C * 2 + B * H * 3 * W * 4
                 + (w_dec.size + w_ffm.size + Eh.size + Ew.size) * 2
                 + (wse.size + b1c.size + vecs.size) * 4)
    return pl.pallas_call(
        kern,
        out_shape=(jax.ShapeDtypeStruct((B, P, C), jnp.bfloat16),
                   jax.ShapeDtypeStruct((B, H, 3 * W), jnp.float32)),
        grid=(B,),
        in_specs=[
            pl.BlockSpec((1, P, C2), lambda b: (b, 0, 0)),
            pl.BlockSpec(w_dec.shape, lambda b: (0, 0, 0)),
            pl.BlockSpec(wse.shape, lambda b: (0, 0, 0)),
            pl.BlockSpec(b1c.shape, lambda b: (0, 0)),
            pl.BlockSpec(w_ffm.shape, lambda b: (0, 0)),
            pl.BlockSpec(vecs.shape, lambda b: (0, 0)),
            pl.BlockSpec(Eh.shape, lambda b: (0, 0)),
            pl.BlockSpec(Ew.shape, lambda b: (0, 0)),
        ],
        out_specs=(pl.BlockSpec((1, P, C), lambda b: (b, 0, 0)),
                   pl.BlockSpec((1, H, 3 * W), lambda b: (b, 0, 0))),
        compiler_params=_cparams("parallel"),
        cost_estimate=pl.CostEstimate(flops=int(flops), transcendentals=int(trans),
                                      bytes_accessed=int(bytes_acc)),
    )(feats, w_dec, wse, b1c, w_ffm, vecs, Eh, Ew)


# -------------------------------- JAX glue ----------------------------------

def _interp_matrix(out_size, in_size):
    # Row-interpolation matrix reproducing F.interpolate(mode='bilinear',
    # align_corners=False) along one axis.
    o = jnp.arange(out_size, dtype=jnp.float32)
    src = (o + 0.5) * (in_size / out_size) - 0.5
    src = jnp.clip(src, 0.0, in_size - 1.0)
    i0 = jnp.floor(src).astype(jnp.int32)
    i1 = jnp.minimum(i0 + 1, in_size - 1)
    frac = src - i0.astype(jnp.float32)
    R = jnp.zeros((out_size, in_size), jnp.float32)
    idx = jnp.arange(out_size)
    R = R.at[idx, i0].add(1.0 - frac)
    R = R.at[idx, i1].add(frac)
    return R


def init_params(key, C=128, num_classes=1, patch_dim=48, reduction=16):
    assert num_classes == 1, "seg heads implemented as single lane-reduction rows"
    Cr = max(C // reduction, 1)
    keys = iter(jax.random.split(key, 64))

    def nrm(shape, s=0.1):
        return s * jax.random.normal(next(keys), shape, jnp.float32)

    def bn(c, eps=1e-5):
        gamma = 1.0 + 0.1 * jax.random.normal(next(keys), (1, c), jnp.float32)
        beta = 0.1 * jax.random.normal(next(keys), (1, c), jnp.float32)
        mean = 0.1 * jax.random.normal(next(keys), (1, c), jnp.float32)
        var = 1.0 + 0.1 * jnp.abs(jax.random.normal(next(keys), (1, c), jnp.float32))
        scale = gamma / jnp.sqrt(var + eps)
        shift = beta - mean * scale
        return scale, shift

    def scse_p():
        return dict(w1=nrm((C, Cr)), b1=nrm((1, Cr)),
                    w2=nrm((Cr, C)), b2=nrm((1, C)),
                    ws=nrm((1, C)), bs=nrm((1, 1)))

    return dict(
        patch_w=[nrm((patch_dim, C)) for _ in range(3)],
        patch_b=[nrm((1, C)) for _ in range(3)],
        dec=[dict(w=nrm((C, C)), bn=bn(C),
                  seg_w=nrm((1, C)), seg_b=nrm((1, 1)))
             for _ in range(2)],
        ffm=dict(scse1=scse_p(), scse2=scse_p(),
                 conv_wa=nrm((C, C)), conv_wb=nrm((C, C)),
                 conv_bn=bn(C), scse_out=scse_p()),
        head_w=nrm((1, C)), head_b=nrm((1, 1)),
    )


def forward(params, x_nchw, C=128, num_classes=1, patch=4):
    assert num_classes == 1
    B, Cin, H, W = x_nchw.shape
    Hf, Wf = H // patch, W // patch
    P = Hf * Wf
    Cr = params["ffm"]["scse1"]["w2"].shape[0]

    # NCHW -> space-to-depth patches [B, P, patch*patch*Cin] (glue only).
    x = jnp.transpose(x_nchw, (0, 2, 3, 1)).astype(jnp.float32)
    patches = x.reshape(B, Hf, patch, Wf, patch, Cin)
    patches = patches.transpose(0, 1, 3, 2, 4, 5).reshape(B, P, patch * patch * Cin)
    K0 = patch * patch * Cin
    # Pad the contraction to a multiple of 64 (alignment / MXU depth); at real
    # patch sizes (16x16x3=768) this is already >= 256-deep.
    K = max(64, -(-K0 // 64) * 64)
    patches = jnp.pad(patches, ((0, 0), (0, 0), (0, K - K0)))

    # Backbone stand-in: fold the two feature adds into the weights/biases
    # (f0 + f1 and f0 + f2 are linear), concat to one lane-dense matmul.
    w0, w1, w2 = params["patch_w"]
    b0, b1, b2 = params["patch_b"]
    w_cat = jnp.concatenate([w0 + w1, w0 + w2], axis=1)
    w_cat = jnp.pad(w_cat, ((0, K - K0), (0, 0))).astype(jnp.bfloat16)
    b_cat = jnp.concatenate([b0 + b1, b0 + b2], axis=1)

    feats = patch_embed_fused(patches.astype(jnp.bfloat16), w_cat, b_cat)  # [B,P,2C] bf16

    # Bilinear resize expressed as matmuls over the flattened pixel axis,
    # bf16 interpolation operands.
    rh = _interp_matrix(H, Hf)                    # [H, Hf]
    rw = _interp_matrix(W, Wf)                    # [W, Wf]
    pidx = jnp.arange(P)
    Eh = rh[:, pidx // Wf].astype(jnp.bfloat16)   # [H, P]
    Ew = rw[:, pidx % Wf].T.astype(jnp.bfloat16)  # [P, W]

    # ---- pack decode/FFM parameters into a handful of refs ----
    d0, d1 = params["dec"]
    ffm = params["ffm"]
    w_dec = jnp.stack([d0["w"], d1["w"]]).astype(jnp.bfloat16)            # [2, C, C]
    scse_list = [ffm["scse1"], ffm["scse2"], ffm["scse_out"]]
    wse = jnp.stack([jnp.concatenate([s["w1"].T, s["w2"]], axis=0)
                     for s in scse_list])                                 # [3, 2Cr, C]
    b1c = jnp.concatenate([s["b1"].reshape(Cr, 1) for s in scse_list], 0) # [3Cr, 1]
    w_ffm = jnp.concatenate([ffm["conv_wa"], ffm["conv_wb"]],
                            axis=0).astype(jnp.bfloat16)                  # [2C, C]

    def rowv(v):
        return v.reshape(-1)

    def rowsc(v):
        return jnp.broadcast_to(v.reshape(()), (C,))

    rows = [
        rowv(d0["bn"][0]), rowv(d0["bn"][1]), rowv(d0["seg_w"]), rowsc(d0["seg_b"]),
        rowv(d1["bn"][0]), rowv(d1["bn"][1]), rowv(d1["seg_w"]), rowsc(d1["seg_b"]),
        rowv(ffm["scse1"]["b2"]), rowv(ffm["scse1"]["ws"]), rowsc(ffm["scse1"]["bs"]),
        rowv(ffm["scse2"]["b2"]), rowv(ffm["scse2"]["ws"]), rowsc(ffm["scse2"]["bs"]),
        rowv(ffm["conv_bn"][0]), rowv(ffm["conv_bn"][1]),
        rowv(ffm["scse_out"]["b2"]), rowv(ffm["scse_out"]["ws"]), rowsc(ffm["scse_out"]["bs"]),
        rowv(params["head_w"]), rowsc(params["head_b"]),
    ]
    rows += [jnp.zeros((C,), jnp.float32)] * ((-len(rows)) % 8)
    vecs = jnp.stack(rows).astype(jnp.float32)                            # [24, C]

    dec_opt, ups = decode_ffm_fused(feats, w_dec, wse, b1c, w_ffm, vecs,
                                    Eh, Ew, C, Cr)

    # ---- convert back to PyTorch's NCHW layout (glue) ----
    features_opt = feats[..., :C].astype(jnp.float32)
    features_sar = feats[..., C:].astype(jnp.float32)

    def to_nchw_feat(f):                       # [B,P,C] -> [B,C,Hf,Wf]
        return jnp.transpose(f.reshape(B, Hf, Wf, C), (0, 3, 1, 2))

    features_opt_n = to_nchw_feat(features_opt)
    # NOTE: the reference module slices the *tensor* features_opt[-2:], i.e.
    # its batch axis; reproduced literally here.
    return [
        features_opt_n[-2:],
        to_nchw_feat(features_sar),
        to_nchw_feat(dec_opt.astype(jnp.float32)),
        ups[:, None, :, 0:W],                  # out_opt     [B,1,H,W]
        ups[:, None, :, W:2 * W],              # out_sar     [B,1,H,W]
        ups[:, None, :, 2 * W:3 * W],          # out_combine [B,1,H,W]
    ]


if __name__ == "__main__":
    key = jax.random.PRNGKey(0)
    kx, kp = jax.random.split(key)
    # W is a multiple of 128 so the fused upsample stores are lane-dense
    # (for other widths, flatten the output slab to [B, H*W] instead).
    B, Cin, H, W = 2, 3, 64, 128
    x = jax.random.normal(kx, (B, Cin, H, W), jnp.float32)
    params = init_params(kp)

    outs = jax.jit(forward)(params, x)
    for o in outs:
        jax.block_until_ready(o)
    print("KERNEL_OK")
</pallas_src>

<mosaic_0001>
module attributes {stable_mosaic.version = 11 : i64} {
  func.func private @main(%arg0: i32) attributes {dimension_semantics = [#tpu.dimension_semantics<core_parallel>], iteration_bounds = array<i64: 2>, tpu.core_type = #tpu.core_type<sc_scalar_subcore>, window_params = []} {
    return
  }
}

module attributes {stable_mosaic.version = 11 : i64} {
  func.func private @main(%arg0: i32) attributes {dimension_semantics = [#tpu.dimension_semantics<core_parallel>], iteration_bounds = array<i64: 2>, tpu.core_type = #tpu.core_type<sc_scalar_subcore>, window_params = []} {
    return
  }
}

module attributes {stable_mosaic.version = 11 : i64} {
  func.func @_patch_embed_kernel(%arg0: i32, %arg1: i32, %arg2: memref<1x512x64xbf16, #tpu.memory_space<vmem>>, %arg3: memref<64x256xbf16, #tpu.memory_space<vmem>>, %arg4: memref<1x256xf32, #tpu.memory_space<vmem>>, %arg5: memref<1x512x256xbf16, #tpu.memory_space<vmem>>) attributes {dimension_semantics = [#tpu.dimension_semantics<parallel>, #tpu.dimension_semantics<parallel>], iteration_bounds = array<i64: 2, 1>, scalar_prefetch = 0 : i64, scratch_operands = 0 : i64, tpu.core_type = #tpu.core_type<tc>, window_params = [{transform_indices = @transform_0, window_bounds = array<i64: 1, 512, 64>}, {pipeline_mode = #tpu.pipeline_mode<synchronous>, transform_indices = @transform_1, window_bounds = array<i64: 64, 256>}, {pipeline_mode = #tpu.pipeline_mode<synchronous>, transform_indices = @transform_2, window_bounds = array<i64: 1, 256>}, {transform_indices = @transform_3, window_bounds = array<i64: 1, 512, 256>}]} {
    %c0 = arith.constant 0 : index
    %c0_0 = arith.constant 0 : index
    %c0_1 = arith.constant 0 : index
    %0 = vector.load %arg2[%c0, %c0_0, %c0_1] : memref<1x512x64xbf16, #tpu.memory_space<vmem>>, vector<1x512x64xbf16>
    %1 = vector.shape_cast %0 : vector<1x512x64xbf16> to vector<512x64xbf16>
    %c0_2 = arith.constant 0 : index
    %c0_3 = arith.constant 0 : index
    %2 = vector.load %arg3[%c0_2, %c0_3] : memref<64x256xbf16, #tpu.memory_space<vmem>>, vector<64x256xbf16>
    %cst = arith.constant dense<0.000000e+00> : vector<512x256xf32>
    %3 = tpu.matmul %1, %2, %cst {dimension_numbers = #tpu.dot_dimension_numbers<[1], [0], [0], [1], [0, 0, 1, 1], [], []>} : vector<512x64xbf16>, vector<64x256xbf16>, vector<512x256xf32> -> vector<512x256xf32>
    %c0_4 = arith.constant 0 : index
    %c0_5 = arith.constant 0 : index
    %4 = vector.load %arg4[%c0_4, %c0_5] : memref<1x256xf32, #tpu.memory_space<vmem>>, vector<1x256xf32>
    %5 = vector.broadcast %4 : vector<1x256xf32> to vector<512x256xf32>
    %6 = arith.addf %3, %5 : vector<512x256xf32>
    %7 = arith.truncf %6 : vector<512x256xf32> to vector<512x256xbf16>
    %8 = vector.shape_cast %7 : vector<512x256xbf16> to vector<1x512x256xbf16>
    %c0_6 = arith.constant 0 : index
    %c0_7 = arith.constant 0 : index
    %c0_8 = arith.constant 0 : index
    %9 = vector.load %arg5[%c0_6, %c0_7, %c0_8] : memref<1x512x256xbf16, #tpu.memory_space<vmem>>, vector<1x512x256xbf16>
    tpu.vector_store %arg5[%c0_6, %c0_7, %c0_8], %8 {strides = array<i32>} : memref<1x512x256xbf16, #tpu.memory_space<vmem>>, vector<1x512x256xbf16>,
    return
  }
  func.func @transform_0(%arg0: i32, %arg1: i32) -> (i32, i32, i32) {
    %c0_i32 = arith.constant 0 : i32
    %c0_i32_0 = arith.constant 0 : i32
    return %arg0, %arg1, %c0_i32 : i32, i32, i32
  }
  func.func @transform_1(%arg0: i32, %arg1: i32) -> (i32, i32) {
    %c0_i32 = arith.constant 0 : i32
    %c0_i32_0 = arith.constant 0 : i32
    %c0_i32_1 = arith.constant 0 : i32
    return %c0_i32, %c0_i32_0 : i32, i32
  }
  func.func @transform_2(%arg0: i32, %arg1: i32) -> (i32, i32) {
    %c0_i32 = arith.constant 0 : i32
    %c0_i32_0 = arith.constant 0 : i32
    %c0_i32_1 = arith.constant 0 : i32
    return %c0_i32, %c0_i32_0 : i32, i32
  }
  func.func @transform_3(%arg0: i32, %arg1: i32) -> (i32, i32, i32) {
    %c0_i32 = arith.constant 0 : i32
    %c0_i32_0 = arith.constant 0 : i32
    return %arg0, %arg1, %c0_i32 : i32, i32, i32
  }
}

module attributes {stable_mosaic.version = 11 : i64} {
  func.func @_decode_ffm_kernel(%arg0: i32, %arg1: memref<1x512x256xbf16, #tpu.memory_space<vmem>>, %arg2: memref<2x128x128xbf16, #tpu.memory_space<vmem>>, %arg3: memref<3x16x128xf32, #tpu.memory_space<vmem>>, %arg4: memref<24x1xf32, #tpu.memory_space<vmem>>, %arg5: memref<256x128xbf16, #tpu.memory_space<vmem>>, %arg6: memref<24x128xf32, #tpu.memory_space<vmem>>, %arg7: memref<64x512xbf16, #tpu.memory_space<vmem>>, %arg8: memref<512x128xbf16, #tpu.memory_space<vmem>>, %arg9: memref<1x512x128xbf16, #tpu.memory_space<vmem>>, %arg10: memref<1x64x384xf32, #tpu.memory_space<vmem>>) attributes {dimension_semantics = [#tpu.dimension_semantics<parallel>], iteration_bounds = array<i64: 2>, scalar_prefetch = 0 : i64, scratch_operands = 0 : i64, tpu.core_type = #tpu.core_type<tc>, window_params = [{transform_indices = @transform_0, window_bounds = array<i64: 1, 512, 256>}, {pipeline_mode = #tpu.pipeline_mode<synchronous>, transform_indices = @transform_1, window_bounds = array<i64: 2, 128, 128>}, {pipeline_mode = #tpu.pipeline_mode<synchronous>, transform_indices = @transform_2, window_bounds = array<i64: 3, 16, 128>}, {pipeline_mode = #tpu.pipeline_mode<synchronous>, transform_indices = @transform_3, window_bounds = array<i64: 24, 1>}, {pipeline_mode = #tpu.pipeline_mode<synchronous>, transform_indices = @transform_4, window_bounds = array<i64: 256, 128>}, {pipeline_mode = #tpu.pipeline_mode<synchronous>, transform_indices = @transform_5, window_bounds = array<i64: 24, 128>}, {pipeline_mode = #tpu.pipeline_mode<synchronous>, transform_indices = @transform_6, window_bounds = array<i64: 64, 512>}, {pipeline_mode = #tpu.pipeline_mode<synchronous>, transform_indices = @transform_7, window_bounds = array<i64: 512, 128>}, {transform_indices = @transform_8, window_bounds = array<i64: 1, 512, 128>}, {transform_indices = @transform_9, window_bounds = array<i64: 1, 64, 384>}]} {
    %c0 = arith.constant 0 : index
    %c0_0 = arith.constant 0 : index
    %c0_1 = arith.constant 0 : index
    %0 = vector.load %arg1[%c0, %c0_0, %c0_1] : memref<1x512x256xbf16, #tpu.memory_space<vmem>>, vector<1x512x256xbf16>
    %1 = vector.shape_cast %0 : vector<1x512x256xbf16> to vector<512x256xbf16>
    %2 = vector.extract_strided_slice %1 {offsets = [0, 0], sizes = [512, 128], strides = [1, 1]} : vector<512x256xbf16> to vector<512x128xbf16>
    %c0_2 = arith.constant 0 : index
    %c0_3 = arith.constant 0 : index
    %c0_4 = arith.constant 0 : index
    %3 = vector.load %arg2[%c0_2, %c0_3, %c0_4] : memref<2x128x128xbf16, #tpu.memory_space<vmem>>, vector<1x128x128xbf16>
    %4 = vector.shape_cast %3 : vector<1x128x128xbf16> to vector<128x128xbf16>
    %cst = arith.constant dense<0.000000e+00> : vector<512x128xf32>
    %5 = tpu.matmul %2, %4, %cst {dimension_numbers = #tpu.dot_dimension_numbers<[1], [0], [0], [1], [0, 0, 1, 1], [], []>} : vector<512x128xbf16>, vector<128x128xbf16>, vector<512x128xf32> -> vector<512x128xf32>
    %c0_5 = arith.constant 0 : index
    %c0_6 = arith.constant 0 : index
    %6 = vector.load %arg6[%c0_5, %c0_6] : memref<24x128xf32, #tpu.memory_space<vmem>>, vector<1x128xf32>
    %7 = vector.broadcast %6 : vector<1x128xf32> to vector<512x128xf32>
    %8 = arith.mulf %5, %7 : vector<512x128xf32>
    %c1 = arith.constant 1 : index
    %c0_7 = arith.constant 0 : index
    %9 = vector.load %arg6[%c1, %c0_7] : memref<24x128xf32, #tpu.memory_space<vmem>>, vector<1x128xf32>
    %10 = vector.broadcast %9 : vector<1x128xf32> to vector<512x128xf32>
    %11 = arith.addf %8, %10 : vector<512x128xf32>
    %cst_8 = arith.constant 0.000000e+00 : f32
    %12 = vector.broadcast %cst_8 : f32 to vector<512x128xf32>
    %13 = arith.maximumf %11, %12 : vector<512x128xf32>
    %14 = vector.extract_strided_slice %1 {offsets = [0, 128], sizes = [512, 128], strides = [1, 1]} : vector<512x256xbf16> to vector<512x128xbf16>
    %c1_9 = arith.constant 1 : index
    %c0_10 = arith.constant 0 : index
    %c0_11 = arith.constant 0 : index
    %15 = vector.load %arg2[%c1_9, %c0_10, %c0_11] : memref<2x128x128xbf16, #tpu.memory_space<vmem>>, vector<1x128x128xbf16>
    %16 = vector.shape_cast %15 : vector<1x128x128xbf16> to vector<128x128xbf16>
    %cst_12 = arith.constant dense<0.000000e+00> : vector<512x128xf32>
    %17 = tpu.matmul %14, %16, %cst_12 {dimension_numbers = #tpu.dot_dimension_numbers<[1], [0], [0], [1], [0, 0, 1, 1], [], []>} : vector<512x128xbf16>, vector<128x128xbf16>, vector<512x128xf32> -> vector<512x128xf32>
    %c4 = arith.constant 4 : index
    %c0_13 = arith.constant 0 : index
    %18 = vector.load %arg6[%c4, %c0_13] : memref<24x128xf32, #tpu.memory_space<vmem>>, vector<1x128xf32>
    %19 = vector.broadcast %18 : vector<1x128xf32> to vector<512x128xf32>
    %20 = arith.mulf %17, %19 : vector<512x128xf32>
    %c5 = arith.constant 5 : index
    %c0_14 = arith.constant 0 : index
    %21 = vector.load %arg6[%c5, %c0_14] : memref<24x128xf32, #tpu.memory_space<vmem>>, vector<1x128xf32>
    %22 = vector.broadcast %21 : vector<1x128xf32> to vector<512x128xf32>
    %23 = arith.addf %20, %22 : vector<512x128xf32>
    %cst_15 = arith.constant 0.000000e+00 : f32
    %24 = vector.broadcast %cst_15 : f32 to vector<512x128xf32>
    %25 = arith.maximumf %23, %24 : vector<512x128xf32>
    %26 = arith.truncf %13 : vector<512x128xf32> to vector<512x128xbf16>
    %27 = vector.shape_cast %26 : vector<512x128xbf16> to vector<1x512x128xbf16>
    %c0_16 = arith.constant 0 : index
    %c0_17 = arith.constant 0 : index
    %c0_18 = arith.constant 0 : index
    %28 = vector.load %arg9[%c0_16, %c0_17, %c0_18] : memref<1x512x128xbf16, #tpu.memory_space<vmem>>, vector<1x512x128xbf16>
    tpu.vector_store %arg9[%c0_16, %c0_17, %c0_18], %27 {strides = array<i32>} : memref<1x512x128xbf16, #tpu.memory_space<vmem>>, vector<1x512x128xbf16>,
    %c0_19 = arith.constant 0 : index
    %c0_20 = arith.constant 0 : index
    %c0_21 = arith.constant 0 : index
    %29 = vector.load %arg3[%c0_19, %c0_20, %c0_21] : memref<3x16x128xf32, #tpu.memory_space<vmem>>, vector<1x16x128xf32>
    %30 = vector.shape_cast %29 : vector<1x16x128xf32> to vector<16x128xf32>
    %31 = vector.extract_strided_slice %30 {offsets = [0, 0], sizes = [8, 128], strides = [1, 1]} : vector<16x128xf32> to vector<8x128xf32>
    %32 = vector.extract_strided_slice %30 {offsets = [8, 0], sizes = [8, 128], strides = [1, 1]} : vector<16x128xf32> to vector<8x128xf32>
    %c0_22 = arith.constant 0 : index
    %c0_23 = arith.constant 0 : index
    %33 = vector.load %arg4[%c0_22, %c0_23] : memref<24x1xf32, #tpu.memory_space<vmem>>, vector<8x1xf32>
    %cst_24 = arith.constant dense<0.000000e+00> : vector<128xf32>
    %34 = vector.multi_reduction <add>, %25, %cst_24 [0] : vector<512x128xf32> to vector<128xf32>
    %35 = vector.shape_cast %34 : vector<128xf32> to vector<1x128xf32>
    %cst_25 = arith.constant 5.120000e+02 : f32
    %36 = vector.broadcast %cst_25 : f32 to vector<1x128xf32>
    %37 = arith.divf %35, %36 : vector<1x128xf32>
    %38 = vector.broadcast %37 : vector<1x128xf32> to vector<8x128xf32>
    %39 = arith.mulf %38, %31 : vector<8x128xf32>
    %cst_26 = arith.constant dense<0.000000e+00> : vector<8xf32>
    %40 = vector.multi_reduction <add>, %39, %cst_26 [1] : vector<8x128xf32> to vector<8xf32>
    %41 = vector.shape_cast %40 : vector<8xf32> to vector<8x1xf32>
    %42 = arith.addf %41, %33 : vector<8x1xf32>
    %cst_27 = arith.constant 0.000000e+00 : f32
    %43 = vector.broadcast %cst_27 : f32 to vector<8x1xf32>
    %44 = arith.maximumf %42, %43 : vector<8x1xf32>
    %45 = vector.broadcast %44 : vector<8x1xf32> to vector<8x128xf32>
    %46 = arith.mulf %45, %32 : vector<8x128xf32>
    %cst_28 = arith.constant dense<0.000000e+00> : vector<128xf32>
    %47 = vector.multi_reduction <add>, %46, %cst_28 [0] : vector<8x128xf32> to vector<128xf32>
    %48 = vector.shape_cast %47 : vector<128xf32> to vector<1x128xf32>
    %c8 = arith.constant 8 : index
    %c0_29 = arith.constant 0 : index
    %49 = vector.load %arg6[%c8, %c0_29] : memref<24x128xf32, #tpu.memory_space<vmem>>, vector<1x128xf32>
    %50 = arith.addf %48, %49 : vector<1x128xf32>
    %51 = arith.negf %50 : vector<1x128xf32>
    %52 = math.exp %51 : vector<1x128xf32>
    %cst_30 = arith.constant 1.000000e+00 : f32
    %53 = vector.broadcast %cst_30 : f32 to vector<1x128xf32>
    %54 = arith.addf %53, %52 : vector<1x128xf32>
    %55 = arith.divf %53, %54 : vector<1x128xf32>
    %c9 = arith.constant 9 : index
    %c0_31 = arith.constant 0 : index
    %56 = vector.load %arg6[%c9, %c0_31] : memref<24x128xf32, #tpu.memory_space<vmem>>, vector<1x128xf32>
    %57 = vector.broadcast %56 : vector<1x128xf32> to vector<512x128xf32>
    %58 = arith.mulf %25, %57 : vector<512x128xf32>
    %cst_32 = arith.constant dense<0.000000e+00> : vector<512xf32>
    %59 = vector.multi_reduction <add>, %58, %cst_32 [1] : vector<512x128xf32> to vector<512xf32>
    %60 = vector.shape_cast %59 : vector<512xf32> to vector<512x1xf32>
    %c10 = arith.constant 10 : index
    %c0_33 = arith.constant 0 : index
    %61 = vector.load %arg6[%c10, %c0_33] : memref<24x128xf32, #tpu.memory_space<vmem>>, vector<1x1xf32>
    %62 = vector.broadcast %61 : vector<1x1xf32> to vector<512x1xf32>
    %63 = arith.addf %60, %62 : vector<512x1xf32>
    %64 = arith.negf %63 : vector<512x1xf32>
    %65 = math.exp %64 : vector<512x1xf32>
    %cst_34 = arith.constant 1.000000e+00 : f32
    %66 = vector.broadcast %cst_34 : f32 to vector<512x1xf32>
    %67 = arith.addf %66, %65 : vector<512x1xf32>
    %68 = arith.divf %66, %67 : vector<512x1xf32>
    %69 = vector.broadcast %55 : vector<1x128xf32> to vector<512x128xf32>
    %70 = vector.broadcast %68 : vector<512x1xf32> to vector<512x128xf32>
    %71 = arith.addf %69, %70 : vector<512x128xf32>
    %72 = arith.mulf %25, %71 : vector<512x128xf32>
    %c1_35 = arith.constant 1 : index
    %c0_36 = arith.constant 0 : index
    %c0_37 = arith.constant 0 : index
    %73 = vector.load %arg3[%c1_35, %c0_36, %c0_37] : memref<3x16x128xf32, #tpu.memory_space<vmem>>, vector<1x16x128xf32>
    %74 = vector.shape_cast %73 : vector<1x16x128xf32> to vector<16x128xf32>
    %75 = vector.extract_strided_slice %74 {offsets = [0, 0], sizes = [8, 128], strides = [1, 1]} : vector<16x128xf32> to vector<8x128xf32>
    %76 = vector.extract_strided_slice %74 {offsets = [8, 0], sizes = [8, 128], strides = [1, 1]} : vector<16x128xf32> to vector<8x128xf32>
    %c8_38 = arith.constant 8 : index
    %c0_39 = arith.constant 0 : index
    %77 = vector.load %arg4[%c8_38, %c0_39] : memref<24x1xf32, #tpu.memory_space<vmem>>, vector<8x1xf32>
    %cst_40 = arith.constant dense<0.000000e+00> : vector<128xf32>
    %78 = vector.multi_reduction <add>, %13, %cst_40 [0] : vector<512x128xf32> to vector<128xf32>
    %79 = vector.shape_cast %78 : vector<128xf32> to vector<1x128xf32>
    %cst_41 = arith.constant 5.120000e+02 : f32
    %80 = vector.broadcast %cst_41 : f32 to vector<1x128xf32>
    %81 = arith.divf %79, %80 : vector<1x128xf32>
    %82 = vector.broadcast %81 : vector<1x128xf32> to vector<8x128xf32>
    %83 = arith.mulf %82, %75 : vector<8x128xf32>
    %cst_42 = arith.constant dense<0.000000e+00> : vector<8xf32>
    %84 = vector.multi_reduction <add>, %83, %cst_42 [1] : vector<8x128xf32> to vector<8xf32>
    %85 = vector.shape_cast %84 : vector<8xf32> to vector<8x1xf32>
    %86 = arith.addf %85, %77 : vector<8x1xf32>
    %cst_43 = arith.constant 0.000000e+00 : f32
    %87 = vector.broadcast %cst_43 : f32 to vector<8x1xf32>
    %88 = arith.maximumf %86, %87 : vector<8x1xf32>
    %89 = vector.broadcast %88 : vector<8x1xf32> to vector<8x128xf32>
    %90 = arith.mulf %89, %76 : vector<8x128xf32>
    %cst_44 = arith.constant dense<0.000000e+00> : vector<128xf32>
    %91 = vector.multi_reduction <add>, %90, %cst_44 [0] : vector<8x128xf32> to vector<128xf32>
    %92 = vector.shape_cast %91 : vector<128xf32> to vector<1x128xf32>
    %c11 = arith.constant 11 : index
    %c0_45 = arith.constant 0 : index
    %93 = vector.load %arg6[%c11, %c0_45] : memref<24x128xf32, #tpu.memory_space<vmem>>, vector<1x128xf32>
    %94 = arith.addf %92, %93 : vector<1x128xf32>
    %95 = arith.negf %94 : vector<1x128xf32>
    %96 = math.exp %95 : vector<1x128xf32>
    %cst_46 = arith.constant 1.000000e+00 : f32
    %97 = vector.broadcast %cst_46 : f32 to vector<1x128xf32>
    %98 = arith.addf %97, %96 : vector<1x128xf32>
    %99 = arith.divf %97, %98 : vector<1x128xf32>
    %c12 = arith.constant 12 : index
    %c0_47 = arith.constant 0 : index
    %100 = vector.load %arg6[%c12, %c0_47] : memref<24x128xf32, #tpu.memory_space<vmem>>, vector<1x128xf32>
    %101 = vector.broadcast %100 : vector<1x128xf32> to vector<512x128xf32>
    %102 = arith.mulf %13, %101 : vector<512x128xf32>
    %cst_48 = arith.constant dense<0.000000e+00> : vector<512xf32>
    %103 = vector.multi_reduction <add>, %102, %cst_48 [1] : vector<512x128xf32> to vector<512xf32>
    %104 = vector.shape_cast %103 : vector<512xf32> to vector<512x1xf32>
    %c13 = arith.constant 13 : index
    %c0_49 = arith.constant 0 : index
    %105 = vector.load %arg6[%c13, %c0_49] : memref<24x128xf32, #tpu.memory_space<vmem>>, vector<1x1xf32>
    %106 = vector.broadcast %105 : vector<1x1xf32> to vector<512x1xf32>
    %107 = arith.addf %104, %106 : vector<512x1xf32>
    %108 = arith.negf %107 : vector<512x1xf32>
    %109 = math.exp %108 : vector<512x1xf32>
    %cst_50 = arith.constant 1.000000e+00 : f32
    %110 = vector.broadcast %cst_50 : f32 to vector<512x1xf32>
    %111 = arith.addf %110, %109 : vector<512x1xf32>
    %112 = arith.divf %110, %111 : vector<512x1xf32>
    %113 = vector.broadcast %99 : vector<1x128xf32> to vector<512x128xf32>
    %114 = vector.broadcast %112 : vector<512x1xf32> to vector<512x128xf32>
    %115 = arith.addf %113, %114 : vector<512x128xf32>
    %116 = arith.mulf %13, %115 : vector<512x128xf32>
    %117 = tpu.concatenate %72, %116 in 1 : vector<512x128xf32>, vector<512x128xf32> -> vector<512x256xf32>
    %118 = arith.truncf %117 : vector<512x256xf32> to vector<512x256xbf16>
    %c0_51 = arith.constant 0 : index
    %c0_52 = arith.constant 0 : index
    %119 = vector.load %arg5[%c0_51, %c0_52] : memref<256x128xbf16, #tpu.memory_space<vmem>>, vector<256x128xbf16>
    %cst_53 = arith.constant dense<0.000000e+00> : vector<512x128xf32>
    %120 = tpu.matmul %118, %119, %cst_53 {dimension_numbers = #tpu.dot_dimension_numbers<[1], [0], [0], [1], [0, 0, 1, 1], [], []>} : vector<512x256xbf16>, vector<256x128xbf16>, vector<512x128xf32> -> vector<512x128xf32>
    %c14 = arith.constant 14 : index
    %c0_54 = arith.constant 0 : index
    %121 = vector.load %arg6[%c14, %c0_54] : memref<24x128xf32, #tpu.memory_space<vmem>>, vector<1x128xf32>
    %122 = vector.broadcast %121 : vector<1x128xf32> to vector<512x128xf32>
    %123 = arith.mulf %120, %122 : vector<512x128xf32>
    %c15 = arith.constant 15 : index
    %c0_55 = arith.constant 0 : index
    %124 = vector.load %arg6[%c15, %c0_55] : memref<24x128xf32, #tpu.memory_space<vmem>>, vector<1x128xf32>
    %125 = vector.broadcast %124 : vector<1x128xf32> to vector<512x128xf32>
    %126 = arith.addf %123, %125 : vector<512x128xf32>
    %cst_56 = arith.constant 0.000000e+00 : f32
    %127 = vector.broadcast %cst_56 : f32 to vector<512x128xf32>
    %128 = arith.maximumf %126, %127 : vector<512x128xf32>
    %c2 = arith.constant 2 : index
    %c0_57 = arith.constant 0 : index
    %c0_58 = arith.constant 0 : index
    %129 = vector.load %arg3[%c2, %c0_57, %c0_58] : memref<3x16x128xf32, #tpu.memory_space<vmem>>, vector<1x16x128xf32>
    %130 = vector.shape_cast %129 : vector<1x16x128xf32> to vector<16x128xf32>
    %131 = vector.extract_strided_slice %130 {offsets = [0, 0], sizes = [8, 128], strides = [1, 1]} : vector<16x128xf32> to vector<8x128xf32>
    %132 = vector.extract_strided_slice %130 {offsets = [8, 0], sizes = [8, 128], strides = [1, 1]} : vector<16x128xf32> to vector<8x128xf32>
    %c16 = arith.constant 16 : index
    %c0_59 = arith.constant 0 : index
    %133 = vector.load %arg4[%c16, %c0_59] : memref<24x1xf32, #tpu.memory_space<vmem>>, vector<8x1xf32>
    %cst_60 = arith.constant dense<0.000000e+00> : vector<128xf32>
    %134 = vector.multi_reduction <add>, %128, %cst_60 [0] : vector<512x128xf32> to vector<128xf32>
    %135 = vector.shape_cast %134 : vector<128xf32> to vector<1x128xf32>
    %cst_61 = arith.constant 5.120000e+02 : f32
    %136 = vector.broadcast %cst_61 : f32 to vector<1x128xf32>
    %137 = arith.divf %135, %136 : vector<1x128xf32>
    %138 = vector.broadcast %137 : vector<1x128xf32> to vector<8x128xf32>
    %139 = arith.mulf %138, %131 : vector<8x128xf32>
    %cst_62 = arith.constant dense<0.000000e+00> : vector<8xf32>
    %140 = vector.multi_reduction <add>, %139, %cst_62 [1] : vector<8x128xf32> to vector<8xf32>
    %141 = vector.shape_cast %140 : vector<8xf32> to vector<8x1xf32>
    %142 = arith.addf %141, %133 : vector<8x1xf32>
    %cst_63 = arith.constant 0.000000e+00 : f32
    %143 = vector.broadcast %cst_63 : f32 to vector<8x1xf32>
    %144 = arith.maximumf %142, %143 : vector<8x1xf32>
    %145 = vector.broadcast %144 : vector<8x1xf32> to vector<8x128xf32>
    %146 = arith.mulf %145, %132 : vector<8x128xf32>
    %cst_64 = arith.constant dense<0.000000e+00> : vector<128xf32>
    %147 = vector.multi_reduction <add>, %146, %cst_64 [0] : vector<8x128xf32> to vector<128xf32>
    %148 = vector.shape_cast %147 : vector<128xf32> to vector<1x128xf32>
    %c16_65 = arith.constant 16 : index
    %c0_66 = arith.constant 0 : index
    %149 = vector.load %arg6[%c16_65, %c0_66] : memref<24x128xf32, #tpu.memory_space<vmem>>, vector<1x128xf32>
    %150 = arith.addf %148, %149 : vector<1x128xf32>
    %151 = arith.negf %150 : vector<1x128xf32>
    %152 = math.exp %151 : vector<1x128xf32>
    %cst_67 = arith.constant 1.000000e+00 : f32
    %153 = vector.broadcast %cst_67 : f32 to vector<1x128xf32>
    %154 = arith.addf %153, %152 : vector<1x128xf32>
    %155 = arith.divf %153, %154 : vector<1x128xf32>
    %c17 = arith.constant 17 : index
    %c0_68 = arith.constant 0 : index
    %156 = vector.load %arg6[%c17, %c0_68] : memref<24x128xf32, #tpu.memory_space<vmem>>, vector<1x128xf32>
    %157 = vector.broadcast %156 : vector<1x128xf32> to vector<512x128xf32>
    %158 = arith.mulf %128, %157 : vector<512x128xf32>
    %cst_69 = arith.constant dense<0.000000e+00> : vector<512xf32>
    %159 = vector.multi_reduction <add>, %158, %cst_69 [1] : vector<512x128xf32> to vector<512xf32>
    %160 = vector.shape_cast %159 : vector<512xf32> to vector<512x1xf32>
    %c18 = arith.constant 18 : index
    %c0_70 = arith.constant 0 : index
    %161 = vector.load %arg6[%c18, %c0_70] : memref<24x128xf32, #tpu.memory_space<vmem>>, vector<1x1xf32>
    %162 = vector.broadcast %161 : vector<1x1xf32> to vector<512x1xf32>
    %163 = arith.addf %160, %162 : vector<512x1xf32>
    %164 = arith.negf %163 : vector<512x1xf32>
    %165 = math.exp %164 : vector<512x1xf32>
    %cst_71 = arith.constant 1.000000e+00 : f32
    %166 = vector.broadcast %cst_71 : f32 to vector<512x1xf32>
    %167 = arith.addf %166, %165 : vector<512x1xf32>
    %168 = arith.divf %166, %167 : vector<512x1xf32>
    %169 = vector.broadcast %155 : vector<1x128xf32> to vector<512x128xf32>
    %170 = vector.broadcast %168 : vector<512x1xf32> to vector<512x128xf32>
    %171 = arith.addf %169, %170 : vector<512x128xf32>
    %172 = arith.mulf %128, %171 : vector<512x128xf32>
    %c2_72 = arith.constant 2 : index
    %c0_73 = arith.constant 0 : index
    %173 = vector.load %arg6[%c2_72, %c0_73] : memref<24x128xf32, #tpu.memory_space<vmem>>, vector<1x128xf32>
    %174 = vector.broadcast %173 : vector<1x128xf32> to vector<512x128xf32>
    %175 = arith.mulf %13, %174 : vector<512x128xf32>
    %cst_74 = arith.constant dense<0.000000e+00> : vector<512xf32>
    %176 = vector.multi_reduction <add>, %175, %cst_74 [1] : vector<512x128xf32> to vector<512xf32>
    %177 = vector.shape_cast %176 : vector<512xf32> to vector<512x1xf32>
    %c3 = arith.constant 3 : index
    %c0_75 = arith.constant 0 : index
    %178 = vector.load %arg6[%c3, %c0_75] : memref<24x128xf32, #tpu.memory_space<vmem>>, vector<1x1xf32>
    %179 = vector.broadcast %178 : vector<1x1xf32> to vector<512x1xf32>
    %180 = arith.addf %177, %179 : vector<512x1xf32>
    %c6 = arith.constant 6 : index
    %c0_76 = arith.constant 0 : index
    %181 = vector.load %arg6[%c6, %c0_76] : memref<24x128xf32, #tpu.memory_space<vmem>>, vector<1x128xf32>
    %182 = vector.broadcast %181 : vector<1x128xf32> to vector<512x128xf32>
    %183 = arith.mulf %25, %182 : vector<512x128xf32>
    %cst_77 = arith.constant dense<0.000000e+00> : vector<512xf32>
    %184 = vector.multi_reduction <add>, %183, %cst_77 [1] : vector<512x128xf32> to vector<512xf32>
    %185 = vector.shape_cast %184 : vector<512xf32> to vector<512x1xf32>
    %c7 = arith.constant 7 : index
    %c0_78 = arith.constant 0 : index
    %186 = vector.load %arg6[%c7, %c0_78] : memref<24x128xf32, #tpu.memory_space<vmem>>, vector<1x1xf32>
    %187 = vector.broadcast %186 : vector<1x1xf32> to vector<512x1xf32>
    %188 = arith.addf %185, %187 : vector<512x1xf32>
    %c19 = arith.constant 19 : index
    %c0_79 = arith.constant 0 : index
    %189 = vector.load %arg6[%c19, %c0_79] : memref<24x128xf32, #tpu.memory_space<vmem>>, vector<1x128xf32>
    %190 = vector.broadcast %189 : vector<1x128xf32> to vector<512x128xf32>
    %191 = arith.mulf %172, %190 : vector<512x128xf32>
    %cst_80 = arith.constant dense<0.000000e+00> : vector<512xf32>
    %192 = vector.multi_reduction <add>, %191, %cst_80 [1] : vector<512x128xf32> to vector<512xf32>
    %193 = vector.shape_cast %192 : vector<512xf32> to vector<512x1xf32>
    %c20 = arith.constant 20 : index
    %c0_81 = arith.constant 0 : index
    %194 = vector.load %arg6[%c20, %c0_81] : memref<24x128xf32, #tpu.memory_space<vmem>>, vector<1x1xf32>
    %195 = vector.broadcast %194 : vector<1x1xf32> to vector<512x1xf32>
    %196 = arith.addf %193, %195 : vector<512x1xf32>
    %c0_82 = arith.constant 0 : index
    %c0_83 = arith.constant 0 : index
    %197 = vector.load %arg8[%c0_82, %c0_83] : memref<512x128xbf16, #tpu.memory_space<vmem>>, vector<512x128xbf16>
    %198 = arith.truncf %180 : vector<512x1xf32> to vector<512x1xbf16>
    %199 = vector.broadcast %198 : vector<512x1xbf16> to vector<512x128xbf16>
    %200 = arith.mulf %199, %197 : vector<512x128xbf16>
    %201 = arith.truncf %188 : vector<512x1xf32> to vector<512x1xbf16>
    %202 = vector.broadcast %201 : vector<512x1xbf16> to vector<512x128xbf16>
    %203 = arith.mulf %202, %197 : vector<512x128xbf16>
    %204 = arith.truncf %196 : vector<512x1xf32> to vector<512x1xbf16>
    %205 = vector.broadcast %204 : vector<512x1xbf16> to vector<512x128xbf16>
    %206 = arith.mulf %205, %197 : vector<512x128xbf16>
    %207 = tpu.concatenate %200, %203, %206 in 1 : vector<512x128xbf16>, vector<512x128xbf16>, vector<512x128xbf16> -> vector<512x384xbf16>
    %c0_84 = arith.constant 0 : index
    %c0_85 = arith.constant 0 : index
    %208 = vector.load %arg7[%c0_84, %c0_85] : memref<64x512xbf16, #tpu.memory_space<vmem>>, vector<64x512xbf16>
    %cst_86 = arith.constant dense<0.000000e+00> : vector<64x384xf32>
    %209 = tpu.matmul %208, %207, %cst_86 {dimension_numbers = #tpu.dot_dimension_numbers<[1], [0], [0], [1], [0, 0, 1, 1], [], []>} : vector<64x512xbf16>, vector<512x384xbf16>, vector<64x384xf32> -> vector<64x384xf32>
    %210 = vector.shape_cast %209 : vector<64x384xf32> to vector<1x64x384xf32>
    %c0_87 = arith.constant 0 : index
    %c0_88 = arith.constant 0 : index
    %c0_89 = arith.constant 0 : index
    %211 = vector.load %arg10[%c0_87, %c0_88, %c0_89] : memref<1x64x384xf32, #tpu.memory_space<vmem>>, vector<1x64x384xf32>
    tpu.vector_store %arg10[%c0_87, %c0_88, %c0_89], %210 {strides = array<i32>} : memref<1x64x384xf32, #tpu.memory_space<vmem>>, vector<1x64x384xf32>,
    return
  }
  func.func @transform_0(%arg0: i32) -> (i32, i32, i32) {
    %c0_i32 = arith.constant 0 : i32
    %c0_i32_0 = arith.constant 0 : i32
    %c0_i32_1 = arith.constant 0 : i32
    return %arg0, %c0_i32, %c0_i32_0 : i32, i32, i32
  }
  func.func @transform_1(%arg0: i32) -> (i32, i32, i32) {
    %c0_i32 = arith.constant 0 : i32
    %c0_i32_0 = arith.constant 0 : i32
    %c0_i32_1 = arith.constant 0 : i32
    %c0_i32_2 = arith.constant 0 : i32
    return %c0_i32, %c0_i32_0, %c0_i32_1 : i32, i32, i32
  }
  func.func @transform_2(%arg0: i32) -> (i32, i32, i32) {
    %c0_i32 = arith.constant 0 : i32
    %c0_i32_0 = arith.constant 0 : i32
    %c0_i32_1 = arith.constant 0 : i32
    %c0_i32_2 = arith.constant 0 : i32
    return %c0_i32, %c0_i32_0, %c0_i32_1 : i32, i32, i32
  }
  func.func @transform_3(%arg0: i32) -> (i32, i32) {
    %c0_i32 = arith.constant 0 : i32
    %c0_i32_0 = arith.constant 0 : i32
    %c0_i32_1 = arith.constant 0 : i32
    return %c0_i32, %c0_i32_0 : i32, i32
  }
  func.func @transform_4(%arg0: i32) -> (i32, i32) {
    %c0_i32 = arith.constant 0 : i32
    %c0_i32_0 = arith.constant 0 : i32
    %c0_i32_1 = arith.constant 0 : i32
    return %c0_i32, %c0_i32_0 : i32, i32
  }
  func.func @transform_5(%arg0: i32) -> (i32, i32) {
    %c0_i32 = arith.constant 0 : i32
    %c0_i32_0 = arith.constant 0 : i32
    %c0_i32_1 = arith.constant 0 : i32
    return %c0_i32, %c0_i32_0 : i32, i32
  }
  func.func @transform_6(%arg0: i32) -> (i32, i32) {
    %c0_i32 = arith.constant 0 : i32
    %c0_i32_0 = arith.constant 0 : i32
    %c0_i32_1 = arith.constant 0 : i32
    return %c0_i32, %c0_i32_0 : i32, i32
  }
  func.func @transform_7(%arg0: i32) -> (i32, i32) {
    %c0_i32 = arith.constant 0 : i32
    %c0_i32_0 = arith.constant 0 : i32
    %c0_i32_1 = arith.constant 0 : i32
    return %c0_i32, %c0_i32_0 : i32, i32
  }
  func.func @transform_8(%arg0: i32) -> (i32, i32, i32) {
    %c0_i32 = arith.constant 0 : i32
    %c0_i32_0 = arith.constant 0 : i32
    %c0_i32_1 = arith.constant 0 : i32
    return %arg0, %c0_i32, %c0_i32_0 : i32, i32, i32
  }
  func.func @transform_9(%arg0: i32) -> (i32, i32, i32) {
    %c0_i32 = arith.constant 0 : i32
    %c0_i32_0 = arith.constant 0 : i32
    %c0_i32_1 = arith.constant 0 : i32
    return %arg0, %c0_i32, %c0_i32_0 : i32, i32, i32
  }
}

</mosaic_0001>

<llo_original>
// kernel: forward.2
$region0: #{forward.2}
  #allocation0 [shape = 'u32[]', space=smem, size = 0x4, offset = 0x4, fixed_abs, tag = 'smem constant byte address 0x4 - core index']
  #allocation1 [shape = 'u32[144,128]{1,0:T(1,128)}', space=vmem, size = 0x12000, scoped, tag = 'internal scratch']
  %s0 = inlined_call_operand.vmem [shape: bf16[2,512,64], index: 0, kind: input, shape index: {}]
  %s1 = inlined_call_operand.vmem [shape: bf16[64,256], index: 1, kind: input, shape index: {}]
  %s2 = inlined_call_operand.vmem [shape: f32[1,256], index: 2, kind: input, shape index: {}]
  %s3 = inlined_call_operand.vmem [shape: bf16[2,512,256], index: 3, kind: output, shape index: {}]
  %s4 = sld [smem:[#allocation0]]
  $region45: #{forward.2} parent=0
    _
  %s6 = ssub.s32 1, %s4
  %s7 = scalar_select 0, %s6, %s4
  loop: start=0, step=1, limit=4
  $region2: #{forward.2} parent=0 // loop_pre_header
    _
  $region3: #{forward.2} parent=0 // loop_header
    %s9 = sphi 0, %s13
    %p10 = scmp.ge.s32.totalorder %s9, 4
    %s16 = sphi 0, %s28
    %s17 = sphi 0, %s24
    %s18 = sphi 0, %s16
    %s19 = sphi 0, %s17
    %s20 = sphi 0, %s18
    %s21 = sphi 0, %s19
    %s33 = sphi 0, %s35
    %s36 = sphi 0, %s33
    %s37 = sphi 0, %s36
    %s53 = sphi 0, %s37
    %s57 = sphi 0, %s57
    %s59 = sphi 0, %s57
    %s60 = sphi 0, %s59
    %s74 = sphi 0, %s60
    %s78 = sphi 0, %s78
    %s80 = sphi 0, %s78
    %s81 = sphi 0, %s80
    %s95 = sphi 0, %s81
    %s103 = sphi 0, %s105
    %s106 = sphi 0, %s103
    %s107 = sphi 0, %s106
    %s123 = sphi 0, %s107
  $region4: #{forward.2} parent=0 // loop_header_branch
    %12 = sbr.rel (%p10) target = $region8
  $region5: #{forward.2} parent=0 // loop_body
    %s14 = ssub.s32 %s9, 1
    %s15 = ssub.s32 %s9, 2
    %s22 = sadd.s32 1, %s17
    %p23 = scmp.ge.s32.totalorder %s22, 1
    %s24 = scalar_select %p23, 0, %s22
    %s25 = sadd.s32 1, %s16
    %s26 = scalar_select %p23, %s25, %s16
    %p27 = scmp.ge.s32.totalorder %s26, 2
    %s28 = scalar_select %p27, 0, %s26
    %s29 = ssub.s32 %s16, %s28
    %s30 = ssub.s32 %s17, %s24
    %s31 = sor.u32 %s29, %s30
    %p32 = scmp.eq.s32.totalorder %s31, 0
    %s34 = sadd.s32 %s33, 1
    %s35 = scalar_select %p32, %s33, %s34
    %p38 = pneg %p32
    %p39 = scmp.eq.s32.totalorder %s9, 1
    %p40 = por %p38, %p39
    %p41 = scmp.ne.s32.totalorder %s33, %s36
    %p42 = scmp.eq.s32.totalorder %s9, 0
    %p43 = por %p41, %p42
    %p44 = scmp.ne.s32.totalorder %s33, %s36
    %p45 = scmp.eq.s32.totalorder %s14, 1
    %p46 = por %p44, %p45
    %p47 = scmp.ne.s32.totalorder %s36, %s37
    %p48 = scmp.eq.s32.totalorder %s14, 0
    %p49 = por %p47, %p48
    %p50 = scmp.ne.s32.totalorder %s36, %s37
    %p51 = scmp.eq.s32.totalorder %s15, 1
    %p52 = por %p50, %p51
    %p54 = scmp.ne.s32.totalorder %s37, %s53
    %p55 = scmp.eq.s32.totalorder %s15, 0
    %p56 = por %p54, %p55
    %s58 = sadd.s32 %s57, 1
    %p61 = scmp.eq.s32.totalorder %s9, 1
    %p62 = scmp.ne.s32.totalorder %s57, %s59
    %p63 = scmp.eq.s32.totalorder %s9, 0
    %p64 = por %p62, %p63
    %p65 = scmp.ne.s32.totalorder %s57, %s59
    %p66 = scmp.eq.s32.totalorder %s14, 1
    %p67 = por %p65, %p66
    %p68 = scmp.ne.s32.totalorder %s59, %s60
    %p69 = scmp.eq.s32.totalorder %s14, 0
    %p70 = por %p68, %p69
    %p71 = scmp.ne.s32.totalorder %s59, %s60
    %p72 = scmp.eq.s32.totalorder %s15, 1
    %p73 = por %p71, %p72
    %p75 = scmp.ne.s32.totalorder %s60, %s74
    %p76 = scmp.eq.s32.totalorder %s15, 0
    %p77 = por %p75, %p76
    %s79 = sadd.s32 %s78, 1
    %p82 = scmp.eq.s32.totalorder %s9, 1
    %p83 = scmp.ne.s32.totalorder %s78, %s80
    %p84 = scmp.eq.s32.totalorder %s9, 0
    %p85 = por %p83, %p84
    %p86 = scmp.ne.s32.totalorder %s78, %s80
    %p87 = scmp.eq.s32.totalorder %s14, 1
    %p88 = por %p86, %p87
    %p89 = scmp.ne.s32.totalorder %s80, %s81
    %p90 = scmp.eq.s32.totalorder %s14, 0
    %p91 = por %p89, %p90
    %p92 = scmp.ne.s32.totalorder %s80, %s81
    %p93 = scmp.eq.s32.totalorder %s15, 1
    %p94 = por %p92, %p93
    %p96 = scmp.ne.s32.totalorder %s81, %s95
    %p97 = scmp.eq.s32.totalorder %s15, 0
    %p98 = por %p96, %p97
    %s99 = ssub.s32 %s16, %s28
    %s100 = ssub.s32 %s17, %s24
    %s101 = sor.u32 %s99, %s100
    %p102 = scmp.eq.s32.totalorder %s101, 0
    %s104 = sadd.s32 %s103, 1
    %s105 = scalar_select %p102, %s103, %s104
    %p108 = pneg %p102
    %p109 = scmp.eq.s32.totalorder %s9, 1
    %p110 = por %p108, %p109
    %p111 = scmp.ne.s32.totalorder %s103, %s106
    %p112 = scmp.eq.s32.totalorder %s9, 0
    %p113 = por %p111, %p112
    %p114 = scmp.ne.s32.totalorder %s103, %s106
    %p115 = scmp.eq.s32.totalorder %s14, 1
    %p116 = por %p114, %p115
    %p117 = scmp.ne.s32.totalorder %s106, %s107
    %p118 = scmp.eq.s32.totalorder %s14, 0
    %p119 = por %p117, %p118
    %p120 = scmp.ne.s32.totalorder %s106, %s107
    %p121 = scmp.eq.s32.totalorder %s15, 1
    %p122 = por %p120, %p121
    %p124 = scmp.ne.s32.totalorder %s107, %s123
    %p125 = scmp.eq.s32.totalorder %s15, 0
    %p126 = por %p124, %p125
    %p127 = scmp.le.s32.totalorder 1, %s9
    %p128 = scmp.lt.s32.totalorder %s9, 3
    %p129 = pnand %p127, %p128
    %p130 = pneg %p129
    // Predicated region
    $region9: #{forward.2} parent=5 // pred_check
      _
    $region10: #{forward.2} parent=5 // pred_check_branch
      %132 = sbr.rel (%p129) target = $region12
    $region11: #{forward.2} parent=5 // pred_region
      %s133 = ssub.s32 %s9, 1
      // Predicated region
      $region13: #{forward.2} parent=11 // pred_check
        %p134 = pneg %p70
      $region14: #{forward.2} parent=11 // pred_check_branch
        %136 = sbr.rel (%p134) target = $region16
      $region15: #{forward.2} parent=11 // pred_region
        _
      $region16: #{forward.2} parent=11 // pred_fallthru
        _
      // Predicated region
      $region17: #{forward.2} parent=11 // pred_check
        %p137 = pneg %p91
      $region18: #{forward.2} parent=11 // pred_check_branch
        %139 = sbr.rel (%p137) target = $region20
      $region19: #{forward.2} parent=11 // pred_region
        _
      $region20: #{forward.2} parent=11 // pred_fallthru
        _
    $region12: #{forward.2} parent=5 // pred_fallthru
      _
    %p140 = scmp.lt.s32.totalorder %s9, 2
    // Predicated region
    $region21: #{forward.2} parent=5 // pred_check
      %p141 = pneg %p140
    $region22: #{forward.2} parent=5 // pred_check_branch
      %143 = sbr.rel (%p141) target = $region24
    $region23: #{forward.2} parent=5 // pred_region
      // Predicated region
      $region25: #{forward.2} parent=23 // pred_check
        %p144 = pneg %p43
      $region26: #{forward.2} parent=23 // pred_check_branch
        %146 = sbr.rel (%p144) target = $region28
      $region27: #{forward.2} parent=23 // pred_region
        %s147 = smul.u32 64, %s17
        %p148 = scmp.lt.s32.totalorder %s16, 1
        %s149 = scalar_select %p148, %s16, 1
        %p150 = scmp.lt.s32.totalorder %s147, 63
        %s151 = scalar_select %p150, %s147, 63
        %s152 = smul.addr %s149, 64
        %s153 = sadd.s32 %s151, %s152
        %s154 = smul.addr %s153, 4
        %s155 = scalar_lea.vmem %s0, %s154
        %s156 = smul.u32 64, %s17
      $region28: #{forward.2} parent=23 // pred_fallthru
        _
    $region24: #{forward.2} parent=5 // pred_fallthru
      _
    %p157 = scmp.le.s32.totalorder 1, %s9
    %p158 = scmp.lt.s32.totalorder %s9, 3
    %p159 = pnand %p157, %p158
    %p160 = pneg %p159
    // Predicated region
    $region29: #{forward.2} parent=5 // pred_check
      _
    $region30: #{forward.2} parent=5 // pred_check_branch
      %162 = sbr.rel (%p159) target = $region32
    $region31: #{forward.2} parent=5 // pred_region
      %s163 = ssub.s32 %s9, 1
      %s164 = smul.u32 64, %s19
      %p165 = scmp.lt.s32.totalorder %s18, 1
      %s166 = scalar_select %p165, %s18, 1
      %p167 = scmp.lt.s32.totalorder %s164, 63
      %s168 = scalar_select %p167, %s164, 63
      %s169 = smul.addr %s166, 64
      %s170 = sadd.s32 %s168, %s169
      %s171 = smul.addr %s170, 4
      %s172 = scalar_lea.vmem %s0, %s171
      %p173 = pneg %p49
      %p174 = pneg %p46
      %p175 = pneg %p70
      %p176 = pneg %p67
      %p177 = pneg %p91
      %p178 = pneg %p88
      %p179 = pneg %p119
      %p180 = pneg %p116
      %s181 = smul.u32 64, %s19
      %p182 = scmp.lt.s32.totalorder %s18, 1
      %s183 = scalar_select %p182, %s18, 1
      %p184 = scmp.lt.s32.totalorder %s181, 63
      %s185 = scalar_select %p184, %s181, 63
      %s186 = smul.addr %s185, 2
      %s187 = smul.addr %s183, 128
      %s188 = sadd.s32 %s186, %s187
      %s189 = smul.addr %s188, 4
      %s190 = scalar_lea.vmem %s3, %s189
      %s191 = smul.u32 64, %s19
      %p192 = scmp.lt.s32.totalorder %s18, 1
      %s193 = scalar_select %p192, %s18, 1
      %p194 = scmp.lt.s32.totalorder %s191, 63
      %s195 = scalar_select %p194, %s191, 63
      %s196 = smul.addr %s193, 64
      %s197 = sadd.s32 %s195, %s196
      %s198 = smul.addr %s197, 4
      %s199 = scalar_lea.vmem %s0, %s198
      %s200 = smul.u32 64, %s19
      %s201 = smul.u32 64, %s19
      %p202 = scmp.lt.s32.totalorder %s18, 1
      %s203 = scalar_select %p202, %s18, 1
      %p204 = scmp.lt.s32.totalorder %s201, 63
      %s205 = scalar_select %p204, %s201, 63
      %s206 = smul.addr %s205, 2
      %s207 = smul.addr %s203, 128
      %s208 = sadd.s32 %s206, %s207
      %s209 = smul.addr %s208, 4
      %s210 = scalar_lea.vmem %s3, %s209
      %s211 = smul.u32 64, %s19
      %v213 = vld [vmem:[%s199] sm:$0xf]
      %v214 = vld [vmem:[%s199 + $0x4] sm:$0xf]
      %v215 = vld [vmem:[%s199 + $0x8] sm:$0xf]
      %v216 = vld [vmem:[%s199 + $0xc] sm:$0xf]
      %v217 = vld [vmem:[%s199 + $0x10] sm:$0xf]
      %v218 = vld [vmem:[%s199 + $0x14] sm:$0xf]
      %v219 = vld [vmem:[%s199 + $0x18] sm:$0xf]
      %v220 = vld [vmem:[%s199 + $0x1c] sm:$0xf]
      %v221 = vld [vmem:[%s199 + $0x20] sm:$0xf]
      %v222 = vld [vmem:[%s199 + $0x24] sm:$0xf]
      %v223 = vld [vmem:[%s199 + $0x28] sm:$0xf]
      %v224 = vld [vmem:[%s199 + $0x2c] sm:$0xf]
      %v225 = vld [vmem:[%s199 + $0x30] sm:$0xf]
      %v226 = vld [vmem:[%s199 + $0x34] sm:$0xf]
      %v227 = vld [vmem:[%s199 + $0x38] sm:$0xf]
      %v228 = vld [vmem:[%s199 + $0x3c] sm:$0xf]
      %v229 = vld [vmem:[%s199 + $0x40] sm:$0xf]
      %v230 = vld [vmem:[%s199 + $0x44] sm:$0xf]
      %v231 = vld [vmem:[%s199 + $0x48] sm:$0xf]
      %v232 = vld [vmem:[%s199 + $0x4c] sm:$0xf]
      %v233 = vld [vmem:[%s199 + $0x50] sm:$0xf]
      %v234 = vld [vmem:[%s199 + $0x54] sm:$0xf]
      %v235 = vld [vmem:[%s199 + $0x58] sm:$0xf]
      %v236 = vld [vmem:[%s199 + $0x5c] sm:$0xf]
      %v237 = vld [vmem:[%s199 + $0x60] sm:$0xf]
      %v238 = vld [vmem:[%s199 + $0x64] sm:$0xf]
      %v239 = vld [vmem:[%s199 + $0x68] sm:$0xf]
      %v240 = vld [vmem:[%s199 + $0x6c] sm:$0xf]
      %v241 = vld [vmem:[%s199 + $0x70] sm:$0xf]
      %v242 = vld [vmem:[%s199 + $0x74] sm:$0xf]
      %v243 = vld [vmem:[%s199 + $0x78] sm:$0xf]
      %v244 = vld [vmem:[%s199 + $0x7c] sm:$0xf]
      %v245 = vld [vmem:[%s199 + $0x80] sm:$0xf]
      %v246 = vld [vmem:[%s199 + $0x84] sm:$0xf]
      %v247 = vld [vmem:[%s199 + $0x88] sm:$0xf]
      %v248 = vld [vmem:[%s199 + $0x8c] sm:$0xf]
      %v249 = vld [vmem:[%s199 + $0x90] sm:$0xf]
      %v250 = vld [vmem:[%s199 + $0x94] sm:$0xf]
      %v251 = vld [vmem:[%s199 + $0x98] sm:$0xf]
      %v252 = vld [vmem:[%s199 + $0x9c] sm:$0xf]
      %v253 = vld [vmem:[%s199 + $0xa0] sm:$0xf]
      %v254 = vld [vmem:[%s199 + $0xa4] sm:$0xf]
      %v255 = vld [vmem:[%s199 + $0xa8] sm:$0xf]
      %v256 = vld [vmem:[%s199 + $0xac] sm:$0xf]
      %v257 = vld [vmem:[%s199 + $0xb0] sm:$0xf]
      %v258 = vld [vmem:[%s199 + $0xb4] sm:$0xf]
      %v259 = vld [vmem:[%s199 + $0xb8] sm:$0xf]
      %v260 = vld [vmem:[%s199 + $0xbc] sm:$0xf]
      %v261 = vld [vmem:[%s199 + $0xc0] sm:$0xf]
      %v262 = vld [vmem:[%s199 + $0xc4] sm:$0xf]
      %v263 = vld [vmem:[%s199 + $0xc8] sm:$0xf]
      %v264 = vld [vmem:[%s199 + $0xcc] sm:$0xf]
      %v265 = vld [vmem:[%s199 + $0xd0] sm:$0xf]
      %v266 = vld [vmem:[%s199 + $0xd4] sm:$0xf]
      %v267 = vld [vmem:[%s199 + $0xd8] sm:$0xf]
      %v268 = vld [vmem:[%s199 + $0xdc] sm:$0xf]
      %v269 = vld [vmem:[%s199 + $0xe0] sm:$0xf]
      %v270 = vld [vmem:[%s199 + $0xe4] sm:$0xf]
      %v271 = vld [vmem:[%s199 + $0xe8] sm:$0xf]
      %v272 = vld [vmem:[%s199 + $0xec] sm:$0xf]
      %v273 = vld [vmem:[%s199 + $0xf0] sm:$0xf]
      %v274 = vld [vmem:[%s199 + $0xf4] sm:$0xf]
      %v275 = vld [vmem:[%s199 + $0xf8] sm:$0xf]
      %v276 = vld [vmem:[%s199 + $0xfc] sm:$0xf]
      %v277 = vld [vmem:[%s1] sm:$0xff]
      %v278 = vld [vmem:[%s1 + $0x8] sm:$0xff]
      %v279 = vld [vmem:[%s1 + $0x10] sm:$0xff]
      %v280 = vld [vmem:[%s1 + $0x18] sm:$0xff]
      %v281 = vld [vmem:[%s1 + $0x20] sm:$0xff]
      %v282 = vld [vmem:[%s1 + $0x28] sm:$0xff]
      %v283 = vld [vmem:[%s1 + $0x30] sm:$0xff]
      %v284 = vld [vmem:[%s1 + $0x38] sm:$0xff]
      %v285 = vld [vmem:[%s2] sm:$0x3]
      %v287 = vlaneseq
      %v288 = vshrl.u32 %v287, 7
      %v289 = vsub.s32 0, %v288
      %v290 = vrot.slane %v285, %v289
      %v291 = vlaneseq
      %v292 = vshrl.u32 %v291, 7
      %v293 = vsub.s32 1, %v292
      %v294 = vrot.slane %v285, %v293
      %v361 = vunpack.c.l.b16 %v213
      %v362 = vunpack.c.l.b16 %v214
      %v363 = vunpack.c.l.b16 %v215
      %v364 = vunpack.c.l.b16 %v216
      %v365 = vunpack.c.l.b16 %v217
      %v366 = vunpack.c.l.b16 %v218
      %v367 = vunpack.c.l.b16 %v219
      %v368 = vunpack.c.l.b16 %v220
      %v369 = vunpack.c.l.b16 %v221
      %v370 = vunpack.c.l.b16 %v222
      %v371 = vunpack.c.l.b16 %v223
      %v372 = vunpack.c.l.b16 %v224
      %v373 = vunpack.c.l.b16 %v225
      %v374 = vunpack.c.l.b16 %v226
      %v375 = vunpack.c.l.b16 %v227
      %v376 = vunpack.c.l.b16 %v228
      %v377 = vunpack.c.l.b16 %v229
      %v378 = vunpack.c.l.b16 %v230
      %v379 = vunpack.c.l.b16 %v231
      %v380 = vunpack.c.l.b16 %v232
      %v381 = vunpack.c.l.b16 %v233
      %v382 = vunpack.c.l.b16 %v234
      %v383 = vunpack.c.l.b16 %v235
      %v384 = vunpack.c.l.b16 %v236
      %v385 = vunpack.c.l.b16 %v237
      %v386 = vunpack.c.l.b16 %v238
      %v387 = vunpack.c.l.b16 %v239
      %v388 = vunpack.c.l.b16 %v240
      %v389 = vunpack.c.l.b16 %v241
      %v390 = vunpack.c.l.b16 %v242
      %v391 = vunpack.c.l.b16 %v243
      %v392 = vunpack.c.l.b16 %v244
      %v393 = vunpack.c.l.b16 %v245
      %v394 = vunpack.c.l.b16 %v246
      %v395 = vunpack.c.l.b16 %v247
      %v396 = vunpack.c.l.b16 %v248
      %v397 = vunpack.c.l.b16 %v249
      %v398 = vunpack.c.l.b16 %v250
      %v399 = vunpack.c.l.b16 %v251
      %v400 = vunpack.c.l.b16 %v252
      %v401 = vunpack.c.l.b16 %v253
      %v402 = vunpack.c.l.b16 %v254
      %v403 = vunpack.c.l.b16 %v255
      %v404 = vunpack.c.l.b16 %v256
      %v405 = vunpack.c.l.b16 %v257
      %v406 = vunpack.c.l.b16 %v258
      %v407 = vunpack.c.l.b16 %v259
      %v408 = vunpack.c.l.b16 %v260
      %v409 = vunpack.c.l.b16 %v261
      %v410 = vunpack.c.l.b16 %v262
      %v411 = vunpack.c.l.b16 %v263
      %v412 = vunpack.c.l.b16 %v264
      %v413 = vunpack.c.l.b16 %v265
      %v414 = vunpack.c.l.b16 %v266
      %v415 = vunpack.c.l.b16 %v267
      %v416 = vunpack.c.l.b16 %v268
      %v417 = vunpack.c.l.b16 %v269
      %v418 = vunpack.c.l.b16 %v270
      %v419 = vunpack.c.l.b16 %v271
      %v420 = vunpack.c.l.b16 %v272
      %v421 = vunpack.c.l.b16 %v273
      %v422 = vunpack.c.l.b16 %v274
      %v423 = vunpack.c.l.b16 %v275
      %v424 = vunpack.c.l.b16 %v276
      %v425 = vpack.c.b16 %v362, %v361
      %v426 = vpack.c.b16 %v364, %v363
      %v427 = vpack.c.b16 %v366, %v365
      %v428 = vpack.c.b16 %v368, %v367
      %v429 = vpack.c.b16 %v370, %v369
      %v430 = vpack.c.b16 %v372, %v371
      %v431 = vpack.c.b16 %v374, %v373
      %v432 = vpack.c.b16 %v376, %v375
      %v433 = vpack.c.b16 %v378, %v377
      %v434 = vpack.c.b16 %v380, %v379
      %v435 = vpack.c.b16 %v382, %v381
      %v436 = vpack.c.b16 %v384, %v383
      %v437 = vpack.c.b16 %v386, %v385
      %v438 = vpack.c.b16 %v388, %v387
      %v439 = vpack.c.b16 %v390, %v389
      %v440 = vpack.c.b16 %v392, %v391
      %v441 = vpack.c.b16 %v394, %v393
      %v442 = vpack.c.b16 %v396, %v395
      %v443 = vpack.c.b16 %v398, %v397
      %v444 = vpack.c.b16 %v400, %v399
      %v445 = vpack.c.b16 %v402, %v401
      %v446 = vpack.c.b16 %v404, %v403
      %v447 = vpack.c.b16 %v406, %v405
      %v448 = vpack.c.b16 %v408, %v407
      %v449 = vpack.c.b16 %v410, %v409
      %v450 = vpack.c.b16 %v412, %v411
      %v451 = vpack.c.b16 %v414, %v413
      %v452 = vpack.c.b16 %v416, %v415
      %v453 = vpack.c.b16 %v418, %v417
      %v454 = vpack.c.b16 %v420, %v419
      %v455 = vpack.c.b16 %v422, %v421
      %v456 = vpack.c.b16 %v424, %v423
      %v465 = vunpack.c.l.b16 %v277
      %v466 = vunpack.c.h.b16 %v277
      %v467 = vunpack.c.l.b16 %v278
      %v468 = vunpack.c.h.b16 %v278
      %v469 = vunpack.c.l.b16 %v279
      %v470 = vunpack.c.h.b16 %v279
      %v471 = vunpack.c.l.b16 %v280
      %v472 = vunpack.c.h.b16 %v280
      %v473 = vunpack.c.l.b16 %v281
      %v474 = vunpack.c.h.b16 %v281
      %v475 = vunpack.c.l.b16 %v282
      %v476 = vunpack.c.h.b16 %v282
      %v477 = vunpack.c.l.b16 %v283
      %v478 = vunpack.c.h.b16 %v283
      %v479 = vunpack.c.l.b16 %v284
      %v480 = vunpack.c.h.b16 %v284
      %v481 = vpack.c.b16 %v467, %v465
      %v482 = vpack.c.b16 %v468, %v466
      %v483 = vpack.c.b16 %v471, %v469
      %v484 = vpack.c.b16 %v472, %v470
      %v485 = vpack.c.b16 %v475, %v473
      %v486 = vpack.c.b16 %v476, %v474
      %v487 = vpack.c.b16 %v479, %v477
      %v488 = vpack.c.b16 %v480, %v478
      %vm497 = vcmask 523264
      %v499 = vsel %vm497, %v425, 0
      %v502 = vsel %vm497, %v426, 0
      %v505 = vsel %vm497, %v427, 0
      %v508 = vsel %vm497, %v428, 0
      %v511 = vsel %vm497, %v429, 0
      %v514 = vsel %vm497, %v430, 0
      %v517 = vsel %vm497, %v431, 0
      %v520 = vsel %vm497, %v432, 0
      %v523 = vsel %vm497, %v433, 0
      %v526 = vsel %vm497, %v434, 0
      %v529 = vsel %vm497, %v435, 0
      %v532 = vsel %vm497, %v436, 0
      %v535 = vsel %vm497, %v437, 0
      %v538 = vsel %vm497, %v438, 0
      %v541 = vsel %vm497, %v439, 0
      %v544 = vsel %vm497, %v440, 0
      %v547 = vsel %vm497, %v441, 0
      %v550 = vsel %vm497, %v442, 0
      %v553 = vsel %vm497, %v443, 0
      %v556 = vsel %vm497, %v444, 0
      %v559 = vsel %vm497, %v445, 0
      %v562 = vsel %vm497, %v446, 0
      %v565 = vsel %vm497, %v447, 0
      %v568 = vsel %vm497, %v448, 0
      %v571 = vsel %vm497, %v449, 0
      %v574 = vsel %vm497, %v450, 0
      %v577 = vsel %vm497, %v451, 0
      %v580 = vsel %vm497, %v452, 0
      %v583 = vsel %vm497, %v453, 0
      %v586 = vsel %vm497, %v454, 0
      %v589 = vsel %vm497, %v455, 0
      %v592 = vsel %vm497, %v456, 0
      %594 = vmatprep.subr.bf16.mxu0 0
      %595 = vmatpush1.bf16.msra.mxu0 0
      %596 = vmatprep.subr.bf16.mxu0 0
      %597 = vmatpush1.bf16.msra.mxu0 0
      %598 = vmatprep.subr.bf16.mxu0 0
      %599 = vmatpush1.bf16.msra.mxu0 0
      %600 = vmatprep.subr.bf16.mxu0 0
      %601 = vmatpush1.bf16.msra.mxu0 0
      %602 = vmatprep.subr.bf16.mxu0 %v488
      %603 = vmatpush1.bf16.msra.mxu0 %v487
      %604 = vmatprep.subr.bf16.mxu0 %v486
      %605 = vmatpush1.bf16.msra.mxu0 %v485
      %606 = vmatprep.subr.bf16.mxu0 %v484
      %607 = vmatpush1.bf16.msra.mxu0 %v483
      %608 = vmatprep.subr.bf16.mxu0 %v482
      %609 = vmatpush1.bf16.msra.mxu0 %v481
      %610 = vmatprep.subr.bf16.mxu0 0
      %611 = vmatpush2.bf16.msra.mxu0 0
      %612 = vmatprep.subr.bf16.mxu0 0
      %613 = vmatpush2.bf16.msra.mxu0 0
      %614 = vmatprep.subr.bf16.mxu0 0
      %615 = vmatpush2.bf16.msra.mxu0 0
      %616 = vmatprep.subr.bf16.mxu0 0
      %617 = vmatpush2.bf16.msra.mxu0 0
      %618 = vmatprep.subr.bf16.mxu0 0
      %619 = vmatpush2.bf16.msra.mxu0 0
      %620 = vmatprep.subr.bf16.mxu0 0
      %621 = vmatpush2.bf16.msra.mxu0 0
      %622 = vmatprep.subr.bf16.mxu0 0
      %623 = vmatpush2.bf16.msra.mxu0 0
      %624 = vmatprep.subr.bf16.mxu0 0
      %625 = vmatpush2.bf16.msra.mxu0 0
      %626 = vmatprep.mubr.bf16.mxu0 0
      %627 = vmatmul.mubr.bf16.gmra.mxu0 %v499
      %v628 = vpop.f32.mrf.mxu0
      %v629 = vadd.f32 %v290, %v628
      %v630 = vpop.f32.mrf.mxu0
      %v631 = vadd.f32 %v294, %v630
      %v632 = vpop.f32.mrf.mxu0
      %v633 = vadd.f32 %v290, %v632
      %v634 = vpop.f32.mrf.mxu0
      %v635 = vadd.f32 %v294, %v634
      %636 = vmatprep.mubr.bf16.mxu0 0
      %637 = vmatmul.mubr.bf16.gmra.mxu0 %v502
      %v638 = vpop.f32.mrf.mxu0
      %v639 = vadd.f32 %v290, %v638
      %v640 = vpop.f32.mrf.mxu0
      %v641 = vadd.f32 %v294, %v640
      %v642 = vpop.f32.mrf.mxu0
      %v643 = vadd.f32 %v290, %v642
      %v644 = vpop.f32.mrf.mxu0
      %v645 = vadd.f32 %v294, %v644
      %646 = vmatprep.mubr.bf16.mxu0 0
      %647 = vmatmul.mubr.bf16.gmra.mxu0 %v505
      %v648 = vpop.f32.mrf.mxu0
      %v649 = vadd.f32 %v290, %v648
      %v650 = vpop.f32.mrf.mxu0
      %v651 = vadd.f32 %v294, %v650
      %v652 = vpop.f32.mrf.mxu0
      %v653 = vadd.f32 %v290, %v652
      %v654 = vpop.f32.mrf.mxu0
      %v655 = vadd.f32 %v294, %v654
      %656 = vmatprep.mubr.bf16.mxu0 0
      %657 = vmatmul.mubr.bf16.gmra.mxu0 %v508
      %v658 = vpop.f32.mrf.mxu0
      %v659 = vadd.f32 %v290, %v658
      %v660 = vpop.f32.mrf.mxu0
      %v661 = vadd.f32 %v294, %v660
      %v662 = vpop.f32.mrf.mxu0
      %v663 = vadd.f32 %v290, %v662
      %v664 = vpop.f32.mrf.mxu0
      %v665 = vadd.f32 %v294, %v664
      %666 = vmatprep.mubr.bf16.mxu0 0
      %667 = vmatmul.mubr.bf16.gmra.mxu0 %v511
      %v668 = vpop.f32.mrf.mxu0
      %v669 = vadd.f32 %v290, %v668
      %v670 = vpop.f32.mrf.mxu0
      %v671 = vadd.f32 %v294, %v670
      %v672 = vpop.f32.mrf.mxu0
      %v673 = vadd.f32 %v290, %v672
      %v674 = vpop.f32.mrf.mxu0
      %v675 = vadd.f32 %v294, %v674
      %676 = vmatprep.mubr.bf16.mxu0 0
      %677 = vmatmul.mubr.bf16.gmra.mxu0 %v514
      %v678 = vpop.f32.mrf.mxu0
      %v679 = vadd.f32 %v290, %v678
      %v680 = vpop.f32.mrf.mxu0
      %v681 = vadd.f32 %v294, %v680
      %v682 = vpop.f32.mrf.mxu0
      %v683 = vadd.f32 %v290, %v682
      %v684 = vpop.f32.mrf.mxu0
      %v685 = vadd.f32 %v294, %v684
      %686 = vmatprep.mubr.bf16.mxu0 0
      %687 = vmatmul.mubr.bf16.gmra.mxu0 %v517
      %v688 = vpop.f32.mrf.mxu0
      %v689 = vadd.f32 %v290, %v688
      %v690 = vpop.f32.mrf.mxu0
      %v691 = vadd.f32 %v294, %v690
      %v692 = vpop.f32.mrf.mxu0
      %v693 = vadd.f32 %v290, %v692
      %v694 = vpop.f32.mrf.mxu0
      %v695 = vadd.f32 %v294, %v694
      %696 = vmatprep.mubr.bf16.mxu0 0
      %697 = vmatmul.mubr.bf16.gmra.mxu0 %v520
      %v698 = vpop.f32.mrf.mxu0
      %v699 = vadd.f32 %v290, %v698
      %v700 = vpop.f32.mrf.mxu0
      %v701 = vadd.f32 %v294, %v700
      %v702 = vpop.f32.mrf.mxu0
      %v703 = vadd.f32 %v290, %v702
      %v704 = vpop.f32.mrf.mxu0
      %v705 = vadd.f32 %v294, %v704
      %706 = vmatprep.mubr.bf16.mxu0 0
      %707 = vmatmul.mubr.bf16.gmra.mxu0 %v523
      %v708 = vpop.f32.mrf.mxu0
      %v709 = vadd.f32 %v290, %v708
      %v710 = vpop.f32.mrf.mxu0
      %v711 = vadd.f32 %v294, %v710
      %v712 = vpop.f32.mrf.mxu0
      %v713 = vadd.f32 %v290, %v712
      %v714 = vpop.f32.mrf.mxu0
      %v715 = vadd.f32 %v294, %v714
      %716 = vmatprep.mubr.bf16.mxu0 0
      %717 = vmatmul.mubr.bf16.gmra.mxu0 %v526
      %v718 = vpop.f32.mrf.mxu0
      %v719 = vadd.f32 %v290, %v718
      %v720 = vpop.f32.mrf.mxu0
      %v721 = vadd.f32 %v294, %v720
      %v722 = vpop.f32.mrf.mxu0
      %v723 = vadd.f32 %v290, %v722
      %v724 = vpop.f32.mrf.mxu0
      %v725 = vadd.f32 %v294, %v724
      %726 = vmatprep.mubr.bf16.mxu0 0
      %727 = vmatmul.mubr.bf16.gmra.mxu0 %v529
      %v728 = vpop.f32.mrf.mxu0
      %v729 = vadd.f32 %v290, %v728
      %v730 = vpop.f32.mrf.mxu0
      %v731 = vadd.f32 %v294, %v730
      %v732 = vpop.f32.mrf.mxu0
      %v733 = vadd.f32 %v290, %v732
      %v734 = vpop.f32.mrf.mxu0
      %v735 = vadd.f32 %v294, %v734
      %736 = vmatprep.mubr.bf16.mxu0 0
      %737 = vmatmul.mubr.bf16.gmra.mxu0 %v532
      %v738 = vpop.f32.mrf.mxu0
      %v739 = vadd.f32 %v290, %v738
      %v740 = vpop.f32.mrf.mxu0
      %v741 = vadd.f32 %v294, %v740
      %v742 = vpop.f32.mrf.mxu0
      %v743 = vadd.f32 %v290, %v742
      %v744 = vpop.f32.mrf.mxu0
      %v745 = vadd.f32 %v294, %v744
      %746 = vmatprep.mubr.bf16.mxu0 0
      %747 = vmatmul.mubr.bf16.gmra.mxu0 %v535
      %v748 = vpop.f32.mrf.mxu0
      %v749 = vadd.f32 %v290, %v748
      %v750 = vpop.f32.mrf.mxu0
      %v751 = vadd.f32 %v294, %v750
      %v752 = vpop.f32.mrf.mxu0
      %v753 = vadd.f32 %v290, %v752
      %v754 = vpop.f32.mrf.mxu0
      %v755 = vadd.f32 %v294, %v754
      %756 = vmatprep.mubr.bf16.mxu0 0
      %757 = vmatmul.mubr.bf16.gmra.mxu0 %v538
      %v758 = vpop.f32.mrf.mxu0
      %v759 = vadd.f32 %v290, %v758
      %v760 = vpop.f32.mrf.mxu0
      %v761 = vadd.f32 %v294, %v760
      %v762 = vpop.f32.mrf.mxu0
      %v763 = vadd.f32 %v290, %v762
      %v764 = vpop.f32.mrf.mxu0
      %v765 = vadd.f32 %v294, %v764
      %766 = vmatprep.mubr.bf16.mxu0 0
      %767 = vmatmul.mubr.bf16.gmra.mxu0 %v541
      %v768 = vpop.f32.mrf.mxu0
      %v769 = vadd.f32 %v290, %v768
      %v770 = vpop.f32.mrf.mxu0
      %v771 = vadd.f32 %v294, %v770
      %v772 = vpop.f32.mrf.mxu0
      %v773 = vadd.f32 %v290, %v772
      %v774 = vpop.f32.mrf.mxu0
      %v775 = vadd.f32 %v294, %v774
      %776 = vmatprep.mubr.bf16.mxu0 0
      %777 = vmatmul.mubr.bf16.gmra.mxu0 %v544
      %v778 = vpop.f32.mrf.mxu0
      %v779 = vadd.f32 %v290, %v778
      %v780 = vpop.f32.mrf.mxu0
      %v781 = vadd.f32 %v294, %v780
      %v782 = vpop.f32.mrf.mxu0
      %v783 = vadd.f32 %v290, %v782
      %v784 = vpop.f32.mrf.mxu0
      %v785 = vadd.f32 %v294, %v784
      %786 = vmatprep.mubr.bf16.mxu0 0
      %787 = vmatmul.mubr.bf16.gmra.mxu0 %v547
      %v788 = vpop.f32.mrf.mxu0
      %v789 = vadd.f32 %v290, %v788
      %v790 = vpop.f32.mrf.mxu0
      %v791 = vadd.f32 %v294, %v790
      %v792 = vpop.f32.mrf.mxu0
      %v793 = vadd.f32 %v290, %v792
      %v794 = vpop.f32.mrf.mxu0
      %v795 = vadd.f32 %v294, %v794
      %796 = vmatprep.mubr.bf16.mxu0 0
      %797 = vmatmul.mubr.bf16.gmra.mxu0 %v550
      %v798 = vpop.f32.mrf.mxu0
      %v799 = vadd.f32 %v290, %v798
      %v800 = vpop.f32.mrf.mxu0
      %v801 = vadd.f32 %v294, %v800
      %v802 = vpop.f32.mrf.mxu0
      %v803 = vadd.f32 %v290, %v802
      %v804 = vpop.f32.mrf.mxu0
      %v805 = vadd.f32 %v294, %v804
      %806 = vmatprep.mubr.bf16.mxu0 0
      %807 = vmatmul.mubr.bf16.gmra.mxu0 %v553
      %v808 = vpop.f32.mrf.mxu0
      %v809 = vadd.f32 %v290, %v808
      %v810 = vpop.f32.mrf.mxu0
      %v811 = vadd.f32 %v294, %v810
      %v812 = vpop.f32.mrf.mxu0
      %v813 = vadd.f32 %v290, %v812
      %v814 = vpop.f32.mrf.mxu0
      %v815 = vadd.f32 %v294, %v814
      %816 = vmatprep.mubr.bf16.mxu0 0
      %817 = vmatmul.mubr.bf16.gmra.mxu0 %v556
      %v818 = vpop.f32.mrf.mxu0
      %v819 = vadd.f32 %v290, %v818
      %v820 = vpop.f32.mrf.mxu0
      %v821 = vadd.f32 %v294, %v820
      %v822 = vpop.f32.mrf.mxu0
      %v823 = vadd.f32 %v290, %v822
      %v824 = vpop.f32.mrf.mxu0
      %v825 = vadd.f32 %v294, %v824
      %826 = vmatprep.mubr.bf16.mxu0 0
      %827 = vmatmul.mubr.bf16.gmra.mxu0 %v559
      %v828 = vpop.f32.mrf.mxu0
      %v829 = vadd.f32 %v290, %v828
      %v830 = vpop.f32.mrf.mxu0
      %v831 = vadd.f32 %v294, %v830
      %v832 = vpop.f32.mrf.mxu0
      %v833 = vadd.f32 %v290, %v832
      %v834 = vpop.f32.mrf.mxu0
      %v835 = vadd.f32 %v294, %v834
      %836 = vmatprep.mubr.bf16.mxu0 0
      %837 = vmatmul.mubr.bf16.gmra.mxu0 %v562
      %v838 = vpop.f32.mrf.mxu0
      %v839 = vadd.f32 %v290, %v838
      %v840 = vpop.f32.mrf.mxu0
      %v841 = vadd.f32 %v294, %v840
      %v842 = vpop.f32.mrf.mxu0
      %v843 = vadd.f32 %v290, %v842
      %v844 = vpop.f32.mrf.mxu0
      %v845 = vadd.f32 %v294, %v844
      %846 = vmatprep.mubr.bf16.mxu0 0
      %847 = vmatmul.mubr.bf16.gmra.mxu0 %v565
      %v848 = vpop.f32.mrf.mxu0
      %v849 = vadd.f32 %v290, %v848
      %v850 = vpop.f32.mrf.mxu0
      %v851 = vadd.f32 %v294, %v850
      %v852 = vpop.f32.mrf.mxu0
      %v853 = vadd.f32 %v290, %v852
      %v854 = vpop.f32.mrf.mxu0
      %v855 = vadd.f32 %v294, %v854
      %856 = vmatprep.mubr.bf16.mxu0 0
      %857 = vmatmul.mubr.bf16.gmra.mxu0 %v568
      %v858 = vpop.f32.mrf.mxu0
      %v859 = vadd.f32 %v290, %v858
      %v860 = vpop.f32.mrf.mxu0
      %v861 = vadd.f32 %v294, %v860
      %v862 = vpop.f32.mrf.mxu0
      %v863 = vadd.f32 %v290, %v862
      %v864 = vpop.f32.mrf.mxu0
      %v865 = vadd.f32 %v294, %v864
      %866 = vmatprep.mubr.bf16.mxu0 0
      %867 = vmatmul.mubr.bf16.gmra.mxu0 %v571
      %v868 = vpop.f32.mrf.mxu0
      %v869 = vadd.f32 %v290, %v868
      %v870 = vpop.f32.mrf.mxu0
      %v871 = vadd.f32 %v294, %v870
      %v872 = vpop.f32.mrf.mxu0
      %v873 = vadd.f32 %v290, %v872
      %v874 = vpop.f32.mrf.mxu0
      %v875 = vadd.f32 %v294, %v874
      %876 = vmatprep.mubr.bf16.mxu0 0
      %877 = vmatmul.mubr.bf16.gmra.mxu0 %v574
      %v878 = vpop.f32.mrf.mxu0
      %v879 = vadd.f32 %v290, %v878
      %v880 = vpop.f32.mrf.mxu0
      %v881 = vadd.f32 %v294, %v880
      %v882 = vpop.f32.mrf.mxu0
      %v883 = vadd.f32 %v290, %v882
      %v884 = vpop.f32.mrf.mxu0
      %v885 = vadd.f32 %v294, %v884
      %886 = vmatprep.mubr.bf16.mxu0 0
      %887 = vmatmul.mubr.bf16.gmra.mxu0 %v577
      %v888 = vpop.f32.mrf.mxu0
      %v889 = vadd.f32 %v290, %v888
      %v890 = vpop.f32.mrf.mxu0
      %v891 = vadd.f32 %v294, %v890
      %v892 = vpop.f32.mrf.mxu0
      %v893 = vadd.f32 %v290, %v892
      %v894 = vpop.f32.mrf.mxu0
      %v895 = vadd.f32 %v294, %v894
      %896 = vmatprep.mubr.bf16.mxu0 0
      %897 = vmatmul.mubr.bf16.gmra.mxu0 %v580
      %v898 = vpop.f32.mrf.mxu0
      %v899 = vadd.f32 %v290, %v898
      %v900 = vpop.f32.mrf.mxu0
      %v901 = vadd.f32 %v294, %v900
      %v902 = vpop.f32.mrf.mxu0
      %v903 = vadd.f32 %v290, %v902
      %v904 = vpop.f32.mrf.mxu0
      %v905 = vadd.f32 %v294, %v904
      %906 = vmatprep.mubr.bf16.mxu0 0
      %907 = vmatmul.mubr.bf16.gmra.mxu0 %v583
      %v908 = vpop.f32.mrf.mxu0
      %v909 = vadd.f32 %v290, %v908
      %v910 = vpop.f32.mrf.mxu0
      %v911 = vadd.f32 %v294, %v910
      %v912 = vpop.f32.mrf.mxu0
      %v913 = vadd.f32 %v290, %v912
      %v914 = vpop.f32.mrf.mxu0
      %v915 = vadd.f32 %v294, %v914
      %916 = vmatprep.mubr.bf16.mxu0 0
      %917 = vmatmul.mubr.bf16.gmra.mxu0 %v586
      %v918 = vpop.f32.mrf.mxu0
      %v919 = vadd.f32 %v290, %v918
      %v920 = vpop.f32.mrf.mxu0
      %v921 = vadd.f32 %v294, %v920
      %v922 = vpop.f32.mrf.mxu0
      %v923 = vadd.f32 %v290, %v922
      %v924 = vpop.f32.mrf.mxu0
      %v925 = vadd.f32 %v294, %v924
      %926 = vmatprep.mubr.bf16.mxu0 0
      %927 = vmatmul.mubr.bf16.gmra.mxu0 %v589
      %v928 = vpop.f32.mrf.mxu0
      %v929 = vadd.f32 %v290, %v928
      %v930 = vpop.f32.mrf.mxu0
      %v931 = vadd.f32 %v294, %v930
      %v932 = vpop.f32.mrf.mxu0
      %v933 = vadd.f32 %v290, %v932
      %v934 = vpop.f32.mrf.mxu0
      %v935 = vadd.f32 %v294, %v934
      %936 = vmatprep.mubr.bf16.mxu0 0
      %937 = vmatmul.mubr.bf16.gmra.mxu0 %v592
      %v938 = vpop.f32.mrf.mxu0
      %v939 = vadd.f32 %v290, %v938
      %v940 = vpop.f32.mrf.mxu0
      %v941 = vadd.f32 %v294, %v940
      %v942 = vpop.f32.mrf.mxu0
      %v943 = vadd.f32 %v290, %v942
      %v944 = vpop.f32.mrf.mxu0
      %v945 = vadd.f32 %v294, %v944
      %946 = vdwg.mxu0
      %v947 = vpack.c.bf16 %v633, %v629
      %v948 = vpack.c.bf16 %v635, %v631
      %v949 = vpack.c.bf16 %v643, %v639
      %v950 = vpack.c.bf16 %v645, %v641
      %v951 = vpack.c.bf16 %v653, %v649
      %v952 = vpack.c.bf16 %v655, %v651
      %v953 = vpack.c.bf16 %v663, %v659
      %v954 = vpack.c.bf16 %v665, %v661
      %v955 = vpack.c.bf16 %v673, %v669
      %v956 = vpack.c.bf16 %v675, %v671
      %v957 = vpack.c.bf16 %v683, %v679
      %v958 = vpack.c.bf16 %v685, %v681
      %v959 = vpack.c.bf16 %v693, %v689
      %v960 = vpack.c.bf16 %v695, %v691
      %v961 = vpack.c.bf16 %v703, %v699
      %v962 = vpack.c.bf16 %v705, %v701
      %v963 = vpack.c.bf16 %v713, %v709
      %v964 = vpack.c.bf16 %v715, %v711
      %v965 = vpack.c.bf16 %v723, %v719
      %v966 = vpack.c.bf16 %v725, %v721
      %v967 = vpack.c.bf16 %v733, %v729
      %v968 = vpack.c.bf16 %v735, %v731
      %v969 = vpack.c.bf16 %v743, %v739
      %v970 = vpack.c.bf16 %v745, %v741
      %v971 = vpack.c.bf16 %v753, %v749
      %v972 = vpack.c.bf16 %v755, %v751
      %v973 = vpack.c.bf16 %v763, %v759
      %v974 = vpack.c.bf16 %v765, %v761
      %v975 = vpack.c.bf16 %v773, %v769
      %v976 = vpack.c.bf16 %v775, %v771
      %v977 = vpack.c.bf16 %v783, %v779
      %v978 = vpack.c.bf16 %v785, %v781
      %v979 = vpack.c.bf16 %v793, %v789
      %v980 = vpack.c.bf16 %v795, %v791
      %v981 = vpack.c.bf16 %v803, %v799
      %v982 = vpack.c.bf16 %v805, %v801
      %v983 = vpack.c.bf16 %v813, %v809
      %v984 = vpack.c.bf16 %v815, %v811
      %v985 = vpack.c.bf16 %v823, %v819
      %v986 = vpack.c.bf16 %v825, %v821
      %v987 = vpack.c.bf16 %v833, %v829
      %v988 = vpack.c.bf16 %v835, %v831
      %v989 = vpack.c.bf16 %v843, %v839
      %v990 = vpack.c.bf16 %v845, %v841
      %v991 = vpack.c.bf16 %v853, %v849
      %v992 = vpack.c.bf16 %v855, %v851
      %v993 = vpack.c.bf16 %v863, %v859
      %v994 = vpack.c.bf16 %v865, %v861
      %v995 = vpack.c.bf16 %v873, %v869
      %v996 = vpack.c.bf16 %v875, %v871
      %v997 = vpack.c.bf16 %v883, %v879
      %v998 = vpack.c.bf16 %v885, %v881
      %v999 = vpack.c.bf16 %v893, %v889
      %v1000 = vpack.c.bf16 %v895, %v891
      %v1001 = vpack.c.bf16 %v903, %v899
      %v1002 = vpack.c.bf16 %v905, %v901
      %v1003 = vpack.c.bf16 %v913, %v909
      %v1004 = vpack.c.bf16 %v915, %v911
      %v1005 = vpack.c.bf16 %v923, %v919
      %v1006 = vpack.c.bf16 %v925, %v921
      %v1007 = vpack.c.bf16 %v933, %v929
      %v1008 = vpack.c.bf16 %v935, %v931
      %v1009 = vpack.c.bf16 %v943, %v939
      %v1010 = vpack.c.bf16 %v945, %v941
      %v1075 = vunpack.c.l.b16 %v947
      %v1076 = vunpack.c.l.b16 %v948
      %v1077 = vunpack.c.h.b16 %v947
      %v1078 = vunpack.c.h.b16 %v948
      %v1079 = vunpack.c.l.b16 %v949
      %v1080 = vunpack.c.l.b16 %v950
      %v1081 = vunpack.c.h.b16 %v949
      %v1082 = vunpack.c.h.b16 %v950
      %v1083 = vunpack.c.l.b16 %v951
      %v1084 = vunpack.c.l.b16 %v952
      %v1085 = vunpack.c.h.b16 %v951
      %v1086 = vunpack.c.h.b16 %v952
      %v1087 = vunpack.c.l.b16 %v953
      %v1088 = vunpack.c.l.b16 %v954
      %v1089 = vunpack.c.h.b16 %v953
      %v1090 = vunpack.c.h.b16 %v954
      %v1091 = vunpack.c.l.b16 %v955
      %v1092 = vunpack.c.l.b16 %v956
      %v1093 = vunpack.c.h.b16 %v955
      %v1094 = vunpack.c.h.b16 %v956
      %v1095 = vunpack.c.l.b16 %v957
      %v1096 = vunpack.c.l.b16 %v958
      %v1097 = vunpack.c.h.b16 %v957
      %v1098 = vunpack.c.h.b16 %v958
      %v1099 = vunpack.c.l.b16 %v959
      %v1100 = vunpack.c.l.b16 %v960
      %v1101 = vunpack.c.h.b16 %v959
      %v1102 = vunpack.c.h.b16 %v960
      %v1103 = vunpack.c.l.b16 %v961
      %v1104 = vunpack.c.l.b16 %v962
      %v1105 = vunpack.c.h.b16 %v961
      %v1106 = vunpack.c.h.b16 %v962
      %v1107 = vunpack.c.l.b16 %v963
      %v1108 = vunpack.c.l.b16 %v964
      %v1109 = vunpack.c.h.b16 %v963
      %v1110 = vunpack.c.h.b16 %v964
      %v1111 = vunpack.c.l.b16 %v965
      %v1112 = vunpack.c.l.b16 %v966
      %v1113 = vunpack.c.h.b16 %v965
      %v1114 = vunpack.c.h.b16 %v966
      %v1115 = vunpack.c.l.b16 %v967
      %v1116 = vunpack.c.l.b16 %v968
      %v1117 = vunpack.c.h.b16 %v967
      %v1118 = vunpack.c.h.b16 %v968
      %v1119 = vunpack.c.l.b16 %v969
      %v1120 = vunpack.c.l.b16 %v970
      %v1121 = vunpack.c.h.b16 %v969
      %v1122 = vunpack.c.h.b16 %v970
      %v1123 = vunpack.c.l.b16 %v971
      %v1124 = vunpack.c.l.b16 %v972
      %v1125 = vunpack.c.h.b16 %v971
      %v1126 = vunpack.c.h.b16 %v972
      %v1127 = vunpack.c.l.b16 %v973
      %v1128 = vunpack.c.l.b16 %v974
      %v1129 = vunpack.c.h.b16 %v973
      %v1130 = vunpack.c.h.b16 %v974
      %v1131 = vunpack.c.l.b16 %v975
      %v1132 = vunpack.c.l.b16 %v976
      %v1133 = vunpack.c.h.b16 %v975
      %v1134 = vunpack.c.h.b16 %v976
      %v1135 = vunpack.c.l.b16 %v977
      %v1136 = vunpack.c.l.b16 %v978
      %v1137 = vunpack.c.h.b16 %v977
      %v1138 = vunpack.c.h.b16 %v978
      %v1139 = vunpack.c.l.b16 %v979
      %v1140 = vunpack.c.l.b16 %v980
      %v1141 = vunpack.c.h.b16 %v979
      %v1142 = vunpack.c.h.b16 %v980
      %v1143 = vunpack.c.l.b16 %v981
      %v1144 = vunpack.c.l.b16 %v982
      %v1145 = vunpack.c.h.b16 %v981
      %v1146 = vunpack.c.h.b16 %v982
      %v1147 = vunpack.c.l.b16 %v983
      %v1148 = vunpack.c.l.b16 %v984
      %v1149 = vunpack.c.h.b16 %v983
      %v1150 = vunpack.c.h.b16 %v984
      %v1151 = vunpack.c.l.b16 %v985
      %v1152 = vunpack.c.l.b16 %v986
      %v1153 = vunpack.c.h.b16 %v985
      %v1154 = vunpack.c.h.b16 %v986
      %v1155 = vunpack.c.l.b16 %v987
      %v1156 = vunpack.c.l.b16 %v988
      %v1157 = vunpack.c.h.b16 %v987
      %v1158 = vunpack.c.h.b16 %v988
      %v1159 = vunpack.c.l.b16 %v989
      %v1160 = vunpack.c.l.b16 %v990
      %v1161 = vunpack.c.h.b16 %v989
      %v1162 = vunpack.c.h.b16 %v990
      %v1163 = vunpack.c.l.b16 %v991
      %v1164 = vunpack.c.l.b16 %v992
      %v1165 = vunpack.c.h.b16 %v991
      %v1166 = vunpack.c.h.b16 %v992
      %v1167 = vunpack.c.l.b16 %v993
      %v1168 = vunpack.c.l.b16 %v994
      %v1169 = vunpack.c.h.b16 %v993
      %v1170 = vunpack.c.h.b16 %v994
      %v1171 = vunpack.c.l.b16 %v995
      %v1172 = vunpack.c.l.b16 %v996
      %v1173 = vunpack.c.h.b16 %v995
      %v1174 = vunpack.c.h.b16 %v996
      %v1175 = vunpack.c.l.b16 %v997
      %v1176 = vunpack.c.l.b16 %v998
      %v1177 = vunpack.c.h.b16 %v997
      %v1178 = vunpack.c.h.b16 %v998
      %v1179 = vunpack.c.l.b16 %v999
      %v1180 = vunpack.c.l.b16 %v1000
      %v1181 = vunpack.c.h.b16 %v999
      %v1182 = vunpack.c.h.b16 %v1000
      %v1183 = vunpack.c.l.b16 %v1001
      %v1184 = vunpack.c.l.b16 %v1002
      %v1185 = vunpack.c.h.b16 %v1001
      %v1186 = vunpack.c.h.b16 %v1002
      %v1187 = vunpack.c.l.b16 %v1003
      %v1188 = vunpack.c.l.b16 %v1004
      %v1189 = vunpack.c.h.b16 %v1003
      %v1190 = vunpack.c.h.b16 %v1004
      %v1191 = vunpack.c.l.b16 %v1005
      %v1192 = vunpack.c.l.b16 %v1006
      %v1193 = vunpack.c.h.b16 %v1005
      %v1194 = vunpack.c.h.b16 %v1006
      %v1195 = vunpack.c.l.b16 %v1007
      %v1196 = vunpack.c.l.b16 %v1008
      %v1197 = vunpack.c.h.b16 %v1007
      %v1198 = vunpack.c.h.b16 %v1008
      %v1199 = vunpack.c.l.b16 %v1009
      %v1200 = vunpack.c.l.b16 %v1010
      %v1201 = vunpack.c.h.b16 %v1009
      %v1202 = vunpack.c.h.b16 %v1010
      %v1203 = vpack.c.b16 %v1076, %v1075
      %v1204 = vpack.c.b16 %v1078, %v1077
      %v1205 = vpack.c.b16 %v1080, %v1079
      %v1206 = vpack.c.b16 %v1082, %v1081
      %v1207 = vpack.c.b16 %v1084, %v1083
      %v1208 = vpack.c.b16 %v1086, %v1085
      %v1209 = vpack.c.b16 %v1088, %v1087
      %v1210 = vpack.c.b16 %v1090, %v1089
      %v1211 = vpack.c.b16 %v1092, %v1091
      %v1212 = vpack.c.b16 %v1094, %v1093
      %v1213 = vpack.c.b16 %v1096, %v1095
      %v1214 = vpack.c.b16 %v1098, %v1097
      %v1215 = vpack.c.b16 %v1100, %v1099
      %v1216 = vpack.c.b16 %v1102, %v1101
      %v1217 = vpack.c.b16 %v1104, %v1103
      %v1218 = vpack.c.b16 %v1106, %v1105
      %v1219 = vpack.c.b16 %v1108, %v1107
      %v1220 = vpack.c.b16 %v1110, %v1109
      %v1221 = vpack.c.b16 %v1112, %v1111
      %v1222 = vpack.c.b16 %v1114, %v1113
      %v1223 = vpack.c.b16 %v1116, %v1115
      %v1224 = vpack.c.b16 %v1118, %v1117
      %v1225 = vpack.c.b16 %v1120, %v1119
      %v1226 = vpack.c.b16 %v1122, %v1121
      %v1227 = vpack.c.b16 %v1124, %v1123
      %v1228 = vpack.c.b16 %v1126, %v1125
      %v1229 = vpack.c.b16 %v1128, %v1127
      %v1230 = vpack.c.b16 %v1130, %v1129
      %v1231 = vpack.c.b16 %v1132, %v1131
      %v1232 = vpack.c.b16 %v1134, %v1133
      %v1233 = vpack.c.b16 %v1136, %v1135
      %v1234 = vpack.c.b16 %v1138, %v1137
      %v1235 = vpack.c.b16 %v1140, %v1139
      %v1236 = vpack.c.b16 %v1142, %v1141
      %v1237 = vpack.c.b16 %v1144, %v1143
      %v1238 = vpack.c.b16 %v1146, %v1145
      %v1239 = vpack.c.b16 %v1148, %v1147
      %v1240 = vpack.c.b16 %v1150, %v1149
      %v1241 = vpack.c.b16 %v1152, %v1151
      %v1242 = vpack.c.b16 %v1154, %v1153
      %v1243 = vpack.c.b16 %v1156, %v1155
      %v1244 = vpack.c.b16 %v1158, %v1157
      %v1245 = vpack.c.b16 %v1160, %v1159
      %v1246 = vpack.c.b16 %v1162, %v1161
      %v1247 = vpack.c.b16 %v1164, %v1163
      %v1248 = vpack.c.b16 %v1166, %v1165
      %v1249 = vpack.c.b16 %v1168, %v1167
      %v1250 = vpack.c.b16 %v1170, %v1169
      %v1251 = vpack.c.b16 %v1172, %v1171
      %v1252 = vpack.c.b16 %v1174, %v1173
      %v1253 = vpack.c.b16 %v1176, %v1175
      %v1254 = vpack.c.b16 %v1178, %v1177
      %v1255 = vpack.c.b16 %v1180, %v1179
      %v1256 = vpack.c.b16 %v1182, %v1181
      %v1257 = vpack.c.b16 %v1184, %v1183
      %v1258 = vpack.c.b16 %v1186, %v1185
      %v1259 = vpack.c.b16 %v1188, %v1187
      %v1260 = vpack.c.b16 %v1190, %v1189
      %v1261 = vpack.c.b16 %v1192, %v1191
      %v1262 = vpack.c.b16 %v1194, %v1193
      %v1263 = vpack.c.b16 %v1196, %v1195
      %v1264 = vpack.c.b16 %v1198, %v1197
      %v1265 = vpack.c.b16 %v1200, %v1199
      %v1266 = vpack.c.b16 %v1202, %v1201
      %1331 = vst [vmem:[%s210] sm:$0xff] %v1203
      %1332 = vst [vmem:[%s210 + $0x8] sm:$0xff] %v1204
      %1333 = vst [vmem:[%s210 + $0x10] sm:$0xff] %v1205
      %1334 = vst [vmem:[%s210 + $0x18] sm:$0xff] %v1206
      %1335 = vst [vmem:[%s210 + $0x20] sm:$0xff] %v1207
      %1336 = vst [vmem:[%s210 + $0x28] sm:$0xff] %v1208
      %1337 = vst [vmem:[%s210 + $0x30] sm:$0xff] %v1209
      %1338 = vst [vmem:[%s210 + $0x38] sm:$0xff] %v1210
      %1339 = vst [vmem:[%s210 + $0x40] sm:$0xff] %v1211
      %1340 = vst [vmem:[%s210 + $0x48] sm:$0xff] %v1212
      %1341 = vst [vmem:[%s210 + $0x50] sm:$0xff] %v1213
      %1342 = vst [vmem:[%s210 + $0x58] sm:$0xff] %v1214
      %1343 = vst [vmem:[%s210 + $0x60] sm:$0xff] %v1215
      %1344 = vst [vmem:[%s210 + $0x68] sm:$0xff] %v1216
      %1345 = vst [vmem:[%s210 + $0x70] sm:$0xff] %v1217
      %1346 = vst [vmem:[%s210 + $0x78] sm:$0xff] %v1218
      %1347 = vst [vmem:[%s210 + $0x80] sm:$0xff] %v1219
      %1348 = vst [vmem:[%s210 + $0x88] sm:$0xff] %v1220
      %1349 = vst [vmem:[%s210 + $0x90] sm:$0xff] %v1221
      %1350 = vst [vmem:[%s210 + $0x98] sm:$0xff] %v1222
      %1351 = vst [vmem:[%s210 + $0xa0] sm:$0xff] %v1223
      %1352 = vst [vmem:[%s210 + $0xa8] sm:$0xff] %v1224
      %1353 = vst [vmem:[%s210 + $0xb0] sm:$0xff] %v1225
      %1354 = vst [vmem:[%s210 + $0xb8] sm:$0xff] %v1226
      %1355 = vst [vmem:[%s210 + $0xc0] sm:$0xff] %v1227
      %1356 = vst [vmem:[%s210 + $0xc8] sm:$0xff] %v1228
      %1357 = vst [vmem:[%s210 + $0xd0] sm:$0xff] %v1229
      %1358 = vst [vmem:[%s210 + $0xd8] sm:$0xff] %v1230
      %1359 = vst [vmem:[%s210 + $0xe0] sm:$0xff] %v1231
      %1360 = vst [vmem:[%s210 + $0xe8] sm:$0xff] %v1232
      %1361 = vst [vmem:[%s210 + $0xf0] sm:$0xff] %v1233
      %1362 = vst [vmem:[%s210 + $0xf8] sm:$0xff] %v1234
      %1363 = vst [vmem:[%s210 + $0x100] sm:$0xff] %v1235
      %1364 = vst [vmem:[%s210 + $0x108] sm:$0xff] %v1236
      %1365 = vst [vmem:[%s210 + $0x110] sm:$0xff] %v1237
      %1366 = vst [vmem:[%s210 + $0x118] sm:$0xff] %v1238
      %1367 = vst [vmem:[%s210 + $0x120] sm:$0xff] %v1239
      %1368 = vst [vmem:[%s210 + $0x128] sm:$0xff] %v1240
      %1369 = vst [vmem:[%s210 + $0x130] sm:$0xff] %v1241
      %1370 = vst [vmem:[%s210 + $0x138] sm:$0xff] %v1242
      %1371 = vst [vmem:[%s210 + $0x140] sm:$0xff] %v1243
      %1372 = vst [vmem:[%s210 + $0x148] sm:$0xff] %v1244
      %1373 = vst [vmem:[%s210 + $0x150] sm:$0xff] %v1245
      %1374 = vst [vmem:[%s210 + $0x158] sm:$0xff] %v1246
      %1375 = vst [vmem:[%s210 + $0x160] sm:$0xff] %v1247
      %1376 = vst [vmem:[%s210 + $0x168] sm:$0xff] %v1248
      %1377 = vst [vmem:[%s210 + $0x170] sm:$0xff] %v1249
      %1378 = vst [vmem:[%s210 + $0x178] sm:$0xff] %v1250
      %1379 = vst [vmem:[%s210 + $0x180] sm:$0xff] %v1251
      %1380 = vst [vmem:[%s210 + $0x188] sm:$0xff] %v1252
      %1381 = vst [vmem:[%s210 + $0x190] sm:$0xff] %v1253
      %1382 = vst [vmem:[%s210 + $0x198] sm:$0xff] %v1254
      %1383 = vst [vmem:[%s210 + $0x1a0] sm:$0xff] %v1255
      %1384 = vst [vmem:[%s210 + $0x1a8] sm:$0xff] %v1256
      %1385 = vst [vmem:[%s210 + $0x1b0] sm:$0xff] %v1257
      %1386 = vst [vmem:[%s210 + $0x1b8] sm:$0xff] %v1258
      %1387 = vst [vmem:[%s210 + $0x1c0] sm:$0xff] %v1259
      %1388 = vst [vmem:[%s210 + $0x1c8] sm:$0xff] %v1260
      %1389 = vst [vmem:[%s210 + $0x1d0] sm:$0xff] %v1261
      %1390 = vst [vmem:[%s210 + $0x1d8] sm:$0xff] %v1262
      %1391 = vst [vmem:[%s210 + $0x1e0] sm:$0xff] %v1263
      %1392 = vst [vmem:[%s210 + $0x1e8] sm:$0xff] %v1264
      %1393 = vst [vmem:[%s210 + $0x1f0] sm:$0xff] %v1265
      %1394 = vst [vmem:[%s210 + $0x1f8] sm:$0xff] %v1266
      %s1395 = smul.u32 64, %s19
      %p1396 = scmp.lt.s32.totalorder %s18, 1
      %s1397 = scalar_select %p1396, %s18, 1
      %p1398 = scmp.lt.s32.totalorder %s1395, 63
      %s1399 = scalar_select %p1398, %s1395, 63
      %s1400 = smul.addr %s1399, 2
      %s1401 = smul.addr %s1397, 128
      %s1402 = sadd.s32 %s1400, %s1401
      %s1403 = smul.addr %s1402, 4
      %s1404 = scalar_lea.vmem %s3, %s1403
      // Predicated region
      $region33: #{forward.2} parent=31 // pred_check
        %p1405 = pneg %p116
      $region34: #{forward.2} parent=31 // pred_check_branch
        %1407 = sbr.rel (%p1405) target = $region36
      $region35: #{forward.2} parent=31 // pred_region
        %s1408 = smul.u32 64, %s19
      $region36: #{forward.2} parent=31 // pred_fallthru
        _
    $region32: #{forward.2} parent=5 // pred_fallthru
      _
    %p1409 = scmp.le.s32.totalorder 2, %s9
    // Predicated region
    $region37: #{forward.2} parent=5 // pred_check
      %p1410 = pneg %p1409
    $region38: #{forward.2} parent=5 // pred_check_branch
      %1412 = sbr.rel (%p1410) target = $region40
    $region39: #{forward.2} parent=5 // pred_region
      %s1413 = ssub.s32 %s9, 2
      // Predicated region
      $region41: #{forward.2} parent=39 // pred_check
        %p1414 = pneg %p122
      $region42: #{forward.2} parent=39 // pred_check_branch
        %1416 = sbr.rel (%p1414) target = $region44
      $region43: #{forward.2} parent=39 // pred_region
        %s1417 = smul.u32 64, %s21
        %p1418 = scmp.lt.s32.totalorder %s20, 1
        %s1419 = scalar_select %p1418, %s20, 1
        %p1420 = scmp.lt.s32.totalorder %s1417, 63
        %s1421 = scalar_select %p1420, %s1417, 63
        %s1422 = smul.addr %s1421, 2
        %s1423 = smul.addr %s1419, 128
        %s1424 = sadd.s32 %s1422, %s1423
        %s1425 = smul.addr %s1424, 4
        %s1426 = scalar_lea.vmem %s3, %s1425
      $region44: #{forward.2} parent=39 // pred_fallthru
        _
    $region40: #{forward.2} parent=5 // pred_fallthru
      _
  $region6: #{forward.2} parent=0 // loop_footer
    %s13 = sadd.s32 1, %s9
  $region7: #{forward.2} parent=0 // loop_footer_branch
    %8 = sbr.rel target = $region3
  $region8: #{forward.2} parent=0 // loop_exit
    _

// kernel: forward.3
$region0: #{forward.3}
  #allocation0 [shape = 'u32[]', space=smem, size = 0x4, offset = 0x4, fixed_abs, tag = 'smem constant byte address 0x4 - core index']
  #allocation1 [shape = 'u32[144,128]{1,0:T(1,128)}', space=vmem, size = 0x12000, scoped, tag = 'internal scratch']
  %s0 = inlined_call_operand.vmem [shape: bf16[2,512,256], index: 0, kind: input, shape index: {}]
  %s1 = inlined_call_operand.vmem [shape: bf16[2,128,128], index: 1, kind: input, shape index: {}]
  %s2 = inlined_call_operand.vmem [shape: f32[3,16,128], index: 2, kind: input, shape index: {}]
  %s3 = inlined_call_operand.vmem [shape: f32[24,1], index: 3, kind: input, shape index: {}]
  %s4 = inlined_call_operand.vmem [shape: bf16[256,128], index: 4, kind: input, shape index: {}]
  %s5 = inlined_call_operand.vmem [shape: f32[24,128], index: 5, kind: input, shape index: {}]
  %s6 = inlined_call_operand.vmem [shape: bf16[64,512], index: 6, kind: input, shape index: {}]
  %s7 = inlined_call_operand.vmem [shape: bf16[512,128], index: 7, kind: input, shape index: {}]
  %s8 = inlined_call_operand.vmem [shape: bf16[2,512,128], index: 8, kind: output, shape index: {0}]
  %s9 = inlined_call_operand.vmem [shape: f32[2,64,384], index: 9, kind: output, shape index: {1}]
  %10 = xla_tuple %s8, %s9
  %s11 = sld [smem:[#allocation0]]
  $region73: #{forward.3} parent=0
    _
  %s13 = ssub.s32 1, %s11
  %s14 = scalar_select 0, %s13, %s11
  loop: start=0, step=1, limit=4
  $region2: #{forward.3} parent=0 // loop_pre_header
    _
  $region3: #{forward.3} parent=0 // loop_header
    %s16 = sphi 0, %s20
    %p17 = scmp.ge.s32.totalorder %s16, 4
    %s26 = sphi 0, %s28
    %s29 = sphi 0, %s26
    %s30 = sphi 0, %s29
    %s46 = sphi 0, %s30
    %s50 = sphi 0, %s50
    %s52 = sphi 0, %s50
    %s53 = sphi 0, %s52
    %s67 = sphi 0, %s53
    %s71 = sphi 0, %s71
    %s73 = sphi 0, %s71
    %s74 = sphi 0, %s73
    %s88 = sphi 0, %s74
    %s92 = sphi 0, %s92
    %s94 = sphi 0, %s92
    %s95 = sphi 0, %s94
    %s109 = sphi 0, %s95
    %s113 = sphi 0, %s113
    %s115 = sphi 0, %s113
    %s116 = sphi 0, %s115
    %s130 = sphi 0, %s116
    %s134 = sphi 0, %s134
    %s136 = sphi 0, %s134
    %s137 = sphi 0, %s136
    %s151 = sphi 0, %s137
    %s155 = sphi 0, %s155
    %s157 = sphi 0, %s155
    %s158 = sphi 0, %s157
    %s172 = sphi 0, %s158
    %s176 = sphi 0, %s176
    %s178 = sphi 0, %s176
    %s179 = sphi 0, %s178
    %s193 = sphi 0, %s179
    %s199 = sphi 0, %s201
    %s202 = sphi 0, %s199
    %s203 = sphi 0, %s202
    %s219 = sphi 0, %s203
    %s225 = sphi 0, %s227
    %s228 = sphi 0, %s225
    %s229 = sphi 0, %s228
    %s245 = sphi 0, %s229
  $region4: #{forward.3} parent=0 // loop_header_branch
    %19 = sbr.rel (%p17) target = $region8
  $region5: #{forward.3} parent=0 // loop_body
    %s21 = ssub.s32 %s16, 1
    %s22 = ssub.s32 %s16, 2
    %s23 = sadd.s32 %s16, 1
    %s24 = ssub.s32 %s16, %s23
    %p25 = scmp.eq.s32.totalorder %s24, 0
    %s27 = sadd.s32 %s26, 1
    %s28 = scalar_select %p25, %s26, %s27
    %p31 = pneg %p25
    %p32 = scmp.eq.s32.totalorder %s16, 1
    %p33 = por %p31, %p32
    %p34 = scmp.ne.s32.totalorder %s26, %s29
    %p35 = scmp.eq.s32.totalorder %s16, 0
    %p36 = por %p34, %p35
    %p37 = scmp.ne.s32.totalorder %s26, %s29
    %p38 = scmp.eq.s32.totalorder %s21, 1
    %p39 = por %p37, %p38
    %p40 = scmp.ne.s32.totalorder %s29, %s30
    %p41 = scmp.eq.s32.totalorder %s21, 0
    %p42 = por %p40, %p41
    %p43 = scmp.ne.s32.totalorder %s29, %s30
    %p44 = scmp.eq.s32.totalorder %s22, 1
    %p45 = por %p43, %p44
    %p47 = scmp.ne.s32.totalorder %s30, %s46
    %p48 = scmp.eq.s32.totalorder %s22, 0
    %p49 = por %p47, %p48
    %s51 = sadd.s32 %s50, 1
    %p54 = scmp.eq.s32.totalorder %s16, 1
    %p55 = scmp.ne.s32.totalorder %s50, %s52
    %p56 = scmp.eq.s32.totalorder %s16, 0
    %p57 = por %p55, %p56
    %p58 = scmp.ne.s32.totalorder %s50, %s52
    %p59 = scmp.eq.s32.totalorder %s21, 1
    %p60 = por %p58, %p59
    %p61 = scmp.ne.s32.totalorder %s52, %s53
    %p62 = scmp.eq.s32.totalorder %s21, 0
    %p63 = por %p61, %p62
    %p64 = scmp.ne.s32.totalorder %s52, %s53
    %p65 = scmp.eq.s32.totalorder %s22, 1
    %p66 = por %p64, %p65
    %p68 = scmp.ne.s32.totalorder %s53, %s67
    %p69 = scmp.eq.s32.totalorder %s22, 0
    %p70 = por %p68, %p69
    %s72 = sadd.s32 %s71, 1
    %p75 = scmp.eq.s32.totalorder %s16, 1
    %p76 = scmp.ne.s32.totalorder %s71, %s73
    %p77 = scmp.eq.s32.totalorder %s16, 0
    %p78 = por %p76, %p77
    %p79 = scmp.ne.s32.totalorder %s71, %s73
    %p80 = scmp.eq.s32.totalorder %s21, 1
    %p81 = por %p79, %p80
    %p82 = scmp.ne.s32.totalorder %s73, %s74
    %p83 = scmp.eq.s32.totalorder %s21, 0
    %p84 = por %p82, %p83
    %p85 = scmp.ne.s32.totalorder %s73, %s74
    %p86 = scmp.eq.s32.totalorder %s22, 1
    %p87 = por %p85, %p86
    %p89 = scmp.ne.s32.totalorder %s74, %s88
    %p90 = scmp.eq.s32.totalorder %s22, 0
    %p91 = por %p89, %p90
    %s93 = sadd.s32 %s92, 1
    %p96 = scmp.eq.s32.totalorder %s16, 1
    %p97 = scmp.ne.s32.totalorder %s92, %s94
    %p98 = scmp.eq.s32.totalorder %s16, 0
    %p99 = por %p97, %p98
    %p100 = scmp.ne.s32.totalorder %s92, %s94
    %p101 = scmp.eq.s32.totalorder %s21, 1
    %p102 = por %p100, %p101
    %p103 = scmp.ne.s32.totalorder %s94, %s95
    %p104 = scmp.eq.s32.totalorder %s21, 0
    %p105 = por %p103, %p104
    %p106 = scmp.ne.s32.totalorder %s94, %s95
    %p107 = scmp.eq.s32.totalorder %s22, 1
    %p108 = por %p106, %p107
    %p110 = scmp.ne.s32.totalorder %s95, %s109
    %p111 = scmp.eq.s32.totalorder %s22, 0
    %p112 = por %p110, %p111
    %s114 = sadd.s32 %s113, 1
    %p117 = scmp.eq.s32.totalorder %s16, 1
    %p118 = scmp.ne.s32.totalorder %s113, %s115
    %p119 = scmp.eq.s32.totalorder %s16, 0
    %p120 = por %p118, %p119
    %p121 = scmp.ne.s32.totalorder %s113, %s115
    %p122 = scmp.eq.s32.totalorder %s21, 1
    %p123 = por %p121, %p122
    %p124 = scmp.ne.s32.totalorder %s115, %s116
    %p125 = scmp.eq.s32.totalorder %s21, 0
    %p126 = por %p124, %p125
    %p127 = scmp.ne.s32.totalorder %s115, %s116
    %p128 = scmp.eq.s32.totalorder %s22, 1
    %p129 = por %p127, %p128
    %p131 = scmp.ne.s32.totalorder %s116, %s130
    %p132 = scmp.eq.s32.totalorder %s22, 0
    %p133 = por %p131, %p132
    %s135 = sadd.s32 %s134, 1
    %p138 = scmp.eq.s32.totalorder %s16, 1
    %p139 = scmp.ne.s32.totalorder %s134, %s136
    %p140 = scmp.eq.s32.totalorder %s16, 0
    %p141 = por %p139, %p140
    %p142 = scmp.ne.s32.totalorder %s134, %s136
    %p143 = scmp.eq.s32.totalorder %s21, 1
    %p144 = por %p142, %p143
    %p145 = scmp.ne.s32.totalorder %s136, %s137
    %p146 = scmp.eq.s32.totalorder %s21, 0
    %p147 = por %p145, %p146
    %p148 = scmp.ne.s32.totalorder %s136, %s137
    %p149 = scmp.eq.s32.totalorder %s22, 1
    %p150 = por %p148, %p149
    %p152 = scmp.ne.s32.totalorder %s137, %s151
    %p153 = scmp.eq.s32.totalorder %s22, 0
    %p154 = por %p152, %p153
    %s156 = sadd.s32 %s155, 1
    %p159 = scmp.eq.s32.totalorder %s16, 1
    %p160 = scmp.ne.s32.totalorder %s155, %s157
    %p161 = scmp.eq.s32.totalorder %s16, 0
    %p162 = por %p160, %p161
    %p163 = scmp.ne.s32.totalorder %s155, %s157
    %p164 = scmp.eq.s32.totalorder %s21, 1
    %p165 = por %p163, %p164
    %p166 = scmp.ne.s32.totalorder %s157, %s158
    %p167 = scmp.eq.s32.totalorder %s21, 0
    %p168 = por %p166, %p167
    %p169 = scmp.ne.s32.totalorder %s157, %s158
    %p170 = scmp.eq.s32.totalorder %s22, 1
    %p171 = por %p169, %p170
    %p173 = scmp.ne.s32.totalorder %s158, %s172
    %p174 = scmp.eq.s32.totalorder %s22, 0
    %p175 = por %p173, %p174
    %s177 = sadd.s32 %s176, 1
    %p180 = scmp.eq.s32.totalorder %s16, 1
    %p181 = scmp.ne.s32.totalorder %s176, %s178
    %p182 = scmp.eq.s32.totalorder %s16, 0
    %p183 = por %p181, %p182
    %p184 = scmp.ne.s32.totalorder %s176, %s178
    %p185 = scmp.eq.s32.totalorder %s21, 1
    %p186 = por %p184, %p185
    %p187 = scmp.ne.s32.totalorder %s178, %s179
    %p188 = scmp.eq.s32.totalorder %s21, 0
    %p189 = por %p187, %p188
    %p190 = scmp.ne.s32.totalorder %s178, %s179
    %p191 = scmp.eq.s32.totalorder %s22, 1
    %p192 = por %p190, %p191
    %p194 = scmp.ne.s32.totalorder %s179, %s193
    %p195 = scmp.eq.s32.totalorder %s22, 0
    %p196 = por %p194, %p195
    %s197 = ssub.s32 %s16, %s23
    %p198 = scmp.eq.s32.totalorder %s197, 0
    %s200 = sadd.s32 %s199, 1
    %s201 = scalar_select %p198, %s199, %s200
    %p204 = pneg %p198
    %p205 = scmp.eq.s32.totalorder %s16, 1
    %p206 = por %p204, %p205
    %p207 = scmp.ne.s32.totalorder %s199, %s202
    %p208 = scmp.eq.s32.totalorder %s16, 0
    %p209 = por %p207, %p208
    %p210 = scmp.ne.s32.totalorder %s199, %s202
    %p211 = scmp.eq.s32.totalorder %s21, 1
    %p212 = por %p210, %p211
    %p213 = scmp.ne.s32.totalorder %s202, %s203
    %p214 = scmp.eq.s32.totalorder %s21, 0
    %p215 = por %p213, %p214
    %p216 = scmp.ne.s32.totalorder %s202, %s203
    %p217 = scmp.eq.s32.totalorder %s22, 1
    %p218 = por %p216, %p217
    %p220 = scmp.ne.s32.totalorder %s203, %s219
    %p221 = scmp.eq.s32.totalorder %s22, 0
    %p222 = por %p220, %p221
    %s223 = ssub.s32 %s16, %s23
    %p224 = scmp.eq.s32.totalorder %s223, 0
    %s226 = sadd.s32 %s225, 1
    %s227 = scalar_select %p224, %s225, %s226
    %p230 = pneg %p224
    %p231 = scmp.eq.s32.totalorder %s16, 1
    %p232 = por %p230, %p231
    %p233 = scmp.ne.s32.totalorder %s225, %s228
    %p234 = scmp.eq.s32.totalorder %s16, 0
    %p235 = por %p233, %p234
    %p236 = scmp.ne.s32.totalorder %s225, %s228
    %p237 = scmp.eq.s32.totalorder %s21, 1
    %p238 = por %p236, %p237
    %p239 = scmp.ne.s32.totalorder %s228, %s229
    %p240 = scmp.eq.s32.totalorder %s21, 0
    %p241 = por %p239, %p240
    %p242 = scmp.ne.s32.totalorder %s228, %s229
    %p243 = scmp.eq.s32.totalorder %s22, 1
    %p244 = por %p242, %p243
    %p246 = scmp.ne.s32.totalorder %s229, %s245
    %p247 = scmp.eq.s32.totalorder %s22, 0
    %p248 = por %p246, %p247
    %p249 = scmp.le.s32.totalorder 1, %s16
    %p250 = scmp.lt.s32.totalorder %s16, 3
    %p251 = pnand %p249, %p250
    %p252 = pneg %p251
    // Predicated region
    $region9: #{forward.3} parent=5 // pred_check
      _
    $region10: #{forward.3} parent=5 // pred_check_branch
      %254 = sbr.rel (%p251) target = $region12
    $region11: #{forward.3} parent=5 // pred_region
      %s255 = ssub.s32 %s16, 1
      // Predicated region
      $region13: #{forward.3} parent=11 // pred_check
        %p256 = pneg %p63
      $region14: #{forward.3} parent=11 // pred_check_branch
        %258 = sbr.rel (%p256) target = $region16
      $region15: #{forward.3} parent=11 // pred_region
        _
      $region16: #{forward.3} parent=11 // pred_fallthru
        _
      // Predicated region
      $region17: #{forward.3} parent=11 // pred_check
        %p259 = pneg %p84
      $region18: #{forward.3} parent=11 // pred_check_branch
        %261 = sbr.rel (%p259) target = $region20
      $region19: #{forward.3} parent=11 // pred_region
        _
      $region20: #{forward.3} parent=11 // pred_fallthru
        _
      // Predicated region
      $region21: #{forward.3} parent=11 // pred_check
        %p262 = pneg %p105
      $region22: #{forward.3} parent=11 // pred_check_branch
        %264 = sbr.rel (%p262) target = $region24
      $region23: #{forward.3} parent=11 // pred_region
        _
      $region24: #{forward.3} parent=11 // pred_fallthru
        _
      // Predicated region
      $region25: #{forward.3} parent=11 // pred_check
        %p265 = pneg %p126
      $region26: #{forward.3} parent=11 // pred_check_branch
        %267 = sbr.rel (%p265) target = $region28
      $region27: #{forward.3} parent=11 // pred_region
        _
      $region28: #{forward.3} parent=11 // pred_fallthru
        _
      // Predicated region
      $region29: #{forward.3} parent=11 // pred_check
        %p268 = pneg %p147
      $region30: #{forward.3} parent=11 // pred_check_branch
        %270 = sbr.rel (%p268) target = $region32
      $region31: #{forward.3} parent=11 // pred_region
        _
      $region32: #{forward.3} parent=11 // pred_fallthru
        _
      // Predicated region
      $region33: #{forward.3} parent=11 // pred_check
        %p271 = pneg %p168
      $region34: #{forward.3} parent=11 // pred_check_branch
        %273 = sbr.rel (%p271) target = $region36
      $region35: #{forward.3} parent=11 // pred_region
        _
      $region36: #{forward.3} parent=11 // pred_fallthru
        _
      // Predicated region
      $region37: #{forward.3} parent=11 // pred_check
        %p274 = pneg %p189
      $region38: #{forward.3} parent=11 // pred_check_branch
        %276 = sbr.rel (%p274) target = $region40
      $region39: #{forward.3} parent=11 // pred_region
        _
      $region40: #{forward.3} parent=11 // pred_fallthru
        _
    $region12: #{forward.3} parent=5 // pred_fallthru
      _
    %p277 = scmp.lt.s32.totalorder %s16, 2
    // Predicated region
    $region41: #{forward.3} parent=5 // pred_check
      %p278 = pneg %p277
    $region42: #{forward.3} parent=5 // pred_check_branch
      %280 = sbr.rel (%p278) target = $region44
    $region43: #{forward.3} parent=5 // pred_region
      // Predicated region
      $region45: #{forward.3} parent=43 // pred_check
        %p281 = pneg %p36
      $region46: #{forward.3} parent=43 // pred_check_branch
        %283 = sbr.rel (%p281) target = $region48
      $region47: #{forward.3} parent=43 // pred_region
        %p284 = scmp.lt.s32.totalorder %s16, 1
        %s285 = scalar_select %p284, %s16, 1
        %s286 = smul.addr %s285, 128
        %s287 = smul.addr %s286, 4
        %s288 = scalar_lea.vmem %s0, %s287
      $region48: #{forward.3} parent=43 // pred_fallthru
        _
    $region44: #{forward.3} parent=5 // pred_fallthru
      _
    %p289 = scmp.le.s32.totalorder 1, %s16
    %p290 = scmp.lt.s32.totalorder %s16, 3
    %p291 = pnand %p289, %p290
    %p292 = pneg %p291
    // Predicated region
    $region49: #{forward.3} parent=5 // pred_check
      _
    $region50: #{forward.3} parent=5 // pred_check_branch
      %294 = sbr.rel (%p291) target = $region52
    $region51: #{forward.3} parent=5 // pred_region
      %s295 = ssub.s32 %s16, 1
      %p296 = scmp.lt.s32.totalorder %s21, 1
      %s297 = scalar_select %p296, %s21, 1
      %s298 = smul.addr %s297, 128
      %s299 = smul.addr %s298, 4
      %s300 = scalar_lea.vmem %s0, %s299
      %p301 = pneg %p42
      %p302 = pneg %p39
      %p303 = pneg %p63
      %p304 = pneg %p60
      %p305 = pneg %p84
      %p306 = pneg %p81
      %p307 = pneg %p105
      %p308 = pneg %p102
      %p309 = pneg %p126
      %p310 = pneg %p123
      %p311 = pneg %p147
      %p312 = pneg %p144
      %p313 = pneg %p168
      %p314 = pneg %p165
      %p315 = pneg %p189
      %p316 = pneg %p186
      %p317 = pneg %p215
      %p318 = pneg %p212
      %p319 = scmp.lt.s32.totalorder %s21, 1
      %s320 = scalar_select %p319, %s21, 1
      %s321 = smul.addr %s320, 64
      %s322 = smul.addr %s321, 4
      %s323 = scalar_lea.vmem %s8, %s322
      %p324 = pneg %p241
      %p325 = pneg %p238
      %p326 = scmp.lt.s32.totalorder %s21, 1
      %s327 = scalar_select %p326, %s21, 1
      %s328 = smul.addr %s327, 24
      %s329 = smul.addr %s328, 8
      %s330 = scalar_lea.vmem %s9, %s329
      %p331 = scmp.lt.s32.totalorder %s21, 1
      %s332 = scalar_select %p331, %s21, 1
      %s333 = smul.addr %s332, 128
      %s334 = smul.addr %s333, 4
      %s335 = scalar_lea.vmem %s0, %s334
      %p336 = scmp.lt.s32.totalorder %s21, 1
      %s337 = scalar_select %p336, %s21, 1
      %s338 = smul.addr %s337, 64
      %s339 = smul.addr %s338, 4
      %s340 = scalar_lea.vmem %s8, %s339
      %p341 = scmp.lt.s32.totalorder %s21, 1
      %s342 = scalar_select %p341, %s21, 1
      %s343 = smul.addr %s342, 24
      %s344 = smul.addr %s343, 8
      %s345 = scalar_lea.vmem %s9, %s344
      %v347 = vld [vmem:[%s335] sm:$0xff]
      %v348 = vld [vmem:[%s335 + $0x8] sm:$0xff]
      %v349 = vld [vmem:[%s335 + $0x10] sm:$0xff]
      %v350 = vld [vmem:[%s335 + $0x18] sm:$0xff]
      %v351 = vld [vmem:[%s335 + $0x20] sm:$0xff]
      %v352 = vld [vmem:[%s335 + $0x28] sm:$0xff]
      %v353 = vld [vmem:[%s335 + $0x30] sm:$0xff]
      %v354 = vld [vmem:[%s335 + $0x38] sm:$0xff]
      %v355 = vld [vmem:[%s335 + $0x40] sm:$0xff]
      %v356 = vld [vmem:[%s335 + $0x48] sm:$0xff]
      %v357 = vld [vmem:[%s335 + $0x50] sm:$0xff]
      %v358 = vld [vmem:[%s335 + $0x58] sm:$0xff]
      %v359 = vld [vmem:[%s335 + $0x60] sm:$0xff]
      %v360 = vld [vmem:[%s335 + $0x68] sm:$0xff]
      %v361 = vld [vmem:[%s335 + $0x70] sm:$0xff]
      %v362 = vld [vmem:[%s335 + $0x78] sm:$0xff]
      %v363 = vld [vmem:[%s335 + $0x80] sm:$0xff]
      %v364 = vld [vmem:[%s335 + $0x88] sm:$0xff]
      %v365 = vld [vmem:[%s335 + $0x90] sm:$0xff]
      %v366 = vld [vmem:[%s335 + $0x98] sm:$0xff]
      %v367 = vld [vmem:[%s335 + $0xa0] sm:$0xff]
      %v368 = vld [vmem:[%s335 + $0xa8] sm:$0xff]
      %v369 = vld [vmem:[%s335 + $0xb0] sm:$0xff]
      %v370 = vld [vmem:[%s335 + $0xb8] sm:$0xff]
      %v371 = vld [vmem:[%s335 + $0xc0] sm:$0xff]
      %v372 = vld [vmem:[%s335 + $0xc8] sm:$0xff]
      %v373 = vld [vmem:[%s335 + $0xd0] sm:$0xff]
      %v374 = vld [vmem:[%s335 + $0xd8] sm:$0xff]
      %v375 = vld [vmem:[%s335 + $0xe0] sm:$0xff]
      %v376 = vld [vmem:[%s335 + $0xe8] sm:$0xff]
      %v377 = vld [vmem:[%s335 + $0xf0] sm:$0xff]
      %v378 = vld [vmem:[%s335 + $0xf8] sm:$0xff]
      %v379 = vld [vmem:[%s335 + $0x100] sm:$0xff]
      %v380 = vld [vmem:[%s335 + $0x108] sm:$0xff]
      %v381 = vld [vmem:[%s335 + $0x110] sm:$0xff]
      %v382 = vld [vmem:[%s335 + $0x118] sm:$0xff]
      %v383 = vld [vmem:[%s335 + $0x120] sm:$0xff]
      %v384 = vld [vmem:[%s335 + $0x128] sm:$0xff]
      %v385 = vld [vmem:[%s335 + $0x130] sm:$0xff]
      %v386 = vld [vmem:[%s335 + $0x138] sm:$0xff]
      %v387 = vld [vmem:[%s335 + $0x140] sm:$0xff]
      %v388 = vld [vmem:[%s335 + $0x148] sm:$0xff]
      %v389 = vld [vmem:[%s335 + $0x150] sm:$0xff]
      %v390 = vld [vmem:[%s335 + $0x158] sm:$0xff]
      %v391 = vld [vmem:[%s335 + $0x160] sm:$0xff]
      %v392 = vld [vmem:[%s335 + $0x168] sm:$0xff]
      %v393 = vld [vmem:[%s335 + $0x170] sm:$0xff]
      %v394 = vld [vmem:[%s335 + $0x178] sm:$0xff]
      %v395 = vld [vmem:[%s335 + $0x180] sm:$0xff]
      %v396 = vld [vmem:[%s335 + $0x188] sm:$0xff]
      %v397 = vld [vmem:[%s335 + $0x190] sm:$0xff]
      %v398 = vld [vmem:[%s335 + $0x198] sm:$0xff]
      %v399 = vld [vmem:[%s335 + $0x1a0] sm:$0xff]
      %v400 = vld [vmem:[%s335 + $0x1a8] sm:$0xff]
      %v401 = vld [vmem:[%s335 + $0x1b0] sm:$0xff]
      %v402 = vld [vmem:[%s335 + $0x1b8] sm:$0xff]
      %v403 = vld [vmem:[%s335 + $0x1c0] sm:$0xff]
      %v404 = vld [vmem:[%s335 + $0x1c8] sm:$0xff]
      %v405 = vld [vmem:[%s335 + $0x1d0] sm:$0xff]
      %v406 = vld [vmem:[%s335 + $0x1d8] sm:$0xff]
      %v407 = vld [vmem:[%s335 + $0x1e0] sm:$0xff]
      %v408 = vld [vmem:[%s335 + $0x1e8] sm:$0xff]
      %v409 = vld [vmem:[%s335 + $0x1f0] sm:$0xff]
      %v410 = vld [vmem:[%s335 + $0x1f8] sm:$0xff]
      %v411 = vld [vmem:[%s1] sm:$0xf]
      %v412 = vld [vmem:[%s1 + $0x4] sm:$0xf]
      %v413 = vld [vmem:[%s1 + $0x8] sm:$0xf]
      %v414 = vld [vmem:[%s1 + $0xc] sm:$0xf]
      %v415 = vld [vmem:[%s1 + $0x10] sm:$0xf]
      %v416 = vld [vmem:[%s1 + $0x14] sm:$0xf]
      %v417 = vld [vmem:[%s1 + $0x18] sm:$0xf]
      %v418 = vld [vmem:[%s1 + $0x1c] sm:$0xf]
      %v419 = vld [vmem:[%s1 + $0x20] sm:$0xf]
      %v420 = vld [vmem:[%s1 + $0x24] sm:$0xf]
      %v421 = vld [vmem:[%s1 + $0x28] sm:$0xf]
      %v422 = vld [vmem:[%s1 + $0x2c] sm:$0xf]
      %v423 = vld [vmem:[%s1 + $0x30] sm:$0xf]
      %v424 = vld [vmem:[%s1 + $0x34] sm:$0xf]
      %v425 = vld [vmem:[%s1 + $0x38] sm:$0xf]
      %v426 = vld [vmem:[%s1 + $0x3c] sm:$0xf]
      %v491 = vunpack.c.l.b16 %v347
      %v492 = vunpack.c.l.b16 %v348
      %v493 = vunpack.c.l.b16 %v349
      %v494 = vunpack.c.l.b16 %v350
      %v495 = vunpack.c.l.b16 %v351
      %v496 = vunpack.c.l.b16 %v352
      %v497 = vunpack.c.l.b16 %v353
      %v498 = vunpack.c.l.b16 %v354
      %v499 = vunpack.c.l.b16 %v355
      %v500 = vunpack.c.l.b16 %v356
      %v501 = vunpack.c.l.b16 %v357
      %v502 = vunpack.c.l.b16 %v358
      %v503 = vunpack.c.l.b16 %v359
      %v504 = vunpack.c.l.b16 %v360
      %v505 = vunpack.c.l.b16 %v361
      %v506 = vunpack.c.l.b16 %v362
      %v507 = vunpack.c.l.b16 %v363
      %v508 = vunpack.c.l.b16 %v364
      %v509 = vunpack.c.l.b16 %v365
      %v510 = vunpack.c.l.b16 %v366
      %v511 = vunpack.c.l.b16 %v367
      %v512 = vunpack.c.l.b16 %v368
      %v513 = vunpack.c.l.b16 %v369
      %v514 = vunpack.c.l.b16 %v370
      %v515 = vunpack.c.l.b16 %v371
      %v516 = vunpack.c.l.b16 %v372
      %v517 = vunpack.c.l.b16 %v373
      %v518 = vunpack.c.l.b16 %v374
      %v519 = vunpack.c.l.b16 %v375
      %v520 = vunpack.c.l.b16 %v376
      %v521 = vunpack.c.l.b16 %v377
      %v522 = vunpack.c.l.b16 %v378
      %v523 = vunpack.c.l.b16 %v379
      %v524 = vunpack.c.l.b16 %v380
      %v525 = vunpack.c.l.b16 %v381
      %v526 = vunpack.c.l.b16 %v382
      %v527 = vunpack.c.l.b16 %v383
      %v528 = vunpack.c.l.b16 %v384
      %v529 = vunpack.c.l.b16 %v385
      %v530 = vunpack.c.l.b16 %v386
      %v531 = vunpack.c.l.b16 %v387
      %v532 = vunpack.c.l.b16 %v388
      %v533 = vunpack.c.l.b16 %v389
      %v534 = vunpack.c.l.b16 %v390
      %v535 = vunpack.c.l.b16 %v391
      %v536 = vunpack.c.l.b16 %v392
      %v537 = vunpack.c.l.b16 %v393
      %v538 = vunpack.c.l.b16 %v394
      %v539 = vunpack.c.l.b16 %v395
      %v540 = vunpack.c.l.b16 %v396
      %v541 = vunpack.c.l.b16 %v397
      %v542 = vunpack.c.l.b16 %v398
      %v543 = vunpack.c.l.b16 %v399
      %v544 = vunpack.c.l.b16 %v400
      %v545 = vunpack.c.l.b16 %v401
      %v546 = vunpack.c.l.b16 %v402
      %v547 = vunpack.c.l.b16 %v403
      %v548 = vunpack.c.l.b16 %v404
      %v549 = vunpack.c.l.b16 %v405
      %v550 = vunpack.c.l.b16 %v406
      %v551 = vunpack.c.l.b16 %v407
      %v552 = vunpack.c.l.b16 %v408
      %v553 = vunpack.c.l.b16 %v409
      %v554 = vunpack.c.l.b16 %v410
      %v555 = vpack.c.b16 %v492, %v491
      %v556 = vpack.c.b16 %v494, %v493
      %v557 = vpack.c.b16 %v496, %v495
      %v558 = vpack.c.b16 %v498, %v497
      %v559 = vpack.c.b16 %v500, %v499
      %v560 = vpack.c.b16 %v502, %v501
      %v561 = vpack.c.b16 %v504, %v503
      %v562 = vpack.c.b16 %v506, %v505
      %v563 = vpack.c.b16 %v508, %v507
      %v564 = vpack.c.b16 %v510, %v509
      %v565 = vpack.c.b16 %v512, %v511
      %v566 = vpack.c.b16 %v514, %v513
      %v567 = vpack.c.b16 %v516, %v515
      %v568 = vpack.c.b16 %v518, %v517
      %v569 = vpack.c.b16 %v520, %v519
      %v570 = vpack.c.b16 %v522, %v521
      %v571 = vpack.c.b16 %v524, %v523
      %v572 = vpack.c.b16 %v526, %v525
      %v573 = vpack.c.b16 %v528, %v527
      %v574 = vpack.c.b16 %v530, %v529
      %v575 = vpack.c.b16 %v532, %v531
      %v576 = vpack.c.b16 %v534, %v533
      %v577 = vpack.c.b16 %v536, %v535
      %v578 = vpack.c.b16 %v538, %v537
      %v579 = vpack.c.b16 %v540, %v539
      %v580 = vpack.c.b16 %v542, %v541
      %v581 = vpack.c.b16 %v544, %v543
      %v582 = vpack.c.b16 %v546, %v545
      %v583 = vpack.c.b16 %v548, %v547
      %v584 = vpack.c.b16 %v550, %v549
      %v585 = vpack.c.b16 %v552, %v551
      %v586 = vpack.c.b16 %v554, %v553
      %v635 = vunpack.c.l.b16 %v411
      %v636 = vunpack.c.l.b16 %v412
      %v637 = vunpack.c.l.b16 %v413
      %v638 = vunpack.c.l.b16 %v414
      %v639 = vunpack.c.l.b16 %v415
      %v640 = vunpack.c.l.b16 %v416
      %v641 = vunpack.c.l.b16 %v417
      %v642 = vunpack.c.l.b16 %v418
      %v643 = vunpack.c.l.b16 %v419
      %v644 = vunpack.c.l.b16 %v420
      %v645 = vunpack.c.l.b16 %v421
      %v646 = vunpack.c.l.b16 %v422
      %v647 = vunpack.c.l.b16 %v423
      %v648 = vunpack.c.l.b16 %v424
      %v649 = vunpack.c.l.b16 %v425
      %v650 = vunpack.c.l.b16 %v426
      %v651 = vpack.c.b16 %v636, %v635
      %v652 = vpack.c.b16 %v638, %v637
      %v653 = vpack.c.b16 %v640, %v639
      %v654 = vpack.c.b16 %v642, %v641
      %v655 = vpack.c.b16 %v644, %v643
      %v656 = vpack.c.b16 %v646, %v645
      %v657 = vpack.c.b16 %v648, %v647
      %v658 = vpack.c.b16 %v650, %v649
      %667 = vmatprep.subr.bf16.mxu0 0
      %668 = vmatpush1.bf16.msra.mxu0 %v658
      %669 = vmatprep.subr.bf16.mxu0 0
      %670 = vmatpush1.bf16.msra.mxu0 %v657
      %671 = vmatprep.subr.bf16.mxu0 0
      %672 = vmatpush1.bf16.msra.mxu0 %v656
      %673 = vmatprep.subr.bf16.mxu0 0
      %674 = vmatpush1.bf16.msra.mxu0 %v655
      %675 = vmatprep.subr.bf16.mxu0 0
      %676 = vmatpush1.bf16.msra.mxu0 %v654
      %677 = vmatprep.subr.bf16.mxu0 0
      %678 = vmatpush1.bf16.msra.mxu0 %v653
      %679 = vmatprep.subr.bf16.mxu0 0
      %680 = vmatpush1.bf16.msra.mxu0 %v652
      %681 = vmatprep.subr.bf16.mxu0 0
      %682 = vmatpush1.bf16.msra.mxu0 %v651
      %683 = vmatprep.subr.bf16.mxu0 0
      %684 = vmatpush2.bf16.msra.mxu0 0
      %685 = vmatprep.subr.bf16.mxu0 0
      %686 = vmatpush2.bf16.msra.mxu0 0
      %687 = vmatprep.subr.bf16.mxu0 0
      %688 = vmatpush2.bf16.msra.mxu0 0
      %689 = vmatprep.subr.bf16.mxu0 0
      %690 = vmatpush2.bf16.msra.mxu0 0
      %691 = vmatprep.subr.bf16.mxu0 0
      %692 = vmatpush2.bf16.msra.mxu0 0
      %693 = vmatprep.subr.bf16.mxu0 0
      %694 = vmatpush2.bf16.msra.mxu0 0
      %695 = vmatprep.subr.bf16.mxu0 0
      %696 = vmatpush2.bf16.msra.mxu0 0
      %697 = vmatprep.subr.bf16.mxu0 0
      %698 = vmatpush2.bf16.msra.mxu0 0
      %699 = vmatprep.mubr.bf16.mxu0 0
      %700 = vmatmul.mubr.bf16.gmra.mxu0 %v555
      %v701 = vpop.f32.mrf.mxu0
      %v702 = vadd.f32 0.0, %v701
      %v703 = vpop.f32.mrf.mxu0
      %v704 = vpop.f32.mrf.mxu0
      %v705 = vadd.f32 0.0, %v704
      %v706 = vpop.f32.mrf.mxu0
      %707 = vmatprep.mubr.bf16.mxu0 0
      %708 = vmatmul.mubr.bf16.gmra.mxu0 %v556
      %v709 = vpop.f32.mrf.mxu0
      %v710 = vadd.f32 0.0, %v709
      %v711 = vpop.f32.mrf.mxu0
      %v712 = vpop.f32.mrf.mxu0
      %v713 = vadd.f32 0.0, %v712
      %v714 = vpop.f32.mrf.mxu0
      %715 = vmatprep.mubr.bf16.mxu0 0
      %716 = vmatmul.mubr.bf16.gmra.mxu0 %v557
      %v717 = vpop.f32.mrf.mxu0
      %v718 = vadd.f32 0.0, %v717
      %v719 = vpop.f32.mrf.mxu0
      %v720 = vpop.f32.mrf.mxu0
      %v721 = vadd.f32 0.0, %v720
      %v722 = vpop.f32.mrf.mxu0
      %723 = vmatprep.mubr.bf16.mxu0 0
      %724 = vmatmul.mubr.bf16.gmra.mxu0 %v558
      %v725 = vpop.f32.mrf.mxu0
      %v726 = vadd.f32 0.0, %v725
      %v727 = vpop.f32.mrf.mxu0
      %v728 = vpop.f32.mrf.mxu0
      %v729 = vadd.f32 0.0, %v728
      %v730 = vpop.f32.mrf.mxu0
      %731 = vmatprep.mubr.bf16.mxu0 0
      %732 = vmatmul.mubr.bf16.gmra.mxu0 %v559
      %v733 = vpop.f32.mrf.mxu0
      %v734 = vadd.f32 0.0, %v733
      %v735 = vpop.f32.mrf.mxu0
      %v736 = vpop.f32.mrf.mxu0
      %v737 = vadd.f32 0.0, %v736
      %v738 = vpop.f32.mrf.mxu0
      %739 = vmatprep.mubr.bf16.mxu0 0
      %740 = vmatmul.mubr.bf16.gmra.mxu0 %v560
      %v741 = vpop.f32.mrf.mxu0
      %v742 = vadd.f32 0.0, %v741
      %v743 = vpop.f32.mrf.mxu0
      %v744 = vpop.f32.mrf.mxu0
      %v745 = vadd.f32 0.0, %v744
      %v746 = vpop.f32.mrf.mxu0
      %747 = vmatprep.mubr.bf16.mxu0 0
      %748 = vmatmul.mubr.bf16.gmra.mxu0 %v561
      %v749 = vpop.f32.mrf.mxu0
      %v750 = vadd.f32 0.0, %v749
      %v751 = vpop.f32.mrf.mxu0
      %v752 = vpop.f32.mrf.mxu0
      %v753 = vadd.f32 0.0, %v752
      %v754 = vpop.f32.mrf.mxu0
      %755 = vmatprep.mubr.bf16.mxu0 0
      %756 = vmatmul.mubr.bf16.gmra.mxu0 %v562
      %v757 = vpop.f32.mrf.mxu0
      %v758 = vadd.f32 0.0, %v757
      %v759 = vpop.f32.mrf.mxu0
      %v760 = vpop.f32.mrf.mxu0
      %v761 = vadd.f32 0.0, %v760
      %v762 = vpop.f32.mrf.mxu0
      %763 = vmatprep.mubr.bf16.mxu0 0
      %764 = vmatmul.mubr.bf16.gmra.mxu0 %v563
      %v765 = vpop.f32.mrf.mxu0
      %v766 = vadd.f32 0.0, %v765
      %v767 = vpop.f32.mrf.mxu0
      %v768 = vpop.f32.mrf.mxu0
      %v769 = vadd.f32 0.0, %v768
      %v770 = vpop.f32.mrf.mxu0
      %771 = vmatprep.mubr.bf16.mxu0 0
      %772 = vmatmul.mubr.bf16.gmra.mxu0 %v564
      %v773 = vpop.f32.mrf.mxu0
      %v774 = vadd.f32 0.0, %v773
      %v775 = vpop.f32.mrf.mxu0
      %v776 = vpop.f32.mrf.mxu0
      %v777 = vadd.f32 0.0, %v776
      %v778 = vpop.f32.mrf.mxu0
      %779 = vmatprep.mubr.bf16.mxu0 0
      %780 = vmatmul.mubr.bf16.gmra.mxu0 %v565
      %v781 = vpop.f32.mrf.mxu0
      %v782 = vadd.f32 0.0, %v781
      %v783 = vpop.f32.mrf.mxu0
      %v784 = vpop.f32.mrf.mxu0
      %v785 = vadd.f32 0.0, %v784
      %v786 = vpop.f32.mrf.mxu0
      %787 = vmatprep.mubr.bf16.mxu0 0
      %788 = vmatmul.mubr.bf16.gmra.mxu0 %v566
      %v789 = vpop.f32.mrf.mxu0
      %v790 = vadd.f32 0.0, %v789
      %v791 = vpop.f32.mrf.mxu0
      %v792 = vpop.f32.mrf.mxu0
      %v793 = vadd.f32 0.0, %v792
      %v794 = vpop.f32.mrf.mxu0
      %795 = vmatprep.mubr.bf16.mxu0 0
      %796 = vmatmul.mubr.bf16.gmra.mxu0 %v567
      %v797 = vpop.f32.mrf.mxu0
      %v798 = vadd.f32 0.0, %v797
      %v799 = vpop.f32.mrf.mxu0
      %v800 = vpop.f32.mrf.mxu0
      %v801 = vadd.f32 0.0, %v800
      %v802 = vpop.f32.mrf.mxu0
      %803 = vmatprep.mubr.bf16.mxu0 0
      %804 = vmatmul.mubr.bf16.gmra.mxu0 %v568
      %v805 = vpop.f32.mrf.mxu0
      %v806 = vadd.f32 0.0, %v805
      %v807 = vpop.f32.mrf.mxu0
      %v808 = vpop.f32.mrf.mxu0
      %v809 = vadd.f32 0.0, %v808
      %v810 = vpop.f32.mrf.mxu0
      %811 = vmatprep.mubr.bf16.mxu0 0
      %812 = vmatmul.mubr.bf16.gmra.mxu0 %v569
      %v813 = vpop.f32.mrf.mxu0
      %v814 = vadd.f32 0.0, %v813
      %v815 = vpop.f32.mrf.mxu0
      %v816 = vpop.f32.mrf.mxu0
      %v817 = vadd.f32 0.0, %v816
      %v818 = vpop.f32.mrf.mxu0
      %819 = vmatprep.mubr.bf16.mxu0 0
      %820 = vmatmul.mubr.bf16.gmra.mxu0 %v570
      %v821 = vpop.f32.mrf.mxu0
      %v822 = vadd.f32 0.0, %v821
      %v823 = vpop.f32.mrf.mxu0
      %v824 = vpop.f32.mrf.mxu0
      %v825 = vadd.f32 0.0, %v824
      %v826 = vpop.f32.mrf.mxu0
      %827 = vmatprep.mubr.bf16.mxu0 0
      %828 = vmatmul.mubr.bf16.gmra.mxu0 %v571
      %v829 = vpop.f32.mrf.mxu0
      %v830 = vadd.f32 0.0, %v829
      %v831 = vpop.f32.mrf.mxu0
      %v832 = vpop.f32.mrf.mxu0
      %v833 = vadd.f32 0.0, %v832
      %v834 = vpop.f32.mrf.mxu0
      %835 = vmatprep.mubr.bf16.mxu0 0
      %836 = vmatmul.mubr.bf16.gmra.mxu0 %v572
      %v837 = vpop.f32.mrf.mxu0
      %v838 = vadd.f32 0.0, %v837
      %v839 = vpop.f32.mrf.mxu0
      %v840 = vpop.f32.mrf.mxu0
      %v841 = vadd.f32 0.0, %v840
      %v842 = vpop.f32.mrf.mxu0
      %843 = vmatprep.mubr.bf16.mxu0 0
      %844 = vmatmul.mubr.bf16.gmra.mxu0 %v573
      %v845 = vpop.f32.mrf.mxu0
      %v846 = vadd.f32 0.0, %v845
      %v847 = vpop.f32.mrf.mxu0
      %v848 = vpop.f32.mrf.mxu0
      %v849 = vadd.f32 0.0, %v848
      %v850 = vpop.f32.mrf.mxu0
      %851 = vmatprep.mubr.bf16.mxu0 0
      %852 = vmatmul.mubr.bf16.gmra.mxu0 %v574
      %v853 = vpop.f32.mrf.mxu0
      %v854 = vadd.f32 0.0, %v853
      %v855 = vpop.f32.mrf.mxu0
      %v856 = vpop.f32.mrf.mxu0
      %v857 = vadd.f32 0.0, %v856
      %v858 = vpop.f32.mrf.mxu0
      %859 = vmatprep.mubr.bf16.mxu0 0
      %860 = vmatmul.mubr.bf16.gmra.mxu0 %v575
      %v861 = vpop.f32.mrf.mxu0
      %v862 = vadd.f32 0.0, %v861
      %v863 = vpop.f32.mrf.mxu0
      %v864 = vpop.f32.mrf.mxu0
      %v865 = vadd.f32 0.0, %v864
      %v866 = vpop.f32.mrf.mxu0
      %867 = vmatprep.mubr.bf16.mxu0 0
      %868 = vmatmul.mubr.bf16.gmra.mxu0 %v576
      %v869 = vpop.f32.mrf.mxu0
      %v870 = vadd.f32 0.0, %v869
      %v871 = vpop.f32.mrf.mxu0
      %v872 = vpop.f32.mrf.mxu0
      %v873 = vadd.f32 0.0, %v872
      %v874 = vpop.f32.mrf.mxu0
      %875 = vmatprep.mubr.bf16.mxu0 0
      %876 = vmatmul.mubr.bf16.gmra.mxu0 %v577
      %v877 = vpop.f32.mrf.mxu0
      %v878 = vadd.f32 0.0, %v877
      %v879 = vpop.f32.mrf.mxu0
      %v880 = vpop.f32.mrf.mxu0
      %v881 = vadd.f32 0.0, %v880
      %v882 = vpop.f32.mrf.mxu0
      %883 = vmatprep.mubr.bf16.mxu0 0
      %884 = vmatmul.mubr.bf16.gmra.mxu0 %v578
      %v885 = vpop.f32.mrf.mxu0
      %v886 = vadd.f32 0.0, %v885
      %v887 = vpop.f32.mrf.mxu0
      %v888 = vpop.f32.mrf.mxu0
      %v889 = vadd.f32 0.0, %v888
      %v890 = vpop.f32.mrf.mxu0
      %891 = vmatprep.mubr.bf16.mxu0 0
      %892 = vmatmul.mubr.bf16.gmra.mxu0 %v579
      %v893 = vpop.f32.mrf.mxu0
      %v894 = vadd.f32 0.0, %v893
      %v895 = vpop.f32.mrf.mxu0
      %v896 = vpop.f32.mrf.mxu0
      %v897 = vadd.f32 0.0, %v896
      %v898 = vpop.f32.mrf.mxu0
      %899 = vmatprep.mubr.bf16.mxu0 0
      %900 = vmatmul.mubr.bf16.gmra.mxu0 %v580
      %v901 = vpop.f32.mrf.mxu0
      %v902 = vadd.f32 0.0, %v901
      %v903 = vpop.f32.mrf.mxu0
      %v904 = vpop.f32.mrf.mxu0
      %v905 = vadd.f32 0.0, %v904
      %v906 = vpop.f32.mrf.mxu0
      %907 = vmatprep.mubr.bf16.mxu0 0
      %908 = vmatmul.mubr.bf16.gmra.mxu0 %v581
      %v909 = vpop.f32.mrf.mxu0
      %v910 = vadd.f32 0.0, %v909
      %v911 = vpop.f32.mrf.mxu0
      %v912 = vpop.f32.mrf.mxu0
      %v913 = vadd.f32 0.0, %v912
      %v914 = vpop.f32.mrf.mxu0
      %915 = vmatprep.mubr.bf16.mxu0 0
      %916 = vmatmul.mubr.bf16.gmra.mxu0 %v582
      %v917 = vpop.f32.mrf.mxu0
      %v918 = vadd.f32 0.0, %v917
      %v919 = vpop.f32.mrf.mxu0
      %v920 = vpop.f32.mrf.mxu0
      %v921 = vadd.f32 0.0, %v920
      %v922 = vpop.f32.mrf.mxu0
      %923 = vmatprep.mubr.bf16.mxu0 0
      %924 = vmatmul.mubr.bf16.gmra.mxu0 %v583
      %v925 = vpop.f32.mrf.mxu0
      %v926 = vadd.f32 0.0, %v925
      %v927 = vpop.f32.mrf.mxu0
      %v928 = vpop.f32.mrf.mxu0
      %v929 = vadd.f32 0.0, %v928
      %v930 = vpop.f32.mrf.mxu0
      %931 = vmatprep.mubr.bf16.mxu0 0
      %932 = vmatmul.mubr.bf16.gmra.mxu0 %v584
      %v933 = vpop.f32.mrf.mxu0
      %v934 = vadd.f32 0.0, %v933
      %v935 = vpop.f32.mrf.mxu0
      %v936 = vpop.f32.mrf.mxu0
      %v937 = vadd.f32 0.0, %v936
      %v938 = vpop.f32.mrf.mxu0
      %939 = vmatprep.mubr.bf16.mxu0 0
      %940 = vmatmul.mubr.bf16.gmra.mxu0 %v585
      %v941 = vpop.f32.mrf.mxu0
      %v942 = vadd.f32 0.0, %v941
      %v943 = vpop.f32.mrf.mxu0
      %v944 = vpop.f32.mrf.mxu0
      %v945 = vadd.f32 0.0, %v944
      %v946 = vpop.f32.mrf.mxu0
      %947 = vmatprep.mubr.bf16.mxu0 0
      %948 = vmatmul.mubr.bf16.gmra.mxu0 %v586
      %v949 = vpop.f32.mrf.mxu0
      %v950 = vadd.f32 0.0, %v949
      %v951 = vpop.f32.mrf.mxu0
      %v952 = vpop.f32.mrf.mxu0
      %v953 = vadd.f32 0.0, %v952
      %v954 = vpop.f32.mrf.mxu0
      %955 = vdwg.mxu0
      %v956 = vld [vmem:[%s5] sm:$0x1]
      %v957 = vlaneseq
      %v958 = vshrl.u32 %v957, 7
      %v959 = vsub.s32 0, %v958
      %v960 = vrot.slane %v956, %v959
      %v961 = vmul.f32 %v702, %v960
      %v962 = vmul.f32 %v705, %v960
      %v963 = vmul.f32 %v710, %v960
      %v964 = vmul.f32 %v713, %v960
      %v965 = vmul.f32 %v718, %v960
      %v966 = vmul.f32 %v721, %v960
      %v967 = vmul.f32 %v726, %v960
      %v968 = vmul.f32 %v729, %v960
      %v969 = vmul.f32 %v734, %v960
      %v970 = vmul.f32 %v737, %v960
      %v971 = vmul.f32 %v742, %v960
      %v972 = vmul.f32 %v745, %v960
      %v973 = vmul.f32 %v750, %v960
      %v974 = vmul.f32 %v753, %v960
      %v975 = vmul.f32 %v758, %v960
      %v976 = vmul.f32 %v761, %v960
      %v977 = vmul.f32 %v766, %v960
      %v978 = vmul.f32 %v769, %v960
      %v979 = vmul.f32 %v774, %v960
      %v980 = vmul.f32 %v777, %v960
      %v981 = vmul.f32 %v782, %v960
      %v982 = vmul.f32 %v785, %v960
      %v983 = vmul.f32 %v790, %v960
      %v984 = vmul.f32 %v793, %v960
      %v985 = vmul.f32 %v798, %v960
      %v986 = vmul.f32 %v801, %v960
      %v987 = vmul.f32 %v806, %v960
      %v988 = vmul.f32 %v809, %v960
      %v989 = vmul.f32 %v814, %v960
      %v990 = vmul.f32 %v817, %v960
      %v991 = vmul.f32 %v822, %v960
      %v992 = vmul.f32 %v825, %v960
      %v993 = vmul.f32 %v830, %v960
      %v994 = vmul.f32 %v833, %v960
      %v995 = vmul.f32 %v838, %v960
      %v996 = vmul.f32 %v841, %v960
      %v997 = vmul.f32 %v846, %v960
      %v998 = vmul.f32 %v849, %v960
      %v999 = vmul.f32 %v854, %v960
      %v1000 = vmul.f32 %v857, %v960
      %v1001 = vmul.f32 %v862, %v960
      %v1002 = vmul.f32 %v865, %v960
      %v1003 = vmul.f32 %v870, %v960
      %v1004 = vmul.f32 %v873, %v960
      %v1005 = vmul.f32 %v878, %v960
      %v1006 = vmul.f32 %v881, %v960
      %v1007 = vmul.f32 %v886, %v960
      %v1008 = vmul.f32 %v889, %v960
      %v1009 = vmul.f32 %v894, %v960
      %v1010 = vmul.f32 %v897, %v960
      %v1011 = vmul.f32 %v902, %v960
      %v1012 = vmul.f32 %v905, %v960
      %v1013 = vmul.f32 %v910, %v960
      %v1014 = vmul.f32 %v913, %v960
      %v1015 = vmul.f32 %v918, %v960
      %v1016 = vmul.f32 %v921, %v960
      %v1017 = vmul.f32 %v926, %v960
      %v1018 = vmul.f32 %v929, %v960
      %v1019 = vmul.f32 %v934, %v960
      %v1020 = vmul.f32 %v937, %v960
      %v1021 = vmul.f32 %v942, %v960
      %v1022 = vmul.f32 %v945, %v960
      %v1023 = vmul.f32 %v950, %v960
      %v1024 = vmul.f32 %v953, %v960
      %v1025 = vld [vmem:[%s5 + $0x1] sm:$0x1]
      %v1026 = vlaneseq
      %v1027 = vshrl.u32 %v1026, 7
      %v1028 = vsub.s32 0, %v1027
      %v1029 = vrot.slane %v1025, %v1028
      %v1030 = vadd.f32 %v961, %v1029
      %v1031 = vadd.f32 %v962, %v1029
      %v1032 = vadd.f32 %v963, %v1029
      %v1033 = vadd.f32 %v964, %v1029
      %v1034 = vadd.f32 %v965, %v1029
      %v1035 = vadd.f32 %v966, %v1029
      %v1036 = vadd.f32 %v967, %v1029
      %v1037 = vadd.f32 %v968, %v1029
      %v1038 = vadd.f32 %v969, %v1029
      %v1039 = vadd.f32 %v970, %v1029
      %v1040 = vadd.f32 %v971, %v1029
      %v1041 = vadd.f32 %v972, %v1029
      %v1042 = vadd.f32 %v973, %v1029
      %v1043 = vadd.f32 %v974, %v1029
      %v1044 = vadd.f32 %v975, %v1029
      %v1045 = vadd.f32 %v976, %v1029
      %v1046 = vadd.f32 %v977, %v1029
      %v1047 = vadd.f32 %v978, %v1029
      %v1048 = vadd.f32 %v979, %v1029
      %v1049 = vadd.f32 %v980, %v1029
      %v1050 = vadd.f32 %v981, %v1029
      %v1051 = vadd.f32 %v982, %v1029
      %v1052 = vadd.f32 %v983, %v1029
      %v1053 = vadd.f32 %v984, %v1029
      %v1054 = vadd.f32 %v985, %v1029
      %v1055 = vadd.f32 %v986, %v1029
      %v1056 = vadd.f32 %v987, %v1029
      %v1057 = vadd.f32 %v988, %v1029
      %v1058 = vadd.f32 %v989, %v1029
      %v1059 = vadd.f32 %v990, %v1029
      %v1060 = vadd.f32 %v991, %v1029
      %v1061 = vadd.f32 %v992, %v1029
      %v1062 = vadd.f32 %v993, %v1029
      %v1063 = vadd.f32 %v994, %v1029
      %v1064 = vadd.f32 %v995, %v1029
      %v1065 = vadd.f32 %v996, %v1029
      %v1066 = vadd.f32 %v997, %v1029
      %v1067 = vadd.f32 %v998, %v1029
      %v1068 = vadd.f32 %v999, %v1029
      %v1069 = vadd.f32 %v1000, %v1029
      %v1070 = vadd.f32 %v1001, %v1029
      %v1071 = vadd.f32 %v1002, %v1029
      %v1072 = vadd.f32 %v1003, %v1029
      %v1073 = vadd.f32 %v1004, %v1029
      %v1074 = vadd.f32 %v1005, %v1029
      %v1075 = vadd.f32 %v1006, %v1029
      %v1076 = vadd.f32 %v1007, %v1029
      %v1077 = vadd.f32 %v1008, %v1029
      %v1078 = vadd.f32 %v1009, %v1029
      %v1079 = vadd.f32 %v1010, %v1029
      %v1080 = vadd.f32 %v1011, %v1029
      %v1081 = vadd.f32 %v1012, %v1029
      %v1082 = vadd.f32 %v1013, %v1029
      %v1083 = vadd.f32 %v1014, %v1029
      %v1084 = vadd.f32 %v1015, %v1029
      %v1085 = vadd.f32 %v1016, %v1029
      %v1086 = vadd.f32 %v1017, %v1029
      %v1087 = vadd.f32 %v1018, %v1029
      %v1088 = vadd.f32 %v1019, %v1029
      %v1089 = vadd.f32 %v1020, %v1029
      %v1090 = vadd.f32 %v1021, %v1029
      %v1091 = vadd.f32 %v1022, %v1029
      %v1092 = vadd.f32 %v1023, %v1029
      %v1093 = vadd.f32 %v1024, %v1029
      %v1094 = vmax.f32 %v1030, 0.0
      %v1095 = vmax.f32 %v1031, 0.0
      %v1096 = vmax.f32 %v1032, 0.0
      %v1097 = vmax.f32 %v1033, 0.0
      %v1098 = vmax.f32 %v1034, 0.0
      %v1099 = vmax.f32 %v1035, 0.0
      %v1100 = vmax.f32 %v1036, 0.0
      %v1101 = vmax.f32 %v1037, 0.0
      %v1102 = vmax.f32 %v1038, 0.0
      %v1103 = vmax.f32 %v1039, 0.0
      %v1104 = vmax.f32 %v1040, 0.0
      %v1105 = vmax.f32 %v1041, 0.0
      %v1106 = vmax.f32 %v1042, 0.0
      %v1107 = vmax.f32 %v1043, 0.0
      %v1108 = vmax.f32 %v1044, 0.0
      %v1109 = vmax.f32 %v1045, 0.0
      %v1110 = vmax.f32 %v1046, 0.0
      %v1111 = vmax.f32 %v1047, 0.0
      %v1112 = vmax.f32 %v1048, 0.0
      %v1113 = vmax.f32 %v1049, 0.0
      %v1114 = vmax.f32 %v1050, 0.0
      %v1115 = vmax.f32 %v1051, 0.0
      %v1116 = vmax.f32 %v1052, 0.0
      %v1117 = vmax.f32 %v1053, 0.0
      %v1118 = vmax.f32 %v1054, 0.0
      %v1119 = vmax.f32 %v1055, 0.0
      %v1120 = vmax.f32 %v1056, 0.0
      %v1121 = vmax.f32 %v1057, 0.0
      %v1122 = vmax.f32 %v1058, 0.0
      %v1123 = vmax.f32 %v1059, 0.0
      %v1124 = vmax.f32 %v1060, 0.0
      %v1125 = vmax.f32 %v1061, 0.0
      %v1126 = vmax.f32 %v1062, 0.0
      %v1127 = vmax.f32 %v1063, 0.0
      %v1128 = vmax.f32 %v1064, 0.0
      %v1129 = vmax.f32 %v1065, 0.0
      %v1130 = vmax.f32 %v1066, 0.0
      %v1131 = vmax.f32 %v1067, 0.0
      %v1132 = vmax.f32 %v1068, 0.0
      %v1133 = vmax.f32 %v1069, 0.0
      %v1134 = vmax.f32 %v1070, 0.0
      %v1135 = vmax.f32 %v1071, 0.0
      %v1136 = vmax.f32 %v1072, 0.0
      %v1137 = vmax.f32 %v1073, 0.0
      %v1138 = vmax.f32 %v1074, 0.0
      %v1139 = vmax.f32 %v1075, 0.0
      %v1140 = vmax.f32 %v1076, 0.0
      %v1141 = vmax.f32 %v1077, 0.0
      %v1142 = vmax.f32 %v1078, 0.0
      %v1143 = vmax.f32 %v1079, 0.0
      %v1144 = vmax.f32 %v1080, 0.0
      %v1145 = vmax.f32 %v1081, 0.0
      %v1146 = vmax.f32 %v1082, 0.0
      %v1147 = vmax.f32 %v1083, 0.0
      %v1148 = vmax.f32 %v1084, 0.0
      %v1149 = vmax.f32 %v1085, 0.0
      %v1150 = vmax.f32 %v1086, 0.0
      %v1151 = vmax.f32 %v1087, 0.0
      %v1152 = vmax.f32 %v1088, 0.0
      %v1153 = vmax.f32 %v1089, 0.0
      %v1154 = vmax.f32 %v1090, 0.0
      %v1155 = vmax.f32 %v1091, 0.0
      %v1156 = vmax.f32 %v1092, 0.0
      %v1157 = vmax.f32 %v1093, 0.0
      %s1158 = scalar_lea.vmem %s1, 64
      %v1159 = vld [vmem:[%s1158] sm:$0xf]
      %v1160 = vld [vmem:[%s1158 + $0x4] sm:$0xf]
      %v1161 = vld [vmem:[%s1158 + $0x8] sm:$0xf]
      %v1162 = vld [vmem:[%s1158 + $0xc] sm:$0xf]
      %v1163 = vld [vmem:[%s1158 + $0x10] sm:$0xf]
      %v1164 = vld [vmem:[%s1158 + $0x14] sm:$0xf]
      %v1165 = vld [vmem:[%s1158 + $0x18] sm:$0xf]
      %v1166 = vld [vmem:[%s1158 + $0x1c] sm:$0xf]
      %v1167 = vld [vmem:[%s1158 + $0x20] sm:$0xf]
      %v1168 = vld [vmem:[%s1158 + $0x24] sm:$0xf]
      %v1169 = vld [vmem:[%s1158 + $0x28] sm:$0xf]
      %v1170 = vld [vmem:[%s1158 + $0x2c] sm:$0xf]
      %v1171 = vld [vmem:[%s1158 + $0x30] sm:$0xf]
      %v1172 = vld [vmem:[%s1158 + $0x34] sm:$0xf]
      %v1173 = vld [vmem:[%s1158 + $0x38] sm:$0xf]
      %v1174 = vld [vmem:[%s1158 + $0x3c] sm:$0xf]
      %v1175 = vunpack.c.h.b16 %v347
      %v1176 = vunpack.c.h.b16 %v348
      %v1177 = vunpack.c.h.b16 %v349
      %v1178 = vunpack.c.h.b16 %v350
      %v1179 = vunpack.c.h.b16 %v351
      %v1180 = vunpack.c.h.b16 %v352
      %v1181 = vunpack.c.h.b16 %v353
      %v1182 = vunpack.c.h.b16 %v354
      %v1183 = vunpack.c.h.b16 %v355
      %v1184 = vunpack.c.h.b16 %v356
      %v1185 = vunpack.c.h.b16 %v357
      %v1186 = vunpack.c.h.b16 %v358
      %v1187 = vunpack.c.h.b16 %v359
      %v1188 = vunpack.c.h.b16 %v360
      %v1189 = vunpack.c.h.b16 %v361
      %v1190 = vunpack.c.h.b16 %v362
      %v1191 = vunpack.c.h.b16 %v363
      %v1192 = vunpack.c.h.b16 %v364
      %v1193 = vunpack.c.h.b16 %v365
      %v1194 = vunpack.c.h.b16 %v366
      %v1195 = vunpack.c.h.b16 %v367
      %v1196 = vunpack.c.h.b16 %v368
      %v1197 = vunpack.c.h.b16 %v369
      %v1198 = vunpack.c.h.b16 %v370
      %v1199 = vunpack.c.h.b16 %v371
      %v1200 = vunpack.c.h.b16 %v372
      %v1201 = vunpack.c.h.b16 %v373
      %v1202 = vunpack.c.h.b16 %v374
      %v1203 = vunpack.c.h.b16 %v375
      %v1204 = vunpack.c.h.b16 %v376
      %v1205 = vunpack.c.h.b16 %v377
      %v1206 = vunpack.c.h.b16 %v378
      %v1207 = vunpack.c.h.b16 %v379
      %v1208 = vunpack.c.h.b16 %v380
      %v1209 = vunpack.c.h.b16 %v381
      %v1210 = vunpack.c.h.b16 %v382
      %v1211 = vunpack.c.h.b16 %v383
      %v1212 = vunpack.c.h.b16 %v384
      %v1213 = vunpack.c.h.b16 %v385
      %v1214 = vunpack.c.h.b16 %v386
      %v1215 = vunpack.c.h.b16 %v387
      %v1216 = vunpack.c.h.b16 %v388
      %v1217 = vunpack.c.h.b16 %v389
      %v1218 = vunpack.c.h.b16 %v390
      %v1219 = vunpack.c.h.b16 %v391
      %v1220 = vunpack.c.h.b16 %v392
      %v1221 = vunpack.c.h.b16 %v393
      %v1222 = vunpack.c.h.b16 %v394
      %v1223 = vunpack.c.h.b16 %v395
      %v1224 = vunpack.c.h.b16 %v396
      %v1225 = vunpack.c.h.b16 %v397
      %v1226 = vunpack.c.h.b16 %v398
      %v1227 = vunpack.c.h.b16 %v399
      %v1228 = vunpack.c.h.b16 %v400
      %v1229 = vunpack.c.h.b16 %v401
      %v1230 = vunpack.c.h.b16 %v402
      %v1231 = vunpack.c.h.b16 %v403
      %v1232 = vunpack.c.h.b16 %v404
      %v1233 = vunpack.c.h.b16 %v405
      %v1234 = vunpack.c.h.b16 %v406
      %v1235 = vunpack.c.h.b16 %v407
      %v1236 = vunpack.c.h.b16 %v408
      %v1237 = vunpack.c.h.b16 %v409
      %v1238 = vunpack.c.h.b16 %v410
      %v1239 = vpack.c.b16 %v1176, %v1175
      %v1240 = vpack.c.b16 %v1178, %v1177
      %v1241 = vpack.c.b16 %v1180, %v1179
      %v1242 = vpack.c.b16 %v1182, %v1181
      %v1243 = vpack.c.b16 %v1184, %v1183
      %v1244 = vpack.c.b16 %v1186, %v1185
      %v1245 = vpack.c.b16 %v1188, %v1187
      %v1246 = vpack.c.b16 %v1190, %v1189
      %v1247 = vpack.c.b16 %v1192, %v1191
      %v1248 = vpack.c.b16 %v1194, %v1193
      %v1249 = vpack.c.b16 %v1196, %v1195
      %v1250 = vpack.c.b16 %v1198, %v1197
      %v1251 = vpack.c.b16 %v1200, %v1199
      %v1252 = vpack.c.b16 %v1202, %v1201
      %v1253 = vpack.c.b16 %v1204, %v1203
      %v1254 = vpack.c.b16 %v1206, %v1205
      %v1255 = vpack.c.b16 %v1208, %v1207
      %v1256 = vpack.c.b16 %v1210, %v1209
      %v1257 = vpack.c.b16 %v1212, %v1211
      %v1258 = vpack.c.b16 %v1214, %v1213
      %v1259 = vpack.c.b16 %v1216, %v1215
      %v1260 = vpack.c.b16 %v1218, %v1217
      %v1261 = vpack.c.b16 %v1220, %v1219
      %v1262 = vpack.c.b16 %v1222, %v1221
      %v1263 = vpack.c.b16 %v1224, %v1223
      %v1264 = vpack.c.b16 %v1226, %v1225
      %v1265 = vpack.c.b16 %v1228, %v1227
      %v1266 = vpack.c.b16 %v1230, %v1229
      %v1267 = vpack.c.b16 %v1232, %v1231
      %v1268 = vpack.c.b16 %v1234, %v1233
      %v1269 = vpack.c.b16 %v1236, %v1235
      %v1270 = vpack.c.b16 %v1238, %v1237
      %v1319 = vunpack.c.l.b16 %v1159
      %v1320 = vunpack.c.l.b16 %v1160
      %v1321 = vunpack.c.l.b16 %v1161
      %v1322 = vunpack.c.l.b16 %v1162
      %v1323 = vunpack.c.l.b16 %v1163
      %v1324 = vunpack.c.l.b16 %v1164
      %v1325 = vunpack.c.l.b16 %v1165
      %v1326 = vunpack.c.l.b16 %v1166
      %v1327 = vunpack.c.l.b16 %v1167
      %v1328 = vunpack.c.l.b16 %v1168
      %v1329 = vunpack.c.l.b16 %v1169
      %v1330 = vunpack.c.l.b16 %v1170
      %v1331 = vunpack.c.l.b16 %v1171
      %v1332 = vunpack.c.l.b16 %v1172
      %v1333 = vunpack.c.l.b16 %v1173
      %v1334 = vunpack.c.l.b16 %v1174
      %v1335 = vpack.c.b16 %v1320, %v1319
      %v1336 = vpack.c.b16 %v1322, %v1321
      %v1337 = vpack.c.b16 %v1324, %v1323
      %v1338 = vpack.c.b16 %v1326, %v1325
      %v1339 = vpack.c.b16 %v1328, %v1327
      %v1340 = vpack.c.b16 %v1330, %v1329
      %v1341 = vpack.c.b16 %v1332, %v1331
      %v1342 = vpack.c.b16 %v1334, %v1333
      %1351 = vmatprep.subr.bf16.mxu0 0
      %1352 = vmatpush1.bf16.msra.mxu0 %v1342
      %1353 = vmatprep.subr.bf16.mxu0 0
      %1354 = vmatpush1.bf16.msra.mxu0 %v1341
      %1355 = vmatprep.subr.bf16.mxu0 0
      %1356 = vmatpush1.bf16.msra.mxu0 %v1340
      %1357 = vmatprep.subr.bf16.mxu0 0
      %1358 = vmatpush1.bf16.msra.mxu0 %v1339
      %1359 = vmatprep.subr.bf16.mxu0 0
      %1360 = vmatpush1.bf16.msra.mxu0 %v1338
      %1361 = vmatprep.subr.bf16.mxu0 0
      %1362 = vmatpush1.bf16.msra.mxu0 %v1337
      %1363 = vmatprep.subr.bf16.mxu0 0
      %1364 = vmatpush1.bf16.msra.mxu0 %v1336
      %1365 = vmatprep.subr.bf16.mxu0 0
      %1366 = vmatpush1.bf16.msra.mxu0 %v1335
      %1367 = vmatprep.subr.bf16.mxu0 0
      %1368 = vmatpush2.bf16.msra.mxu0 0
      %1369 = vmatprep.subr.bf16.mxu0 0
      %1370 = vmatpush2.bf16.msra.mxu0 0
      %1371 = vmatprep.subr.bf16.mxu0 0
      %1372 = vmatpush2.bf16.msra.mxu0 0
      %1373 = vmatprep.subr.bf16.mxu0 0
      %1374 = vmatpush2.bf16.msra.mxu0 0
      %1375 = vmatprep.subr.bf16.mxu0 0
      %1376 = vmatpush2.bf16.msra.mxu0 0
      %1377 = vmatprep.subr.bf16.mxu0 0
      %1378 = vmatpush2.bf16.msra.mxu0 0
      %1379 = vmatprep.subr.bf16.mxu0 0
      %1380 = vmatpush2.bf16.msra.mxu0 0
      %1381 = vmatprep.subr.bf16.mxu0 0
      %1382 = vmatpush2.bf16.msra.mxu0 0
      %1383 = vmatprep.mubr.bf16.mxu0 0
      %1384 = vmatmul.mubr.bf16.gmra.mxu0 %v1239
      %v1385 = vpop.f32.mrf.mxu0
      %v1386 = vadd.f32 0.0, %v1385
      %v1387 = vpop.f32.mrf.mxu0
      %v1388 = vpop.f32.mrf.mxu0
      %v1389 = vadd.f32 0.0, %v1388
      %v1390 = vpop.f32.mrf.mxu0
      %1391 = vmatprep.mubr.bf16.mxu0 0
      %1392 = vmatmul.mubr.bf16.gmra.mxu0 %v1240
      %v1393 = vpop.f32.mrf.mxu0
      %v1394 = vadd.f32 0.0, %v1393
      %v1395 = vpop.f32.mrf.mxu0
      %v1396 = vpop.f32.mrf.mxu0
      %v1397 = vadd.f32 0.0, %v1396
      %v1398 = vpop.f32.mrf.mxu0
      %1399 = vmatprep.mubr.bf16.mxu0 0
      %1400 = vmatmul.mubr.bf16.gmra.mxu0 %v1241
      %v1401 = vpop.f32.mrf.mxu0
      %v1402 = vadd.f32 0.0, %v1401
      %v1403 = vpop.f32.mrf.mxu0
      %v1404 = vpop.f32.mrf.mxu0
      %v1405 = vadd.f32 0.0, %v1404
      %v1406 = vpop.f32.mrf.mxu0
      %1407 = vmatprep.mubr.bf16.mxu0 0
      %1408 = vmatmul.mubr.bf16.gmra.mxu0 %v1242
      %v1409 = vpop.f32.mrf.mxu0
      %v1410 = vadd.f32 0.0, %v1409
      %v1411 = vpop.f32.mrf.mxu0
      %v1412 = vpop.f32.mrf.mxu0
      %v1413 = vadd.f32 0.0, %v1412
      %v1414 = vpop.f32.mrf.mxu0
      %1415 = vmatprep.mubr.bf16.mxu0 0
      %1416 = vmatmul.mubr.bf16.gmra.mxu0 %v1243
      %v1417 = vpop.f32.mrf.mxu0
      %v1418 = vadd.f32 0.0, %v1417
      %v1419 = vpop.f32.mrf.mxu0
      %v1420 = vpop.f32.mrf.mxu0
      %v1421 = vadd.f32 0.0, %v1420
      %v1422 = vpop.f32.mrf.mxu0
      %1423 = vmatprep.mubr.bf16.mxu0 0
      %1424 = vmatmul.mubr.bf16.gmra.mxu0 %v1244
      %v1425 = vpop.f32.mrf.mxu0
      %v1426 = vadd.f32 0.0, %v1425
      %v1427 = vpop.f32.mrf.mxu0
      %v1428 = vpop.f32.mrf.mxu0
      %v1429 = vadd.f32 0.0, %v1428
      %v1430 = vpop.f32.mrf.mxu0
      %1431 = vmatprep.mubr.bf16.mxu0 0
      %1432 = vmatmul.mubr.bf16.gmra.mxu0 %v1245
      %v1433 = vpop.f32.mrf.mxu0
      %v1434 = vadd.f32 0.0, %v1433
      %v1435 = vpop.f32.mrf.mxu0
      %v1436 = vpop.f32.mrf.mxu0
      %v1437 = vadd.f32 0.0, %v1436
      %v1438 = vpop.f32.mrf.mxu0
      %1439 = vmatprep.mubr.bf16.mxu0 0
      %1440 = vmatmul.mubr.bf16.gmra.mxu0 %v1246
      %v1441 = vpop.f32.mrf.mxu0
      %v1442 = vadd.f32 0.0, %v1441
      %v1443 = vpop.f32.mrf.mxu0
      %v1444 = vpop.f32.mrf.mxu0
      %v1445 = vadd.f32 0.0, %v1444
      %v1446 = vpop.f32.mrf.mxu0
      %1447 = vmatprep.mubr.bf16.mxu0 0
      %1448 = vmatmul.mubr.bf16.gmra.mxu0 %v1247
      %v1449 = vpop.f32.mrf.mxu0
      %v1450 = vadd.f32 0.0, %v1449
      %v1451 = vpop.f32.mrf.mxu0
      %v1452 = vpop.f32.mrf.mxu0
      %v1453 = vadd.f32 0.0, %v1452
      %v1454 = vpop.f32.mrf.mxu0
      %1455 = vmatprep.mubr.bf16.mxu0 0
      %1456 = vmatmul.mubr.bf16.gmra.mxu0 %v1248
      %v1457 = vpop.f32.mrf.mxu0
      %v1458 = vadd.f32 0.0, %v1457
      %v1459 = vpop.f32.mrf.mxu0
      %v1460 = vpop.f32.mrf.mxu0
      %v1461 = vadd.f32 0.0, %v1460
      %v1462 = vpop.f32.mrf.mxu0
      %1463 = vmatprep.mubr.bf16.mxu0 0
      %1464 = vmatmul.mubr.bf16.gmra.mxu0 %v1249
      %v1465 = vpop.f32.mrf.mxu0
      %v1466 = vadd.f32 0.0, %v1465
      %v1467 = vpop.f32.mrf.mxu0
      %v1468 = vpop.f32.mrf.mxu0
      %v1469 = vadd.f32 0.0, %v1468
      %v1470 = vpop.f32.mrf.mxu0
      %1471 = vmatprep.mubr.bf16.mxu0 0
      %1472 = vmatmul.mubr.bf16.gmra.mxu0 %v1250
      %v1473 = vpop.f32.mrf.mxu0
      %v1474 = vadd.f32 0.0, %v1473
      %v1475 = vpop.f32.mrf.mxu0
      %v1476 = vpop.f32.mrf.mxu0
      %v1477 = vadd.f32 0.0, %v1476
      %v1478 = vpop.f32.mrf.mxu0
      %1479 = vmatprep.mubr.bf16.mxu0 0
      %1480 = vmatmul.mubr.bf16.gmra.mxu0 %v1251
      %v1481 = vpop.f32.mrf.mxu0
      %v1482 = vadd.f32 0.0, %v1481
      %v1483 = vpop.f32.mrf.mxu0
      %v1484 = vpop.f32.mrf.mxu0
      %v1485 = vadd.f32 0.0, %v1484
      %v1486 = vpop.f32.mrf.mxu0
      %1487 = vmatprep.mubr.bf16.mxu0 0
      %1488 = vmatmul.mubr.bf16.gmra.mxu0 %v1252
      %v1489 = vpop.f32.mrf.mxu0
      %v1490 = vadd.f32 0.0, %v1489
      %v1491 = vpop.f32.mrf.mxu0
      %v1492 = vpop.f32.mrf.mxu0
      %v1493 = vadd.f32 0.0, %v1492
      %v1494 = vpop.f32.mrf.mxu0
      %1495 = vmatprep.mubr.bf16.mxu0 0
      %1496 = vmatmul.mubr.bf16.gmra.mxu0 %v1253
      %v1497 = vpop.f32.mrf.mxu0
      %v1498 = vadd.f32 0.0, %v1497
      %v1499 = vpop.f32.mrf.mxu0
      %v1500 = vpop.f32.mrf.mxu0
      %v1501 = vadd.f32 0.0, %v1500
      %v1502 = vpop.f32.mrf.mxu0
      %1503 = vmatprep.mubr.bf16.mxu0 0
      %1504 = vmatmul.mubr.bf16.gmra.mxu0 %v1254
      %v1505 = vpop.f32.mrf.mxu0
      %v1506 = vadd.f32 0.0, %v1505
      %v1507 = vpop.f32.mrf.mxu0
      %v1508 = vpop.f32.mrf.mxu0
      %v1509 = vadd.f32 0.0, %v1508
      %v1510 = vpop.f32.mrf.mxu0
      %1511 = vmatprep.mubr.bf16.mxu0 0
      %1512 = vmatmul.mubr.bf16.gmra.mxu0 %v1255
      %v1513 = vpop.f32.mrf.mxu0
      %v1514 = vadd.f32 0.0, %v1513
      %v1515 = vpop.f32.mrf.mxu0
      %v1516 = vpop.f32.mrf.mxu0
      %v1517 = vadd.f32 0.0, %v1516
      %v1518 = vpop.f32.mrf.mxu0
      %1519 = vmatprep.mubr.bf16.mxu0 0
      %1520 = vmatmul.mubr.bf16.gmra.mxu0 %v1256
      %v1521 = vpop.f32.mrf.mxu0
      %v1522 = vadd.f32 0.0, %v1521
      %v1523 = vpop.f32.mrf.mxu0
      %v1524 = vpop.f32.mrf.mxu0
      %v1525 = vadd.f32 0.0, %v1524
      %v1526 = vpop.f32.mrf.mxu0
      %1527 = vmatprep.mubr.bf16.mxu0 0
      %1528 = vmatmul.mubr.bf16.gmra.mxu0 %v1257
      %v1529 = vpop.f32.mrf.mxu0
      %v1530 = vadd.f32 0.0, %v1529
      %v1531 = vpop.f32.mrf.mxu0
      %v1532 = vpop.f32.mrf.mxu0
      %v1533 = vadd.f32 0.0, %v1532
      %v1534 = vpop.f32.mrf.mxu0
      %1535 = vmatprep.mubr.bf16.mxu0 0
      %1536 = vmatmul.mubr.bf16.gmra.mxu0 %v1258
      %v1537 = vpop.f32.mrf.mxu0
      %v1538 = vadd.f32 0.0, %v1537
      %v1539 = vpop.f32.mrf.mxu0
      %v1540 = vpop.f32.mrf.mxu0
      %v1541 = vadd.f32 0.0, %v1540
      %v1542 = vpop.f32.mrf.mxu0
      %1543 = vmatprep.mubr.bf16.mxu0 0
      %1544 = vmatmul.mubr.bf16.gmra.mxu0 %v1259
      %v1545 = vpop.f32.mrf.mxu0
      %v1546 = vadd.f32 0.0, %v1545
      %v1547 = vpop.f32.mrf.mxu0
      %v1548 = vpop.f32.mrf.mxu0
      %v1549 = vadd.f32 0.0, %v1548
      %v1550 = vpop.f32.mrf.mxu0
      %1551 = vmatprep.mubr.bf16.mxu0 0
      %1552 = vmatmul.mubr.bf16.gmra.mxu0 %v1260
      %v1553 = vpop.f32.mrf.mxu0
      %v1554 = vadd.f32 0.0, %v1553
      %v1555 = vpop.f32.mrf.mxu0
      %v1556 = vpop.f32.mrf.mxu0
      %v1557 = vadd.f32 0.0, %v1556
      %v1558 = vpop.f32.mrf.mxu0
      %1559 = vmatprep.mubr.bf16.mxu0 0
      %1560 = vmatmul.mubr.bf16.gmra.mxu0 %v1261
      %v1561 = vpop.f32.mrf.mxu0
      %v1562 = vadd.f32 0.0, %v1561
      %v1563 = vpop.f32.mrf.mxu0
      %v1564 = vpop.f32.mrf.mxu0
      %v1565 = vadd.f32 0.0, %v1564
      %v1566 = vpop.f32.mrf.mxu0
      %1567 = vmatprep.mubr.bf16.mxu0 0
      %1568 = vmatmul.mubr.bf16.gmra.mxu0 %v1262
      %v1569 = vpop.f32.mrf.mxu0
      %v1570 = vadd.f32 0.0, %v1569
      %v1571 = vpop.f32.mrf.mxu0
      %v1572 = vpop.f32.mrf.mxu0
      %v1573 = vadd.f32 0.0, %v1572
      %v1574 = vpop.f32.mrf.mxu0
      %1575 = vmatprep.mubr.bf16.mxu0 0
      %1576 = vmatmul.mubr.bf16.gmra.mxu0 %v1263
      %v1577 = vpop.f32.mrf.mxu0
      %v1578 = vadd.f32 0.0, %v1577
      %v1579 = vpop.f32.mrf.mxu0
      %v1580 = vpop.f32.mrf.mxu0
      %v1581 = vadd.f32 0.0, %v1580
      %v1582 = vpop.f32.mrf.mxu0
      %1583 = vmatprep.mubr.bf16.mxu0 0
      %1584 = vmatmul.mubr.bf16.gmra.mxu0 %v1264
      %v1585 = vpop.f32.mrf.mxu0
      %v1586 = vadd.f32 0.0, %v1585
      %v1587 = vpop.f32.mrf.mxu0
      %v1588 = vpop.f32.mrf.mxu0
      %v1589 = vadd.f32 0.0, %v1588
      %v1590 = vpop.f32.mrf.mxu0
      %1591 = vmatprep.mubr.bf16.mxu0 0
      %1592 = vmatmul.mubr.bf16.gmra.mxu0 %v1265
      %v1593 = vpop.f32.mrf.mxu0
      %v1594 = vadd.f32 0.0, %v1593
      %v1595 = vpop.f32.mrf.mxu0
      %v1596 = vpop.f32.mrf.mxu0
      %v1597 = vadd.f32 0.0, %v1596
      %v1598 = vpop.f32.mrf.mxu0
      %1599 = vmatprep.mubr.bf16.mxu0 0
      %1600 = vmatmul.mubr.bf16.gmra.mxu0 %v1266
      %v1601 = vpop.f32.mrf.mxu0
      %v1602 = vadd.f32 0.0, %v1601
      %v1603 = vpop.f32.mrf.mxu0
      %v1604 = vpop.f32.mrf.mxu0
      %v1605 = vadd.f32 0.0, %v1604
      %v1606 = vpop.f32.mrf.mxu0
      %1607 = vmatprep.mubr.bf16.mxu0 0
      %1608 = vmatmul.mubr.bf16.gmra.mxu0 %v1267
      %v1609 = vpop.f32.mrf.mxu0
      %v1610 = vadd.f32 0.0, %v1609
      %v1611 = vpop.f32.mrf.mxu0
      %v1612 = vpop.f32.mrf.mxu0
      %v1613 = vadd.f32 0.0, %v1612
      %v1614 = vpop.f32.mrf.mxu0
      %1615 = vmatprep.mubr.bf16.mxu0 0
      %1616 = vmatmul.mubr.bf16.gmra.mxu0 %v1268
      %v1617 = vpop.f32.mrf.mxu0
      %v1618 = vadd.f32 0.0, %v1617
      %v1619 = vpop.f32.mrf.mxu0
      %v1620 = vpop.f32.mrf.mxu0
      %v1621 = vadd.f32 0.0, %v1620
      %v1622 = vpop.f32.mrf.mxu0
      %1623 = vmatprep.mubr.bf16.mxu0 0
      %1624 = vmatmul.mubr.bf16.gmra.mxu0 %v1269
      %v1625 = vpop.f32.mrf.mxu0
      %v1626 = vadd.f32 0.0, %v1625
      %v1627 = vpop.f32.mrf.mxu0
      %v1628 = vpop.f32.mrf.mxu0
      %v1629 = vadd.f32 0.0, %v1628
      %v1630 = vpop.f32.mrf.mxu0
      %1631 = vmatprep.mubr.bf16.mxu0 0
      %1632 = vmatmul.mubr.bf16.gmra.mxu0 %v1270
      %v1633 = vpop.f32.mrf.mxu0
      %v1634 = vadd.f32 0.0, %v1633
      %v1635 = vpop.f32.mrf.mxu0
      %v1636 = vpop.f32.mrf.mxu0
      %v1637 = vadd.f32 0.0, %v1636
      %v1638 = vpop.f32.mrf.mxu0
      %1639 = vdwg.mxu0
      %v1640 = vld [vmem:[%s5 + $0x4] sm:$0x1]
      %v1641 = vlaneseq
      %v1642 = vshrl.u32 %v1641, 7
      %v1643 = vsub.s32 0, %v1642
      %v1644 = vrot.slane %v1640, %v1643
      %v1645 = vmul.f32 %v1386, %v1644
      %v1646 = vmul.f32 %v1389, %v1644
      %v1647 = vmul.f32 %v1394, %v1644
      %v1648 = vmul.f32 %v1397, %v1644
      %v1649 = vmul.f32 %v1402, %v1644
      %v1650 = vmul.f32 %v1405, %v1644
      %v1651 = vmul.f32 %v1410, %v1644
      %v1652 = vmul.f32 %v1413, %v1644
      %v1653 = vmul.f32 %v1418, %v1644
      %v1654 = vmul.f32 %v1421, %v1644
      %v1655 = vmul.f32 %v1426, %v1644
      %v1656 = vmul.f32 %v1429, %v1644
      %v1657 = vmul.f32 %v1434, %v1644
      %v1658 = vmul.f32 %v1437, %v1644
      %v1659 = vmul.f32 %v1442, %v1644
      %v1660 = vmul.f32 %v1445, %v1644
      %v1661 = vmul.f32 %v1450, %v1644
      %v1662 = vmul.f32 %v1453, %v1644
      %v1663 = vmul.f32 %v1458, %v1644
      %v1664 = vmul.f32 %v1461, %v1644
      %v1665 = vmul.f32 %v1466, %v1644
      %v1666 = vmul.f32 %v1469, %v1644
      %v1667 = vmul.f32 %v1474, %v1644
      %v1668 = vmul.f32 %v1477, %v1644
      %v1669 = vmul.f32 %v1482, %v1644
      %v1670 = vmul.f32 %v1485, %v1644
      %v1671 = vmul.f32 %v1490, %v1644
      %v1672 = vmul.f32 %v1493, %v1644
      %v1673 = vmul.f32 %v1498, %v1644
      %v1674 = vmul.f32 %v1501, %v1644
      %v1675 = vmul.f32 %v1506, %v1644
      %v1676 = vmul.f32 %v1509, %v1644
      %v1677 = vmul.f32 %v1514, %v1644
      %v1678 = vmul.f32 %v1517, %v1644
      %v1679 = vmul.f32 %v1522, %v1644
      %v1680 = vmul.f32 %v1525, %v1644
      %v1681 = vmul.f32 %v1530, %v1644
      %v1682 = vmul.f32 %v1533, %v1644
      %v1683 = vmul.f32 %v1538, %v1644
      %v1684 = vmul.f32 %v1541, %v1644
      %v1685 = vmul.f32 %v1546, %v1644
      %v1686 = vmul.f32 %v1549, %v1644
      %v1687 = vmul.f32 %v1554, %v1644
      %v1688 = vmul.f32 %v1557, %v1644
      %v1689 = vmul.f32 %v1562, %v1644
      %v1690 = vmul.f32 %v1565, %v1644
      %v1691 = vmul.f32 %v1570, %v1644
      %v1692 = vmul.f32 %v1573, %v1644
      %v1693 = vmul.f32 %v1578, %v1644
      %v1694 = vmul.f32 %v1581, %v1644
      %v1695 = vmul.f32 %v1586, %v1644
      %v1696 = vmul.f32 %v1589, %v1644
      %v1697 = vmul.f32 %v1594, %v1644
      %v1698 = vmul.f32 %v1597, %v1644
      %v1699 = vmul.f32 %v1602, %v1644
      %v1700 = vmul.f32 %v1605, %v1644
      %v1701 = vmul.f32 %v1610, %v1644
      %v1702 = vmul.f32 %v1613, %v1644
      %v1703 = vmul.f32 %v1618, %v1644
      %v1704 = vmul.f32 %v1621, %v1644
      %v1705 = vmul.f32 %v1626, %v1644
      %v1706 = vmul.f32 %v1629, %v1644
      %v1707 = vmul.f32 %v1634, %v1644
      %v1708 = vmul.f32 %v1637, %v1644
      %v1709 = vld [vmem:[%s5 + $0x5] sm:$0x1]
      %v1710 = vlaneseq
      %v1711 = vshrl.u32 %v1710, 7
      %v1712 = vsub.s32 0, %v1711
      %v1713 = vrot.slane %v1709, %v1712
      %v1714 = vadd.f32 %v1645, %v1713
      %v1715 = vadd.f32 %v1646, %v1713
      %v1716 = vadd.f32 %v1647, %v1713
      %v1717 = vadd.f32 %v1648, %v1713
      %v1718 = vadd.f32 %v1649, %v1713
      %v1719 = vadd.f32 %v1650, %v1713
      %v1720 = vadd.f32 %v1651, %v1713
      %v1721 = vadd.f32 %v1652, %v1713
      %v1722 = vadd.f32 %v1653, %v1713
      %v1723 = vadd.f32 %v1654, %v1713
      %v1724 = vadd.f32 %v1655, %v1713
      %v1725 = vadd.f32 %v1656, %v1713
      %v1726 = vadd.f32 %v1657, %v1713
      %v1727 = vadd.f32 %v1658, %v1713
      %v1728 = vadd.f32 %v1659, %v1713
      %v1729 = vadd.f32 %v1660, %v1713
      %v1730 = vadd.f32 %v1661, %v1713
      %v1731 = vadd.f32 %v1662, %v1713
      %v1732 = vadd.f32 %v1663, %v1713
      %v1733 = vadd.f32 %v1664, %v1713
      %v1734 = vadd.f32 %v1665, %v1713
      %v1735 = vadd.f32 %v1666, %v1713
      %v1736 = vadd.f32 %v1667, %v1713
      %v1737 = vadd.f32 %v1668, %v1713
      %v1738 = vadd.f32 %v1669, %v1713
      %v1739 = vadd.f32 %v1670, %v1713
      %v1740 = vadd.f32 %v1671, %v1713
      %v1741 = vadd.f32 %v1672, %v1713
      %v1742 = vadd.f32 %v1673, %v1713
      %v1743 = vadd.f32 %v1674, %v1713
      %v1744 = vadd.f32 %v1675, %v1713
      %v1745 = vadd.f32 %v1676, %v1713
      %v1746 = vadd.f32 %v1677, %v1713
      %v1747 = vadd.f32 %v1678, %v1713
      %v1748 = vadd.f32 %v1679, %v1713
      %v1749 = vadd.f32 %v1680, %v1713
      %v1750 = vadd.f32 %v1681, %v1713
      %v1751 = vadd.f32 %v1682, %v1713
      %v1752 = vadd.f32 %v1683, %v1713
      %v1753 = vadd.f32 %v1684, %v1713
      %v1754 = vadd.f32 %v1685, %v1713
      %v1755 = vadd.f32 %v1686, %v1713
      %v1756 = vadd.f32 %v1687, %v1713
      %v1757 = vadd.f32 %v1688, %v1713
      %v1758 = vadd.f32 %v1689, %v1713
      %v1759 = vadd.f32 %v1690, %v1713
      %v1760 = vadd.f32 %v1691, %v1713
      %v1761 = vadd.f32 %v1692, %v1713
      %v1762 = vadd.f32 %v1693, %v1713
      %v1763 = vadd.f32 %v1694, %v1713
      %v1764 = vadd.f32 %v1695, %v1713
      %v1765 = vadd.f32 %v1696, %v1713
      %v1766 = vadd.f32 %v1697, %v1713
      %v1767 = vadd.f32 %v1698, %v1713
      %v1768 = vadd.f32 %v1699, %v1713
      %v1769 = vadd.f32 %v1700, %v1713
      %v1770 = vadd.f32 %v1701, %v1713
      %v1771 = vadd.f32 %v1702, %v1713
      %v1772 = vadd.f32 %v1703, %v1713
      %v1773 = vadd.f32 %v1704, %v1713
      %v1774 = vadd.f32 %v1705, %v1713
      %v1775 = vadd.f32 %v1706, %v1713
      %v1776 = vadd.f32 %v1707, %v1713
      %v1777 = vadd.f32 %v1708, %v1713
      %v1778 = vmax.f32 %v1714, 0.0
      %v1779 = vmax.f32 %v1715, 0.0
      %v1780 = vmax.f32 %v1716, 0.0
      %v1781 = vmax.f32 %v1717, 0.0
      %v1782 = vmax.f32 %v1718, 0.0
      %v1783 = vmax.f32 %v1719, 0.0
      %v1784 = vmax.f32 %v1720, 0.0
      %v1785 = vmax.f32 %v1721, 0.0
      %v1786 = vmax.f32 %v1722, 0.0
      %v1787 = vmax.f32 %v1723, 0.0
      %v1788 = vmax.f32 %v1724, 0.0
      %v1789 = vmax.f32 %v1725, 0.0
      %v1790 = vmax.f32 %v1726, 0.0
      %v1791 = vmax.f32 %v1727, 0.0
      %v1792 = vmax.f32 %v1728, 0.0
      %v1793 = vmax.f32 %v1729, 0.0
      %v1794 = vmax.f32 %v1730, 0.0
      %v1795 = vmax.f32 %v1731, 0.0
      %v1796 = vmax.f32 %v1732, 0.0
      %v1797 = vmax.f32 %v1733, 0.0
      %v1798 = vmax.f32 %v1734, 0.0
      %v1799 = vmax.f32 %v1735, 0.0
      %v1800 = vmax.f32 %v1736, 0.0
      %v1801 = vmax.f32 %v1737, 0.0
      %v1802 = vmax.f32 %v1738, 0.0
      %v1803 = vmax.f32 %v1739, 0.0
      %v1804 = vmax.f32 %v1740, 0.0
      %v1805 = vmax.f32 %v1741, 0.0
      %v1806 = vmax.f32 %v1742, 0.0
      %v1807 = vmax.f32 %v1743, 0.0
      %v1808 = vmax.f32 %v1744, 0.0
      %v1809 = vmax.f32 %v1745, 0.0
      %v1810 = vmax.f32 %v1746, 0.0
      %v1811 = vmax.f32 %v1747, 0.0
      %v1812 = vmax.f32 %v1748, 0.0
      %v1813 = vmax.f32 %v1749, 0.0
      %v1814 = vmax.f32 %v1750, 0.0
      %v1815 = vmax.f32 %v1751, 0.0
      %v1816 = vmax.f32 %v1752, 0.0
      %v1817 = vmax.f32 %v1753, 0.0
      %v1818 = vmax.f32 %v1754, 0.0
      %v1819 = vmax.f32 %v1755, 0.0
      %v1820 = vmax.f32 %v1756, 0.0
      %v1821 = vmax.f32 %v1757, 0.0
      %v1822 = vmax.f32 %v1758, 0.0
      %v1823 = vmax.f32 %v1759, 0.0
      %v1824 = vmax.f32 %v1760, 0.0
      %v1825 = vmax.f32 %v1761, 0.0
      %v1826 = vmax.f32 %v1762, 0.0
      %v1827 = vmax.f32 %v1763, 0.0
      %v1828 = vmax.f32 %v1764, 0.0
      %v1829 = vmax.f32 %v1765, 0.0
      %v1830 = vmax.f32 %v1766, 0.0
      %v1831 = vmax.f32 %v1767, 0.0
      %v1832 = vmax.f32 %v1768, 0.0
      %v1833 = vmax.f32 %v1769, 0.0
      %v1834 = vmax.f32 %v1770, 0.0
      %v1835 = vmax.f32 %v1771, 0.0
      %v1836 = vmax.f32 %v1772, 0.0
      %v1837 = vmax.f32 %v1773, 0.0
      %v1838 = vmax.f32 %v1774, 0.0
      %v1839 = vmax.f32 %v1775, 0.0
      %v1840 = vmax.f32 %v1776, 0.0
      %v1841 = vmax.f32 %v1777, 0.0
      %v1842 = vpack.c.bf16 %v1095, %v1094
      %v1843 = vpack.c.bf16 %v1097, %v1096
      %v1844 = vpack.c.bf16 %v1099, %v1098
      %v1845 = vpack.c.bf16 %v1101, %v1100
      %v1846 = vpack.c.bf16 %v1103, %v1102
      %v1847 = vpack.c.bf16 %v1105, %v1104
      %v1848 = vpack.c.bf16 %v1107, %v1106
      %v1849 = vpack.c.bf16 %v1109, %v1108
      %v1850 = vpack.c.bf16 %v1111, %v1110
      %v1851 = vpack.c.bf16 %v1113, %v1112
      %v1852 = vpack.c.bf16 %v1115, %v1114
      %v1853 = vpack.c.bf16 %v1117, %v1116
      %v1854 = vpack.c.bf16 %v1119, %v1118
      %v1855 = vpack.c.bf16 %v1121, %v1120
      %v1856 = vpack.c.bf16 %v1123, %v1122
      %v1857 = vpack.c.bf16 %v1125, %v1124
      %v1858 = vpack.c.bf16 %v1127, %v1126
      %v1859 = vpack.c.bf16 %v1129, %v1128
      %v1860 = vpack.c.bf16 %v1131, %v1130
      %v1861 = vpack.c.bf16 %v1133, %v1132
      %v1862 = vpack.c.bf16 %v1135, %v1134
      %v1863 = vpack.c.bf16 %v1137, %v1136
      %v1864 = vpack.c.bf16 %v1139, %v1138
      %v1865 = vpack.c.bf16 %v1141, %v1140
      %v1866 = vpack.c.bf16 %v1143, %v1142
      %v1867 = vpack.c.bf16 %v1145, %v1144
      %v1868 = vpack.c.bf16 %v1147, %v1146
      %v1869 = vpack.c.bf16 %v1149, %v1148
      %v1870 = vpack.c.bf16 %v1151, %v1150
      %v1871 = vpack.c.bf16 %v1153, %v1152
      %v1872 = vpack.c.bf16 %v1155, %v1154
      %v1873 = vpack.c.bf16 %v1157, %v1156
      %v1906 = vunpack.c.l.b16 %v1842
      %v1907 = vunpack.c.h.b16 %v1842
      %v1908 = vunpack.c.l.b16 %v1843
      %v1909 = vunpack.c.h.b16 %v1843
      %v1910 = vunpack.c.l.b16 %v1844
      %v1911 = vunpack.c.h.b16 %v1844
      %v1912 = vunpack.c.l.b16 %v1845
      %v1913 = vunpack.c.h.b16 %v1845
      %v1914 = vunpack.c.l.b16 %v1846
      %v1915 = vunpack.c.h.b16 %v1846
      %v1916 = vunpack.c.l.b16 %v1847
      %v1917 = vunpack.c.h.b16 %v1847
      %v1918 = vunpack.c.l.b16 %v1848
      %v1919 = vunpack.c.h.b16 %v1848
      %v1920 = vunpack.c.l.b16 %v1849
      %v1921 = vunpack.c.h.b16 %v1849
      %v1922 = vunpack.c.l.b16 %v1850
      %v1923 = vunpack.c.h.b16 %v1850
      %v1924 = vunpack.c.l.b16 %v1851
      %v1925 = vunpack.c.h.b16 %v1851
      %v1926 = vunpack.c.l.b16 %v1852
      %v1927 = vunpack.c.h.b16 %v1852
      %v1928 = vunpack.c.l.b16 %v1853
      %v1929 = vunpack.c.h.b16 %v1853
      %v1930 = vunpack.c.l.b16 %v1854
      %v1931 = vunpack.c.h.b16 %v1854
      %v1932 = vunpack.c.l.b16 %v1855
      %v1933 = vunpack.c.h.b16 %v1855
      %v1934 = vunpack.c.l.b16 %v1856
      %v1935 = vunpack.c.h.b16 %v1856
      %v1936 = vunpack.c.l.b16 %v1857
      %v1937 = vunpack.c.h.b16 %v1857
      %v1938 = vunpack.c.l.b16 %v1858
      %v1939 = vunpack.c.h.b16 %v1858
      %v1940 = vunpack.c.l.b16 %v1859
      %v1941 = vunpack.c.h.b16 %v1859
      %v1942 = vunpack.c.l.b16 %v1860
      %v1943 = vunpack.c.h.b16 %v1860
      %v1944 = vunpack.c.l.b16 %v1861
      %v1945 = vunpack.c.h.b16 %v1861
      %v1946 = vunpack.c.l.b16 %v1862
      %v1947 = vunpack.c.h.b16 %v1862
      %v1948 = vunpack.c.l.b16 %v1863
      %v1949 = vunpack.c.h.b16 %v1863
      %v1950 = vunpack.c.l.b16 %v1864
      %v1951 = vunpack.c.h.b16 %v1864
      %v1952 = vunpack.c.l.b16 %v1865
      %v1953 = vunpack.c.h.b16 %v1865
      %v1954 = vunpack.c.l.b16 %v1866
      %v1955 = vunpack.c.h.b16 %v1866
      %v1956 = vunpack.c.l.b16 %v1867
      %v1957 = vunpack.c.h.b16 %v1867
      %v1958 = vunpack.c.l.b16 %v1868
      %v1959 = vunpack.c.h.b16 %v1868
      %v1960 = vunpack.c.l.b16 %v1869
      %v1961 = vunpack.c.h.b16 %v1869
      %v1962 = vunpack.c.l.b16 %v1870
      %v1963 = vunpack.c.h.b16 %v1870
      %v1964 = vunpack.c.l.b16 %v1871
      %v1965 = vunpack.c.h.b16 %v1871
      %v1966 = vunpack.c.l.b16 %v1872
      %v1967 = vunpack.c.h.b16 %v1872
      %v1968 = vunpack.c.l.b16 %v1873
      %v1969 = vunpack.c.h.b16 %v1873
      %v1970 = vpack.c.b16 %v1906, %v1906
      %v1971 = vpack.c.b16 %v1907, %v1907
      %v1972 = vpack.c.b16 %v1908, %v1908
      %v1973 = vpack.c.b16 %v1909, %v1909
      %v1974 = vpack.c.b16 %v1910, %v1910
      %v1975 = vpack.c.b16 %v1911, %v1911
      %v1976 = vpack.c.b16 %v1912, %v1912
      %v1977 = vpack.c.b16 %v1913, %v1913
      %v1978 = vpack.c.b16 %v1914, %v1914
      %v1979 = vpack.c.b16 %v1915, %v1915
      %v1980 = vpack.c.b16 %v1916, %v1916
      %v1981 = vpack.c.b16 %v1917, %v1917
      %v1982 = vpack.c.b16 %v1918, %v1918
      %v1983 = vpack.c.b16 %v1919, %v1919
      %v1984 = vpack.c.b16 %v1920, %v1920
      %v1985 = vpack.c.b16 %v1921, %v1921
      %v1986 = vpack.c.b16 %v1922, %v1922
      %v1987 = vpack.c.b16 %v1923, %v1923
      %v1988 = vpack.c.b16 %v1924, %v1924
      %v1989 = vpack.c.b16 %v1925, %v1925
      %v1990 = vpack.c.b16 %v1926, %v1926
      %v1991 = vpack.c.b16 %v1927, %v1927
      %v1992 = vpack.c.b16 %v1928, %v1928
      %v1993 = vpack.c.b16 %v1929, %v1929
      %v1994 = vpack.c.b16 %v1930, %v1930
      %v1995 = vpack.c.b16 %v1931, %v1931
      %v1996 = vpack.c.b16 %v1932, %v1932
      %v1997 = vpack.c.b16 %v1933, %v1933
      %v1998 = vpack.c.b16 %v1934, %v1934
      %v1999 = vpack.c.b16 %v1935, %v1935
      %v2000 = vpack.c.b16 %v1936, %v1936
      %v2001 = vpack.c.b16 %v1937, %v1937
      %v2002 = vpack.c.b16 %v1938, %v1938
      %v2003 = vpack.c.b16 %v1939, %v1939
      %v2004 = vpack.c.b16 %v1940, %v1940
      %v2005 = vpack.c.b16 %v1941, %v1941
      %v2006 = vpack.c.b16 %v1942, %v1942
      %v2007 = vpack.c.b16 %v1943, %v1943
      %v2008 = vpack.c.b16 %v1944, %v1944
      %v2009 = vpack.c.b16 %v1945, %v1945
      %v2010 = vpack.c.b16 %v1946, %v1946
      %v2011 = vpack.c.b16 %v1947, %v1947
      %v2012 = vpack.c.b16 %v1948, %v1948
      %v2013 = vpack.c.b16 %v1949, %v1949
      %v2014 = vpack.c.b16 %v1950, %v1950
      %v2015 = vpack.c.b16 %v1951, %v1951
      %v2016 = vpack.c.b16 %v1952, %v1952
      %v2017 = vpack.c.b16 %v1953, %v1953
      %v2018 = vpack.c.b16 %v1954, %v1954
      %v2019 = vpack.c.b16 %v1955, %v1955
      %v2020 = vpack.c.b16 %v1956, %v1956
      %v2021 = vpack.c.b16 %v1957, %v1957
      %v2022 = vpack.c.b16 %v1958, %v1958
      %v2023 = vpack.c.b16 %v1959, %v1959
      %v2024 = vpack.c.b16 %v1960, %v1960
      %v2025 = vpack.c.b16 %v1961, %v1961
      %v2026 = vpack.c.b16 %v1962, %v1962
      %v2027 = vpack.c.b16 %v1963, %v1963
      %v2028 = vpack.c.b16 %v1964, %v1964
      %v2029 = vpack.c.b16 %v1965, %v1965
      %v2030 = vpack.c.b16 %v1966, %v1966
      %v2031 = vpack.c.b16 %v1967, %v1967
      %v2032 = vpack.c.b16 %v1968, %v1968
      %v2033 = vpack.c.b16 %v1969, %v1969
      %2098 = vst [vmem:[%s340] sm:$0xf] %v1970
      %2099 = vst [vmem:[%s340 + $0x4] sm:$0xf] %v1971
      %2100 = vst [vmem:[%s340 + $0x8] sm:$0xf] %v1972
      %2101 = vst [vmem:[%s340 + $0xc] sm:$0xf] %v1973
      %2102 = vst [vmem:[%s340 + $0x10] sm:$0xf] %v1974
      %2103 = vst [vmem:[%s340 + $0x14] sm:$0xf] %v1975
      %2104 = vst [vmem:[%s340 + $0x18] sm:$0xf] %v1976
      %2105 = vst [vmem:[%s340 + $0x1c] sm:$0xf] %v1977
      %2106 = vst [vmem:[%s340 + $0x20] sm:$0xf] %v1978
      %2107 = vst [vmem:[%s340 + $0x24] sm:$0xf] %v1979
      %2108 = vst [vmem:[%s340 + $0x28] sm:$0xf] %v1980
      %2109 = vst [vmem:[%s340 + $0x2c] sm:$0xf] %v1981
      %2110 = vst [vmem:[%s340 + $0x30] sm:$0xf] %v1982
      %2111 = vst [vmem:[%s340 + $0x34] sm:$0xf] %v1983
      %2112 = vst [vmem:[%s340 + $0x38] sm:$0xf] %v1984
      %2113 = vst [vmem:[%s340 + $0x3c] sm:$0xf] %v1985
      %2114 = vst [vmem:[%s340 + $0x40] sm:$0xf] %v1986
      %2115 = vst [vmem:[%s340 + $0x44] sm:$0xf] %v1987
      %2116 = vst [vmem:[%s340 + $0x48] sm:$0xf] %v1988
      %2117 = vst [vmem:[%s340 + $0x4c] sm:$0xf] %v1989
      %2118 = vst [vmem:[%s340 + $0x50] sm:$0xf] %v1990
      %2119 = vst [vmem:[%s340 + $0x54] sm:$0xf] %v1991
      %2120 = vst [vmem:[%s340 + $0x58] sm:$0xf] %v1992
      %2121 = vst [vmem:[%s340 + $0x5c] sm:$0xf] %v1993
      %2122 = vst [vmem:[%s340 + $0x60] sm:$0xf] %v1994
      %2123 = vst [vmem:[%s340 + $0x64] sm:$0xf] %v1995
      %2124 = vst [vmem:[%s340 + $0x68] sm:$0xf] %v1996
      %2125 = vst [vmem:[%s340 + $0x6c] sm:$0xf] %v1997
      %2126 = vst [vmem:[%s340 + $0x70] sm:$0xf] %v1998
      %2127 = vst [vmem:[%s340 + $0x74] sm:$0xf] %v1999
      %2128 = vst [vmem:[%s340 + $0x78] sm:$0xf] %v2000
      %2129 = vst [vmem:[%s340 + $0x7c] sm:$0xf] %v2001
      %2130 = vst [vmem:[%s340 + $0x80] sm:$0xf] %v2002
      %2131 = vst [vmem:[%s340 + $0x84] sm:$0xf] %v2003
      %2132 = vst [vmem:[%s340 + $0x88] sm:$0xf] %v2004
      %2133 = vst [vmem:[%s340 + $0x8c] sm:$0xf] %v2005
      %2134 = vst [vmem:[%s340 + $0x90] sm:$0xf] %v2006
      %2135 = vst [vmem:[%s340 + $0x94] sm:$0xf] %v2007
      %2136 = vst [vmem:[%s340 + $0x98] sm:$0xf] %v2008
      %2137 = vst [vmem:[%s340 + $0x9c] sm:$0xf] %v2009
      %2138 = vst [vmem:[%s340 + $0xa0] sm:$0xf] %v2010
      %2139 = vst [vmem:[%s340 + $0xa4] sm:$0xf] %v2011
      %2140 = vst [vmem:[%s340 + $0xa8] sm:$0xf] %v2012
      %2141 = vst [vmem:[%s340 + $0xac] sm:$0xf] %v2013
      %2142 = vst [vmem:[%s340 + $0xb0] sm:$0xf] %v2014
      %2143 = vst [vmem:[%s340 + $0xb4] sm:$0xf] %v2015
      %2144 = vst [vmem:[%s340 + $0xb8] sm:$0xf] %v2016
      %2145 = vst [vmem:[%s340 + $0xbc] sm:$0xf] %v2017
      %2146 = vst [vmem:[%s340 + $0xc0] sm:$0xf] %v2018
      %2147 = vst [vmem:[%s340 + $0xc4] sm:$0xf] %v2019
      %2148 = vst [vmem:[%s340 + $0xc8] sm:$0xf] %v2020
      %2149 = vst [vmem:[%s340 + $0xcc] sm:$0xf] %v2021
      %2150 = vst [vmem:[%s340 + $0xd0] sm:$0xf] %v2022
      %2151 = vst [vmem:[%s340 + $0xd4] sm:$0xf] %v2023
      %2152 = vst [vmem:[%s340 + $0xd8] sm:$0xf] %v2024
      %2153 = vst [vmem:[%s340 + $0xdc] sm:$0xf] %v2025
      %2154 = vst [vmem:[%s340 + $0xe0] sm:$0xf] %v2026
      %2155 = vst [vmem:[%s340 + $0xe4] sm:$0xf] %v2027
      %2156 = vst [vmem:[%s340 + $0xe8] sm:$0xf] %v2028
      %2157 = vst [vmem:[%s340 + $0xec] sm:$0xf] %v2029
      %2158 = vst [vmem:[%s340 + $0xf0] sm:$0xf] %v2030
      %2159 = vst [vmem:[%s340 + $0xf4] sm:$0xf] %v2031
      %2160 = vst [vmem:[%s340 + $0xf8] sm:$0xf] %v2032
      %2161 = vst [vmem:[%s340 + $0xfc] sm:$0xf] %v2033
      %v2162 = vld [vmem:[%s2] sm:$0xff]
      %v2163 = vld [vmem:[%s2 + $0x8] sm:$0xff]
      %v2164 = vld [vmem:[%s3] sm:$0xff]
      %v2165 = vadd.f32 %v1778, %v1779
      %v2166 = vadd.f32 %v2165, %v1780
      %v2167 = vadd.f32 %v2166, %v1781
      %v2168 = vadd.f32 %v2167, %v1782
      %v2169 = vadd.f32 %v2168, %v1783
      %v2170 = vadd.f32 %v2169, %v1784
      %v2171 = vadd.f32 %v2170, %v1785
      %v2172 = vadd.f32 %v2171, %v1786
      %v2173 = vadd.f32 %v2172, %v1787
      %v2174 = vadd.f32 %v2173, %v1788
      %v2175 = vadd.f32 %v2174, %v1789
      %v2176 = vadd.f32 %v2175, %v1790
      %v2177 = vadd.f32 %v2176, %v1791
      %v2178 = vadd.f32 %v2177, %v1792
      %v2179 = vadd.f32 %v2178, %v1793
      %v2180 = vadd.f32 %v2179, %v1794
      %v2181 = vadd.f32 %v2180, %v1795
      %v2182 = vadd.f32 %v2181, %v1796
      %v2183 = vadd.f32 %v2182, %v1797
      %v2184 = vadd.f32 %v2183, %v1798
      %v2185 = vadd.f32 %v2184, %v1799
      %v2186 = vadd.f32 %v2185, %v1800
      %v2187 = vadd.f32 %v2186, %v1801
      %v2188 = vadd.f32 %v2187, %v1802
      %v2189 = vadd.f32 %v2188, %v1803
      %v2190 = vadd.f32 %v2189, %v1804
      %v2191 = vadd.f32 %v2190, %v1805
      %v2192 = vadd.f32 %v2191, %v1806
      %v2193 = vadd.f32 %v2192, %v1807
      %v2194 = vadd.f32 %v2193, %v1808
      %v2195 = vadd.f32 %v2194, %v1809
      %v2196 = vadd.f32 %v2195, %v1810
      %v2197 = vadd.f32 %v2196, %v1811
      %v2198 = vadd.f32 %v2197, %v1812
      %v2199 = vadd.f32 %v2198, %v1813
      %v2200 = vadd.f32 %v2199, %v1814
      %v2201 = vadd.f32 %v2200, %v1815
      %v2202 = vadd.f32 %v2201, %v1816
      %v2203 = vadd.f32 %v2202, %v1817
      %v2204 = vadd.f32 %v2203, %v1818
      %v2205 = vadd.f32 %v2204, %v1819
      %v2206 = vadd.f32 %v2205, %v1820
      %v2207 = vadd.f32 %v2206, %v1821
      %v2208 = vadd.f32 %v2207, %v1822
      %v2209 = vadd.f32 %v2208, %v1823
      %v2210 = vadd.f32 %v2209, %v1824
      %v2211 = vadd.f32 %v2210, %v1825
      %v2212 = vadd.f32 %v2211, %v1826
      %v2213 = vadd.f32 %v2212, %v1827
      %v2214 = vadd.f32 %v2213, %v1828
      %v2215 = vadd.f32 %v2214, %v1829
      %v2216 = vadd.f32 %v2215, %v1830
      %v2217 = vadd.f32 %v2216, %v1831
      %v2218 = vadd.f32 %v2217, %v1832
      %v2219 = vadd.f32 %v2218, %v1833
      %v2220 = vadd.f32 %v2219, %v1834
      %v2221 = vadd.f32 %v2220, %v1835
      %v2222 = vadd.f32 %v2221, %v1836
      %v2223 = vadd.f32 %v2222, %v1837
      %v2224 = vadd.f32 %v2223, %v1838
      %v2225 = vadd.f32 %v2224, %v1839
      %v2226 = vadd.f32 %v2225, %v1840
      %v2227 = vadd.f32 %v2226, %v1841
      %v2228 = vrot.slane %v2227, 4
      %v2229 = vadd.f32 %v2227, %v2228
      %v2230 = vrot.slane %v2229, 2
      %v2231 = vadd.f32 %v2229, %v2230
      %v2232 = vrot.slane %v2231, 1
      %v2233 = vadd.f32 %v2231, %v2232
      %v2234 = vrcp.pop 512.0
      %v2235 = vmul.f32 %v2233, %v2234
      %v2236 = vmul.f32 %v2235, %v2162
      %2237 = vadd.xlane.f32.xlu0 %v2236
      %v2238 = vpop.xlane.xlu0 %2237
      %v2239 = vadd.f32 %v2238, %v2164
      %v2240 = vmax.f32 %v2239, 0.0
      %2242 = vset.pattern.permute.xlu0 0
      %2243 = vperm.xlu0 %2242, %v2240
      %v2244 = vpop.permute.xlu0 %2243
      %v2246 = vmul.f32 %v2244, %v2163
      %v2247 = vrot.slane %v2246, 4
      %v2248 = vadd.f32 %v2246, %v2247
      %v2249 = vrot.slane %v2248, 2
      %v2250 = vadd.f32 %v2248, %v2249
      %v2251 = vrot.slane %v2250, 1
      %v2252 = vadd.f32 %v2250, %v2251
      %v2253 = vld [vmem:[%s5 + $0x8] sm:$0x1]
      %v2254 = vadd.f32 %v2252, %v2253
      %v2255 = vxor.u32 %v2254, 2147483648
      %v2256 = vmul.f32 %v2255, 1.442695
      %v2257 = vpow.pop %v2256
      %v2258 = vadd.f32 %v2257, 1.0
      %v2259 = vrcp.pop %v2258
      %v2260 = vmul.f32 1.0, %v2259
      %v2261 = vld [vmem:[%s5 + $0x9] sm:$0x1]
      %v2262 = vlaneseq
      %v2263 = vshrl.u32 %v2262, 7
      %v2264 = vsub.s32 0, %v2263
      %v2265 = vrot.slane %v2261, %v2264
      %v2266 = vmul.f32 %v1778, %v2265
      %v2267 = vmul.f32 %v1779, %v2265
      %v2268 = vmul.f32 %v1780, %v2265
      %v2269 = vmul.f32 %v1781, %v2265
      %v2270 = vmul.f32 %v1782, %v2265
      %v2271 = vmul.f32 %v1783, %v2265
      %v2272 = vmul.f32 %v1784, %v2265
      %v2273 = vmul.f32 %v1785, %v2265
      %v2274 = vmul.f32 %v1786, %v2265
      %v2275 = vmul.f32 %v1787, %v2265
      %v2276 = vmul.f32 %v1788, %v2265
      %v2277 = vmul.f32 %v1789, %v2265
      %v2278 = vmul.f32 %v1790, %v2265
      %v2279 = vmul.f32 %v1791, %v2265
      %v2280 = vmul.f32 %v1792, %v2265
      %v2281 = vmul.f32 %v1793, %v2265
      %v2282 = vmul.f32 %v1794, %v2265
      %v2283 = vmul.f32 %v1795, %v2265
      %v2284 = vmul.f32 %v1796, %v2265
      %v2285 = vmul.f32 %v1797, %v2265
      %v2286 = vmul.f32 %v1798, %v2265
      %v2287 = vmul.f32 %v1799, %v2265
      %v2288 = vmul.f32 %v1800, %v2265
      %v2289 = vmul.f32 %v1801, %v2265
      %v2290 = vmul.f32 %v1802, %v2265
      %v2291 = vmul.f32 %v1803, %v2265
      %v2292 = vmul.f32 %v1804, %v2265
      %v2293 = vmul.f32 %v1805, %v2265
      %v2294 = vmul.f32 %v1806, %v2265
      %v2295 = vmul.f32 %v1807, %v2265
      %v2296 = vmul.f32 %v1808, %v2265
      %v2297 = vmul.f32 %v1809, %v2265
      %v2298 = vmul.f32 %v1810, %v2265
      %v2299 = vmul.f32 %v1811, %v2265
      %v2300 = vmul.f32 %v1812, %v2265
      %v2301 = vmul.f32 %v1813, %v2265
      %v2302 = vmul.f32 %v1814, %v2265
      %v2303 = vmul.f32 %v1815, %v2265
      %v2304 = vmul.f32 %v1816, %v2265
      %v2305 = vmul.f32 %v1817, %v2265
      %v2306 = vmul.f32 %v1818, %v2265
      %v2307 = vmul.f32 %v1819, %v2265
      %v2308 = vmul.f32 %v1820, %v2265
      %v2309 = vmul.f32 %v1821, %v2265
      %v2310 = vmul.f32 %v1822, %v2265
      %v2311 = vmul.f32 %v1823, %v2265
      %v2312 = vmul.f32 %v1824, %v2265
      %v2313 = vmul.f32 %v1825, %v2265
      %v2314 = vmul.f32 %v1826, %v2265
      %v2315 = vmul.f32 %v1827, %v2265
      %v2316 = vmul.f32 %v1828, %v2265
      %v2317 = vmul.f32 %v1829, %v2265
      %v2318 = vmul.f32 %v1830, %v2265
      %v2319 = vmul.f32 %v1831, %v2265
      %v2320 = vmul.f32 %v1832, %v2265
      %v2321 = vmul.f32 %v1833, %v2265
      %v2322 = vmul.f32 %v1834, %v2265
      %v2323 = vmul.f32 %v1835, %v2265
      %v2324 = vmul.f32 %v1836, %v2265
      %v2325 = vmul.f32 %v1837, %v2265
      %v2326 = vmul.f32 %v1838, %v2265
      %v2327 = vmul.f32 %v1839, %v2265
      %v2328 = vmul.f32 %v1840, %v2265
      %v2329 = vmul.f32 %v1841, %v2265
      %2330 = vadd.xlane.f32.xlu0 %v2266
      %v2331 = vpop.xlane.xlu0 %2330
      %2332 = vadd.xlane.f32.xlu0 %v2267
      %v2333 = vpop.xlane.xlu0 %2332
      %2334 = vadd.xlane.f32.xlu0 %v2268
      %v2335 = vpop.xlane.xlu0 %2334
      %2336 = vadd.xlane.f32.xlu0 %v2269
      %v2337 = vpop.xlane.xlu0 %2336
      %2338 = vadd.xlane.f32.xlu0 %v2270
      %v2339 = vpop.xlane.xlu0 %2338
      %2340 = vadd.xlane.f32.xlu0 %v2271
      %v2341 = vpop.xlane.xlu0 %2340
      %2342 = vadd.xlane.f32.xlu0 %v2272
      %v2343 = vpop.xlane.xlu0 %2342
      %2344 = vadd.xlane.f32.xlu0 %v2273
      %v2345 = vpop.xlane.xlu0 %2344
      %2346 = vadd.xlane.f32.xlu0 %v2274
      %v2347 = vpop.xlane.xlu0 %2346
      %2348 = vadd.xlane.f32.xlu0 %v2275
      %v2349 = vpop.xlane.xlu0 %2348
      %2350 = vadd.xlane.f32.xlu0 %v2276
      %v2351 = vpop.xlane.xlu0 %2350
      %2352 = vadd.xlane.f32.xlu0 %v2277
      %v2353 = vpop.xlane.xlu0 %2352
      %2354 = vadd.xlane.f32.xlu0 %v2278
      %v2355 = vpop.xlane.xlu0 %2354
      %2356 = vadd.xlane.f32.xlu0 %v2279
      %v2357 = vpop.xlane.xlu0 %2356
      %2358 = vadd.xlane.f32.xlu0 %v2280
      %v2359 = vpop.xlane.xlu0 %2358
      %2360 = vadd.xlane.f32.xlu0 %v2281
      %v2361 = vpop.xlane.xlu0 %2360
      %2362 = vadd.xlane.f32.xlu0 %v2282
      %v2363 = vpop.xlane.xlu0 %2362
      %2364 = vadd.xlane.f32.xlu0 %v2283
      %v2365 = vpop.xlane.xlu0 %2364
      %2366 = vadd.xlane.f32.xlu0 %v2284
      %v2367 = vpop.xlane.xlu0 %2366
      %2368 = vadd.xlane.f32.xlu0 %v2285
      %v2369 = vpop.xlane.xlu0 %2368
      %2370 = vadd.xlane.f32.xlu0 %v2286
      %v2371 = vpop.xlane.xlu0 %2370
      %2372 = vadd.xlane.f32.xlu0 %v2287
      %v2373 = vpop.xlane.xlu0 %2372
      %2374 = vadd.xlane.f32.xlu0 %v2288
      %v2375 = vpop.xlane.xlu0 %2374
      %2376 = vadd.xlane.f32.xlu0 %v2289
      %v2377 = vpop.xlane.xlu0 %2376
      %2378 = vadd.xlane.f32.xlu0 %v2290
      %v2379 = vpop.xlane.xlu0 %2378
      %2380 = vadd.xlane.f32.xlu0 %v2291
      %v2381 = vpop.xlane.xlu0 %2380
      %2382 = vadd.xlane.f32.xlu0 %v2292
      %v2383 = vpop.xlane.xlu0 %2382
      %2384 = vadd.xlane.f32.xlu0 %v2293
      %v2385 = vpop.xlane.xlu0 %2384
      %2386 = vadd.xlane.f32.xlu0 %v2294
      %v2387 = vpop.xlane.xlu0 %2386
      %2388 = vadd.xlane.f32.xlu0 %v2295
      %v2389 = vpop.xlane.xlu0 %2388
      %2390 = vadd.xlane.f32.xlu0 %v2296
      %v2391 = vpop.xlane.xlu0 %2390
      %2392 = vadd.xlane.f32.xlu0 %v2297
      %v2393 = vpop.xlane.xlu0 %2392
      %2394 = vadd.xlane.f32.xlu0 %v2298
      %v2395 = vpop.xlane.xlu0 %2394
      %2396 = vadd.xlane.f32.xlu0 %v2299
      %v2397 = vpop.xlane.xlu0 %2396
      %2398 = vadd.xlane.f32.xlu0 %v2300
      %v2399 = vpop.xlane.xlu0 %2398
      %2400 = vadd.xlane.f32.xlu0 %v2301
      %v2401 = vpop.xlane.xlu0 %2400
      %2402 = vadd.xlane.f32.xlu0 %v2302
      %v2403 = vpop.xlane.xlu0 %2402
      %2404 = vadd.xlane.f32.xlu0 %v2303
      %v2405 = vpop.xlane.xlu0 %2404
      %2406 = vadd.xlane.f32.xlu0 %v2304
      %v2407 = vpop.xlane.xlu0 %2406
      %2408 = vadd.xlane.f32.xlu0 %v2305
      %v2409 = vpop.xlane.xlu0 %2408
      %2410 = vadd.xlane.f32.xlu0 %v2306
      %v2411 = vpop.xlane.xlu0 %2410
      %2412 = vadd.xlane.f32.xlu0 %v2307
      %v2413 = vpop.xlane.xlu0 %2412
      %2414 = vadd.xlane.f32.xlu0 %v2308
      %v2415 = vpop.xlane.xlu0 %2414
      %2416 = vadd.xlane.f32.xlu0 %v2309
      %v2417 = vpop.xlane.xlu0 %2416
      %2418 = vadd.xlane.f32.xlu0 %v2310
      %v2419 = vpop.xlane.xlu0 %2418
      %2420 = vadd.xlane.f32.xlu0 %v2311
      %v2421 = vpop.xlane.xlu0 %2420
      %2422 = vadd.xlane.f32.xlu0 %v2312
      %v2423 = vpop.xlane.xlu0 %2422
      %2424 = vadd.xlane.f32.xlu0 %v2313
      %v2425 = vpop.xlane.xlu0 %2424
      %2426 = vadd.xlane.f32.xlu0 %v2314
      %v2427 = vpop.xlane.xlu0 %2426
      %2428 = vadd.xlane.f32.xlu0 %v2315
      %v2429 = vpop.xlane.xlu0 %2428
      %2430 = vadd.xlane.f32.xlu0 %v2316
      %v2431 = vpop.xlane.xlu0 %2430
      %2432 = vadd.xlane.f32.xlu0 %v2317
      %v2433 = vpop.xlane.xlu0 %2432
      %2434 = vadd.xlane.f32.xlu0 %v2318
      %v2435 = vpop.xlane.xlu0 %2434
      %2436 = vadd.xlane.f32.xlu0 %v2319
      %v2437 = vpop.xlane.xlu0 %2436
      %2438 = vadd.xlane.f32.xlu0 %v2320
      %v2439 = vpop.xlane.xlu0 %2438
      %2440 = vadd.xlane.f32.xlu0 %v2321
      %v2441 = vpop.xlane.xlu0 %2440
      %2442 = vadd.xlane.f32.xlu0 %v2322
      %v2443 = vpop.xlane.xlu0 %2442
      %2444 = vadd.xlane.f32.xlu0 %v2323
      %v2445 = vpop.xlane.xlu0 %2444
      %2446 = vadd.xlane.f32.xlu0 %v2324
      %v2447 = vpop.xlane.xlu0 %2446
      %2448 = vadd.xlane.f32.xlu0 %v2325
      %v2449 = vpop.xlane.xlu0 %2448
      %2450 = vadd.xlane.f32.xlu0 %v2326
      %v2451 = vpop.xlane.xlu0 %2450
      %2452 = vadd.xlane.f32.xlu0 %v2327
      %v2453 = vpop.xlane.xlu0 %2452
      %2454 = vadd.xlane.f32.xlu0 %v2328
      %v2455 = vpop.xlane.xlu0 %2454
      %2456 = vadd.xlane.f32.xlu0 %v2329
      %v2457 = vpop.xlane.xlu0 %2456
      %v2458 = vld [vmem:[%s5 + $0xa] sm:$0x1]
      %v2459 = vlaneseq
      %v2460 = vshrl.u32 %v2459, 7
      %v2461 = vsub.s32 0, %v2460
      %v2462 = vrot.slane %v2458, %v2461
      %v2463 = vadd.f32 %v2331, %v2462
      %v2464 = vadd.f32 %v2333, %v2462
      %v2465 = vadd.f32 %v2335, %v2462
      %v2466 = vadd.f32 %v2337, %v2462
      %v2467 = vadd.f32 %v2339, %v2462
      %v2468 = vadd.f32 %v2341, %v2462
      %v2469 = vadd.f32 %v2343, %v2462
      %v2470 = vadd.f32 %v2345, %v2462
      %v2471 = vadd.f32 %v2347, %v2462
      %v2472 = vadd.f32 %v2349, %v2462
      %v2473 = vadd.f32 %v2351, %v2462
      %v2474 = vadd.f32 %v2353, %v2462
      %v2475 = vadd.f32 %v2355, %v2462
      %v2476 = vadd.f32 %v2357, %v2462
      %v2477 = vadd.f32 %v2359, %v2462
      %v2478 = vadd.f32 %v2361, %v2462
      %v2479 = vadd.f32 %v2363, %v2462
      %v2480 = vadd.f32 %v2365, %v2462
      %v2481 = vadd.f32 %v2367, %v2462
      %v2482 = vadd.f32 %v2369, %v2462
      %v2483 = vadd.f32 %v2371, %v2462
      %v2484 = vadd.f32 %v2373, %v2462
      %v2485 = vadd.f32 %v2375, %v2462
      %v2486 = vadd.f32 %v2377, %v2462
      %v2487 = vadd.f32 %v2379, %v2462
      %v2488 = vadd.f32 %v2381, %v2462
      %v2489 = vadd.f32 %v2383, %v2462
      %v2490 = vadd.f32 %v2385, %v2462
      %v2491 = vadd.f32 %v2387, %v2462
      %v2492 = vadd.f32 %v2389, %v2462
      %v2493 = vadd.f32 %v2391, %v2462
      %v2494 = vadd.f32 %v2393, %v2462
      %v2495 = vadd.f32 %v2395, %v2462
      %v2496 = vadd.f32 %v2397, %v2462
      %v2497 = vadd.f32 %v2399, %v2462
      %v2498 = vadd.f32 %v2401, %v2462
      %v2499 = vadd.f32 %v2403, %v2462
      %v2500 = vadd.f32 %v2405, %v2462
      %v2501 = vadd.f32 %v2407, %v2462
      %v2502 = vadd.f32 %v2409, %v2462
      %v2503 = vadd.f32 %v2411, %v2462
      %v2504 = vadd.f32 %v2413, %v2462
      %v2505 = vadd.f32 %v2415, %v2462
      %v2506 = vadd.f32 %v2417, %v2462
      %v2507 = vadd.f32 %v2419, %v2462
      %v2508 = vadd.f32 %v2421, %v2462
      %v2509 = vadd.f32 %v2423, %v2462
      %v2510 = vadd.f32 %v2425, %v2462
      %v2511 = vadd.f32 %v2427, %v2462
      %v2512 = vadd.f32 %v2429, %v2462
      %v2513 = vadd.f32 %v2431, %v2462
      %v2514 = vadd.f32 %v2433, %v2462
      %v2515 = vadd.f32 %v2435, %v2462
      %v2516 = vadd.f32 %v2437, %v2462
      %v2517 = vadd.f32 %v2439, %v2462
      %v2518 = vadd.f32 %v2441, %v2462
      %v2519 = vadd.f32 %v2443, %v2462
      %v2520 = vadd.f32 %v2445, %v2462
      %v2521 = vadd.f32 %v2447, %v2462
      %v2522 = vadd.f32 %v2449, %v2462
      %v2523 = vadd.f32 %v2451, %v2462
      %v2524 = vadd.f32 %v2453, %v2462
      %v2525 = vadd.f32 %v2455, %v2462
      %v2526 = vadd.f32 %v2457, %v2462
      %v2527 = vxor.u32 %v2463, 2147483648
      %v2528 = vxor.u32 %v2464, 2147483648
      %v2529 = vxor.u32 %v2465, 2147483648
      %v2530 = vxor.u32 %v2466, 2147483648
      %v2531 = vxor.u32 %v2467, 2147483648
      %v2532 = vxor.u32 %v2468, 2147483648
      %v2533 = vxor.u32 %v2469, 2147483648
      %v2534 = vxor.u32 %v2470, 2147483648
      %v2535 = vxor.u32 %v2471, 2147483648
      %v2536 = vxor.u32 %v2472, 2147483648
      %v2537 = vxor.u32 %v2473, 2147483648
      %v2538 = vxor.u32 %v2474, 2147483648
      %v2539 = vxor.u32 %v2475, 2147483648
      %v2540 = vxor.u32 %v2476, 2147483648
      %v2541 = vxor.u32 %v2477, 2147483648
      %v2542 = vxor.u32 %v2478, 2147483648
      %v2543 = vxor.u32 %v2479, 2147483648
      %v2544 = vxor.u32 %v2480, 2147483648
      %v2545 = vxor.u32 %v2481, 2147483648
      %v2546 = vxor.u32 %v2482, 2147483648
      %v2547 = vxor.u32 %v2483, 2147483648
      %v2548 = vxor.u32 %v2484, 2147483648
      %v2549 = vxor.u32 %v2485, 2147483648
      %v2550 = vxor.u32 %v2486, 2147483648
      %v2551 = vxor.u32 %v2487, 2147483648
      %v2552 = vxor.u32 %v2488, 2147483648
      %v2553 = vxor.u32 %v2489, 2147483648
      %v2554 = vxor.u32 %v2490, 2147483648
      %v2555 = vxor.u32 %v2491, 2147483648
      %v2556 = vxor.u32 %v2492, 2147483648
      %v2557 = vxor.u32 %v2493, 2147483648
      %v2558 = vxor.u32 %v2494, 2147483648
      %v2559 = vxor.u32 %v2495, 2147483648
      %v2560 = vxor.u32 %v2496, 2147483648
      %v2561 = vxor.u32 %v2497, 2147483648
      %v2562 = vxor.u32 %v2498, 2147483648
      %v2563 = vxor.u32 %v2499, 2147483648
      %v2564 = vxor.u32 %v2500, 2147483648
      %v2565 = vxor.u32 %v2501, 2147483648
      %v2566 = vxor.u32 %v2502, 2147483648
      %v2567 = vxor.u32 %v2503, 2147483648
      %v2568 = vxor.u32 %v2504, 2147483648
      %v2569 = vxor.u32 %v2505, 2147483648
      %v2570 = vxor.u32 %v2506, 2147483648
      %v2571 = vxor.u32 %v2507, 2147483648
      %v2572 = vxor.u32 %v2508, 2147483648
      %v2573 = vxor.u32 %v2509, 2147483648
      %v2574 = vxor.u32 %v2510, 2147483648
      %v2575 = vxor.u32 %v2511, 2147483648
      %v2576 = vxor.u32 %v2512, 2147483648
      %v2577 = vxor.u32 %v2513, 2147483648
      %v2578 = vxor.u32 %v2514, 2147483648
      %v2579 = vxor.u32 %v2515, 2147483648
      %v2580 = vxor.u32 %v2516, 2147483648
      %v2581 = vxor.u32 %v2517, 2147483648
      %v2582 = vxor.u32 %v2518, 2147483648
      %v2583 = vxor.u32 %v2519, 2147483648
      %v2584 = vxor.u32 %v2520, 2147483648
      %v2585 = vxor.u32 %v2521, 2147483648
      %v2586 = vxor.u32 %v2522, 2147483648
      %v2587 = vxor.u32 %v2523, 2147483648
      %v2588 = vxor.u32 %v2524, 2147483648
      %v2589 = vxor.u32 %v2525, 2147483648
      %v2590 = vxor.u32 %v2526, 2147483648
      %v2591 = vmul.f32 %v2527, 1.442695
      %v2592 = vpow.pop %v2591
      %v2593 = vmul.f32 %v2528, 1.442695
      %v2594 = vpow.pop %v2593
      %v2595 = vmul.f32 %v2529, 1.442695
      %v2596 = vpow.pop %v2595
      %v2597 = vmul.f32 %v2530, 1.442695
      %v2598 = vpow.pop %v2597
      %v2599 = vmul.f32 %v2531, 1.442695
      %v2600 = vpow.pop %v2599
      %v2601 = vmul.f32 %v2532, 1.442695
      %v2602 = vpow.pop %v2601
      %v2603 = vmul.f32 %v2533, 1.442695
      %v2604 = vpow.pop %v2603
      %v2605 = vmul.f32 %v2534, 1.442695
      %v2606 = vpow.pop %v2605
      %v2607 = vmul.f32 %v2535, 1.442695
      %v2608 = vpow.pop %v2607
      %v2609 = vmul.f32 %v2536, 1.442695
      %v2610 = vpow.pop %v2609
      %v2611 = vmul.f32 %v2537, 1.442695
      %v2612 = vpow.pop %v2611
      %v2613 = vmul.f32 %v2538, 1.442695
      %v2614 = vpow.pop %v2613
      %v2615 = vmul.f32 %v2539, 1.442695
      %v2616 = vpow.pop %v2615
      %v2617 = vmul.f32 %v2540, 1.442695
      %v2618 = vpow.pop %v2617
      %v2619 = vmul.f32 %v2541, 1.442695
      %v2620 = vpow.pop %v2619
      %v2621 = vmul.f32 %v2542, 1.442695
      %v2622 = vpow.pop %v2621
      %v2623 = vmul.f32 %v2543, 1.442695
      %v2624 = vpow.pop %v2623
      %v2625 = vmul.f32 %v2544, 1.442695
      %v2626 = vpow.pop %v2625
      %v2627 = vmul.f32 %v2545, 1.442695
      %v2628 = vpow.pop %v2627
      %v2629 = vmul.f32 %v2546, 1.442695
      %v2630 = vpow.pop %v2629
      %v2631 = vmul.f32 %v2547, 1.442695
      %v2632 = vpow.pop %v2631
      %v2633 = vmul.f32 %v2548, 1.442695
      %v2634 = vpow.pop %v2633
      %v2635 = vmul.f32 %v2549, 1.442695
      %v2636 = vpow.pop %v2635
      %v2637 = vmul.f32 %v2550, 1.442695
      %v2638 = vpow.pop %v2637
      %v2639 = vmul.f32 %v2551, 1.442695
      %v2640 = vpow.pop %v2639
      %v2641 = vmul.f32 %v2552, 1.442695
      %v2642 = vpow.pop %v2641
      %v2643 = vmul.f32 %v2553, 1.442695
      %v2644 = vpow.pop %v2643
      %v2645 = vmul.f32 %v2554, 1.442695
      %v2646 = vpow.pop %v2645
      %v2647 = vmul.f32 %v2555, 1.442695
      %v2648 = vpow.pop %v2647
      %v2649 = vmul.f32 %v2556, 1.442695
      %v2650 = vpow.pop %v2649
      %v2651 = vmul.f32 %v2557, 1.442695
      %v2652 = vpow.pop %v2651
      %v2653 = vmul.f32 %v2558, 1.442695
      %v2654 = vpow.pop %v2653
      %v2655 = vmul.f32 %v2559, 1.442695
      %v2656 = vpow.pop %v2655
      %v2657 = vmul.f32 %v2560, 1.442695
      %v2658 = vpow.pop %v2657
      %v2659 = vmul.f32 %v2561, 1.442695
      %v2660 = vpow.pop %v2659
      %v2661 = vmul.f32 %v2562, 1.442695
      %v2662 = vpow.pop %v2661
      %v2663 = vmul.f32 %v2563, 1.442695
      %v2664 = vpow.pop %v2663
      %v2665 = vmul.f32 %v2564, 1.442695
      %v2666 = vpow.pop %v2665
      %v2667 = vmul.f32 %v2565, 1.442695
      %v2668 = vpow.pop %v2667
      %v2669 = vmul.f32 %v2566, 1.442695
      %v2670 = vpow.pop %v2669
      %v2671 = vmul.f32 %v2567, 1.442695
      %v2672 = vpow.pop %v2671
      %v2673 = vmul.f32 %v2568, 1.442695
      %v2674 = vpow.pop %v2673
      %v2675 = vmul.f32 %v2569, 1.442695
      %v2676 = vpow.pop %v2675
      %v2677 = vmul.f32 %v2570, 1.442695
      %v2678 = vpow.pop %v2677
      %v2679 = vmul.f32 %v2571, 1.442695
      %v2680 = vpow.pop %v2679
      %v2681 = vmul.f32 %v2572, 1.442695
      %v2682 = vpow.pop %v2681
      %v2683 = vmul.f32 %v2573, 1.442695
      %v2684 = vpow.pop %v2683
      %v2685 = vmul.f32 %v2574, 1.442695
      %v2686 = vpow.pop %v2685
      %v2687 = vmul.f32 %v2575, 1.442695
      %v2688 = vpow.pop %v2687
      %v2689 = vmul.f32 %v2576, 1.442695
      %v2690 = vpow.pop %v2689
      %v2691 = vmul.f32 %v2577, 1.442695
      %v2692 = vpow.pop %v2691
      %v2693 = vmul.f32 %v2578, 1.442695
      %v2694 = vpow.pop %v2693
      %v2695 = vmul.f32 %v2579, 1.442695
      %v2696 = vpow.pop %v2695
      %v2697 = vmul.f32 %v2580, 1.442695
      %v2698 = vpow.pop %v2697
      %v2699 = vmul.f32 %v2581, 1.442695
      %v2700 = vpow.pop %v2699
      %v2701 = vmul.f32 %v2582, 1.442695
      %v2702 = vpow.pop %v2701
      %v2703 = vmul.f32 %v2583, 1.442695
      %v2704 = vpow.pop %v2703
      %v2705 = vmul.f32 %v2584, 1.442695
      %v2706 = vpow.pop %v2705
      %v2707 = vmul.f32 %v2585, 1.442695
      %v2708 = vpow.pop %v2707
      %v2709 = vmul.f32 %v2586, 1.442695
      %v2710 = vpow.pop %v2709
      %v2711 = vmul.f32 %v2587, 1.442695
      %v2712 = vpow.pop %v2711
      %v2713 = vmul.f32 %v2588, 1.442695
      %v2714 = vpow.pop %v2713
      %v2715 = vmul.f32 %v2589, 1.442695
      %v2716 = vpow.pop %v2715
      %v2717 = vmul.f32 %v2590, 1.442695
      %v2718 = vpow.pop %v2717
      %v2719 = vadd.f32 %v2592, 1.0
      %v2720 = vadd.f32 %v2594, 1.0
      %v2721 = vadd.f32 %v2596, 1.0
      %v2722 = vadd.f32 %v2598, 1.0
      %v2723 = vadd.f32 %v2600, 1.0
      %v2724 = vadd.f32 %v2602, 1.0
      %v2725 = vadd.f32 %v2604, 1.0
      %v2726 = vadd.f32 %v2606, 1.0
      %v2727 = vadd.f32 %v2608, 1.0
      %v2728 = vadd.f32 %v2610, 1.0
      %v2729 = vadd.f32 %v2612, 1.0
      %v2730 = vadd.f32 %v2614, 1.0
      %v2731 = vadd.f32 %v2616, 1.0
      %v2732 = vadd.f32 %v2618, 1.0
      %v2733 = vadd.f32 %v2620, 1.0
      %v2734 = vadd.f32 %v2622, 1.0
      %v2735 = vadd.f32 %v2624, 1.0
      %v2736 = vadd.f32 %v2626, 1.0
      %v2737 = vadd.f32 %v2628, 1.0
      %v2738 = vadd.f32 %v2630, 1.0
      %v2739 = vadd.f32 %v2632, 1.0
      %v2740 = vadd.f32 %v2634, 1.0
      %v2741 = vadd.f32 %v2636, 1.0
      %v2742 = vadd.f32 %v2638, 1.0
      %v2743 = vadd.f32 %v2640, 1.0
      %v2744 = vadd.f32 %v2642, 1.0
      %v2745 = vadd.f32 %v2644, 1.0
      %v2746 = vadd.f32 %v2646, 1.0
      %v2747 = vadd.f32 %v2648, 1.0
      %v2748 = vadd.f32 %v2650, 1.0
      %v2749 = vadd.f32 %v2652, 1.0
      %v2750 = vadd.f32 %v2654, 1.0
      %v2751 = vadd.f32 %v2656, 1.0
      %v2752 = vadd.f32 %v2658, 1.0
      %v2753 = vadd.f32 %v2660, 1.0
      %v2754 = vadd.f32 %v2662, 1.0
      %v2755 = vadd.f32 %v2664, 1.0
      %v2756 = vadd.f32 %v2666, 1.0
      %v2757 = vadd.f32 %v2668, 1.0
      %v2758 = vadd.f32 %v2670, 1.0
      %v2759 = vadd.f32 %v2672, 1.0
      %v2760 = vadd.f32 %v2674, 1.0
      %v2761 = vadd.f32 %v2676, 1.0
      %v2762 = vadd.f32 %v2678, 1.0
      %v2763 = vadd.f32 %v2680, 1.0
      %v2764 = vadd.f32 %v2682, 1.0
      %v2765 = vadd.f32 %v2684, 1.0
      %v2766 = vadd.f32 %v2686, 1.0
      %v2767 = vadd.f32 %v2688, 1.0
      %v2768 = vadd.f32 %v2690, 1.0
      %v2769 = vadd.f32 %v2692, 1.0
      %v2770 = vadd.f32 %v2694, 1.0
      %v2771 = vadd.f32 %v2696, 1.0
      %v2772 = vadd.f32 %v2698, 1.0
      %v2773 = vadd.f32 %v2700, 1.0
      %v2774 = vadd.f32 %v2702, 1.0
      %v2775 = vadd.f32 %v2704, 1.0
      %v2776 = vadd.f32 %v2706, 1.0
      %v2777 = vadd.f32 %v2708, 1.0
      %v2778 = vadd.f32 %v2710, 1.0
      %v2779 = vadd.f32 %v2712, 1.0
      %v2780 = vadd.f32 %v2714, 1.0
      %v2781 = vadd.f32 %v2716, 1.0
      %v2782 = vadd.f32 %v2718, 1.0
      %v2783 = vrcp.pop %v2719
      %v2784 = vmul.f32 1.0, %v2783
      %v2785 = vrcp.pop %v2720
      %v2786 = vmul.f32 1.0, %v2785
      %v2787 = vrcp.pop %v2721
      %v2788 = vmul.f32 1.0, %v2787
      %v2789 = vrcp.pop %v2722
      %v2790 = vmul.f32 1.0, %v2789
      %v2791 = vrcp.pop %v2723
      %v2792 = vmul.f32 1.0, %v2791
      %v2793 = vrcp.pop %v2724
      %v2794 = vmul.f32 1.0, %v2793
      %v2795 = vrcp.pop %v2725
      %v2796 = vmul.f32 1.0, %v2795
      %v2797 = vrcp.pop %v2726
      %v2798 = vmul.f32 1.0, %v2797
      %v2799 = vrcp.pop %v2727
      %v2800 = vmul.f32 1.0, %v2799
      %v2801 = vrcp.pop %v2728
      %v2802 = vmul.f32 1.0, %v2801
      %v2803 = vrcp.pop %v2729
      %v2804 = vmul.f32 1.0, %v2803
      %v2805 = vrcp.pop %v2730
      %v2806 = vmul.f32 1.0, %v2805
      %v2807 = vrcp.pop %v2731
      %v2808 = vmul.f32 1.0, %v2807
      %v2809 = vrcp.pop %v2732
      %v2810 = vmul.f32 1.0, %v2809
      %v2811 = vrcp.pop %v2733
      %v2812 = vmul.f32 1.0, %v2811
      %v2813 = vrcp.pop %v2734
      %v2814 = vmul.f32 1.0, %v2813
      %v2815 = vrcp.pop %v2735
      %v2816 = vmul.f32 1.0, %v2815
      %v2817 = vrcp.pop %v2736
      %v2818 = vmul.f32 1.0, %v2817
      %v2819 = vrcp.pop %v2737
      %v2820 = vmul.f32 1.0, %v2819
      %v2821 = vrcp.pop %v2738
      %v2822 = vmul.f32 1.0, %v2821
      %v2823 = vrcp.pop %v2739
      %v2824 = vmul.f32 1.0, %v2823
      %v2825 = vrcp.pop %v2740
      %v2826 = vmul.f32 1.0, %v2825
      %v2827 = vrcp.pop %v2741
      %v2828 = vmul.f32 1.0, %v2827
      %v2829 = vrcp.pop %v2742
      %v2830 = vmul.f32 1.0, %v2829
      %v2831 = vrcp.pop %v2743
      %v2832 = vmul.f32 1.0, %v2831
      %v2833 = vrcp.pop %v2744
      %v2834 = vmul.f32 1.0, %v2833
      %v2835 = vrcp.pop %v2745
      %v2836 = vmul.f32 1.0, %v2835
      %v2837 = vrcp.pop %v2746
      %v2838 = vmul.f32 1.0, %v2837
      %v2839 = vrcp.pop %v2747
      %v2840 = vmul.f32 1.0, %v2839
      %v2841 = vrcp.pop %v2748
      %v2842 = vmul.f32 1.0, %v2841
      %v2843 = vrcp.pop %v2749
      %v2844 = vmul.f32 1.0, %v2843
      %v2845 = vrcp.pop %v2750
      %v2846 = vmul.f32 1.0, %v2845
      %v2847 = vrcp.pop %v2751
      %v2848 = vmul.f32 1.0, %v2847
      %v2849 = vrcp.pop %v2752
      %v2850 = vmul.f32 1.0, %v2849
      %v2851 = vrcp.pop %v2753
      %v2852 = vmul.f32 1.0, %v2851
      %v2853 = vrcp.pop %v2754
      %v2854 = vmul.f32 1.0, %v2853
      %v2855 = vrcp.pop %v2755
      %v2856 = vmul.f32 1.0, %v2855
      %v2857 = vrcp.pop %v2756
      %v2858 = vmul.f32 1.0, %v2857
      %v2859 = vrcp.pop %v2757
      %v2860 = vmul.f32 1.0, %v2859
      %v2861 = vrcp.pop %v2758
      %v2862 = vmul.f32 1.0, %v2861
      %v2863 = vrcp.pop %v2759
      %v2864 = vmul.f32 1.0, %v2863
      %v2865 = vrcp.pop %v2760
      %v2866 = vmul.f32 1.0, %v2865
      %v2867 = vrcp.pop %v2761
      %v2868 = vmul.f32 1.0, %v2867
      %v2869 = vrcp.pop %v2762
      %v2870 = vmul.f32 1.0, %v2869
      %v2871 = vrcp.pop %v2763
      %v2872 = vmul.f32 1.0, %v2871
      %v2873 = vrcp.pop %v2764
      %v2874 = vmul.f32 1.0, %v2873
      %v2875 = vrcp.pop %v2765
      %v2876 = vmul.f32 1.0, %v2875
      %v2877 = vrcp.pop %v2766
      %v2878 = vmul.f32 1.0, %v2877
      %v2879 = vrcp.pop %v2767
      %v2880 = vmul.f32 1.0, %v2879
      %v2881 = vrcp.pop %v2768
      %v2882 = vmul.f32 1.0, %v2881
      %v2883 = vrcp.pop %v2769
      %v2884 = vmul.f32 1.0, %v2883
      %v2885 = vrcp.pop %v2770
      %v2886 = vmul.f32 1.0, %v2885
      %v2887 = vrcp.pop %v2771
      %v2888 = vmul.f32 1.0, %v2887
      %v2889 = vrcp.pop %v2772
      %v2890 = vmul.f32 1.0, %v2889
      %v2891 = vrcp.pop %v2773
      %v2892 = vmul.f32 1.0, %v2891
      %v2893 = vrcp.pop %v2774
      %v2894 = vmul.f32 1.0, %v2893
      %v2895 = vrcp.pop %v2775
      %v2896 = vmul.f32 1.0, %v2895
      %v2897 = vrcp.pop %v2776
      %v2898 = vmul.f32 1.0, %v2897
      %v2899 = vrcp.pop %v2777
      %v2900 = vmul.f32 1.0, %v2899
      %v2901 = vrcp.pop %v2778
      %v2902 = vmul.f32 1.0, %v2901
      %v2903 = vrcp.pop %v2779
      %v2904 = vmul.f32 1.0, %v2903
      %v2905 = vrcp.pop %v2780
      %v2906 = vmul.f32 1.0, %v2905
      %v2907 = vrcp.pop %v2781
      %v2908 = vmul.f32 1.0, %v2907
      %v2909 = vrcp.pop %v2782
      %v2910 = vmul.f32 1.0, %v2909
      %v2911 = vlaneseq
      %v2912 = vshrl.u32 %v2911, 7
      %v2913 = vsub.s32 0, %v2912
      %v2914 = vrot.slane %v2260, %v2913
      %2916 = vset.pattern.permute.xlu0 0
      %2917 = vperm.xlu0 %2916, %v2784
      %v2918 = vpop.permute.xlu0 %2917
      %2921 = vset.pattern.permute.xlu0 0
      %2922 = vperm.xlu0 %2921, %v2786
      %v2923 = vpop.permute.xlu0 %2922
      %2926 = vset.pattern.permute.xlu0 0
      %2927 = vperm.xlu0 %2926, %v2788
      %v2928 = vpop.permute.xlu0 %2927
      %2931 = vset.pattern.permute.xlu0 0
      %2932 = vperm.xlu0 %2931, %v2790
      %v2933 = vpop.permute.xlu0 %2932
      %2936 = vset.pattern.permute.xlu0 0
      %2937 = vperm.xlu0 %2936, %v2792
      %v2938 = vpop.permute.xlu0 %2937
      %2941 = vset.pattern.permute.xlu0 0
      %2942 = vperm.xlu0 %2941, %v2794
      %v2943 = vpop.permute.xlu0 %2942
      %2946 = vset.pattern.permute.xlu0 0
      %2947 = vperm.xlu0 %2946, %v2796
      %v2948 = vpop.permute.xlu0 %2947
      %2951 = vset.pattern.permute.xlu0 0
      %2952 = vperm.xlu0 %2951, %v2798
      %v2953 = vpop.permute.xlu0 %2952
      %2956 = vset.pattern.permute.xlu0 0
      %2957 = vperm.xlu0 %2956, %v2800
      %v2958 = vpop.permute.xlu0 %2957
      %2961 = vset.pattern.permute.xlu0 0
      %2962 = vperm.xlu0 %2961, %v2802
      %v2963 = vpop.permute.xlu0 %2962
      %2966 = vset.pattern.permute.xlu0 0
      %2967 = vperm.xlu0 %2966, %v2804
      %v2968 = vpop.permute.xlu0 %2967
      %2971 = vset.pattern.permute.xlu0 0
      %2972 = vperm.xlu0 %2971, %v2806
      %v2973 = vpop.permute.xlu0 %2972
      %2976 = vset.pattern.permute.xlu0 0
      %2977 = vperm.xlu0 %2976, %v2808
      %v2978 = vpop.permute.xlu0 %2977
      %2981 = vset.pattern.permute.xlu0 0
      %2982 = vperm.xlu0 %2981, %v2810
      %v2983 = vpop.permute.xlu0 %2982
      %2986 = vset.pattern.permute.xlu0 0
      %2987 = vperm.xlu0 %2986, %v2812
      %v2988 = vpop.permute.xlu0 %2987
      %2991 = vset.pattern.permute.xlu0 0
      %2992 = vperm.xlu0 %2991, %v2814
      %v2993 = vpop.permute.xlu0 %2992
      %2996 = vset.pattern.permute.xlu0 0
      %2997 = vperm.xlu0 %2996, %v2816
      %v2998 = vpop.permute.xlu0 %2997
      %3001 = vset.pattern.permute.xlu0 0
      %3002 = vperm.xlu0 %3001, %v2818
      %v3003 = vpop.permute.xlu0 %3002
      %3006 = vset.pattern.permute.xlu0 0
      %3007 = vperm.xlu0 %3006, %v2820
      %v3008 = vpop.permute.xlu0 %3007
      %3011 = vset.pattern.permute.xlu0 0
      %3012 = vperm.xlu0 %3011, %v2822
      %v3013 = vpop.permute.xlu0 %3012
      %3016 = vset.pattern.permute.xlu0 0
      %3017 = vperm.xlu0 %3016, %v2824
      %v3018 = vpop.permute.xlu0 %3017
      %3021 = vset.pattern.permute.xlu0 0
      %3022 = vperm.xlu0 %3021, %v2826
      %v3023 = vpop.permute.xlu0 %3022
      %3026 = vset.pattern.permute.xlu0 0
      %3027 = vperm.xlu0 %3026, %v2828
      %v3028 = vpop.permute.xlu0 %3027
      %3031 = vset.pattern.permute.xlu0 0
      %3032 = vperm.xlu0 %3031, %v2830
      %v3033 = vpop.permute.xlu0 %3032
      %3036 = vset.pattern.permute.xlu0 0
      %3037 = vperm.xlu0 %3036, %v2832
      %v3038 = vpop.permute.xlu0 %3037
      %3041 = vset.pattern.permute.xlu0 0
      %3042 = vperm.xlu0 %3041, %v2834
      %v3043 = vpop.permute.xlu0 %3042
      %3046 = vset.pattern.permute.xlu0 0
      %3047 = vperm.xlu0 %3046, %v2836
      %v3048 = vpop.permute.xlu0 %3047
      %3051 = vset.pattern.permute.xlu0 0
      %3052 = vperm.xlu0 %3051, %v2838
      %v3053 = vpop.permute.xlu0 %3052
      %3056 = vset.pattern.permute.xlu0 0
      %3057 = vperm.xlu0 %3056, %v2840
      %v3058 = vpop.permute.xlu0 %3057
      %3061 = vset.pattern.permute.xlu0 0
      %3062 = vperm.xlu0 %3061, %v2842
      %v3063 = vpop.permute.xlu0 %3062
      %3066 = vset.pattern.permute.xlu0 0
      %3067 = vperm.xlu0 %3066, %v2844
      %v3068 = vpop.permute.xlu0 %3067
      %3071 = vset.pattern.permute.xlu0 0
      %3072 = vperm.xlu0 %3071, %v2846
      %v3073 = vpop.permute.xlu0 %3072
      %3076 = vset.pattern.permute.xlu0 0
      %3077 = vperm.xlu0 %3076, %v2848
      %v3078 = vpop.permute.xlu0 %3077
      %3081 = vset.pattern.permute.xlu0 0
      %3082 = vperm.xlu0 %3081, %v2850
      %v3083 = vpop.permute.xlu0 %3082
      %3086 = vset.pattern.permute.xlu0 0
      %3087 = vperm.xlu0 %3086, %v2852
      %v3088 = vpop.permute.xlu0 %3087
      %3091 = vset.pattern.permute.xlu0 0
      %3092 = vperm.xlu0 %3091, %v2854
      %v3093 = vpop.permute.xlu0 %3092
      %3096 = vset.pattern.permute.xlu0 0
      %3097 = vperm.xlu0 %3096, %v2856
      %v3098 = vpop.permute.xlu0 %3097
      %3101 = vset.pattern.permute.xlu0 0
      %3102 = vperm.xlu0 %3101, %v2858
      %v3103 = vpop.permute.xlu0 %3102
      %3106 = vset.pattern.permute.xlu0 0
      %3107 = vperm.xlu0 %3106, %v2860
      %v3108 = vpop.permute.xlu0 %3107
      %3111 = vset.pattern.permute.xlu0 0
      %3112 = vperm.xlu0 %3111, %v2862
      %v3113 = vpop.permute.xlu0 %3112
      %3116 = vset.pattern.permute.xlu0 0
      %3117 = vperm.xlu0 %3116, %v2864
      %v3118 = vpop.permute.xlu0 %3117
      %3121 = vset.pattern.permute.xlu0 0
      %3122 = vperm.xlu0 %3121, %v2866
      %v3123 = vpop.permute.xlu0 %3122
      %3126 = vset.pattern.permute.xlu0 0
      %3127 = vperm.xlu0 %3126, %v2868
      %v3128 = vpop.permute.xlu0 %3127
      %3131 = vset.pattern.permute.xlu0 0
      %3132 = vperm.xlu0 %3131, %v2870
      %v3133 = vpop.permute.xlu0 %3132
      %3136 = vset.pattern.permute.xlu0 0
      %3137 = vperm.xlu0 %3136, %v2872
      %v3138 = vpop.permute.xlu0 %3137
      %3141 = vset.pattern.permute.xlu0 0
      %3142 = vperm.xlu0 %3141, %v2874
      %v3143 = vpop.permute.xlu0 %3142
      %3146 = vset.pattern.permute.xlu0 0
      %3147 = vperm.xlu0 %3146, %v2876
      %v3148 = vpop.permute.xlu0 %3147
      %3151 = vset.pattern.permute.xlu0 0
      %3152 = vperm.xlu0 %3151, %v2878
      %v3153 = vpop.permute.xlu0 %3152
      %3156 = vset.pattern.permute.xlu0 0
      %3157 = vperm.xlu0 %3156, %v2880
      %v3158 = vpop.permute.xlu0 %3157
      %3161 = vset.pattern.permute.xlu0 0
      %3162 = vperm.xlu0 %3161, %v2882
      %v3163 = vpop.permute.xlu0 %3162
      %3166 = vset.pattern.permute.xlu0 0
      %3167 = vperm.xlu0 %3166, %v2884
      %v3168 = vpop.permute.xlu0 %3167
      %3171 = vset.pattern.permute.xlu0 0
      %3172 = vperm.xlu0 %3171, %v2886
      %v3173 = vpop.permute.xlu0 %3172
      %3176 = vset.pattern.permute.xlu0 0
      %3177 = vperm.xlu0 %3176, %v2888
      %v3178 = vpop.permute.xlu0 %3177
      %3181 = vset.pattern.permute.xlu0 0
      %3182 = vperm.xlu0 %3181, %v2890
      %v3183 = vpop.permute.xlu0 %3182
      %3186 = vset.pattern.permute.xlu0 0
      %3187 = vperm.xlu0 %3186, %v2892
      %v3188 = vpop.permute.xlu0 %3187
      %3191 = vset.pattern.permute.xlu0 0
      %3192 = vperm.xlu0 %3191, %v2894
      %v3193 = vpop.permute.xlu0 %3192
      %3196 = vset.pattern.permute.xlu0 0
      %3197 = vperm.xlu0 %3196, %v2896
      %v3198 = vpop.permute.xlu0 %3197
      %3201 = vset.pattern.permute.xlu0 0
      %3202 = vperm.xlu0 %3201, %v2898
      %v3203 = vpop.permute.xlu0 %3202
      %3206 = vset.pattern.permute.xlu0 0
      %3207 = vperm.xlu0 %3206, %v2900
      %v3208 = vpop.permute.xlu0 %3207
      %3211 = vset.pattern.permute.xlu0 0
      %3212 = vperm.xlu0 %3211, %v2902
      %v3213 = vpop.permute.xlu0 %3212
      %3216 = vset.pattern.permute.xlu0 0
      %3217 = vperm.xlu0 %3216, %v2904
      %v3218 = vpop.permute.xlu0 %3217
      %3221 = vset.pattern.permute.xlu0 0
      %3222 = vperm.xlu0 %3221, %v2906
      %v3223 = vpop.permute.xlu0 %3222
      %3226 = vset.pattern.permute.xlu0 0
      %3227 = vperm.xlu0 %3226, %v2908
      %v3228 = vpop.permute.xlu0 %3227
      %3231 = vset.pattern.permute.xlu0 0
      %3232 = vperm.xlu0 %3231, %v2910
      %v3233 = vpop.permute.xlu0 %3232
      %v3235 = vadd.f32 %v2914, %v2918
      %v3236 = vadd.f32 %v2914, %v2923
      %v3237 = vadd.f32 %v2914, %v2928
      %v3238 = vadd.f32 %v2914, %v2933
      %v3239 = vadd.f32 %v2914, %v2938
      %v3240 = vadd.f32 %v2914, %v2943
      %v3241 = vadd.f32 %v2914, %v2948
      %v3242 = vadd.f32 %v2914, %v2953
      %v3243 = vadd.f32 %v2914, %v2958
      %v3244 = vadd.f32 %v2914, %v2963
      %v3245 = vadd.f32 %v2914, %v2968
      %v3246 = vadd.f32 %v2914, %v2973
      %v3247 = vadd.f32 %v2914, %v2978
      %v3248 = vadd.f32 %v2914, %v2983
      %v3249 = vadd.f32 %v2914, %v2988
      %v3250 = vadd.f32 %v2914, %v2993
      %v3251 = vadd.f32 %v2914, %v2998
      %v3252 = vadd.f32 %v2914, %v3003
      %v3253 = vadd.f32 %v2914, %v3008
      %v3254 = vadd.f32 %v2914, %v3013
      %v3255 = vadd.f32 %v2914, %v3018
      %v3256 = vadd.f32 %v2914, %v3023
      %v3257 = vadd.f32 %v2914, %v3028
      %v3258 = vadd.f32 %v2914, %v3033
      %v3259 = vadd.f32 %v2914, %v3038
      %v3260 = vadd.f32 %v2914, %v3043
      %v3261 = vadd.f32 %v2914, %v3048
      %v3262 = vadd.f32 %v2914, %v3053
      %v3263 = vadd.f32 %v2914, %v3058
      %v3264 = vadd.f32 %v2914, %v3063
      %v3265 = vadd.f32 %v2914, %v3068
      %v3266 = vadd.f32 %v2914, %v3073
      %v3267 = vadd.f32 %v2914, %v3078
      %v3268 = vadd.f32 %v2914, %v3083
      %v3269 = vadd.f32 %v2914, %v3088
      %v3270 = vadd.f32 %v2914, %v3093
      %v3271 = vadd.f32 %v2914, %v3098
      %v3272 = vadd.f32 %v2914, %v3103
      %v3273 = vadd.f32 %v2914, %v3108
      %v3274 = vadd.f32 %v2914, %v3113
      %v3275 = vadd.f32 %v2914, %v3118
      %v3276 = vadd.f32 %v2914, %v3123
      %v3277 = vadd.f32 %v2914, %v3128
      %v3278 = vadd.f32 %v2914, %v3133
      %v3279 = vadd.f32 %v2914, %v3138
      %v3280 = vadd.f32 %v2914, %v3143
      %v3281 = vadd.f32 %v2914, %v3148
      %v3282 = vadd.f32 %v2914, %v3153
      %v3283 = vadd.f32 %v2914, %v3158
      %v3284 = vadd.f32 %v2914, %v3163
      %v3285 = vadd.f32 %v2914, %v3168
      %v3286 = vadd.f32 %v2914, %v3173
      %v3287 = vadd.f32 %v2914, %v3178
      %v3288 = vadd.f32 %v2914, %v3183
      %v3289 = vadd.f32 %v2914, %v3188
      %v3290 = vadd.f32 %v2914, %v3193
      %v3291 = vadd.f32 %v2914, %v3198
      %v3292 = vadd.f32 %v2914, %v3203
      %v3293 = vadd.f32 %v2914, %v3208
      %v3294 = vadd.f32 %v2914, %v3213
      %v3295 = vadd.f32 %v2914, %v3218
      %v3296 = vadd.f32 %v2914, %v3223
      %v3297 = vadd.f32 %v2914, %v3228
      %v3298 = vadd.f32 %v2914, %v3233
      %v3299 = vmul.f32 %v1778, %v3235
      %v3300 = vmul.f32 %v1779, %v3236
      %v3301 = vmul.f32 %v1780, %v3237
      %v3302 = vmul.f32 %v1781, %v3238
      %v3303 = vmul.f32 %v1782, %v3239
      %v3304 = vmul.f32 %v1783, %v3240
      %v3305 = vmul.f32 %v1784, %v3241
      %v3306 = vmul.f32 %v1785, %v3242
      %v3307 = vmul.f32 %v1786, %v3243
      %v3308 = vmul.f32 %v1787, %v3244
      %v3309 = vmul.f32 %v1788, %v3245
      %v3310 = vmul.f32 %v1789, %v3246
      %v3311 = vmul.f32 %v1790, %v3247
      %v3312 = vmul.f32 %v1791, %v3248
      %v3313 = vmul.f32 %v1792, %v3249
      %v3314 = vmul.f32 %v1793, %v3250
      %v3315 = vmul.f32 %v1794, %v3251
      %v3316 = vmul.f32 %v1795, %v3252
      %v3317 = vmul.f32 %v1796, %v3253
      %v3318 = vmul.f32 %v1797, %v3254
      %v3319 = vmul.f32 %v1798, %v3255
      %v3320 = vmul.f32 %v1799, %v3256
      %v3321 = vmul.f32 %v1800, %v3257
      %v3322 = vmul.f32 %v1801, %v3258
      %v3323 = vmul.f32 %v1802, %v3259
      %v3324 = vmul.f32 %v1803, %v3260
      %v3325 = vmul.f32 %v1804, %v3261
      %v3326 = vmul.f32 %v1805, %v3262
      %v3327 = vmul.f32 %v1806, %v3263
      %v3328 = vmul.f32 %v1807, %v3264
      %v3329 = vmul.f32 %v1808, %v3265
      %v3330 = vmul.f32 %v1809, %v3266
      %v3331 = vmul.f32 %v1810, %v3267
      %v3332 = vmul.f32 %v1811, %v3268
      %v3333 = vmul.f32 %v1812, %v3269
      %v3334 = vmul.f32 %v1813, %v3270
      %v3335 = vmul.f32 %v1814, %v3271
      %v3336 = vmul.f32 %v1815, %v3272
      %v3337 = vmul.f32 %v1816, %v3273
      %v3338 = vmul.f32 %v1817, %v3274
      %v3339 = vmul.f32 %v1818, %v3275
      %v3340 = vmul.f32 %v1819, %v3276
      %v3341 = vmul.f32 %v1820, %v3277
      %v3342 = vmul.f32 %v1821, %v3278
      %v3343 = vmul.f32 %v1822, %v3279
      %v3344 = vmul.f32 %v1823, %v3280
      %v3345 = vmul.f32 %v1824, %v3281
      %v3346 = vmul.f32 %v1825, %v3282
      %v3347 = vmul.f32 %v1826, %v3283
      %v3348 = vmul.f32 %v1827, %v3284
      %v3349 = vmul.f32 %v1828, %v3285
      %v3350 = vmul.f32 %v1829, %v3286
      %v3351 = vmul.f32 %v1830, %v3287
      %v3352 = vmul.f32 %v1831, %v3288
      %v3353 = vmul.f32 %v1832, %v3289
      %v3354 = vmul.f32 %v1833, %v3290
      %v3355 = vmul.f32 %v1834, %v3291
      %v3356 = vmul.f32 %v1835, %v3292
      %v3357 = vmul.f32 %v1836, %v3293
      %v3358 = vmul.f32 %v1837, %v3294
      %v3359 = vmul.f32 %v1838, %v3295
      %v3360 = vmul.f32 %v1839, %v3296
      %v3361 = vmul.f32 %v1840, %v3297
      %v3362 = vmul.f32 %v1841, %v3298
      %s3363 = scalar_lea.vmem %s2, 16
      %v3364 = vld [vmem:[%s3363] sm:$0xff]
      %v3365 = vld [vmem:[%s3363 + $0x8] sm:$0xff]
      %v3366 = vld [vmem:[%s3 + $0x8] sm:$0xff]
      %v3367 = vadd.f32 %v1094, %v1095
      %v3368 = vadd.f32 %v3367, %v1096
      %v3369 = vadd.f32 %v3368, %v1097
      %v3370 = vadd.f32 %v3369, %v1098
      %v3371 = vadd.f32 %v3370, %v1099
      %v3372 = vadd.f32 %v3371, %v1100
      %v3373 = vadd.f32 %v3372, %v1101
      %v3374 = vadd.f32 %v3373, %v1102
      %v3375 = vadd.f32 %v3374, %v1103
      %v3376 = vadd.f32 %v3375, %v1104
      %v3377 = vadd.f32 %v3376, %v1105
      %v3378 = vadd.f32 %v3377, %v1106
      %v3379 = vadd.f32 %v3378, %v1107
      %v3380 = vadd.f32 %v3379, %v1108
      %v3381 = vadd.f32 %v3380, %v1109
      %v3382 = vadd.f32 %v3381, %v1110
      %v3383 = vadd.f32 %v3382, %v1111
      %v3384 = vadd.f32 %v3383, %v1112
      %v3385 = vadd.f32 %v3384, %v1113
      %v3386 = vadd.f32 %v3385, %v1114
      %v3387 = vadd.f32 %v3386, %v1115
      %v3388 = vadd.f32 %v3387, %v1116
      %v3389 = vadd.f32 %v3388, %v1117
      %v3390 = vadd.f32 %v3389, %v1118
      %v3391 = vadd.f32 %v3390, %v1119
      %v3392 = vadd.f32 %v3391, %v1120
      %v3393 = vadd.f32 %v3392, %v1121
      %v3394 = vadd.f32 %v3393, %v1122
      %v3395 = vadd.f32 %v3394, %v1123
      %v3396 = vadd.f32 %v3395, %v1124
      %v3397 = vadd.f32 %v3396, %v1125
      %v3398 = vadd.f32 %v3397, %v1126
      %v3399 = vadd.f32 %v3398, %v1127
      %v3400 = vadd.f32 %v3399, %v1128
      %v3401 = vadd.f32 %v3400, %v1129
      %v3402 = vadd.f32 %v3401, %v1130
      %v3403 = vadd.f32 %v3402, %v1131
      %v3404 = vadd.f32 %v3403, %v1132
      %v3405 = vadd.f32 %v3404, %v1133
      %v3406 = vadd.f32 %v3405, %v1134
      %v3407 = vadd.f32 %v3406, %v1135
      %v3408 = vadd.f32 %v3407, %v1136
      %v3409 = vadd.f32 %v3408, %v1137
      %v3410 = vadd.f32 %v3409, %v1138
      %v3411 = vadd.f32 %v3410, %v1139
      %v3412 = vadd.f32 %v3411, %v1140
      %v3413 = vadd.f32 %v3412, %v1141
      %v3414 = vadd.f32 %v3413, %v1142
      %v3415 = vadd.f32 %v3414, %v1143
      %v3416 = vadd.f32 %v3415, %v1144
      %v3417 = vadd.f32 %v3416, %v1145
      %v3418 = vadd.f32 %v3417, %v1146
      %v3419 = vadd.f32 %v3418, %v1147
      %v3420 = vadd.f32 %v3419, %v1148
      %v3421 = vadd.f32 %v3420, %v1149
      %v3422 = vadd.f32 %v3421, %v1150
      %v3423 = vadd.f32 %v3422, %v1151
      %v3424 = vadd.f32 %v3423, %v1152
      %v3425 = vadd.f32 %v3424, %v1153
      %v3426 = vadd.f32 %v3425, %v1154
      %v3427 = vadd.f32 %v3426, %v1155
      %v3428 = vadd.f32 %v3427, %v1156
      %v3429 = vadd.f32 %v3428, %v1157
      %v3430 = vrot.slane %v3429, 4
      %v3431 = vadd.f32 %v3429, %v3430
      %v3432 = vrot.slane %v3431, 2
      %v3433 = vadd.f32 %v3431, %v3432
      %v3434 = vrot.slane %v3433, 1
      %v3435 = vadd.f32 %v3433, %v3434
      %v3436 = vmul.f32 %v3435, %v2234
      %v3437 = vmul.f32 %v3436, %v3364
      %3438 = vadd.xlane.f32.xlu0 %v3437
      %v3439 = vpop.xlane.xlu0 %3438
      %v3440 = vadd.f32 %v3439, %v3366
      %v3441 = vmax.f32 %v3440, 0.0
      %3443 = vset.pattern.permute.xlu0 0
      %3444 = vperm.xlu0 %3443, %v3441
      %v3445 = vpop.permute.xlu0 %3444
      %v3447 = vmul.f32 %v3445, %v3365
      %v3448 = vrot.slane %v3447, 4
      %v3449 = vadd.f32 %v3447, %v3448
      %v3450 = vrot.slane %v3449, 2
      %v3451 = vadd.f32 %v3449, %v3450
      %v3452 = vrot.slane %v3451, 1
      %v3453 = vadd.f32 %v3451, %v3452
      %v3454 = vld [vmem:[%s5 + $0xb] sm:$0x1]
      %v3455 = vadd.f32 %v3453, %v3454
      %v3456 = vxor.u32 %v3455, 2147483648
      %v3457 = vmul.f32 %v3456, 1.442695
      %v3458 = vpow.pop %v3457
      %v3459 = vadd.f32 %v3458, 1.0
      %v3460 = vrcp.pop %v3459
      %v3461 = vmul.f32 1.0, %v3460
      %v3462 = vld [vmem:[%s5 + $0xc] sm:$0x1]
      %v3463 = vlaneseq
      %v3464 = vshrl.u32 %v3463, 7
      %v3465 = vsub.s32 0, %v3464
      %v3466 = vrot.slane %v3462, %v3465
      %v3467 = vmul.f32 %v1094, %v3466
      %v3468 = vmul.f32 %v1095, %v3466
      %v3469 = vmul.f32 %v1096, %v3466
      %v3470 = vmul.f32 %v1097, %v3466
      %v3471 = vmul.f32 %v1098, %v3466
      %v3472 = vmul.f32 %v1099, %v3466
      %v3473 = vmul.f32 %v1100, %v3466
      %v3474 = vmul.f32 %v1101, %v3466
      %v3475 = vmul.f32 %v1102, %v3466
      %v3476 = vmul.f32 %v1103, %v3466
      %v3477 = vmul.f32 %v1104, %v3466
      %v3478 = vmul.f32 %v1105, %v3466
      %v3479 = vmul.f32 %v1106, %v3466
      %v3480 = vmul.f32 %v1107, %v3466
      %v3481 = vmul.f32 %v1108, %v3466
      %v3482 = vmul.f32 %v1109, %v3466
      %v3483 = vmul.f32 %v1110, %v3466
      %v3484 = vmul.f32 %v1111, %v3466
      %v3485 = vmul.f32 %v1112, %v3466
      %v3486 = vmul.f32 %v1113, %v3466
      %v3487 = vmul.f32 %v1114, %v3466
      %v3488 = vmul.f32 %v1115, %v3466
      %v3489 = vmul.f32 %v1116, %v3466
      %v3490 = vmul.f32 %v1117, %v3466
      %v3491 = vmul.f32 %v1118, %v3466
      %v3492 = vmul.f32 %v1119, %v3466
      %v3493 = vmul.f32 %v1120, %v3466
      %v3494 = vmul.f32 %v1121, %v3466
      %v3495 = vmul.f32 %v1122, %v3466
      %v3496 = vmul.f32 %v1123, %v3466
      %v3497 = vmul.f32 %v1124, %v3466
      %v3498 = vmul.f32 %v1125, %v3466
      %v3499 = vmul.f32 %v1126, %v3466
      %v3500 = vmul.f32 %v1127, %v3466
      %v3501 = vmul.f32 %v1128, %v3466
      %v3502 = vmul.f32 %v1129, %v3466
      %v3503 = vmul.f32 %v1130, %v3466
      %v3504 = vmul.f32 %v1131, %v3466
      %v3505 = vmul.f32 %v1132, %v3466
      %v3506 = vmul.f32 %v1133, %v3466
      %v3507 = vmul.f32 %v1134, %v3466
      %v3508 = vmul.f32 %v1135, %v3466
      %v3509 = vmul.f32 %v1136, %v3466
      %v3510 = vmul.f32 %v1137, %v3466
      %v3511 = vmul.f32 %v1138, %v3466
      %v3512 = vmul.f32 %v1139, %v3466
      %v3513 = vmul.f32 %v1140, %v3466
      %v3514 = vmul.f32 %v1141, %v3466
      %v3515 = vmul.f32 %v1142, %v3466
      %v3516 = vmul.f32 %v1143, %v3466
      %v3517 = vmul.f32 %v1144, %v3466
      %v3518 = vmul.f32 %v1145, %v3466
      %v3519 = vmul.f32 %v1146, %v3466
      %v3520 = vmul.f32 %v1147, %v3466
      %v3521 = vmul.f32 %v1148, %v3466
      %v3522 = vmul.f32 %v1149, %v3466
      %v3523 = vmul.f32 %v1150, %v3466
      %v3524 = vmul.f32 %v1151, %v3466
      %v3525 = vmul.f32 %v1152, %v3466
      %v3526 = vmul.f32 %v1153, %v3466
      %v3527 = vmul.f32 %v1154, %v3466
      %v3528 = vmul.f32 %v1155, %v3466
      %v3529 = vmul.f32 %v1156, %v3466
      %v3530 = vmul.f32 %v1157, %v3466
      %3531 = vadd.xlane.f32.xlu0 %v3467
      %v3532 = vpop.xlane.xlu0 %3531
      %3533 = vadd.xlane.f32.xlu0 %v3468
      %v3534 = vpop.xlane.xlu0 %3533
      %3535 = vadd.xlane.f32.xlu0 %v3469
      %v3536 = vpop.xlane.xlu0 %3535
      %3537 = vadd.xlane.f32.xlu0 %v3470
      %v3538 = vpop.xlane.xlu0 %3537
      %3539 = vadd.xlane.f32.xlu0 %v3471
      %v3540 = vpop.xlane.xlu0 %3539
      %3541 = vadd.xlane.f32.xlu0 %v3472
      %v3542 = vpop.xlane.xlu0 %3541
      %3543 = vadd.xlane.f32.xlu0 %v3473
      %v3544 = vpop.xlane.xlu0 %3543
      %3545 = vadd.xlane.f32.xlu0 %v3474
      %v3546 = vpop.xlane.xlu0 %3545
      %3547 = vadd.xlane.f32.xlu0 %v3475
      %v3548 = vpop.xlane.xlu0 %3547
      %3549 = vadd.xlane.f32.xlu0 %v3476
      %v3550 = vpop.xlane.xlu0 %3549
      %3551 = vadd.xlane.f32.xlu0 %v3477
      %v3552 = vpop.xlane.xlu0 %3551
      %3553 = vadd.xlane.f32.xlu0 %v3478
      %v3554 = vpop.xlane.xlu0 %3553
      %3555 = vadd.xlane.f32.xlu0 %v3479
      %v3556 = vpop.xlane.xlu0 %3555
      %3557 = vadd.xlane.f32.xlu0 %v3480
      %v3558 = vpop.xlane.xlu0 %3557
      %3559 = vadd.xlane.f32.xlu0 %v3481
      %v3560 = vpop.xlane.xlu0 %3559
      %3561 = vadd.xlane.f32.xlu0 %v3482
      %v3562 = vpop.xlane.xlu0 %3561
      %3563 = vadd.xlane.f32.xlu0 %v3483
      %v3564 = vpop.xlane.xlu0 %3563
      %3565 = vadd.xlane.f32.xlu0 %v3484
      %v3566 = vpop.xlane.xlu0 %3565
      %3567 = vadd.xlane.f32.xlu0 %v3485
      %v3568 = vpop.xlane.xlu0 %3567
      %3569 = vadd.xlane.f32.xlu0 %v3486
      %v3570 = vpop.xlane.xlu0 %3569
      %3571 = vadd.xlane.f32.xlu0 %v3487
      %v3572 = vpop.xlane.xlu0 %3571
      %3573 = vadd.xlane.f32.xlu0 %v3488
      %v3574 = vpop.xlane.xlu0 %3573
      %3575 = vadd.xlane.f32.xlu0 %v3489
      %v3576 = vpop.xlane.xlu0 %3575
      %3577 = vadd.xlane.f32.xlu0 %v3490
      %v3578 = vpop.xlane.xlu0 %3577
      %3579 = vadd.xlane.f32.xlu0 %v3491
      %v3580 = vpop.xlane.xlu0 %3579
      %3581 = vadd.xlane.f32.xlu0 %v3492
      %v3582 = vpop.xlane.xlu0 %3581
      %3583 = vadd.xlane.f32.xlu0 %v3493
      %v3584 = vpop.xlane.xlu0 %3583
      %3585 = vadd.xlane.f32.xlu0 %v3494
      %v3586 = vpop.xlane.xlu0 %3585
      %3587 = vadd.xlane.f32.xlu0 %v3495
      %v3588 = vpop.xlane.xlu0 %3587
      %3589 = vadd.xlane.f32.xlu0 %v3496
      %v3590 = vpop.xlane.xlu0 %3589
      %3591 = vadd.xlane.f32.xlu0 %v3497
      %v3592 = vpop.xlane.xlu0 %3591
      %3593 = vadd.xlane.f32.xlu0 %v3498
      %v3594 = vpop.xlane.xlu0 %3593
      %3595 = vadd.xlane.f32.xlu0 %v3499
      %v3596 = vpop.xlane.xlu0 %3595
      %3597 = vadd.xlane.f32.xlu0 %v3500
      %v3598 = vpop.xlane.xlu0 %3597
      %3599 = vadd.xlane.f32.xlu0 %v3501
      %v3600 = vpop.xlane.xlu0 %3599
      %3601 = vadd.xlane.f32.xlu0 %v3502
      %v3602 = vpop.xlane.xlu0 %3601
      %3603 = vadd.xlane.f32.xlu0 %v3503
      %v3604 = vpop.xlane.xlu0 %3603
      %3605 = vadd.xlane.f32.xlu0 %v3504
      %v3606 = vpop.xlane.xlu0 %3605
      %3607 = vadd.xlane.f32.xlu0 %v3505
      %v3608 = vpop.xlane.xlu0 %3607
      %3609 = vadd.xlane.f32.xlu0 %v3506
      %v3610 = vpop.xlane.xlu0 %3609
      %3611 = vadd.xlane.f32.xlu0 %v3507
      %v3612 = vpop.xlane.xlu0 %3611
      %3613 = vadd.xlane.f32.xlu0 %v3508
      %v3614 = vpop.xlane.xlu0 %3613
      %3615 = vadd.xlane.f32.xlu0 %v3509
      %v3616 = vpop.xlane.xlu0 %3615
      %3617 = vadd.xlane.f32.xlu0 %v3510
      %v3618 = vpop.xlane.xlu0 %3617
      %3619 = vadd.xlane.f32.xlu0 %v3511
      %v3620 = vpop.xlane.xlu0 %3619
      %3621 = vadd.xlane.f32.xlu0 %v3512
      %v3622 = vpop.xlane.xlu0 %3621
      %3623 = vadd.xlane.f32.xlu0 %v3513
      %v3624 = vpop.xlane.xlu0 %3623
      %3625 = vadd.xlane.f32.xlu0 %v3514
      %v3626 = vpop.xlane.xlu0 %3625
      %3627 = vadd.xlane.f32.xlu0 %v3515
      %v3628 = vpop.xlane.xlu0 %3627
      %3629 = vadd.xlane.f32.xlu0 %v3516
      %v3630 = vpop.xlane.xlu0 %3629
      %3631 = vadd.xlane.f32.xlu0 %v3517
      %v3632 = vpop.xlane.xlu0 %3631
      %3633 = vadd.xlane.f32.xlu0 %v3518
      %v3634 = vpop.xlane.xlu0 %3633
      %3635 = vadd.xlane.f32.xlu0 %v3519
      %v3636 = vpop.xlane.xlu0 %3635
      %3637 = vadd.xlane.f32.xlu0 %v3520
      %v3638 = vpop.xlane.xlu0 %3637
      %3639 = vadd.xlane.f32.xlu0 %v3521
      %v3640 = vpop.xlane.xlu0 %3639
      %3641 = vadd.xlane.f32.xlu0 %v3522
      %v3642 = vpop.xlane.xlu0 %3641
      %3643 = vadd.xlane.f32.xlu0 %v3523
      %v3644 = vpop.xlane.xlu0 %3643
      %3645 = vadd.xlane.f32.xlu0 %v3524
      %v3646 = vpop.xlane.xlu0 %3645
      %3647 = vadd.xlane.f32.xlu0 %v3525
      %v3648 = vpop.xlane.xlu0 %3647
      %3649 = vadd.xlane.f32.xlu0 %v3526
      %v3650 = vpop.xlane.xlu0 %3649
      %3651 = vadd.xlane.f32.xlu0 %v3527
      %v3652 = vpop.xlane.xlu0 %3651
      %3653 = vadd.xlane.f32.xlu0 %v3528
      %v3654 = vpop.xlane.xlu0 %3653
      %3655 = vadd.xlane.f32.xlu0 %v3529
      %v3656 = vpop.xlane.xlu0 %3655
      %3657 = vadd.xlane.f32.xlu0 %v3530
      %v3658 = vpop.xlane.xlu0 %3657
      %v3659 = vld [vmem:[%s5 + $0xd] sm:$0x1]
      %v3660 = vlaneseq
      %v3661 = vshrl.u32 %v3660, 7
      %v3662 = vsub.s32 0, %v3661
      %v3663 = vrot.slane %v3659, %v3662
      %v3664 = vadd.f32 %v3532, %v3663
      %v3665 = vadd.f32 %v3534, %v3663
      %v3666 = vadd.f32 %v3536, %v3663
      %v3667 = vadd.f32 %v3538, %v3663
      %v3668 = vadd.f32 %v3540, %v3663
      %v3669 = vadd.f32 %v3542, %v3663
      %v3670 = vadd.f32 %v3544, %v3663
      %v3671 = vadd.f32 %v3546, %v3663
      %v3672 = vadd.f32 %v3548, %v3663
      %v3673 = vadd.f32 %v3550, %v3663
      %v3674 = vadd.f32 %v3552, %v3663
      %v3675 = vadd.f32 %v3554, %v3663
      %v3676 = vadd.f32 %v3556, %v3663
      %v3677 = vadd.f32 %v3558, %v3663
      %v3678 = vadd.f32 %v3560, %v3663
      %v3679 = vadd.f32 %v3562, %v3663
      %v3680 = vadd.f32 %v3564, %v3663
      %v3681 = vadd.f32 %v3566, %v3663
      %v3682 = vadd.f32 %v3568, %v3663
      %v3683 = vadd.f32 %v3570, %v3663
      %v3684 = vadd.f32 %v3572, %v3663
      %v3685 = vadd.f32 %v3574, %v3663
      %v3686 = vadd.f32 %v3576, %v3663
      %v3687 = vadd.f32 %v3578, %v3663
      %v3688 = vadd.f32 %v3580, %v3663
      %v3689 = vadd.f32 %v3582, %v3663
      %v3690 = vadd.f32 %v3584, %v3663
      %v3691 = vadd.f32 %v3586, %v3663
      %v3692 = vadd.f32 %v3588, %v3663
      %v3693 = vadd.f32 %v3590, %v3663
      %v3694 = vadd.f32 %v3592, %v3663
      %v3695 = vadd.f32 %v3594, %v3663
      %v3696 = vadd.f32 %v3596, %v3663
      %v3697 = vadd.f32 %v3598, %v3663
      %v3698 = vadd.f32 %v3600, %v3663
      %v3699 = vadd.f32 %v3602, %v3663
      %v3700 = vadd.f32 %v3604, %v3663
      %v3701 = vadd.f32 %v3606, %v3663
      %v3702 = vadd.f32 %v3608, %v3663
      %v3703 = vadd.f32 %v3610, %v3663
      %v3704 = vadd.f32 %v3612, %v3663
      %v3705 = vadd.f32 %v3614, %v3663
      %v3706 = vadd.f32 %v3616, %v3663
      %v3707 = vadd.f32 %v3618, %v3663
      %v3708 = vadd.f32 %v3620, %v3663
      %v3709 = vadd.f32 %v3622, %v3663
      %v3710 = vadd.f32 %v3624, %v3663
      %v3711 = vadd.f32 %v3626, %v3663
      %v3712 = vadd.f32 %v3628, %v3663
      %v3713 = vadd.f32 %v3630, %v3663
      %v3714 = vadd.f32 %v3632, %v3663
      %v3715 = vadd.f32 %v3634, %v3663
      %v3716 = vadd.f32 %v3636, %v3663
      %v3717 = vadd.f32 %v3638, %v3663
      %v3718 = vadd.f32 %v3640, %v3663
      %v3719 = vadd.f32 %v3642, %v3663
      %v3720 = vadd.f32 %v3644, %v3663
      %v3721 = vadd.f32 %v3646, %v3663
      %v3722 = vadd.f32 %v3648, %v3663
      %v3723 = vadd.f32 %v3650, %v3663
      %v3724 = vadd.f32 %v3652, %v3663
      %v3725 = vadd.f32 %v3654, %v3663
      %v3726 = vadd.f32 %v3656, %v3663
      %v3727 = vadd.f32 %v3658, %v3663
      %v3728 = vxor.u32 %v3664, 2147483648
      %v3729 = vxor.u32 %v3665, 2147483648
      %v3730 = vxor.u32 %v3666, 2147483648
      %v3731 = vxor.u32 %v3667, 2147483648
      %v3732 = vxor.u32 %v3668, 2147483648
      %v3733 = vxor.u32 %v3669, 2147483648
      %v3734 = vxor.u32 %v3670, 2147483648
      %v3735 = vxor.u32 %v3671, 2147483648
      %v3736 = vxor.u32 %v3672, 2147483648
      %v3737 = vxor.u32 %v3673, 2147483648
      %v3738 = vxor.u32 %v3674, 2147483648
      %v3739 = vxor.u32 %v3675, 2147483648
      %v3740 = vxor.u32 %v3676, 2147483648
      %v3741 = vxor.u32 %v3677, 2147483648
      %v3742 = vxor.u32 %v3678, 2147483648
      %v3743 = vxor.u32 %v3679, 2147483648
      %v3744 = vxor.u32 %v3680, 2147483648
      %v3745 = vxor.u32 %v3681, 2147483648
      %v3746 = vxor.u32 %v3682, 2147483648
      %v3747 = vxor.u32 %v3683, 2147483648
      %v3748 = vxor.u32 %v3684, 2147483648
      %v3749 = vxor.u32 %v3685, 2147483648
      %v3750 = vxor.u32 %v3686, 2147483648
      %v3751 = vxor.u32 %v3687, 2147483648
      %v3752 = vxor.u32 %v3688, 2147483648
      %v3753 = vxor.u32 %v3689, 2147483648
      %v3754 = vxor.u32 %v3690, 2147483648
      %v3755 = vxor.u32 %v3691, 2147483648
      %v3756 = vxor.u32 %v3692, 2147483648
      %v3757 = vxor.u32 %v3693, 2147483648
      %v3758 = vxor.u32 %v3694, 2147483648
      %v3759 = vxor.u32 %v3695, 2147483648
      %v3760 = vxor.u32 %v3696, 2147483648
      %v3761 = vxor.u32 %v3697, 2147483648
      %v3762 = vxor.u32 %v3698, 2147483648
      %v3763 = vxor.u32 %v3699, 2147483648
      %v3764 = vxor.u32 %v3700, 2147483648
      %v3765 = vxor.u32 %v3701, 2147483648
      %v3766 = vxor.u32 %v3702, 2147483648
      %v3767 = vxor.u32 %v3703, 2147483648
      %v3768 = vxor.u32 %v3704, 2147483648
      %v3769 = vxor.u32 %v3705, 2147483648
      %v3770 = vxor.u32 %v3706, 2147483648
      %v3771 = vxor.u32 %v3707, 2147483648
      %v3772 = vxor.u32 %v3708, 2147483648
      %v3773 = vxor.u32 %v3709, 2147483648
      %v3774 = vxor.u32 %v3710, 2147483648
      %v3775 = vxor.u32 %v3711, 2147483648
      %v3776 = vxor.u32 %v3712, 2147483648
      %v3777 = vxor.u32 %v3713, 2147483648
      %v3778 = vxor.u32 %v3714, 2147483648
      %v3779 = vxor.u32 %v3715, 2147483648
      %v3780 = vxor.u32 %v3716, 2147483648
      %v3781 = vxor.u32 %v3717, 2147483648
      %v3782 = vxor.u32 %v3718, 2147483648
      %v3783 = vxor.u32 %v3719, 2147483648
      %v3784 = vxor.u32 %v3720, 2147483648
      %v3785 = vxor.u32 %v3721, 2147483648
      %v3786 = vxor.u32 %v3722, 2147483648
      %v3787 = vxor.u32 %v3723, 2147483648
      %v3788 = vxor.u32 %v3724, 2147483648
      %v3789 = vxor.u32 %v3725, 2147483648
      %v3790 = vxor.u32 %v3726, 2147483648
      %v3791 = vxor.u32 %v3727, 2147483648
      %v3792 = vmul.f32 %v3728, 1.442695
      %v3793 = vpow.pop %v3792
      %v3794 = vmul.f32 %v3729, 1.442695
      %v3795 = vpow.pop %v3794
      %v3796 = vmul.f32 %v3730, 1.442695
      %v3797 = vpow.pop %v3796
      %v3798 = vmul.f32 %v3731, 1.442695
      %v3799 = vpow.pop %v3798
      %v3800 = vmul.f32 %v3732, 1.442695
      %v3801 = vpow.pop %v3800
      %v3802 = vmul.f32 %v3733, 1.442695
      %v3803 = vpow.pop %v3802
      %v3804 = vmul.f32 %v3734, 1.442695
      %v3805 = vpow.pop %v3804
      %v3806 = vmul.f32 %v3735, 1.442695
      %v3807 = vpow.pop %v3806
      %v3808 = vmul.f32 %v3736, 1.442695
      %v3809 = vpow.pop %v3808
      %v3810 = vmul.f32 %v3737, 1.442695
      %v3811 = vpow.pop %v3810
      %v3812 = vmul.f32 %v3738, 1.442695
      %v3813 = vpow.pop %v3812
      %v3814 = vmul.f32 %v3739, 1.442695
      %v3815 = vpow.pop %v3814
      %v3816 = vmul.f32 %v3740, 1.442695
      %v3817 = vpow.pop %v3816
      %v3818 = vmul.f32 %v3741, 1.442695
      %v3819 = vpow.pop %v3818
      %v3820 = vmul.f32 %v3742, 1.442695
      %v3821 = vpow.pop %v3820
      %v3822 = vmul.f32 %v3743, 1.442695
      %v3823 = vpow.pop %v3822
      %v3824 = vmul.f32 %v3744, 1.442695
      %v3825 = vpow.pop %v3824
      %v3826 = vmul.f32 %v3745, 1.442695
      %v3827 = vpow.pop %v3826
      %v3828 = vmul.f32 %v3746, 1.442695
      %v3829 = vpow.pop %v3828
      %v3830 = vmul.f32 %v3747, 1.442695
      %v3831 = vpow.pop %v3830
      %v3832 = vmul.f32 %v3748, 1.442695
      %v3833 = vpow.pop %v3832
      %v3834 = vmul.f32 %v3749, 1.442695
      %v3835 = vpow.pop %v3834
      %v3836 = vmul.f32 %v3750, 1.442695
      %v3837 = vpow.pop %v3836
      %v3838 = vmul.f32 %v3751, 1.442695
      %v3839 = vpow.pop %v3838
      %v3840 = vmul.f32 %v3752, 1.442695
      %v3841 = vpow.pop %v3840
      %v3842 = vmul.f32 %v3753, 1.442695
      %v3843 = vpow.pop %v3842
      %v3844 = vmul.f32 %v3754, 1.442695
      %v3845 = vpow.pop %v3844
      %v3846 = vmul.f32 %v3755, 1.442695
      %v3847 = vpow.pop %v3846
      %v3848 = vmul.f32 %v3756, 1.442695
      %v3849 = vpow.pop %v3848
      %v3850 = vmul.f32 %v3757, 1.442695
      %v3851 = vpow.pop %v3850
      %v3852 = vmul.f32 %v3758, 1.442695
      %v3853 = vpow.pop %v3852
      %v3854 = vmul.f32 %v3759, 1.442695
      %v3855 = vpow.pop %v3854
      %v3856 = vmul.f32 %v3760, 1.442695
      %v3857 = vpow.pop %v3856
      %v3858 = vmul.f32 %v3761, 1.442695
      %v3859 = vpow.pop %v3858
      %v3860 = vmul.f32 %v3762, 1.442695
      %v3861 = vpow.pop %v3860
      %v3862 = vmul.f32 %v3763, 1.442695
      %v3863 = vpow.pop %v3862
      %v3864 = vmul.f32 %v3764, 1.442695
      %v3865 = vpow.pop %v3864
      %v3866 = vmul.f32 %v3765, 1.442695
      %v3867 = vpow.pop %v3866
      %v3868 = vmul.f32 %v3766, 1.442695
      %v3869 = vpow.pop %v3868
      %v3870 = vmul.f32 %v3767, 1.442695
      %v3871 = vpow.pop %v3870
      %v3872 = vmul.f32 %v3768, 1.442695
      %v3873 = vpow.pop %v3872
      %v3874 = vmul.f32 %v3769, 1.442695
      %v3875 = vpow.pop %v3874
      %v3876 = vmul.f32 %v3770, 1.442695
      %v3877 = vpow.pop %v3876
      %v3878 = vmul.f32 %v3771, 1.442695
      %v3879 = vpow.pop %v3878
      %v3880 = vmul.f32 %v3772, 1.442695
      %v3881 = vpow.pop %v3880
      %v3882 = vmul.f32 %v3773, 1.442695
      %v3883 = vpow.pop %v3882
      %v3884 = vmul.f32 %v3774, 1.442695
      %v3885 = vpow.pop %v3884
      %v3886 = vmul.f32 %v3775, 1.442695
      %v3887 = vpow.pop %v3886
      %v3888 = vmul.f32 %v3776, 1.442695
      %v3889 = vpow.pop %v3888
      %v3890 = vmul.f32 %v3777, 1.442695
      %v3891 = vpow.pop %v3890
      %v3892 = vmul.f32 %v3778, 1.442695
      %v3893 = vpow.pop %v3892
      %v3894 = vmul.f32 %v3779, 1.442695
      %v3895 = vpow.pop %v3894
      %v3896 = vmul.f32 %v3780, 1.442695
      %v3897 = vpow.pop %v3896
      %v3898 = vmul.f32 %v3781, 1.442695
      %v3899 = vpow.pop %v3898
      %v3900 = vmul.f32 %v3782, 1.442695
      %v3901 = vpow.pop %v3900
      %v3902 = vmul.f32 %v3783, 1.442695
      %v3903 = vpow.pop %v3902
      %v3904 = vmul.f32 %v3784, 1.442695
      %v3905 = vpow.pop %v3904
      %v3906 = vmul.f32 %v3785, 1.442695
      %v3907 = vpow.pop %v3906
      %v3908 = vmul.f32 %v3786, 1.442695
      %v3909 = vpow.pop %v3908
      %v3910 = vmul.f32 %v3787, 1.442695
      %v3911 = vpow.pop %v3910
      %v3912 = vmul.f32 %v3788, 1.442695
      %v3913 = vpow.pop %v3912
      %v3914 = vmul.f32 %v3789, 1.442695
      %v3915 = vpow.pop %v3914
      %v3916 = vmul.f32 %v3790, 1.442695
      %v3917 = vpow.pop %v3916
      %v3918 = vmul.f32 %v3791, 1.442695
      %v3919 = vpow.pop %v3918
      %v3920 = vadd.f32 %v3793, 1.0
      %v3921 = vadd.f32 %v3795, 1.0
      %v3922 = vadd.f32 %v3797, 1.0
      %v3923 = vadd.f32 %v3799, 1.0
      %v3924 = vadd.f32 %v3801, 1.0
      %v3925 = vadd.f32 %v3803, 1.0
      %v3926 = vadd.f32 %v3805, 1.0
      %v3927 = vadd.f32 %v3807, 1.0
      %v3928 = vadd.f32 %v3809, 1.0
      %v3929 = vadd.f32 %v3811, 1.0
      %v3930 = vadd.f32 %v3813, 1.0
      %v3931 = vadd.f32 %v3815, 1.0
      %v3932 = vadd.f32 %v3817, 1.0
      %v3933 = vadd.f32 %v3819, 1.0
      %v3934 = vadd.f32 %v3821, 1.0
      %v3935 = vadd.f32 %v3823, 1.0
      %v3936 = vadd.f32 %v3825, 1.0
      %v3937 = vadd.f32 %v3827, 1.0
      %v3938 = vadd.f32 %v3829, 1.0
      %v3939 = vadd.f32 %v3831, 1.0
      %v3940 = vadd.f32 %v3833, 1.0
      %v3941 = vadd.f32 %v3835, 1.0
      %v3942 = vadd.f32 %v3837, 1.0
      %v3943 = vadd.f32 %v3839, 1.0
      %v3944 = vadd.f32 %v3841, 1.0
      %v3945 = vadd.f32 %v3843, 1.0
      %v3946 = vadd.f32 %v3845, 1.0
      %v3947 = vadd.f32 %v3847, 1.0
      %v3948 = vadd.f32 %v3849, 1.0
      %v3949 = vadd.f32 %v3851, 1.0
      %v3950 = vadd.f32 %v3853, 1.0
      %v3951 = vadd.f32 %v3855, 1.0
      %v3952 = vadd.f32 %v3857, 1.0
      %v3953 = vadd.f32 %v3859, 1.0
      %v3954 = vadd.f32 %v3861, 1.0
      %v3955 = vadd.f32 %v3863, 1.0
      %v3956 = vadd.f32 %v3865, 1.0
      %v3957 = vadd.f32 %v3867, 1.0
      %v3958 = vadd.f32 %v3869, 1.0
      %v3959 = vadd.f32 %v3871, 1.0
      %v3960 = vadd.f32 %v3873, 1.0
      %v3961 = vadd.f32 %v3875, 1.0
      %v3962 = vadd.f32 %v3877, 1.0
      %v3963 = vadd.f32 %v3879, 1.0
      %v3964 = vadd.f32 %v3881, 1.0
      %v3965 = vadd.f32 %v3883, 1.0
      %v3966 = vadd.f32 %v3885, 1.0
      %v3967 = vadd.f32 %v3887, 1.0
      %v3968 = vadd.f32 %v3889, 1.0
      %v3969 = vadd.f32 %v3891, 1.0
      %v3970 = vadd.f32 %v3893, 1.0
      %v3971 = vadd.f32 %v3895, 1.0
      %v3972 = vadd.f32 %v3897, 1.0
      %v3973 = vadd.f32 %v3899, 1.0
      %v3974 = vadd.f32 %v3901, 1.0
      %v3975 = vadd.f32 %v3903, 1.0
      %v3976 = vadd.f32 %v3905, 1.0
      %v3977 = vadd.f32 %v3907, 1.0
      %v3978 = vadd.f32 %v3909, 1.0
      %v3979 = vadd.f32 %v3911, 1.0
      %v3980 = vadd.f32 %v3913, 1.0
      %v3981 = vadd.f32 %v3915, 1.0
      %v3982 = vadd.f32 %v3917, 1.0
      %v3983 = vadd.f32 %v3919, 1.0
      %v3984 = vrcp.pop %v3920
      %v3985 = vmul.f32 1.0, %v3984
      %v3986 = vrcp.pop %v3921
      %v3987 = vmul.f32 1.0, %v3986
      %v3988 = vrcp.pop %v3922
      %v3989 = vmul.f32 1.0, %v3988
      %v3990 = vrcp.pop %v3923
      %v3991 = vmul.f32 1.0, %v3990
      %v3992 = vrcp.pop %v3924
      %v3993 = vmul.f32 1.0, %v3992
      %v3994 = vrcp.pop %v3925
      %v3995 = vmul.f32 1.0, %v3994
      %v3996 = vrcp.pop %v3926
      %v3997 = vmul.f32 1.0, %v3996
      %v3998 = vrcp.pop %v3927
      %v3999 = vmul.f32 1.0, %v3998
      %v4000 = vrcp.pop %v3928
      %v4001 = vmul.f32 1.0, %v4000
      %v4002 = vrcp.pop %v3929
      %v4003 = vmul.f32 1.0, %v4002
      %v4004 = vrcp.pop %v3930
      %v4005 = vmul.f32 1.0, %v4004
      %v4006 = vrcp.pop %v3931
      %v4007 = vmul.f32 1.0, %v4006
      %v4008 = vrcp.pop %v3932
      %v4009 = vmul.f32 1.0, %v4008
      %v4010 = vrcp.pop %v3933
      %v4011 = vmul.f32 1.0, %v4010
      %v4012 = vrcp.pop %v3934
      %v4013 = vmul.f32 1.0, %v4012
      %v4014 = vrcp.pop %v3935
      %v4015 = vmul.f32 1.0, %v4014
      %v4016 = vrcp.pop %v3936
      %v4017 = vmul.f32 1.0, %v4016
      %v4018 = vrcp.pop %v3937
      %v4019 = vmul.f32 1.0, %v4018
      %v4020 = vrcp.pop %v3938
      %v4021 = vmul.f32 1.0, %v4020
      %v4022 = vrcp.pop %v3939
      %v4023 = vmul.f32 1.0, %v4022
      %v4024 = vrcp.pop %v3940
      %v4025 = vmul.f32 1.0, %v4024
      %v4026 = vrcp.pop %v3941
      %v4027 = vmul.f32 1.0, %v4026
      %v4028 = vrcp.pop %v3942
      %v4029 = vmul.f32 1.0, %v4028
      %v4030 = vrcp.pop %v3943
      %v4031 = vmul.f32 1.0, %v4030
      %v4032 = vrcp.pop %v3944
      %v4033 = vmul.f32 1.0, %v4032
      %v4034 = vrcp.pop %v3945
      %v4035 = vmul.f32 1.0, %v4034
      %v4036 = vrcp.pop %v3946
      %v4037 = vmul.f32 1.0, %v4036
      %v4038 = vrcp.pop %v3947
      %v4039 = vmul.f32 1.0, %v4038
      %v4040 = vrcp.pop %v3948
      %v4041 = vmul.f32 1.0, %v4040
      %v4042 = vrcp.pop %v3949
      %v4043 = vmul.f32 1.0, %v4042
      %v4044 = vrcp.pop %v3950
      %v4045 = vmul.f32 1.0, %v4044
      %v4046 = vrcp.pop %v3951
      %v4047 = vmul.f32 1.0, %v4046
      %v4048 = vrcp.pop %v3952
      %v4049 = vmul.f32 1.0, %v4048
      %v4050 = vrcp.pop %v3953
      %v4051 = vmul.f32 1.0, %v4050
      %v4052 = vrcp.pop %v3954
      %v4053 = vmul.f32 1.0, %v4052
      %v4054 = vrcp.pop %v3955
      %v4055 = vmul.f32 1.0, %v4054
      %v4056 = vrcp.pop %v3956
      %v4057 = vmul.f32 1.0, %v4056
      %v4058 = vrcp.pop %v3957
      %v4059 = vmul.f32 1.0, %v4058
      %v4060 = vrcp.pop %v3958
      %v4061 = vmul.f32 1.0, %v4060
      %v4062 = vrcp.pop %v3959
      %v4063 = vmul.f32 1.0, %v4062
      %v4064 = vrcp.pop %v3960
      %v4065 = vmul.f32 1.0, %v4064
      %v4066 = vrcp.pop %v3961
      %v4067 = vmul.f32 1.0, %v4066
      %v4068 = vrcp.pop %v3962
      %v4069 = vmul.f32 1.0, %v4068
      %v4070 = vrcp.pop %v3963
      %v4071 = vmul.f32 1.0, %v4070
      %v4072 = vrcp.pop %v3964
      %v4073 = vmul.f32 1.0, %v4072
      %v4074 = vrcp.pop %v3965
      %v4075 = vmul.f32 1.0, %v4074
      %v4076 = vrcp.pop %v3966
      %v4077 = vmul.f32 1.0, %v4076
      %v4078 = vrcp.pop %v3967
      %v4079 = vmul.f32 1.0, %v4078
      %v4080 = vrcp.pop %v3968
      %v4081 = vmul.f32 1.0, %v4080
      %v4082 = vrcp.pop %v3969
      %v4083 = vmul.f32 1.0, %v4082
      %v4084 = vrcp.pop %v3970
      %v4085 = vmul.f32 1.0, %v4084
      %v4086 = vrcp.pop %v3971
      %v4087 = vmul.f32 1.0, %v4086
      %v4088 = vrcp.pop %v3972
      %v4089 = vmul.f32 1.0, %v4088
      %v4090 = vrcp.pop %v3973
      %v4091 = vmul.f32 1.0, %v4090
      %v4092 = vrcp.pop %v3974
      %v4093 = vmul.f32 1.0, %v4092
      %v4094 = vrcp.pop %v3975
      %v4095 = vmul.f32 1.0, %v4094
      %v4096 = vrcp.pop %v3976
      %v4097 = vmul.f32 1.0, %v4096
      %v4098 = vrcp.pop %v3977
      %v4099 = vmul.f32 1.0, %v4098
      %v4100 = vrcp.pop %v3978
      %v4101 = vmul.f32 1.0, %v4100
      %v4102 = vrcp.pop %v3979
      %v4103 = vmul.f32 1.0, %v4102
      %v4104 = vrcp.pop %v3980
      %v4105 = vmul.f32 1.0, %v4104
      %v4106 = vrcp.pop %v3981
      %v4107 = vmul.f32 1.0, %v4106
      %v4108 = vrcp.pop %v3982
      %v4109 = vmul.f32 1.0, %v4108
      %v4110 = vrcp.pop %v3983
      %v4111 = vmul.f32 1.0, %v4110
      %v4112 = vlaneseq
      %v4113 = vshrl.u32 %v4112, 7
      %v4114 = vsub.s32 0, %v4113
      %v4115 = vrot.slane %v3461, %v4114
      %4117 = vset.pattern.permute.xlu0 0
      %4118 = vperm.xlu0 %4117, %v3985
      %v4119 = vpop.permute.xlu0 %4118
      %4122 = vset.pattern.permute.xlu0 0
      %4123 = vperm.xlu0 %4122, %v3987
      %v4124 = vpop.permute.xlu0 %4123
      %4127 = vset.pattern.permute.xlu0 0
      %4128 = vperm.xlu0 %4127, %v3989
      %v4129 = vpop.permute.xlu0 %4128
      %4132 = vset.pattern.permute.xlu0 0
      %4133 = vperm.xlu0 %4132, %v3991
      %v4134 = vpop.permute.xlu0 %4133
      %4137 = vset.pattern.permute.xlu0 0
      %4138 = vperm.xlu0 %4137, %v3993
      %v4139 = vpop.permute.xlu0 %4138
      %4142 = vset.pattern.permute.xlu0 0
      %4143 = vperm.xlu0 %4142, %v3995
      %v4144 = vpop.permute.xlu0 %4143
      %4147 = vset.pattern.permute.xlu0 0
      %4148 = vperm.xlu0 %4147, %v3997
      %v4149 = vpop.permute.xlu0 %4148
      %4152 = vset.pattern.permute.xlu0 0
      %4153 = vperm.xlu0 %4152, %v3999
      %v4154 = vpop.permute.xlu0 %4153
      %4157 = vset.pattern.permute.xlu0 0
      %4158 = vperm.xlu0 %4157, %v4001
      %v4159 = vpop.permute.xlu0 %4158
      %4162 = vset.pattern.permute.xlu0 0
      %4163 = vperm.xlu0 %4162, %v4003
      %v4164 = vpop.permute.xlu0 %4163
      %4167 = vset.pattern.permute.xlu0 0
      %4168 = vperm.xlu0 %4167, %v4005
      %v4169 = vpop.permute.xlu0 %4168
      %4172 = vset.pattern.permute.xlu0 0
      %4173 = vperm.xlu0 %4172, %v4007
      %v4174 = vpop.permute.xlu0 %4173
      %4177 = vset.pattern.permute.xlu0 0
      %4178 = vperm.xlu0 %4177, %v4009
      %v4179 = vpop.permute.xlu0 %4178
      %4182 = vset.pattern.permute.xlu0 0
      %4183 = vperm.xlu0 %4182, %v4011
      %v4184 = vpop.permute.xlu0 %4183
      %4187 = vset.pattern.permute.xlu0 0
      %4188 = vperm.xlu0 %4187, %v4013
      %v4189 = vpop.permute.xlu0 %4188
      %4192 = vset.pattern.permute.xlu0 0
      %4193 = vperm.xlu0 %4192, %v4015
      %v4194 = vpop.permute.xlu0 %4193
      %4197 = vset.pattern.permute.xlu0 0
      %4198 = vperm.xlu0 %4197, %v4017
      %v4199 = vpop.permute.xlu0 %4198
      %4202 = vset.pattern.permute.xlu0 0
      %4203 = vperm.xlu0 %4202, %v4019
      %v4204 = vpop.permute.xlu0 %4203
      %4207 = vset.pattern.permute.xlu0 0
      %4208 = vperm.xlu0 %4207, %v4021
      %v4209 = vpop.permute.xlu0 %4208
      %4212 = vset.pattern.permute.xlu0 0
      %4213 = vperm.xlu0 %4212, %v4023
      %v4214 = vpop.permute.xlu0 %4213
      %4217 = vset.pattern.permute.xlu0 0
      %4218 = vperm.xlu0 %4217, %v4025
      %v4219 = vpop.permute.xlu0 %4218
      %4222 = vset.pattern.permute.xlu0 0
      %4223 = vperm.xlu0 %4222, %v4027
      %v4224 = vpop.permute.xlu0 %4223
      %4227 = vset.pattern.permute.xlu0 0
      %4228 = vperm.xlu0 %4227, %v4029
      %v4229 = vpop.permute.xlu0 %4228
      %4232 = vset.pattern.permute.xlu0 0
      %4233 = vperm.xlu0 %4232, %v4031
      %v4234 = vpop.permute.xlu0 %4233
      %4237 = vset.pattern.permute.xlu0 0
      %4238 = vperm.xlu0 %4237, %v4033
      %v4239 = vpop.permute.xlu0 %4238
      %4242 = vset.pattern.permute.xlu0 0
      %4243 = vperm.xlu0 %4242, %v4035
      %v4244 = vpop.permute.xlu0 %4243
      %4247 = vset.pattern.permute.xlu0 0
      %4248 = vperm.xlu0 %4247, %v4037
      %v4249 = vpop.permute.xlu0 %4248
      %4252 = vset.pattern.permute.xlu0 0
      %4253 = vperm.xlu0 %4252, %v4039
      %v4254 = vpop.permute.xlu0 %4253
      %4257 = vset.pattern.permute.xlu0 0
      %4258 = vperm.xlu0 %4257, %v4041
      %v4259 = vpop.permute.xlu0 %4258
      %4262 = vset.pattern.permute.xlu0 0
      %4263 = vperm.xlu0 %4262, %v4043
      %v4264 = vpop.permute.xlu0 %4263
      %4267 = vset.pattern.permute.xlu0 0
      %4268 = vperm.xlu0 %4267, %v4045
      %v4269 = vpop.permute.xlu0 %4268
      %4272 = vset.pattern.permute.xlu0 0
      %4273 = vperm.xlu0 %4272, %v4047
      %v4274 = vpop.permute.xlu0 %4273
      %4277 = vset.pattern.permute.xlu0 0
      %4278 = vperm.xlu0 %4277, %v4049
      %v4279 = vpop.permute.xlu0 %4278
      %4282 = vset.pattern.permute.xlu0 0
      %4283 = vperm.xlu0 %4282, %v4051
      %v4284 = vpop.permute.xlu0 %4283
      %4287 = vset.pattern.permute.xlu0 0
      %4288 = vperm.xlu0 %4287, %v4053
      %v4289 = vpop.permute.xlu0 %4288
      %4292 = vset.pattern.permute.xlu0 0
      %4293 = vperm.xlu0 %4292, %v4055
      %v4294 = vpop.permute.xlu0 %4293
      %4297 = vset.pattern.permute.xlu0 0
      %4298 = vperm.xlu0 %4297, %v4057
      %v4299 = vpop.permute.xlu0 %4298
      %4302 = vset.pattern.permute.xlu0 0
      %4303 = vperm.xlu0 %4302, %v4059
      %v4304 = vpop.permute.xlu0 %4303
      %4307 = vset.pattern.permute.xlu0 0
      %4308 = vperm.xlu0 %4307, %v4061
      %v4309 = vpop.permute.xlu0 %4308
      %4312 = vset.pattern.permute.xlu0 0
      %4313 = vperm.xlu0 %4312, %v4063
      %v4314 = vpop.permute.xlu0 %4313
      %4317 = vset.pattern.permute.xlu0 0
      %4318 = vperm.xlu0 %4317, %v4065
      %v4319 = vpop.permute.xlu0 %4318
      %4322 = vset.pattern.permute.xlu0 0
      %4323 = vperm.xlu0 %4322, %v4067
      %v4324 = vpop.permute.xlu0 %4323
      %4327 = vset.pattern.permute.xlu0 0
      %4328 = vperm.xlu0 %4327, %v4069
      %v4329 = vpop.permute.xlu0 %4328
      %4332 = vset.pattern.permute.xlu0 0
      %4333 = vperm.xlu0 %4332, %v4071
      %v4334 = vpop.permute.xlu0 %4333
      %4337 = vset.pattern.permute.xlu0 0
      %4338 = vperm.xlu0 %4337, %v4073
      %v4339 = vpop.permute.xlu0 %4338
      %4342 = vset.pattern.permute.xlu0 0
      %4343 = vperm.xlu0 %4342, %v4075
      %v4344 = vpop.permute.xlu0 %4343
      %4347 = vset.pattern.permute.xlu0 0
      %4348 = vperm.xlu0 %4347, %v4077
      %v4349 = vpop.permute.xlu0 %4348
      %4352 = vset.pattern.permute.xlu0 0
      %4353 = vperm.xlu0 %4352, %v4079
      %v4354 = vpop.permute.xlu0 %4353
      %4357 = vset.pattern.permute.xlu0 0
      %4358 = vperm.xlu0 %4357, %v4081
      %v4359 = vpop.permute.xlu0 %4358
      %4362 = vset.pattern.permute.xlu0 0
      %4363 = vperm.xlu0 %4362, %v4083
      %v4364 = vpop.permute.xlu0 %4363
      %4367 = vset.pattern.permute.xlu0 0
      %4368 = vperm.xlu0 %4367, %v4085
      %v4369 = vpop.permute.xlu0 %4368
      %4372 = vset.pattern.permute.xlu0 0
      %4373 = vperm.xlu0 %4372, %v4087
      %v4374 = vpop.permute.xlu0 %4373
      %4377 = vset.pattern.permute.xlu0 0
      %4378 = vperm.xlu0 %4377, %v4089
      %v4379 = vpop.permute.xlu0 %4378
      %4382 = vset.pattern.permute.xlu0 0
      %4383 = vperm.xlu0 %4382, %v4091
      %v4384 = vpop.permute.xlu0 %4383
      %4387 = vset.pattern.permute.xlu0 0
      %4388 = vperm.xlu0 %4387, %v4093
      %v4389 = vpop.permute.xlu0 %4388
      %4392 = vset.pattern.permute.xlu0 0
      %4393 = vperm.xlu0 %4392, %v4095
      %v4394 = vpop.permute.xlu0 %4393
      %4397 = vset.pattern.permute.xlu0 0
      %4398 = vperm.xlu0 %4397, %v4097
      %v4399 = vpop.permute.xlu0 %4398
      %4402 = vset.pattern.permute.xlu0 0
      %4403 = vperm.xlu0 %4402, %v4099
      %v4404 = vpop.permute.xlu0 %4403
      %4407 = vset.pattern.permute.xlu0 0
      %4408 = vperm.xlu0 %4407, %v4101
      %v4409 = vpop.permute.xlu0 %4408
      %4412 = vset.pattern.permute.xlu0 0
      %4413 = vperm.xlu0 %4412, %v4103
      %v4414 = vpop.permute.xlu0 %4413
      %4417 = vset.pattern.permute.xlu0 0
      %4418 = vperm.xlu0 %4417, %v4105
      %v4419 = vpop.permute.xlu0 %4418
      %4422 = vset.pattern.permute.xlu0 0
      %4423 = vperm.xlu0 %4422, %v4107
      %v4424 = vpop.permute.xlu0 %4423
      %4427 = vset.pattern.permute.xlu0 0
      %4428 = vperm.xlu0 %4427, %v4109
      %v4429 = vpop.permute.xlu0 %4428
      %4432 = vset.pattern.permute.xlu0 0
      %4433 = vperm.xlu0 %4432, %v4111
      %v4434 = vpop.permute.xlu0 %4433
      %v4436 = vadd.f32 %v4115, %v4119
      %v4437 = vadd.f32 %v4115, %v4124
      %v4438 = vadd.f32 %v4115, %v4129
      %v4439 = vadd.f32 %v4115, %v4134
      %v4440 = vadd.f32 %v4115, %v4139
      %v4441 = vadd.f32 %v4115, %v4144
      %v4442 = vadd.f32 %v4115, %v4149
      %v4443 = vadd.f32 %v4115, %v4154
      %v4444 = vadd.f32 %v4115, %v4159
      %v4445 = vadd.f32 %v4115, %v4164
      %v4446 = vadd.f32 %v4115, %v4169
      %v4447 = vadd.f32 %v4115, %v4174
      %v4448 = vadd.f32 %v4115, %v4179
      %v4449 = vadd.f32 %v4115, %v4184
      %v4450 = vadd.f32 %v4115, %v4189
      %v4451 = vadd.f32 %v4115, %v4194
      %v4452 = vadd.f32 %v4115, %v4199
      %v4453 = vadd.f32 %v4115, %v4204
      %v4454 = vadd.f32 %v4115, %v4209
      %v4455 = vadd.f32 %v4115, %v4214
      %v4456 = vadd.f32 %v4115, %v4219
      %v4457 = vadd.f32 %v4115, %v4224
      %v4458 = vadd.f32 %v4115, %v4229
      %v4459 = vadd.f32 %v4115, %v4234
      %v4460 = vadd.f32 %v4115, %v4239
      %v4461 = vadd.f32 %v4115, %v4244
      %v4462 = vadd.f32 %v4115, %v4249
      %v4463 = vadd.f32 %v4115, %v4254
      %v4464 = vadd.f32 %v4115, %v4259
      %v4465 = vadd.f32 %v4115, %v4264
      %v4466 = vadd.f32 %v4115, %v4269
      %v4467 = vadd.f32 %v4115, %v4274
      %v4468 = vadd.f32 %v4115, %v4279
      %v4469 = vadd.f32 %v4115, %v4284
      %v4470 = vadd.f32 %v4115, %v4289
      %v4471 = vadd.f32 %v4115, %v4294
      %v4472 = vadd.f32 %v4115, %v4299
      %v4473 = vadd.f32 %v4115, %v4304
      %v4474 = vadd.f32 %v4115, %v4309
      %v4475 = vadd.f32 %v4115, %v4314
      %v4476 = vadd.f32 %v4115, %v4319
      %v4477 = vadd.f32 %v4115, %v4324
      %v4478 = vadd.f32 %v4115, %v4329
      %v4479 = vadd.f32 %v4115, %v4334
      %v4480 = vadd.f32 %v4115, %v4339
      %v4481 = vadd.f32 %v4115, %v4344
      %v4482 = vadd.f32 %v4115, %v4349
      %v4483 = vadd.f32 %v4115, %v4354
      %v4484 = vadd.f32 %v4115, %v4359
      %v4485 = vadd.f32 %v4115, %v4364
      %v4486 = vadd.f32 %v4115, %v4369
      %v4487 = vadd.f32 %v4115, %v4374
      %v4488 = vadd.f32 %v4115, %v4379
      %v4489 = vadd.f32 %v4115, %v4384
      %v4490 = vadd.f32 %v4115, %v4389
      %v4491 = vadd.f32 %v4115, %v4394
      %v4492 = vadd.f32 %v4115, %v4399
      %v4493 = vadd.f32 %v4115, %v4404
      %v4494 = vadd.f32 %v4115, %v4409
      %v4495 = vadd.f32 %v4115, %v4414
      %v4496 = vadd.f32 %v4115, %v4419
      %v4497 = vadd.f32 %v4115, %v4424
      %v4498 = vadd.f32 %v4115, %v4429
      %v4499 = vadd.f32 %v4115, %v4434
      %v4500 = vmul.f32 %v1094, %v4436
      %v4501 = vmul.f32 %v1095, %v4437
      %v4502 = vmul.f32 %v1096, %v4438
      %v4503 = vmul.f32 %v1097, %v4439
      %v4504 = vmul.f32 %v1098, %v4440
      %v4505 = vmul.f32 %v1099, %v4441
      %v4506 = vmul.f32 %v1100, %v4442
      %v4507 = vmul.f32 %v1101, %v4443
      %v4508 = vmul.f32 %v1102, %v4444
      %v4509 = vmul.f32 %v1103, %v4445
      %v4510 = vmul.f32 %v1104, %v4446
      %v4511 = vmul.f32 %v1105, %v4447
      %v4512 = vmul.f32 %v1106, %v4448
      %v4513 = vmul.f32 %v1107, %v4449
      %v4514 = vmul.f32 %v1108, %v4450
      %v4515 = vmul.f32 %v1109, %v4451
      %v4516 = vmul.f32 %v1110, %v4452
      %v4517 = vmul.f32 %v1111, %v4453
      %v4518 = vmul.f32 %v1112, %v4454
      %v4519 = vmul.f32 %v1113, %v4455
      %v4520 = vmul.f32 %v1114, %v4456
      %v4521 = vmul.f32 %v1115, %v4457
      %v4522 = vmul.f32 %v1116, %v4458
      %v4523 = vmul.f32 %v1117, %v4459
      %v4524 = vmul.f32 %v1118, %v4460
      %v4525 = vmul.f32 %v1119, %v4461
      %v4526 = vmul.f32 %v1120, %v4462
      %v4527 = vmul.f32 %v1121, %v4463
      %v4528 = vmul.f32 %v1122, %v4464
      %v4529 = vmul.f32 %v1123, %v4465
      %v4530 = vmul.f32 %v1124, %v4466
      %v4531 = vmul.f32 %v1125, %v4467
      %v4532 = vmul.f32 %v1126, %v4468
      %v4533 = vmul.f32 %v1127, %v4469
      %v4534 = vmul.f32 %v1128, %v4470
      %v4535 = vmul.f32 %v1129, %v4471
      %v4536 = vmul.f32 %v1130, %v4472
      %v4537 = vmul.f32 %v1131, %v4473
      %v4538 = vmul.f32 %v1132, %v4474
      %v4539 = vmul.f32 %v1133, %v4475
      %v4540 = vmul.f32 %v1134, %v4476
      %v4541 = vmul.f32 %v1135, %v4477
      %v4542 = vmul.f32 %v1136, %v4478
      %v4543 = vmul.f32 %v1137, %v4479
      %v4544 = vmul.f32 %v1138, %v4480
      %v4545 = vmul.f32 %v1139, %v4481
      %v4546 = vmul.f32 %v1140, %v4482
      %v4547 = vmul.f32 %v1141, %v4483
      %v4548 = vmul.f32 %v1142, %v4484
      %v4549 = vmul.f32 %v1143, %v4485
      %v4550 = vmul.f32 %v1144, %v4486
      %v4551 = vmul.f32 %v1145, %v4487
      %v4552 = vmul.f32 %v1146, %v4488
      %v4553 = vmul.f32 %v1147, %v4489
      %v4554 = vmul.f32 %v1148, %v4490
      %v4555 = vmul.f32 %v1149, %v4491
      %v4556 = vmul.f32 %v1150, %v4492
      %v4557 = vmul.f32 %v1151, %v4493
      %v4558 = vmul.f32 %v1152, %v4494
      %v4559 = vmul.f32 %v1153, %v4495
      %v4560 = vmul.f32 %v1154, %v4496
      %v4561 = vmul.f32 %v1155, %v4497
      %v4562 = vmul.f32 %v1156, %v4498
      %v4563 = vmul.f32 %v1157, %v4499
      %v4564 = vpack.c.bf16 %v3300, %v3299
      %v4565 = vpack.c.bf16 %v4501, %v4500
      %v4566 = vpack.c.bf16 %v3302, %v3301
      %v4567 = vpack.c.bf16 %v4503, %v4502
      %v4568 = vpack.c.bf16 %v3304, %v3303
      %v4569 = vpack.c.bf16 %v4505, %v4504
      %v4570 = vpack.c.bf16 %v3306, %v3305
      %v4571 = vpack.c.bf16 %v4507, %v4506
      %v4572 = vpack.c.bf16 %v3308, %v3307
      %v4573 = vpack.c.bf16 %v4509, %v4508
      %v4574 = vpack.c.bf16 %v3310, %v3309
      %v4575 = vpack.c.bf16 %v4511, %v4510
      %v4576 = vpack.c.bf16 %v3312, %v3311
      %v4577 = vpack.c.bf16 %v4513, %v4512
      %v4578 = vpack.c.bf16 %v3314, %v3313
      %v4579 = vpack.c.bf16 %v4515, %v4514
      %v4580 = vpack.c.bf16 %v3316, %v3315
      %v4581 = vpack.c.bf16 %v4517, %v4516
      %v4582 = vpack.c.bf16 %v3318, %v3317
      %v4583 = vpack.c.bf16 %v4519, %v4518
      %v4584 = vpack.c.bf16 %v3320, %v3319
      %v4585 = vpack.c.bf16 %v4521, %v4520
      %v4586 = vpack.c.bf16 %v3322, %v3321
      %v4587 = vpack.c.bf16 %v4523, %v4522
      %v4588 = vpack.c.bf16 %v3324, %v3323
      %v4589 = vpack.c.bf16 %v4525, %v4524
      %v4590 = vpack.c.bf16 %v3326, %v3325
      %v4591 = vpack.c.bf16 %v4527, %v4526
      %v4592 = vpack.c.bf16 %v3328, %v3327
      %v4593 = vpack.c.bf16 %v4529, %v4528
      %v4594 = vpack.c.bf16 %v3330, %v3329
      %v4595 = vpack.c.bf16 %v4531, %v4530
      %v4596 = vpack.c.bf16 %v3332, %v3331
      %v4597 = vpack.c.bf16 %v4533, %v4532
      %v4598 = vpack.c.bf16 %v3334, %v3333
      %v4599 = vpack.c.bf16 %v4535, %v4534
      %v4600 = vpack.c.bf16 %v3336, %v3335
      %v4601 = vpack.c.bf16 %v4537, %v4536
      %v4602 = vpack.c.bf16 %v3338, %v3337
      %v4603 = vpack.c.bf16 %v4539, %v4538
      %v4604 = vpack.c.bf16 %v3340, %v3339
      %v4605 = vpack.c.bf16 %v4541, %v4540
      %v4606 = vpack.c.bf16 %v3342, %v3341
      %v4607 = vpack.c.bf16 %v4543, %v4542
      %v4608 = vpack.c.bf16 %v3344, %v3343
      %v4609 = vpack.c.bf16 %v4545, %v4544
      %v4610 = vpack.c.bf16 %v3346, %v3345
      %v4611 = vpack.c.bf16 %v4547, %v4546
      %v4612 = vpack.c.bf16 %v3348, %v3347
      %v4613 = vpack.c.bf16 %v4549, %v4548
      %v4614 = vpack.c.bf16 %v3350, %v3349
      %v4615 = vpack.c.bf16 %v4551, %v4550
      %v4616 = vpack.c.bf16 %v3352, %v3351
      %v4617 = vpack.c.bf16 %v4553, %v4552
      %v4618 = vpack.c.bf16 %v3354, %v3353
      %v4619 = vpack.c.bf16 %v4555, %v4554
      %v4620 = vpack.c.bf16 %v3356, %v3355
      %v4621 = vpack.c.bf16 %v4557, %v4556
      %v4622 = vpack.c.bf16 %v3358, %v3357
      %v4623 = vpack.c.bf16 %v4559, %v4558
      %v4624 = vpack.c.bf16 %v3360, %v3359
      %v4625 = vpack.c.bf16 %v4561, %v4560
      %v4626 = vpack.c.bf16 %v3362, %v3361
      %v4627 = vpack.c.bf16 %v4563, %v4562
      %v4628 = vld [vmem:[%s4] sm:$0xf]
      %v4629 = vld [vmem:[%s4 + $0x4] sm:$0xf]
      %v4630 = vld [vmem:[%s4 + $0x8] sm:$0xf]
      %v4631 = vld [vmem:[%s4 + $0xc] sm:$0xf]
      %v4632 = vld [vmem:[%s4 + $0x10] sm:$0xf]
      %v4633 = vld [vmem:[%s4 + $0x14] sm:$0xf]
      %v4634 = vld [vmem:[%s4 + $0x18] sm:$0xf]
      %v4635 = vld [vmem:[%s4 + $0x1c] sm:$0xf]
      %v4636 = vld [vmem:[%s4 + $0x20] sm:$0xf]
      %v4637 = vld [vmem:[%s4 + $0x24] sm:$0xf]
      %v4638 = vld [vmem:[%s4 + $0x28] sm:$0xf]
      %v4639 = vld [vmem:[%s4 + $0x2c] sm:$0xf]
      %v4640 = vld [vmem:[%s4 + $0x30] sm:$0xf]
      %v4641 = vld [vmem:[%s4 + $0x34] sm:$0xf]
      %v4642 = vld [vmem:[%s4 + $0x38] sm:$0xf]
      %v4643 = vld [vmem:[%s4 + $0x3c] sm:$0xf]
      %v4644 = vld [vmem:[%s4 + $0x40] sm:$0xf]
      %v4645 = vld [vmem:[%s4 + $0x44] sm:$0xf]
      %v4646 = vld [vmem:[%s4 + $0x48] sm:$0xf]
      %v4647 = vld [vmem:[%s4 + $0x4c] sm:$0xf]
      %v4648 = vld [vmem:[%s4 + $0x50] sm:$0xf]
      %v4649 = vld [vmem:[%s4 + $0x54] sm:$0xf]
      %v4650 = vld [vmem:[%s4 + $0x58] sm:$0xf]
      %v4651 = vld [vmem:[%s4 + $0x5c] sm:$0xf]
      %v4652 = vld [vmem:[%s4 + $0x60] sm:$0xf]
      %v4653 = vld [vmem:[%s4 + $0x64] sm:$0xf]
      %v4654 = vld [vmem:[%s4 + $0x68] sm:$0xf]
      %v4655 = vld [vmem:[%s4 + $0x6c] sm:$0xf]
      %v4656 = vld [vmem:[%s4 + $0x70] sm:$0xf]
      %v4657 = vld [vmem:[%s4 + $0x74] sm:$0xf]
      %v4658 = vld [vmem:[%s4 + $0x78] sm:$0xf]
      %v4659 = vld [vmem:[%s4 + $0x7c] sm:$0xf]
      %v4692 = vunpack.c.l.b16 %v4628
      %v4693 = vunpack.c.l.b16 %v4629
      %v4694 = vunpack.c.l.b16 %v4630
      %v4695 = vunpack.c.l.b16 %v4631
      %v4696 = vunpack.c.l.b16 %v4632
      %v4697 = vunpack.c.l.b16 %v4633
      %v4698 = vunpack.c.l.b16 %v4634
      %v4699 = vunpack.c.l.b16 %v4635
      %v4700 = vunpack.c.l.b16 %v4636
      %v4701 = vunpack.c.l.b16 %v4637
      %v4702 = vunpack.c.l.b16 %v4638
      %v4703 = vunpack.c.l.b16 %v4639
      %v4704 = vunpack.c.l.b16 %v4640
      %v4705 = vunpack.c.l.b16 %v4641
      %v4706 = vunpack.c.l.b16 %v4642
      %v4707 = vunpack.c.l.b16 %v4643
      %v4708 = vunpack.c.l.b16 %v4644
      %v4709 = vunpack.c.l.b16 %v4645
      %v4710 = vunpack.c.l.b16 %v4646
      %v4711 = vunpack.c.l.b16 %v4647
      %v4712 = vunpack.c.l.b16 %v4648
      %v4713 = vunpack.c.l.b16 %v4649
      %v4714 = vunpack.c.l.b16 %v4650
      %v4715 = vunpack.c.l.b16 %v4651
      %v4716 = vunpack.c.l.b16 %v4652
      %v4717 = vunpack.c.l.b16 %v4653
      %v4718 = vunpack.c.l.b16 %v4654
      %v4719 = vunpack.c.l.b16 %v4655
      %v4720 = vunpack.c.l.b16 %v4656
      %v4721 = vunpack.c.l.b16 %v4657
      %v4722 = vunpack.c.l.b16 %v4658
      %v4723 = vunpack.c.l.b16 %v4659
      %v4724 = vpack.c.b16 %v4693, %v4692
      %v4725 = vpack.c.b16 %v4695, %v4694
      %v4726 = vpack.c.b16 %v4697, %v4696
      %v4727 = vpack.c.b16 %v4699, %v4698
      %v4728 = vpack.c.b16 %v4701, %v4700
      %v4729 = vpack.c.b16 %v4703, %v4702
      %v4730 = vpack.c.b16 %v4705, %v4704
      %v4731 = vpack.c.b16 %v4707, %v4706
      %v4732 = vpack.c.b16 %v4709, %v4708
      %v4733 = vpack.c.b16 %v4711, %v4710
      %v4734 = vpack.c.b16 %v4713, %v4712
      %v4735 = vpack.c.b16 %v4715, %v4714
      %v4736 = vpack.c.b16 %v4717, %v4716
      %v4737 = vpack.c.b16 %v4719, %v4718
      %v4738 = vpack.c.b16 %v4721, %v4720
      %v4739 = vpack.c.b16 %v4723, %v4722
      %4756 = vmatprep.subr.bf16.mxu0 0
      %4757 = vmatpush1.bf16.msra.mxu0 %v4731
      %4758 = vmatprep.subr.bf16.mxu0 0
      %4759 = vmatpush1.bf16.msra.mxu0 %v4730
      %4760 = vmatprep.subr.bf16.mxu0 0
      %4761 = vmatpush1.bf16.msra.mxu0 %v4729
      %4762 = vmatprep.subr.bf16.mxu0 0
      %4763 = vmatpush1.bf16.msra.mxu0 %v4728
      %4764 = vmatprep.subr.bf16.mxu0 0
      %4765 = vmatpush1.bf16.msra.mxu0 %v4727
      %4766 = vmatprep.subr.bf16.mxu0 0
      %4767 = vmatpush1.bf16.msra.mxu0 %v4726
      %4768 = vmatprep.subr.bf16.mxu0 0
      %4769 = vmatpush1.bf16.msra.mxu0 %v4725
      %4770 = vmatprep.subr.bf16.mxu0 0
      %4771 = vmatpush1.bf16.msra.mxu0 %v4724
      %4772 = vmatprep.subr.bf16.mxu0 0
      %4773 = vmatpush2.bf16.msra.mxu0 %v4739
      %4774 = vmatprep.subr.bf16.mxu0 0
      %4775 = vmatpush2.bf16.msra.mxu0 %v4738
      %4776 = vmatprep.subr.bf16.mxu0 0
      %4777 = vmatpush2.bf16.msra.mxu0 %v4737
      %4778 = vmatprep.subr.bf16.mxu0 0
      %4779 = vmatpush2.bf16.msra.mxu0 %v4736
      %4780 = vmatprep.subr.bf16.mxu0 0
      %4781 = vmatpush2.bf16.msra.mxu0 %v4735
      %4782 = vmatprep.subr.bf16.mxu0 0
      %4783 = vmatpush2.bf16.msra.mxu0 %v4734
      %4784 = vmatprep.subr.bf16.mxu0 0
      %4785 = vmatpush2.bf16.msra.mxu0 %v4733
      %4786 = vmatprep.subr.bf16.mxu0 0
      %4787 = vmatpush2.bf16.msra.mxu0 %v4732
      %4788 = vmatprep.mubr.bf16.mxu0 %v4565
      %4789 = vmatmul.mubr.bf16.gmra.mxu0 %v4564
      %v4790 = vpop.f32.mrf.mxu0
      %v4791 = vadd.f32 0.0, %v4790
      %v4792 = vpop.f32.mrf.mxu0
      %v4793 = vpop.f32.mrf.mxu0
      %v4794 = vadd.f32 0.0, %v4793
      %v4795 = vpop.f32.mrf.mxu0
      %4796 = vmatprep.mubr.bf16.mxu0 %v4567
      %4797 = vmatmul.mubr.bf16.gmra.mxu0 %v4566
      %v4798 = vpop.f32.mrf.mxu0
      %v4799 = vadd.f32 0.0, %v4798
      %v4800 = vpop.f32.mrf.mxu0
      %v4801 = vpop.f32.mrf.mxu0
      %v4802 = vadd.f32 0.0, %v4801
      %v4803 = vpop.f32.mrf.mxu0
      %4804 = vmatprep.mubr.bf16.mxu0 %v4569
      %4805 = vmatmul.mubr.bf16.gmra.mxu0 %v4568
      %v4806 = vpop.f32.mrf.mxu0
      %v4807 = vadd.f32 0.0, %v4806
      %v4808 = vpop.f32.mrf.mxu0
      %v4809 = vpop.f32.mrf.mxu0
      %v4810 = vadd.f32 0.0, %v4809
      %v4811 = vpop.f32.mrf.mxu0
      %4812 = vmatprep.mubr.bf16.mxu0 %v4571
      %4813 = vmatmul.mubr.bf16.gmra.mxu0 %v4570
      %v4814 = vpop.f32.mrf.mxu0
      %v4815 = vadd.f32 0.0, %v4814
      %v4816 = vpop.f32.mrf.mxu0
      %v4817 = vpop.f32.mrf.mxu0
      %v4818 = vadd.f32 0.0, %v4817
      %v4819 = vpop.f32.mrf.mxu0
      %4820 = vmatprep.mubr.bf16.mxu0 %v4573
      %4821 = vmatmul.mubr.bf16.gmra.mxu0 %v4572
      %v4822 = vpop.f32.mrf.mxu0
      %v4823 = vadd.f32 0.0, %v4822
      %v4824 = vpop.f32.mrf.mxu0
      %v4825 = vpop.f32.mrf.mxu0
      %v4826 = vadd.f32 0.0, %v4825
      %v4827 = vpop.f32.mrf.mxu0
      %4828 = vmatprep.mubr.bf16.mxu0 %v4575
      %4829 = vmatmul.mubr.bf16.gmra.mxu0 %v4574
      %v4830 = vpop.f32.mrf.mxu0
      %v4831 = vadd.f32 0.0, %v4830
      %v4832 = vpop.f32.mrf.mxu0
      %v4833 = vpop.f32.mrf.mxu0
      %v4834 = vadd.f32 0.0, %v4833
      %v4835 = vpop.f32.mrf.mxu0
      %4836 = vmatprep.mubr.bf16.mxu0 %v4577
      %4837 = vmatmul.mubr.bf16.gmra.mxu0 %v4576
      %v4838 = vpop.f32.mrf.mxu0
      %v4839 = vadd.f32 0.0, %v4838
      %v4840 = vpop.f32.mrf.mxu0
      %v4841 = vpop.f32.mrf.mxu0
      %v4842 = vadd.f32 0.0, %v4841
      %v4843 = vpop.f32.mrf.mxu0
      %4844 = vmatprep.mubr.bf16.mxu0 %v4579
      %4845 = vmatmul.mubr.bf16.gmra.mxu0 %v4578
      %v4846 = vpop.f32.mrf.mxu0
      %v4847 = vadd.f32 0.0, %v4846
      %v4848 = vpop.f32.mrf.mxu0
      %v4849 = vpop.f32.mrf.mxu0
      %v4850 = vadd.f32 0.0, %v4849
      %v4851 = vpop.f32.mrf.mxu0
      %4852 = vmatprep.mubr.bf16.mxu0 %v4581
      %4853 = vmatmul.mubr.bf16.gmra.mxu0 %v4580
      %v4854 = vpop.f32.mrf.mxu0
      %v4855 = vadd.f32 0.0, %v4854
      %v4856 = vpop.f32.mrf.mxu0
      %v4857 = vpop.f32.mrf.mxu0
      %v4858 = vadd.f32 0.0, %v4857
      %v4859 = vpop.f32.mrf.mxu0
      %4860 = vmatprep.mubr.bf16.mxu0 %v4583
      %4861 = vmatmul.mubr.bf16.gmra.mxu0 %v4582
      %v4862 = vpop.f32.mrf.mxu0
      %v4863 = vadd.f32 0.0, %v4862
      %v4864 = vpop.f32.mrf.mxu0
      %v4865 = vpop.f32.mrf.mxu0
      %v4866 = vadd.f32 0.0, %v4865
      %v4867 = vpop.f32.mrf.mxu0
      %4868 = vmatprep.mubr.bf16.mxu0 %v4585
      %4869 = vmatmul.mubr.bf16.gmra.mxu0 %v4584
      %v4870 = vpop.f32.mrf.mxu0
      %v4871 = vadd.f32 0.0, %v4870
      %v4872 = vpop.f32.mrf.mxu0
      %v4873 = vpop.f32.mrf.mxu0
      %v4874 = vadd.f32 0.0, %v4873
      %v4875 = vpop.f32.mrf.mxu0
      %4876 = vmatprep.mubr.bf16.mxu0 %v4587
      %4877 = vmatmul.mubr.bf16.gmra.mxu0 %v4586
      %v4878 = vpop.f32.mrf.mxu0
      %v4879 = vadd.f32 0.0, %v4878
      %v4880 = vpop.f32.mrf.mxu0
      %v4881 = vpop.f32.mrf.mxu0
      %v4882 = vadd.f32 0.0, %v4881
      %v4883 = vpop.f32.mrf.mxu0
      %4884 = vmatprep.mubr.bf16.mxu0 %v4589
      %4885 = vmatmul.mubr.bf16.gmra.mxu0 %v4588
      %v4886 = vpop.f32.mrf.mxu0
      %v4887 = vadd.f32 0.0, %v4886
      %v4888 = vpop.f32.mrf.mxu0
      %v4889 = vpop.f32.mrf.mxu0
      %v4890 = vadd.f32 0.0, %v4889
      %v4891 = vpop.f32.mrf.mxu0
      %4892 = vmatprep.mubr.bf16.mxu0 %v4591
      %4893 = vmatmul.mubr.bf16.gmra.mxu0 %v4590
      %v4894 = vpop.f32.mrf.mxu0
      %v4895 = vadd.f32 0.0, %v4894
      %v4896 = vpop.f32.mrf.mxu0
      %v4897 = vpop.f32.mrf.mxu0
      %v4898 = vadd.f32 0.0, %v4897
      %v4899 = vpop.f32.mrf.mxu0
      %4900 = vmatprep.mubr.bf16.mxu0 %v4593
      %4901 = vmatmul.mubr.bf16.gmra.mxu0 %v4592
      %v4902 = vpop.f32.mrf.mxu0
      %v4903 = vadd.f32 0.0, %v4902
      %v4904 = vpop.f32.mrf.mxu0
      %v4905 = vpop.f32.mrf.mxu0
      %v4906 = vadd.f32 0.0, %v4905
      %v4907 = vpop.f32.mrf.mxu0
      %4908 = vmatprep.mubr.bf16.mxu0 %v4595
      %4909 = vmatmul.mubr.bf16.gmra.mxu0 %v4594
      %v4910 = vpop.f32.mrf.mxu0
      %v4911 = vadd.f32 0.0, %v4910
      %v4912 = vpop.f32.mrf.mxu0
      %v4913 = vpop.f32.mrf.mxu0
      %v4914 = vadd.f32 0.0, %v4913
      %v4915 = vpop.f32.mrf.mxu0
      %4916 = vmatprep.mubr.bf16.mxu0 %v4597
      %4917 = vmatmul.mubr.bf16.gmra.mxu0 %v4596
      %v4918 = vpop.f32.mrf.mxu0
      %v4919 = vadd.f32 0.0, %v4918
      %v4920 = vpop.f32.mrf.mxu0
      %v4921 = vpop.f32.mrf.mxu0
      %v4922 = vadd.f32 0.0, %v4921
      %v4923 = vpop.f32.mrf.mxu0
      %4924 = vmatprep.mubr.bf16.mxu0 %v4599
      %4925 = vmatmul.mubr.bf16.gmra.mxu0 %v4598
      %v4926 = vpop.f32.mrf.mxu0
      %v4927 = vadd.f32 0.0, %v4926
      %v4928 = vpop.f32.mrf.mxu0
      %v4929 = vpop.f32.mrf.mxu0
      %v4930 = vadd.f32 0.0, %v4929
      %v4931 = vpop.f32.mrf.mxu0
      %4932 = vmatprep.mubr.bf16.mxu0 %v4601
      %4933 = vmatmul.mubr.bf16.gmra.mxu0 %v4600
      %v4934 = vpop.f32.mrf.mxu0
      %v4935 = vadd.f32 0.0, %v4934
      %v4936 = vpop.f32.mrf.mxu0
      %v4937 = vpop.f32.mrf.mxu0
      %v4938 = vadd.f32 0.0, %v4937
      %v4939 = vpop.f32.mrf.mxu0
      %4940 = vmatprep.mubr.bf16.mxu0 %v4603
      %4941 = vmatmul.mubr.bf16.gmra.mxu0 %v4602
      %v4942 = vpop.f32.mrf.mxu0
      %v4943 = vadd.f32 0.0, %v4942
      %v4944 = vpop.f32.mrf.mxu0
      %v4945 = vpop.f32.mrf.mxu0
      %v4946 = vadd.f32 0.0, %v4945
      %v4947 = vpop.f32.mrf.mxu0
      %4948 = vmatprep.mubr.bf16.mxu0 %v4605
      %4949 = vmatmul.mubr.bf16.gmra.mxu0 %v4604
      %v4950 = vpop.f32.mrf.mxu0
      %v4951 = vadd.f32 0.0, %v4950
      %v4952 = vpop.f32.mrf.mxu0
      %v4953 = vpop.f32.mrf.mxu0
      %v4954 = vadd.f32 0.0, %v4953
      %v4955 = vpop.f32.mrf.mxu0
      %4956 = vmatprep.mubr.bf16.mxu0 %v4607
      %4957 = vmatmul.mubr.bf16.gmra.mxu0 %v4606
      %v4958 = vpop.f32.mrf.mxu0
      %v4959 = vadd.f32 0.0, %v4958
      %v4960 = vpop.f32.mrf.mxu0
      %v4961 = vpop.f32.mrf.mxu0
      %v4962 = vadd.f32 0.0, %v4961
      %v4963 = vpop.f32.mrf.mxu0
      %4964 = vmatprep.mubr.bf16.mxu0 %v4609
      %4965 = vmatmul.mubr.bf16.gmra.mxu0 %v4608
      %v4966 = vpop.f32.mrf.mxu0
      %v4967 = vadd.f32 0.0, %v4966
      %v4968 = vpop.f32.mrf.mxu0
      %v4969 = vpop.f32.mrf.mxu0
      %v4970 = vadd.f32 0.0, %v4969
      %v4971 = vpop.f32.mrf.mxu0
      %4972 = vmatprep.mubr.bf16.mxu0 %v4611
      %4973 = vmatmul.mubr.bf16.gmra.mxu0 %v4610
      %v4974 = vpop.f32.mrf.mxu0
      %v4975 = vadd.f32 0.0, %v4974
      %v4976 = vpop.f32.mrf.mxu0
      %v4977 = vpop.f32.mrf.mxu0
      %v4978 = vadd.f32 0.0, %v4977
      %v4979 = vpop.f32.mrf.mxu0
      %4980 = vmatprep.mubr.bf16.mxu0 %v4613
      %4981 = vmatmul.mubr.bf16.gmra.mxu0 %v4612
      %v4982 = vpop.f32.mrf.mxu0
      %v4983 = vadd.f32 0.0, %v4982
      %v4984 = vpop.f32.mrf.mxu0
      %v4985 = vpop.f32.mrf.mxu0
      %v4986 = vadd.f32 0.0, %v4985
      %v4987 = vpop.f32.mrf.mxu0
      %4988 = vmatprep.mubr.bf16.mxu0 %v4615
      %4989 = vmatmul.mubr.bf16.gmra.mxu0 %v4614
      %v4990 = vpop.f32.mrf.mxu0
      %v4991 = vadd.f32 0.0, %v4990
      %v4992 = vpop.f32.mrf.mxu0
      %v4993 = vpop.f32.mrf.mxu0
      %v4994 = vadd.f32 0.0, %v4993
      %v4995 = vpop.f32.mrf.mxu0
      %4996 = vmatprep.mubr.bf16.mxu0 %v4617
      %4997 = vmatmul.mubr.bf16.gmra.mxu0 %v4616
      %v4998 = vpop.f32.mrf.mxu0
      %v4999 = vadd.f32 0.0, %v4998
      %v5000 = vpop.f32.mrf.mxu0
      %v5001 = vpop.f32.mrf.mxu0
      %v5002 = vadd.f32 0.0, %v5001
      %v5003 = vpop.f32.mrf.mxu0
      %5004 = vmatprep.mubr.bf16.mxu0 %v4619
      %5005 = vmatmul.mubr.bf16.gmra.mxu0 %v4618
      %v5006 = vpop.f32.mrf.mxu0
      %v5007 = vadd.f32 0.0, %v5006
      %v5008 = vpop.f32.mrf.mxu0
      %v5009 = vpop.f32.mrf.mxu0
      %v5010 = vadd.f32 0.0, %v5009
      %v5011 = vpop.f32.mrf.mxu0
      %5012 = vmatprep.mubr.bf16.mxu0 %v4621
      %5013 = vmatmul.mubr.bf16.gmra.mxu0 %v4620
      %v5014 = vpop.f32.mrf.mxu0
      %v5015 = vadd.f32 0.0, %v5014
      %v5016 = vpop.f32.mrf.mxu0
      %v5017 = vpop.f32.mrf.mxu0
      %v5018 = vadd.f32 0.0, %v5017
      %v5019 = vpop.f32.mrf.mxu0
      %5020 = vmatprep.mubr.bf16.mxu0 %v4623
      %5021 = vmatmul.mubr.bf16.gmra.mxu0 %v4622
      %v5022 = vpop.f32.mrf.mxu0
      %v5023 = vadd.f32 0.0, %v5022
      %v5024 = vpop.f32.mrf.mxu0
      %v5025 = vpop.f32.mrf.mxu0
      %v5026 = vadd.f32 0.0, %v5025
      %v5027 = vpop.f32.mrf.mxu0
      %5028 = vmatprep.mubr.bf16.mxu0 %v4625
      %5029 = vmatmul.mubr.bf16.gmra.mxu0 %v4624
      %v5030 = vpop.f32.mrf.mxu0
      %v5031 = vadd.f32 0.0, %v5030
      %v5032 = vpop.f32.mrf.mxu0
      %v5033 = vpop.f32.mrf.mxu0
      %v5034 = vadd.f32 0.0, %v5033
      %v5035 = vpop.f32.mrf.mxu0
      %5036 = vmatprep.mubr.bf16.mxu0 %v4627
      %5037 = vmatmul.mubr.bf16.gmra.mxu0 %v4626
      %v5038 = vpop.f32.mrf.mxu0
      %v5039 = vadd.f32 0.0, %v5038
      %v5040 = vpop.f32.mrf.mxu0
      %v5041 = vpop.f32.mrf.mxu0
      %v5042 = vadd.f32 0.0, %v5041
      %v5043 = vpop.f32.mrf.mxu0
      %5044 = vdwg.mxu0
      %v5045 = vld [vmem:[%s5 + $0xe] sm:$0x1]
      %v5046 = vlaneseq
      %v5047 = vshrl.u32 %v5046, 7
      %v5048 = vsub.s32 0, %v5047
      %v5049 = vrot.slane %v5045, %v5048
      %v5050 = vmul.f32 %v4791, %v5049
      %v5051 = vmul.f32 %v4794, %v5049
      %v5052 = vmul.f32 %v4799, %v5049
      %v5053 = vmul.f32 %v4802, %v5049
      %v5054 = vmul.f32 %v4807, %v5049
      %v5055 = vmul.f32 %v4810, %v5049
      %v5056 = vmul.f32 %v4815, %v5049
      %v5057 = vmul.f32 %v4818, %v5049
      %v5058 = vmul.f32 %v4823, %v5049
      %v5059 = vmul.f32 %v4826, %v5049
      %v5060 = vmul.f32 %v4831, %v5049
      %v5061 = vmul.f32 %v4834, %v5049
      %v5062 = vmul.f32 %v4839, %v5049
      %v5063 = vmul.f32 %v4842, %v5049
      %v5064 = vmul.f32 %v4847, %v5049
      %v5065 = vmul.f32 %v4850, %v5049
      %v5066 = vmul.f32 %v4855, %v5049
      %v5067 = vmul.f32 %v4858, %v5049
      %v5068 = vmul.f32 %v4863, %v5049
      %v5069 = vmul.f32 %v4866, %v5049
      %v5070 = vmul.f32 %v4871, %v5049
      %v5071 = vmul.f32 %v4874, %v5049
      %v5072 = vmul.f32 %v4879, %v5049
      %v5073 = vmul.f32 %v4882, %v5049
      %v5074 = vmul.f32 %v4887, %v5049
      %v5075 = vmul.f32 %v4890, %v5049
      %v5076 = vmul.f32 %v4895, %v5049
      %v5077 = vmul.f32 %v4898, %v5049
      %v5078 = vmul.f32 %v4903, %v5049
      %v5079 = vmul.f32 %v4906, %v5049
      %v5080 = vmul.f32 %v4911, %v5049
      %v5081 = vmul.f32 %v4914, %v5049
      %v5082 = vmul.f32 %v4919, %v5049
      %v5083 = vmul.f32 %v4922, %v5049
      %v5084 = vmul.f32 %v4927, %v5049
      %v5085 = vmul.f32 %v4930, %v5049
      %v5086 = vmul.f32 %v4935, %v5049
      %v5087 = vmul.f32 %v4938, %v5049
      %v5088 = vmul.f32 %v4943, %v5049
      %v5089 = vmul.f32 %v4946, %v5049
      %v5090 = vmul.f32 %v4951, %v5049
      %v5091 = vmul.f32 %v4954, %v5049
      %v5092 = vmul.f32 %v4959, %v5049
      %v5093 = vmul.f32 %v4962, %v5049
      %v5094 = vmul.f32 %v4967, %v5049
      %v5095 = vmul.f32 %v4970, %v5049
      %v5096 = vmul.f32 %v4975, %v5049
      %v5097 = vmul.f32 %v4978, %v5049
      %v5098 = vmul.f32 %v4983, %v5049
      %v5099 = vmul.f32 %v4986, %v5049
      %v5100 = vmul.f32 %v4991, %v5049
      %v5101 = vmul.f32 %v4994, %v5049
      %v5102 = vmul.f32 %v4999, %v5049
      %v5103 = vmul.f32 %v5002, %v5049
      %v5104 = vmul.f32 %v5007, %v5049
      %v5105 = vmul.f32 %v5010, %v5049
      %v5106 = vmul.f32 %v5015, %v5049
      %v5107 = vmul.f32 %v5018, %v5049
      %v5108 = vmul.f32 %v5023, %v5049
      %v5109 = vmul.f32 %v5026, %v5049
      %v5110 = vmul.f32 %v5031, %v5049
      %v5111 = vmul.f32 %v5034, %v5049
      %v5112 = vmul.f32 %v5039, %v5049
      %v5113 = vmul.f32 %v5042, %v5049
      %v5114 = vld [vmem:[%s5 + $0xf] sm:$0x1]
      %v5115 = vlaneseq
      %v5116 = vshrl.u32 %v5115, 7
      %v5117 = vsub.s32 0, %v5116
      %v5118 = vrot.slane %v5114, %v5117
      %v5119 = vadd.f32 %v5050, %v5118
      %v5120 = vadd.f32 %v5051, %v5118
      %v5121 = vadd.f32 %v5052, %v5118
      %v5122 = vadd.f32 %v5053, %v5118
      %v5123 = vadd.f32 %v5054, %v5118
      %v5124 = vadd.f32 %v5055, %v5118
      %v5125 = vadd.f32 %v5056, %v5118
      %v5126 = vadd.f32 %v5057, %v5118
      %v5127 = vadd.f32 %v5058, %v5118
      %v5128 = vadd.f32 %v5059, %v5118
      %v5129 = vadd.f32 %v5060, %v5118
      %v5130 = vadd.f32 %v5061, %v5118
      %v5131 = vadd.f32 %v5062, %v5118
      %v5132 = vadd.f32 %v5063, %v5118
      %v5133 = vadd.f32 %v5064, %v5118
      %v5134 = vadd.f32 %v5065, %v5118
      %v5135 = vadd.f32 %v5066, %v5118
      %v5136 = vadd.f32 %v5067, %v5118
      %v5137 = vadd.f32 %v5068, %v5118
      %v5138 = vadd.f32 %v5069, %v5118
      %v5139 = vadd.f32 %v5070, %v5118
      %v5140 = vadd.f32 %v5071, %v5118
      %v5141 = vadd.f32 %v5072, %v5118
      %v5142 = vadd.f32 %v5073, %v5118
      %v5143 = vadd.f32 %v5074, %v5118
      %v5144 = vadd.f32 %v5075, %v5118
      %v5145 = vadd.f32 %v5076, %v5118
      %v5146 = vadd.f32 %v5077, %v5118
      %v5147 = vadd.f32 %v5078, %v5118
      %v5148 = vadd.f32 %v5079, %v5118
      %v5149 = vadd.f32 %v5080, %v5118
      %v5150 = vadd.f32 %v5081, %v5118
      %v5151 = vadd.f32 %v5082, %v5118
      %v5152 = vadd.f32 %v5083, %v5118
      %v5153 = vadd.f32 %v5084, %v5118
      %v5154 = vadd.f32 %v5085, %v5118
      %v5155 = vadd.f32 %v5086, %v5118
      %v5156 = vadd.f32 %v5087, %v5118
      %v5157 = vadd.f32 %v5088, %v5118
      %v5158 = vadd.f32 %v5089, %v5118
      %v5159 = vadd.f32 %v5090, %v5118
      %v5160 = vadd.f32 %v5091, %v5118
      %v5161 = vadd.f32 %v5092, %v5118
      %v5162 = vadd.f32 %v5093, %v5118
      %v5163 = vadd.f32 %v5094, %v5118
      %v5164 = vadd.f32 %v5095, %v5118
      %v5165 = vadd.f32 %v5096, %v5118
      %v5166 = vadd.f32 %v5097, %v5118
      %v5167 = vadd.f32 %v5098, %v5118
      %v5168 = vadd.f32 %v5099, %v5118
      %v5169 = vadd.f32 %v5100, %v5118
      %v5170 = vadd.f32 %v5101, %v5118
      %v5171 = vadd.f32 %v5102, %v5118
      %v5172 = vadd.f32 %v5103, %v5118
      %v5173 = vadd.f32 %v5104, %v5118
      %v5174 = vadd.f32 %v5105, %v5118
      %v5175 = vadd.f32 %v5106, %v5118
      %v5176 = vadd.f32 %v5107, %v5118
      %v5177 = vadd.f32 %v5108, %v5118
      %v5178 = vadd.f32 %v5109, %v5118
      %v5179 = vadd.f32 %v5110, %v5118
      %v5180 = vadd.f32 %v5111, %v5118
      %v5181 = vadd.f32 %v5112, %v5118
      %v5182 = vadd.f32 %v5113, %v5118
      %v5183 = vmax.f32 %v5119, 0.0
      %v5184 = vmax.f32 %v5120, 0.0
      %v5185 = vmax.f32 %v5121, 0.0
      %v5186 = vmax.f32 %v5122, 0.0
      %v5187 = vmax.f32 %v5123, 0.0
      %v5188 = vmax.f32 %v5124, 0.0
      %v5189 = vmax.f32 %v5125, 0.0
      %v5190 = vmax.f32 %v5126, 0.0
      %v5191 = vmax.f32 %v5127, 0.0
      %v5192 = vmax.f32 %v5128, 0.0
      %v5193 = vmax.f32 %v5129, 0.0
      %v5194 = vmax.f32 %v5130, 0.0
      %v5195 = vmax.f32 %v5131, 0.0
      %v5196 = vmax.f32 %v5132, 0.0
      %v5197 = vmax.f32 %v5133, 0.0
      %v5198 = vmax.f32 %v5134, 0.0
      %v5199 = vmax.f32 %v5135, 0.0
      %v5200 = vmax.f32 %v5136, 0.0
      %v5201 = vmax.f32 %v5137, 0.0
      %v5202 = vmax.f32 %v5138, 0.0
      %v5203 = vmax.f32 %v5139, 0.0
      %v5204 = vmax.f32 %v5140, 0.0
      %v5205 = vmax.f32 %v5141, 0.0
      %v5206 = vmax.f32 %v5142, 0.0
      %v5207 = vmax.f32 %v5143, 0.0
      %v5208 = vmax.f32 %v5144, 0.0
      %v5209 = vmax.f32 %v5145, 0.0
      %v5210 = vmax.f32 %v5146, 0.0
      %v5211 = vmax.f32 %v5147, 0.0
      %v5212 = vmax.f32 %v5148, 0.0
      %v5213 = vmax.f32 %v5149, 0.0
      %v5214 = vmax.f32 %v5150, 0.0
      %v5215 = vmax.f32 %v5151, 0.0
      %v5216 = vmax.f32 %v5152, 0.0
      %v5217 = vmax.f32 %v5153, 0.0
      %v5218 = vmax.f32 %v5154, 0.0
      %v5219 = vmax.f32 %v5155, 0.0
      %v5220 = vmax.f32 %v5156, 0.0
      %v5221 = vmax.f32 %v5157, 0.0
      %v5222 = vmax.f32 %v5158, 0.0
      %v5223 = vmax.f32 %v5159, 0.0
      %v5224 = vmax.f32 %v5160, 0.0
      %v5225 = vmax.f32 %v5161, 0.0
      %v5226 = vmax.f32 %v5162, 0.0
      %v5227 = vmax.f32 %v5163, 0.0
      %v5228 = vmax.f32 %v5164, 0.0
      %v5229 = vmax.f32 %v5165, 0.0
      %v5230 = vmax.f32 %v5166, 0.0
      %v5231 = vmax.f32 %v5167, 0.0
      %v5232 = vmax.f32 %v5168, 0.0
      %v5233 = vmax.f32 %v5169, 0.0
      %v5234 = vmax.f32 %v5170, 0.0
      %v5235 = vmax.f32 %v5171, 0.0
      %v5236 = vmax.f32 %v5172, 0.0
      %v5237 = vmax.f32 %v5173, 0.0
      %v5238 = vmax.f32 %v5174, 0.0
      %v5239 = vmax.f32 %v5175, 0.0
      %v5240 = vmax.f32 %v5176, 0.0
      %v5241 = vmax.f32 %v5177, 0.0
      %v5242 = vmax.f32 %v5178, 0.0
      %v5243 = vmax.f32 %v5179, 0.0
      %v5244 = vmax.f32 %v5180, 0.0
      %v5245 = vmax.f32 %v5181, 0.0
      %v5246 = vmax.f32 %v5182, 0.0
      %s5247 = scalar_lea.vmem %s2, 32
      %v5248 = vld [vmem:[%s5247] sm:$0xff]
      %v5249 = vld [vmem:[%s5247 + $0x8] sm:$0xff]
      %v5250 = vld [vmem:[%s3 + $0x10] sm:$0xff]
      %v5251 = vadd.f32 %v5183, %v5184
      %v5252 = vadd.f32 %v5251, %v5185
      %v5253 = vadd.f32 %v5252, %v5186
      %v5254 = vadd.f32 %v5253, %v5187
      %v5255 = vadd.f32 %v5254, %v5188
      %v5256 = vadd.f32 %v5255, %v5189
      %v5257 = vadd.f32 %v5256, %v5190
      %v5258 = vadd.f32 %v5257, %v5191
      %v5259 = vadd.f32 %v5258, %v5192
      %v5260 = vadd.f32 %v5259, %v5193
      %v5261 = vadd.f32 %v5260, %v5194
      %v5262 = vadd.f32 %v5261, %v5195
      %v5263 = vadd.f32 %v5262, %v5196
      %v5264 = vadd.f32 %v5263, %v5197
      %v5265 = vadd.f32 %v5264, %v5198
      %v5266 = vadd.f32 %v5265, %v5199
      %v5267 = vadd.f32 %v5266, %v5200
      %v5268 = vadd.f32 %v5267, %v5201
      %v5269 = vadd.f32 %v5268, %v5202
      %v5270 = vadd.f32 %v5269, %v5203
      %v5271 = vadd.f32 %v5270, %v5204
      %v5272 = vadd.f32 %v5271, %v5205
      %v5273 = vadd.f32 %v5272, %v5206
      %v5274 = vadd.f32 %v5273, %v5207
      %v5275 = vadd.f32 %v5274, %v5208
      %v5276 = vadd.f32 %v5275, %v5209
      %v5277 = vadd.f32 %v5276, %v5210
      %v5278 = vadd.f32 %v5277, %v5211
      %v5279 = vadd.f32 %v5278, %v5212
      %v5280 = vadd.f32 %v5279, %v5213
      %v5281 = vadd.f32 %v5280, %v5214
      %v5282 = vadd.f32 %v5281, %v5215
      %v5283 = vadd.f32 %v5282, %v5216
      %v5284 = vadd.f32 %v5283, %v5217
      %v5285 = vadd.f32 %v5284, %v5218
      %v5286 = vadd.f32 %v5285, %v5219
      %v5287 = vadd.f32 %v5286, %v5220
      %v5288 = vadd.f32 %v5287, %v5221
      %v5289 = vadd.f32 %v5288, %v5222
      %v5290 = vadd.f32 %v5289, %v5223
      %v5291 = vadd.f32 %v5290, %v5224
      %v5292 = vadd.f32 %v5291, %v5225
      %v5293 = vadd.f32 %v5292, %v5226
      %v5294 = vadd.f32 %v5293, %v5227
      %v5295 = vadd.f32 %v5294, %v5228
      %v5296 = vadd.f32 %v5295, %v5229
      %v5297 = vadd.f32 %v5296, %v5230
      %v5298 = vadd.f32 %v5297, %v5231
      %v5299 = vadd.f32 %v5298, %v5232
      %v5300 = vadd.f32 %v5299, %v5233
      %v5301 = vadd.f32 %v5300, %v5234
      %v5302 = vadd.f32 %v5301, %v5235
      %v5303 = vadd.f32 %v5302, %v5236
      %v5304 = vadd.f32 %v5303, %v5237
      %v5305 = vadd.f32 %v5304, %v5238
      %v5306 = vadd.f32 %v5305, %v5239
      %v5307 = vadd.f32 %v5306, %v5240
      %v5308 = vadd.f32 %v5307, %v5241
      %v5309 = vadd.f32 %v5308, %v5242
      %v5310 = vadd.f32 %v5309, %v5243
      %v5311 = vadd.f32 %v5310, %v5244
      %v5312 = vadd.f32 %v5311, %v5245
      %v5313 = vadd.f32 %v5312, %v5246
      %v5314 = vrot.slane %v5313, 4
      %v5315 = vadd.f32 %v5313, %v5314
      %v5316 = vrot.slane %v5315, 2
      %v5317 = vadd.f32 %v5315, %v5316
      %v5318 = vrot.slane %v5317, 1
      %v5319 = vadd.f32 %v5317, %v5318
      %v5320 = vmul.f32 %v5319, %v2234
      %v5321 = vmul.f32 %v5320, %v5248
      %5322 = vadd.xlane.f32.xlu0 %v5321
      %v5323 = vpop.xlane.xlu0 %5322
      %v5324 = vadd.f32 %v5323, %v5250
      %v5325 = vmax.f32 %v5324, 0.0
      %5327 = vset.pattern.permute.xlu0 0
      %5328 = vperm.xlu0 %5327, %v5325
      %v5329 = vpop.permute.xlu0 %5328
      %v5331 = vmul.f32 %v5329, %v5249
      %v5332 = vrot.slane %v5331, 4
      %v5333 = vadd.f32 %v5331, %v5332
      %v5334 = vrot.slane %v5333, 2
      %v5335 = vadd.f32 %v5333, %v5334
      %v5336 = vrot.slane %v5335, 1
      %v5337 = vadd.f32 %v5335, %v5336
      %v5338 = vld [vmem:[%s5 + $0x10] sm:$0x1]
      %v5339 = vadd.f32 %v5337, %v5338
      %v5340 = vxor.u32 %v5339, 2147483648
      %v5341 = vmul.f32 %v5340, 1.442695
      %v5342 = vpow.pop %v5341
      %v5343 = vadd.f32 %v5342, 1.0
      %v5344 = vrcp.pop %v5343
      %v5345 = vmul.f32 1.0, %v5344
      %v5346 = vld [vmem:[%s5 + $0x11] sm:$0x1]
      %v5347 = vlaneseq
      %v5348 = vshrl.u32 %v5347, 7
      %v5349 = vsub.s32 0, %v5348
      %v5350 = vrot.slane %v5346, %v5349
      %v5351 = vmul.f32 %v5183, %v5350
      %v5352 = vmul.f32 %v5184, %v5350
      %v5353 = vmul.f32 %v5185, %v5350
      %v5354 = vmul.f32 %v5186, %v5350
      %v5355 = vmul.f32 %v5187, %v5350
      %v5356 = vmul.f32 %v5188, %v5350
      %v5357 = vmul.f32 %v5189, %v5350
      %v5358 = vmul.f32 %v5190, %v5350
      %v5359 = vmul.f32 %v5191, %v5350
      %v5360 = vmul.f32 %v5192, %v5350
      %v5361 = vmul.f32 %v5193, %v5350
      %v5362 = vmul.f32 %v5194, %v5350
      %v5363 = vmul.f32 %v5195, %v5350
      %v5364 = vmul.f32 %v5196, %v5350
      %v5365 = vmul.f32 %v5197, %v5350
      %v5366 = vmul.f32 %v5198, %v5350
      %v5367 = vmul.f32 %v5199, %v5350
      %v5368 = vmul.f32 %v5200, %v5350
      %v5369 = vmul.f32 %v5201, %v5350
      %v5370 = vmul.f32 %v5202, %v5350
      %v5371 = vmul.f32 %v5203, %v5350
      %v5372 = vmul.f32 %v5204, %v5350
      %v5373 = vmul.f32 %v5205, %v5350
      %v5374 = vmul.f32 %v5206, %v5350
      %v5375 = vmul.f32 %v5207, %v5350
      %v5376 = vmul.f32 %v5208, %v5350
      %v5377 = vmul.f32 %v5209, %v5350
      %v5378 = vmul.f32 %v5210, %v5350
      %v5379 = vmul.f32 %v5211, %v5350
      %v5380 = vmul.f32 %v5212, %v5350
      %v5381 = vmul.f32 %v5213, %v5350
      %v5382 = vmul.f32 %v5214, %v5350
      %v5383 = vmul.f32 %v5215, %v5350
      %v5384 = vmul.f32 %v5216, %v5350
      %v5385 = vmul.f32 %v5217, %v5350
      %v5386 = vmul.f32 %v5218, %v5350
      %v5387 = vmul.f32 %v5219, %v5350
      %v5388 = vmul.f32 %v5220, %v5350
      %v5389 = vmul.f32 %v5221, %v5350
      %v5390 = vmul.f32 %v5222, %v5350
      %v5391 = vmul.f32 %v5223, %v5350
      %v5392 = vmul.f32 %v5224, %v5350
      %v5393 = vmul.f32 %v5225, %v5350
      %v5394 = vmul.f32 %v5226, %v5350
      %v5395 = vmul.f32 %v5227, %v5350
      %v5396 = vmul.f32 %v5228, %v5350
      %v5397 = vmul.f32 %v5229, %v5350
      %v5398 = vmul.f32 %v5230, %v5350
      %v5399 = vmul.f32 %v5231, %v5350
      %v5400 = vmul.f32 %v5232, %v5350
      %v5401 = vmul.f32 %v5233, %v5350
      %v5402 = vmul.f32 %v5234, %v5350
      %v5403 = vmul.f32 %v5235, %v5350
      %v5404 = vmul.f32 %v5236, %v5350
      %v5405 = vmul.f32 %v5237, %v5350
      %v5406 = vmul.f32 %v5238, %v5350
      %v5407 = vmul.f32 %v5239, %v5350
      %v5408 = vmul.f32 %v5240, %v5350
      %v5409 = vmul.f32 %v5241, %v5350
      %v5410 = vmul.f32 %v5242, %v5350
      %v5411 = vmul.f32 %v5243, %v5350
      %v5412 = vmul.f32 %v5244, %v5350
      %v5413 = vmul.f32 %v5245, %v5350
      %v5414 = vmul.f32 %v5246, %v5350
      %5415 = vadd.xlane.f32.xlu0 %v5351
      %v5416 = vpop.xlane.xlu0 %5415
      %5417 = vadd.xlane.f32.xlu0 %v5352
      %v5418 = vpop.xlane.xlu0 %5417
      %5419 = vadd.xlane.f32.xlu0 %v5353
      %v5420 = vpop.xlane.xlu0 %5419
      %5421 = vadd.xlane.f32.xlu0 %v5354
      %v5422 = vpop.xlane.xlu0 %5421
      %5423 = vadd.xlane.f32.xlu0 %v5355
      %v5424 = vpop.xlane.xlu0 %5423
      %5425 = vadd.xlane.f32.xlu0 %v5356
      %v5426 = vpop.xlane.xlu0 %5425
      %5427 = vadd.xlane.f32.xlu0 %v5357
      %v5428 = vpop.xlane.xlu0 %5427
      %5429 = vadd.xlane.f32.xlu0 %v5358
      %v5430 = vpop.xlane.xlu0 %5429
      %5431 = vadd.xlane.f32.xlu0 %v5359
      %v5432 = vpop.xlane.xlu0 %5431
      %5433 = vadd.xlane.f32.xlu0 %v5360
      %v5434 = vpop.xlane.xlu0 %5433
      %5435 = vadd.xlane.f32.xlu0 %v5361
      %v5436 = vpop.xlane.xlu0 %5435
      %5437 = vadd.xlane.f32.xlu0 %v5362
      %v5438 = vpop.xlane.xlu0 %5437
      %5439 = vadd.xlane.f32.xlu0 %v5363
      %v5440 = vpop.xlane.xlu0 %5439
      %5441 = vadd.xlane.f32.xlu0 %v5364
      %v5442 = vpop.xlane.xlu0 %5441
      %5443 = vadd.xlane.f32.xlu0 %v5365
      %v5444 = vpop.xlane.xlu0 %5443
      %5445 = vadd.xlane.f32.xlu0 %v5366
      %v5446 = vpop.xlane.xlu0 %5445
      %5447 = vadd.xlane.f32.xlu0 %v5367
      %v5448 = vpop.xlane.xlu0 %5447
      %5449 = vadd.xlane.f32.xlu0 %v5368
      %v5450 = vpop.xlane.xlu0 %5449
      %5451 = vadd.xlane.f32.xlu0 %v5369
      %v5452 = vpop.xlane.xlu0 %5451
      %5453 = vadd.xlane.f32.xlu0 %v5370
      %v5454 = vpop.xlane.xlu0 %5453
      %5455 = vadd.xlane.f32.xlu0 %v5371
      %v5456 = vpop.xlane.xlu0 %5455
      %5457 = vadd.xlane.f32.xlu0 %v5372
      %v5458 = vpop.xlane.xlu0 %5457
      %5459 = vadd.xlane.f32.xlu0 %v5373
      %v5460 = vpop.xlane.xlu0 %5459
      %5461 = vadd.xlane.f32.xlu0 %v5374
      %v5462 = vpop.xlane.xlu0 %5461
      %5463 = vadd.xlane.f32.xlu0 %v5375
      %v5464 = vpop.xlane.xlu0 %5463
      %5465 = vadd.xlane.f32.xlu0 %v5376
      %v5466 = vpop.xlane.xlu0 %5465
      %5467 = vadd.xlane.f32.xlu0 %v5377
      %v5468 = vpop.xlane.xlu0 %5467
      %5469 = vadd.xlane.f32.xlu0 %v5378
      %v5470 = vpop.xlane.xlu0 %5469
      %5471 = vadd.xlane.f32.xlu0 %v5379
      %v5472 = vpop.xlane.xlu0 %5471
      %5473 = vadd.xlane.f32.xlu0 %v5380
      %v5474 = vpop.xlane.xlu0 %5473
      %5475 = vadd.xlane.f32.xlu0 %v5381
      %v5476 = vpop.xlane.xlu0 %5475
      %5477 = vadd.xlane.f32.xlu0 %v5382
      %v5478 = vpop.xlane.xlu0 %5477
      %5479 = vadd.xlane.f32.xlu0 %v5383
      %v5480 = vpop.xlane.xlu0 %5479
      %5481 = vadd.xlane.f32.xlu0 %v5384
      %v5482 = vpop.xlane.xlu0 %5481
      %5483 = vadd.xlane.f32.xlu0 %v5385
      %v5484 = vpop.xlane.xlu0 %5483
      %5485 = vadd.xlane.f32.xlu0 %v5386
      %v5486 = vpop.xlane.xlu0 %5485
      %5487 = vadd.xlane.f32.xlu0 %v5387
      %v5488 = vpop.xlane.xlu0 %5487
      %5489 = vadd.xlane.f32.xlu0 %v5388
      %v5490 = vpop.xlane.xlu0 %5489
      %5491 = vadd.xlane.f32.xlu0 %v5389
      %v5492 = vpop.xlane.xlu0 %5491
      %5493 = vadd.xlane.f32.xlu0 %v5390
      %v5494 = vpop.xlane.xlu0 %5493
      %5495 = vadd.xlane.f32.xlu0 %v5391
      %v5496 = vpop.xlane.xlu0 %5495
      %5497 = vadd.xlane.f32.xlu0 %v5392
      %v5498 = vpop.xlane.xlu0 %5497
      %5499 = vadd.xlane.f32.xlu0 %v5393
      %v5500 = vpop.xlane.xlu0 %5499
      %5501 = vadd.xlane.f32.xlu0 %v5394
      %v5502 = vpop.xlane.xlu0 %5501
      %5503 = vadd.xlane.f32.xlu0 %v5395
      %v5504 = vpop.xlane.xlu0 %5503
      %5505 = vadd.xlane.f32.xlu0 %v5396
      %v5506 = vpop.xlane.xlu0 %5505
      %5507 = vadd.xlane.f32.xlu0 %v5397
      %v5508 = vpop.xlane.xlu0 %5507
      %5509 = vadd.xlane.f32.xlu0 %v5398
      %v5510 = vpop.xlane.xlu0 %5509
      %5511 = vadd.xlane.f32.xlu0 %v5399
      %v5512 = vpop.xlane.xlu0 %5511
      %5513 = vadd.xlane.f32.xlu0 %v5400
      %v5514 = vpop.xlane.xlu0 %5513
      %5515 = vadd.xlane.f32.xlu0 %v5401
      %v5516 = vpop.xlane.xlu0 %5515
      %5517 = vadd.xlane.f32.xlu0 %v5402
      %v5518 = vpop.xlane.xlu0 %5517
      %5519 = vadd.xlane.f32.xlu0 %v5403
      %v5520 = vpop.xlane.xlu0 %5519
      %5521 = vadd.xlane.f32.xlu0 %v5404
      %v5522 = vpop.xlane.xlu0 %5521
      %5523 = vadd.xlane.f32.xlu0 %v5405
      %v5524 = vpop.xlane.xlu0 %5523
      %5525 = vadd.xlane.f32.xlu0 %v5406
      %v5526 = vpop.xlane.xlu0 %5525
      %5527 = vadd.xlane.f32.xlu0 %v5407
      %v5528 = vpop.xlane.xlu0 %5527
      %5529 = vadd.xlane.f32.xlu0 %v5408
      %v5530 = vpop.xlane.xlu0 %5529
      %5531 = vadd.xlane.f32.xlu0 %v5409
      %v5532 = vpop.xlane.xlu0 %5531
      %5533 = vadd.xlane.f32.xlu0 %v5410
      %v5534 = vpop.xlane.xlu0 %5533
      %5535 = vadd.xlane.f32.xlu0 %v5411
      %v5536 = vpop.xlane.xlu0 %5535
      %5537 = vadd.xlane.f32.xlu0 %v5412
      %v5538 = vpop.xlane.xlu0 %5537
      %5539 = vadd.xlane.f32.xlu0 %v5413
      %v5540 = vpop.xlane.xlu0 %5539
      %5541 = vadd.xlane.f32.xlu0 %v5414
      %v5542 = vpop.xlane.xlu0 %5541
      %v5543 = vld [vmem:[%s5 + $0x12] sm:$0x1]
      %v5544 = vlaneseq
      %v5545 = vshrl.u32 %v5544, 7
      %v5546 = vsub.s32 0, %v5545
      %v5547 = vrot.slane %v5543, %v5546
      %v5548 = vadd.f32 %v5416, %v5547
      %v5549 = vadd.f32 %v5418, %v5547
      %v5550 = vadd.f32 %v5420, %v5547
      %v5551 = vadd.f32 %v5422, %v5547
      %v5552 = vadd.f32 %v5424, %v5547
      %v5553 = vadd.f32 %v5426, %v5547
      %v5554 = vadd.f32 %v5428, %v5547
      %v5555 = vadd.f32 %v5430, %v5547
      %v5556 = vadd.f32 %v5432, %v5547
      %v5557 = vadd.f32 %v5434, %v5547
      %v5558 = vadd.f32 %v5436, %v5547
      %v5559 = vadd.f32 %v5438, %v5547
      %v5560 = vadd.f32 %v5440, %v5547
      %v5561 = vadd.f32 %v5442, %v5547
      %v5562 = vadd.f32 %v5444, %v5547
      %v5563 = vadd.f32 %v5446, %v5547
      %v5564 = vadd.f32 %v5448, %v5547
      %v5565 = vadd.f32 %v5450, %v5547
      %v5566 = vadd.f32 %v5452, %v5547
      %v5567 = vadd.f32 %v5454, %v5547
      %v5568 = vadd.f32 %v5456, %v5547
      %v5569 = vadd.f32 %v5458, %v5547
      %v5570 = vadd.f32 %v5460, %v5547
      %v5571 = vadd.f32 %v5462, %v5547
      %v5572 = vadd.f32 %v5464, %v5547
      %v5573 = vadd.f32 %v5466, %v5547
      %v5574 = vadd.f32 %v5468, %v5547
      %v5575 = vadd.f32 %v5470, %v5547
      %v5576 = vadd.f32 %v5472, %v5547
      %v5577 = vadd.f32 %v5474, %v5547
      %v5578 = vadd.f32 %v5476, %v5547
      %v5579 = vadd.f32 %v5478, %v5547
      %v5580 = vadd.f32 %v5480, %v5547
      %v5581 = vadd.f32 %v5482, %v5547
      %v5582 = vadd.f32 %v5484, %v5547
      %v5583 = vadd.f32 %v5486, %v5547
      %v5584 = vadd.f32 %v5488, %v5547
      %v5585 = vadd.f32 %v5490, %v5547
      %v5586 = vadd.f32 %v5492, %v5547
      %v5587 = vadd.f32 %v5494, %v5547
      %v5588 = vadd.f32 %v5496, %v5547
      %v5589 = vadd.f32 %v5498, %v5547
      %v5590 = vadd.f32 %v5500, %v5547
      %v5591 = vadd.f32 %v5502, %v5547
      %v5592 = vadd.f32 %v5504, %v5547
      %v5593 = vadd.f32 %v5506, %v5547
      %v5594 = vadd.f32 %v5508, %v5547
      %v5595 = vadd.f32 %v5510, %v5547
      %v5596 = vadd.f32 %v5512, %v5547
      %v5597 = vadd.f32 %v5514, %v5547
      %v5598 = vadd.f32 %v5516, %v5547
      %v5599 = vadd.f32 %v5518, %v5547
      %v5600 = vadd.f32 %v5520, %v5547
      %v5601 = vadd.f32 %v5522, %v5547
      %v5602 = vadd.f32 %v5524, %v5547
      %v5603 = vadd.f32 %v5526, %v5547
      %v5604 = vadd.f32 %v5528, %v5547
      %v5605 = vadd.f32 %v5530, %v5547
      %v5606 = vadd.f32 %v5532, %v5547
      %v5607 = vadd.f32 %v5534, %v5547
      %v5608 = vadd.f32 %v5536, %v5547
      %v5609 = vadd.f32 %v5538, %v5547
      %v5610 = vadd.f32 %v5540, %v5547
      %v5611 = vadd.f32 %v5542, %v5547
      %v5612 = vxor.u32 %v5548, 2147483648
      %v5613 = vxor.u32 %v5549, 2147483648
      %v5614 = vxor.u32 %v5550, 2147483648
      %v5615 = vxor.u32 %v5551, 2147483648
      %v5616 = vxor.u32 %v5552, 2147483648
      %v5617 = vxor.u32 %v5553, 2147483648
      %v5618 = vxor.u32 %v5554, 2147483648
      %v5619 = vxor.u32 %v5555, 2147483648
      %v5620 = vxor.u32 %v5556, 2147483648
      %v5621 = vxor.u32 %v5557, 2147483648
      %v5622 = vxor.u32 %v5558, 2147483648
      %v5623 = vxor.u32 %v5559, 2147483648
      %v5624 = vxor.u32 %v5560, 2147483648
      %v5625 = vxor.u32 %v5561, 2147483648
      %v5626 = vxor.u32 %v5562, 2147483648
      %v5627 = vxor.u32 %v5563, 2147483648
      %v5628 = vxor.u32 %v5564, 2147483648
      %v5629 = vxor.u32 %v5565, 2147483648
      %v5630 = vxor.u32 %v5566, 2147483648
      %v5631 = vxor.u32 %v5567, 2147483648
      %v5632 = vxor.u32 %v5568, 2147483648
      %v5633 = vxor.u32 %v5569, 2147483648
      %v5634 = vxor.u32 %v5570, 2147483648
      %v5635 = vxor.u32 %v5571, 2147483648
      %v5636 = vxor.u32 %v5572, 2147483648
      %v5637 = vxor.u32 %v5573, 2147483648
      %v5638 = vxor.u32 %v5574, 2147483648
      %v5639 = vxor.u32 %v5575, 2147483648
      %v5640 = vxor.u32 %v5576, 2147483648
      %v5641 = vxor.u32 %v5577, 2147483648
      %v5642 = vxor.u32 %v5578, 2147483648
      %v5643 = vxor.u32 %v5579, 2147483648
      %v5644 = vxor.u32 %v5580, 2147483648
      %v5645 = vxor.u32 %v5581, 2147483648
      %v5646 = vxor.u32 %v5582, 2147483648
      %v5647 = vxor.u32 %v5583, 2147483648
      %v5648 = vxor.u32 %v5584, 2147483648
      %v5649 = vxor.u32 %v5585, 2147483648
      %v5650 = vxor.u32 %v5586, 2147483648
      %v5651 = vxor.u32 %v5587, 2147483648
      %v5652 = vxor.u32 %v5588, 2147483648
      %v5653 = vxor.u32 %v5589, 2147483648
      %v5654 = vxor.u32 %v5590, 2147483648
      %v5655 = vxor.u32 %v5591, 2147483648
      %v5656 = vxor.u32 %v5592, 2147483648
      %v5657 = vxor.u32 %v5593, 2147483648
      %v5658 = vxor.u32 %v5594, 2147483648
      %v5659 = vxor.u32 %v5595, 2147483648
      %v5660 = vxor.u32 %v5596, 2147483648
      %v5661 = vxor.u32 %v5597, 2147483648
      %v5662 = vxor.u32 %v5598, 2147483648
      %v5663 = vxor.u32 %v5599, 2147483648
      %v5664 = vxor.u32 %v5600, 2147483648
      %v5665 = vxor.u32 %v5601, 2147483648
      %v5666 = vxor.u32 %v5602, 2147483648
      %v5667 = vxor.u32 %v5603, 2147483648
      %v5668 = vxor.u32 %v5604, 2147483648
      %v5669 = vxor.u32 %v5605, 2147483648
      %v5670 = vxor.u32 %v5606, 2147483648
      %v5671 = vxor.u32 %v5607, 2147483648
      %v5672 = vxor.u32 %v5608, 2147483648
      %v5673 = vxor.u32 %v5609, 2147483648
      %v5674 = vxor.u32 %v5610, 2147483648
      %v5675 = vxor.u32 %v5611, 2147483648
      %v5676 = vmul.f32 %v5612, 1.442695
      %v5677 = vpow.pop %v5676
      %v5678 = vmul.f32 %v5613, 1.442695
      %v5679 = vpow.pop %v5678
      %v5680 = vmul.f32 %v5614, 1.442695
      %v5681 = vpow.pop %v5680
      %v5682 = vmul.f32 %v5615, 1.442695
      %v5683 = vpow.pop %v5682
      %v5684 = vmul.f32 %v5616, 1.442695
      %v5685 = vpow.pop %v5684
      %v5686 = vmul.f32 %v5617, 1.442695
      %v5687 = vpow.pop %v5686
      %v5688 = vmul.f32 %v5618, 1.442695
      %v5689 = vpow.pop %v5688
      %v5690 = vmul.f32 %v5619, 1.442695
      %v5691 = vpow.pop %v5690
      %v5692 = vmul.f32 %v5620, 1.442695
      %v5693 = vpow.pop %v5692
      %v5694 = vmul.f32 %v5621, 1.442695
      %v5695 = vpow.pop %v5694
      %v5696 = vmul.f32 %v5622, 1.442695
      %v5697 = vpow.pop %v5696
      %v5698 = vmul.f32 %v5623, 1.442695
      %v5699 = vpow.pop %v5698
      %v5700 = vmul.f32 %v5624, 1.442695
      %v5701 = vpow.pop %v5700
      %v5702 = vmul.f32 %v5625, 1.442695
      %v5703 = vpow.pop %v5702
      %v5704 = vmul.f32 %v5626, 1.442695
      %v5705 = vpow.pop %v5704
      %v5706 = vmul.f32 %v5627, 1.442695
      %v5707 = vpow.pop %v5706
      %v5708 = vmul.f32 %v5628, 1.442695
      %v5709 = vpow.pop %v5708
      %v5710 = vmul.f32 %v5629, 1.442695
      %v5711 = vpow.pop %v5710
      %v5712 = vmul.f32 %v5630, 1.442695
      %v5713 = vpow.pop %v5712
      %v5714 = vmul.f32 %v5631, 1.442695
      %v5715 = vpow.pop %v5714
      %v5716 = vmul.f32 %v5632, 1.442695
      %v5717 = vpow.pop %v5716
      %v5718 = vmul.f32 %v5633, 1.442695
      %v5719 = vpow.pop %v5718
      %v5720 = vmul.f32 %v5634, 1.442695
      %v5721 = vpow.pop %v5720
      %v5722 = vmul.f32 %v5635, 1.442695
      %v5723 = vpow.pop %v5722
      %v5724 = vmul.f32 %v5636, 1.442695
      %v5725 = vpow.pop %v5724
      %v5726 = vmul.f32 %v5637, 1.442695
      %v5727 = vpow.pop %v5726
      %v5728 = vmul.f32 %v5638, 1.442695
      %v5729 = vpow.pop %v5728
      %v5730 = vmul.f32 %v5639, 1.442695
      %v5731 = vpow.pop %v5730
      %v5732 = vmul.f32 %v5640, 1.442695
      %v5733 = vpow.pop %v5732
      %v5734 = vmul.f32 %v5641, 1.442695
      %v5735 = vpow.pop %v5734
      %v5736 = vmul.f32 %v5642, 1.442695
      %v5737 = vpow.pop %v5736
      %v5738 = vmul.f32 %v5643, 1.442695
      %v5739 = vpow.pop %v5738
      %v5740 = vmul.f32 %v5644, 1.442695
      %v5741 = vpow.pop %v5740
      %v5742 = vmul.f32 %v5645, 1.442695
      %v5743 = vpow.pop %v5742
      %v5744 = vmul.f32 %v5646, 1.442695
      %v5745 = vpow.pop %v5744
      %v5746 = vmul.f32 %v5647, 1.442695
      %v5747 = vpow.pop %v5746
      %v5748 = vmul.f32 %v5648, 1.442695
      %v5749 = vpow.pop %v5748
      %v5750 = vmul.f32 %v5649, 1.442695
      %v5751 = vpow.pop %v5750
      %v5752 = vmul.f32 %v5650, 1.442695
      %v5753 = vpow.pop %v5752
      %v5754 = vmul.f32 %v5651, 1.442695
      %v5755 = vpow.pop %v5754
      %v5756 = vmul.f32 %v5652, 1.442695
      %v5757 = vpow.pop %v5756
      %v5758 = vmul.f32 %v5653, 1.442695
      %v5759 = vpow.pop %v5758
      %v5760 = vmul.f32 %v5654, 1.442695
      %v5761 = vpow.pop %v5760
      %v5762 = vmul.f32 %v5655, 1.442695
      %v5763 = vpow.pop %v5762
      %v5764 = vmul.f32 %v5656, 1.442695
      %v5765 = vpow.pop %v5764
      %v5766 = vmul.f32 %v5657, 1.442695
      %v5767 = vpow.pop %v5766
      %v5768 = vmul.f32 %v5658, 1.442695
      %v5769 = vpow.pop %v5768
      %v5770 = vmul.f32 %v5659, 1.442695
      %v5771 = vpow.pop %v5770
      %v5772 = vmul.f32 %v5660, 1.442695
      %v5773 = vpow.pop %v5772
      %v5774 = vmul.f32 %v5661, 1.442695
      %v5775 = vpow.pop %v5774
      %v5776 = vmul.f32 %v5662, 1.442695
      %v5777 = vpow.pop %v5776
      %v5778 = vmul.f32 %v5663, 1.442695
      %v5779 = vpow.pop %v5778
      %v5780 = vmul.f32 %v5664, 1.442695
      %v5781 = vpow.pop %v5780
      %v5782 = vmul.f32 %v5665, 1.442695
      %v5783 = vpow.pop %v5782
      %v5784 = vmul.f32 %v5666, 1.442695
      %v5785 = vpow.pop %v5784
      %v5786 = vmul.f32 %v5667, 1.442695
      %v5787 = vpow.pop %v5786
      %v5788 = vmul.f32 %v5668, 1.442695
      %v5789 = vpow.pop %v5788
      %v5790 = vmul.f32 %v5669, 1.442695
      %v5791 = vpow.pop %v5790
      %v5792 = vmul.f32 %v5670, 1.442695
      %v5793 = vpow.pop %v5792
      %v5794 = vmul.f32 %v5671, 1.442695
      %v5795 = vpow.pop %v5794
      %v5796 = vmul.f32 %v5672, 1.442695
      %v5797 = vpow.pop %v5796
      %v5798 = vmul.f32 %v5673, 1.442695
      %v5799 = vpow.pop %v5798
      %v5800 = vmul.f32 %v5674, 1.442695
      %v5801 = vpow.pop %v5800
      %v5802 = vmul.f32 %v5675, 1.442695
      %v5803 = vpow.pop %v5802
      %v5804 = vadd.f32 %v5677, 1.0
      %v5805 = vadd.f32 %v5679, 1.0
      %v5806 = vadd.f32 %v5681, 1.0
      %v5807 = vadd.f32 %v5683, 1.0
      %v5808 = vadd.f32 %v5685, 1.0
      %v5809 = vadd.f32 %v5687, 1.0
      %v5810 = vadd.f32 %v5689, 1.0
      %v5811 = vadd.f32 %v5691, 1.0
      %v5812 = vadd.f32 %v5693, 1.0
      %v5813 = vadd.f32 %v5695, 1.0
      %v5814 = vadd.f32 %v5697, 1.0
      %v5815 = vadd.f32 %v5699, 1.0
      %v5816 = vadd.f32 %v5701, 1.0
      %v5817 = vadd.f32 %v5703, 1.0
      %v5818 = vadd.f32 %v5705, 1.0
      %v5819 = vadd.f32 %v5707, 1.0
      %v5820 = vadd.f32 %v5709, 1.0
      %v5821 = vadd.f32 %v5711, 1.0
      %v5822 = vadd.f32 %v5713, 1.0
      %v5823 = vadd.f32 %v5715, 1.0
      %v5824 = vadd.f32 %v5717, 1.0
      %v5825 = vadd.f32 %v5719, 1.0
      %v5826 = vadd.f32 %v5721, 1.0
      %v5827 = vadd.f32 %v5723, 1.0
      %v5828 = vadd.f32 %v5725, 1.0
      %v5829 = vadd.f32 %v5727, 1.0
      %v5830 = vadd.f32 %v5729, 1.0
      %v5831 = vadd.f32 %v5731, 1.0
      %v5832 = vadd.f32 %v5733, 1.0
      %v5833 = vadd.f32 %v5735, 1.0
      %v5834 = vadd.f32 %v5737, 1.0
      %v5835 = vadd.f32 %v5739, 1.0
      %v5836 = vadd.f32 %v5741, 1.0
      %v5837 = vadd.f32 %v5743, 1.0
      %v5838 = vadd.f32 %v5745, 1.0
      %v5839 = vadd.f32 %v5747, 1.0
      %v5840 = vadd.f32 %v5749, 1.0
      %v5841 = vadd.f32 %v5751, 1.0
      %v5842 = vadd.f32 %v5753, 1.0
      %v5843 = vadd.f32 %v5755, 1.0
      %v5844 = vadd.f32 %v5757, 1.0
      %v5845 = vadd.f32 %v5759, 1.0
      %v5846 = vadd.f32 %v5761, 1.0
      %v5847 = vadd.f32 %v5763, 1.0
      %v5848 = vadd.f32 %v5765, 1.0
      %v5849 = vadd.f32 %v5767, 1.0
      %v5850 = vadd.f32 %v5769, 1.0
      %v5851 = vadd.f32 %v5771, 1.0
      %v5852 = vadd.f32 %v5773, 1.0
      %v5853 = vadd.f32 %v5775, 1.0
      %v5854 = vadd.f32 %v5777, 1.0
      %v5855 = vadd.f32 %v5779, 1.0
      %v5856 = vadd.f32 %v5781, 1.0
      %v5857 = vadd.f32 %v5783, 1.0
      %v5858 = vadd.f32 %v5785, 1.0
      %v5859 = vadd.f32 %v5787, 1.0
      %v5860 = vadd.f32 %v5789, 1.0
      %v5861 = vadd.f32 %v5791, 1.0
      %v5862 = vadd.f32 %v5793, 1.0
      %v5863 = vadd.f32 %v5795, 1.0
      %v5864 = vadd.f32 %v5797, 1.0
      %v5865 = vadd.f32 %v5799, 1.0
      %v5866 = vadd.f32 %v5801, 1.0
      %v5867 = vadd.f32 %v5803, 1.0
      %v5868 = vrcp.pop %v5804
      %v5869 = vmul.f32 1.0, %v5868
      %v5870 = vrcp.pop %v5805
      %v5871 = vmul.f32 1.0, %v5870
      %v5872 = vrcp.pop %v5806
      %v5873 = vmul.f32 1.0, %v5872
      %v5874 = vrcp.pop %v5807
      %v5875 = vmul.f32 1.0, %v5874
      %v5876 = vrcp.pop %v5808
      %v5877 = vmul.f32 1.0, %v5876
      %v5878 = vrcp.pop %v5809
      %v5879 = vmul.f32 1.0, %v5878
      %v5880 = vrcp.pop %v5810
      %v5881 = vmul.f32 1.0, %v5880
      %v5882 = vrcp.pop %v5811
      %v5883 = vmul.f32 1.0, %v5882
      %v5884 = vrcp.pop %v5812
      %v5885 = vmul.f32 1.0, %v5884
      %v5886 = vrcp.pop %v5813
      %v5887 = vmul.f32 1.0, %v5886
      %v5888 = vrcp.pop %v5814
      %v5889 = vmul.f32 1.0, %v5888
      %v5890 = vrcp.pop %v5815
      %v5891 = vmul.f32 1.0, %v5890
      %v5892 = vrcp.pop %v5816
      %v5893 = vmul.f32 1.0, %v5892
      %v5894 = vrcp.pop %v5817
      %v5895 = vmul.f32 1.0, %v5894
      %v5896 = vrcp.pop %v5818
      %v5897 = vmul.f32 1.0, %v5896
      %v5898 = vrcp.pop %v5819
      %v5899 = vmul.f32 1.0, %v5898
      %v5900 = vrcp.pop %v5820
      %v5901 = vmul.f32 1.0, %v5900
      %v5902 = vrcp.pop %v5821
      %v5903 = vmul.f32 1.0, %v5902
      %v5904 = vrcp.pop %v5822
      %v5905 = vmul.f32 1.0, %v5904
      %v5906 = vrcp.pop %v5823
      %v5907 = vmul.f32 1.0, %v5906
      %v5908 = vrcp.pop %v5824
      %v5909 = vmul.f32 1.0, %v5908
      %v5910 = vrcp.pop %v5825
      %v5911 = vmul.f32 1.0, %v5910
      %v5912 = vrcp.pop %v5826
      %v5913 = vmul.f32 1.0, %v5912
      %v5914 = vrcp.pop %v5827
      %v5915 = vmul.f32 1.0, %v5914
      %v5916 = vrcp.pop %v5828
      %v5917 = vmul.f32 1.0, %v5916
      %v5918 = vrcp.pop %v5829
      %v5919 = vmul.f32 1.0, %v5918
      %v5920 = vrcp.pop %v5830
      %v5921 = vmul.f32 1.0, %v5920
      %v5922 = vrcp.pop %v5831
      %v5923 = vmul.f32 1.0, %v5922
      %v5924 = vrcp.pop %v5832
      %v5925 = vmul.f32 1.0, %v5924
      %v5926 = vrcp.pop %v5833
      %v5927 = vmul.f32 1.0, %v5926
      %v5928 = vrcp.pop %v5834
      %v5929 = vmul.f32 1.0, %v5928
      %v5930 = vrcp.pop %v5835
      %v5931 = vmul.f32 1.0, %v5930
      %v5932 = vrcp.pop %v5836
      %v5933 = vmul.f32 1.0, %v5932
      %v5934 = vrcp.pop %v5837
      %v5935 = vmul.f32 1.0, %v5934
      %v5936 = vrcp.pop %v5838
      %v5937 = vmul.f32 1.0, %v5936
      %v5938 = vrcp.pop %v5839
      %v5939 = vmul.f32 1.0, %v5938
      %v5940 = vrcp.pop %v5840
      %v5941 = vmul.f32 1.0, %v5940
      %v5942 = vrcp.pop %v5841
      %v5943 = vmul.f32 1.0, %v5942
      %v5944 = vrcp.pop %v5842
      %v5945 = vmul.f32 1.0, %v5944
      %v5946 = vrcp.pop %v5843
      %v5947 = vmul.f32 1.0, %v5946
      %v5948 = vrcp.pop %v5844
      %v5949 = vmul.f32 1.0, %v5948
      %v5950 = vrcp.pop %v5845
      %v5951 = vmul.f32 1.0, %v5950
      %v5952 = vrcp.pop %v5846
      %v5953 = vmul.f32 1.0, %v5952
      %v5954 = vrcp.pop %v5847
      %v5955 = vmul.f32 1.0, %v5954
      %v5956 = vrcp.pop %v5848
      %v5957 = vmul.f32 1.0, %v5956
      %v5958 = vrcp.pop %v5849
      %v5959 = vmul.f32 1.0, %v5958
      %v5960 = vrcp.pop %v5850
      %v5961 = vmul.f32 1.0, %v5960
      %v5962 = vrcp.pop %v5851
      %v5963 = vmul.f32 1.0, %v5962
      %v5964 = vrcp.pop %v5852
      %v5965 = vmul.f32 1.0, %v5964
      %v5966 = vrcp.pop %v5853
      %v5967 = vmul.f32 1.0, %v5966
      %v5968 = vrcp.pop %v5854
      %v5969 = vmul.f32 1.0, %v5968
      %v5970 = vrcp.pop %v5855
      %v5971 = vmul.f32 1.0, %v5970
      %v5972 = vrcp.pop %v5856
      %v5973 = vmul.f32 1.0, %v5972
      %v5974 = vrcp.pop %v5857
      %v5975 = vmul.f32 1.0, %v5974
      %v5976 = vrcp.pop %v5858
      %v5977 = vmul.f32 1.0, %v5976
      %v5978 = vrcp.pop %v5859
      %v5979 = vmul.f32 1.0, %v5978
      %v5980 = vrcp.pop %v5860
      %v5981 = vmul.f32 1.0, %v5980
      %v5982 = vrcp.pop %v5861
      %v5983 = vmul.f32 1.0, %v5982
      %v5984 = vrcp.pop %v5862
      %v5985 = vmul.f32 1.0, %v5984
      %v5986 = vrcp.pop %v5863
      %v5987 = vmul.f32 1.0, %v5986
      %v5988 = vrcp.pop %v5864
      %v5989 = vmul.f32 1.0, %v5988
      %v5990 = vrcp.pop %v5865
      %v5991 = vmul.f32 1.0, %v5990
      %v5992 = vrcp.pop %v5866
      %v5993 = vmul.f32 1.0, %v5992
      %v5994 = vrcp.pop %v5867
      %v5995 = vmul.f32 1.0, %v5994
      %v5996 = vlaneseq
      %v5997 = vshrl.u32 %v5996, 7
      %v5998 = vsub.s32 0, %v5997
      %v5999 = vrot.slane %v5345, %v5998
      %6001 = vset.pattern.permute.xlu0 0
      %6002 = vperm.xlu0 %6001, %v5869
      %v6003 = vpop.permute.xlu0 %6002
      %6006 = vset.pattern.permute.xlu0 0
      %6007 = vperm.xlu0 %6006, %v5871
      %v6008 = vpop.permute.xlu0 %6007
      %6011 = vset.pattern.permute.xlu0 0
      %6012 = vperm.xlu0 %6011, %v5873
      %v6013 = vpop.permute.xlu0 %6012
      %6016 = vset.pattern.permute.xlu0 0
      %6017 = vperm.xlu0 %6016, %v5875
      %v6018 = vpop.permute.xlu0 %6017
      %6021 = vset.pattern.permute.xlu0 0
      %6022 = vperm.xlu0 %6021, %v5877
      %v6023 = vpop.permute.xlu0 %6022
      %6026 = vset.pattern.permute.xlu0 0
      %6027 = vperm.xlu0 %6026, %v5879
      %v6028 = vpop.permute.xlu0 %6027
      %6031 = vset.pattern.permute.xlu0 0
      %6032 = vperm.xlu0 %6031, %v5881
      %v6033 = vpop.permute.xlu0 %6032
      %6036 = vset.pattern.permute.xlu0 0
      %6037 = vperm.xlu0 %6036, %v5883
      %v6038 = vpop.permute.xlu0 %6037
      %6041 = vset.pattern.permute.xlu0 0
      %6042 = vperm.xlu0 %6041, %v5885
      %v6043 = vpop.permute.xlu0 %6042
      %6046 = vset.pattern.permute.xlu0 0
      %6047 = vperm.xlu0 %6046, %v5887
      %v6048 = vpop.permute.xlu0 %6047
      %6051 = vset.pattern.permute.xlu0 0
      %6052 = vperm.xlu0 %6051, %v5889
      %v6053 = vpop.permute.xlu0 %6052
      %6056 = vset.pattern.permute.xlu0 0
      %6057 = vperm.xlu0 %6056, %v5891
      %v6058 = vpop.permute.xlu0 %6057
      %6061 = vset.pattern.permute.xlu0 0
      %6062 = vperm.xlu0 %6061, %v5893
      %v6063 = vpop.permute.xlu0 %6062
      %6066 = vset.pattern.permute.xlu0 0
      %6067 = vperm.xlu0 %6066, %v5895
      %v6068 = vpop.permute.xlu0 %6067
      %6071 = vset.pattern.permute.xlu0 0
      %6072 = vperm.xlu0 %6071, %v5897
      %v6073 = vpop.permute.xlu0 %6072
      %6076 = vset.pattern.permute.xlu0 0
      %6077 = vperm.xlu0 %6076, %v5899
      %v6078 = vpop.permute.xlu0 %6077
      %6081 = vset.pattern.permute.xlu0 0
      %6082 = vperm.xlu0 %6081, %v5901
      %v6083 = vpop.permute.xlu0 %6082
      %6086 = vset.pattern.permute.xlu0 0
      %6087 = vperm.xlu0 %6086, %v5903
      %v6088 = vpop.permute.xlu0 %6087
      %6091 = vset.pattern.permute.xlu0 0
      %6092 = vperm.xlu0 %6091, %v5905
      %v6093 = vpop.permute.xlu0 %6092
      %6096 = vset.pattern.permute.xlu0 0
      %6097 = vperm.xlu0 %6096, %v5907
      %v6098 = vpop.permute.xlu0 %6097
      %6101 = vset.pattern.permute.xlu0 0
      %6102 = vperm.xlu0 %6101, %v5909
      %v6103 = vpop.permute.xlu0 %6102
      %6106 = vset.pattern.permute.xlu0 0
      %6107 = vperm.xlu0 %6106, %v5911
      %v6108 = vpop.permute.xlu0 %6107
      %6111 = vset.pattern.permute.xlu0 0
      %6112 = vperm.xlu0 %6111, %v5913
      %v6113 = vpop.permute.xlu0 %6112
      %6116 = vset.pattern.permute.xlu0 0
      %6117 = vperm.xlu0 %6116, %v5915
      %v6118 = vpop.permute.xlu0 %6117
      %6121 = vset.pattern.permute.xlu0 0
      %6122 = vperm.xlu0 %6121, %v5917
      %v6123 = vpop.permute.xlu0 %6122
      %6126 = vset.pattern.permute.xlu0 0
      %6127 = vperm.xlu0 %6126, %v5919
      %v6128 = vpop.permute.xlu0 %6127
      %6131 = vset.pattern.permute.xlu0 0
      %6132 = vperm.xlu0 %6131, %v5921
      %v6133 = vpop.permute.xlu0 %6132
      %6136 = vset.pattern.permute.xlu0 0
      %6137 = vperm.xlu0 %6136, %v5923
      %v6138 = vpop.permute.xlu0 %6137
      %6141 = vset.pattern.permute.xlu0 0
      %6142 = vperm.xlu0 %6141, %v5925
      %v6143 = vpop.permute.xlu0 %6142
      %6146 = vset.pattern.permute.xlu0 0
      %6147 = vperm.xlu0 %6146, %v5927
      %v6148 = vpop.permute.xlu0 %6147
      %6151 = vset.pattern.permute.xlu0 0
      %6152 = vperm.xlu0 %6151, %v5929
      %v6153 = vpop.permute.xlu0 %6152
      %6156 = vset.pattern.permute.xlu0 0
      %6157 = vperm.xlu0 %6156, %v5931
      %v6158 = vpop.permute.xlu0 %6157
      %6161 = vset.pattern.permute.xlu0 0
      %6162 = vperm.xlu0 %6161, %v5933
      %v6163 = vpop.permute.xlu0 %6162
      %6166 = vset.pattern.permute.xlu0 0
      %6167 = vperm.xlu0 %6166, %v5935
      %v6168 = vpop.permute.xlu0 %6167
      %6171 = vset.pattern.permute.xlu0 0
      %6172 = vperm.xlu0 %6171, %v5937
      %v6173 = vpop.permute.xlu0 %6172
      %6176 = vset.pattern.permute.xlu0 0
      %6177 = vperm.xlu0 %6176, %v5939
      %v6178 = vpop.permute.xlu0 %6177
      %6181 = vset.pattern.permute.xlu0 0
      %6182 = vperm.xlu0 %6181, %v5941
      %v6183 = vpop.permute.xlu0 %6182
      %6186 = vset.pattern.permute.xlu0 0
      %6187 = vperm.xlu0 %6186, %v5943
      %v6188 = vpop.permute.xlu0 %6187
      %6191 = vset.pattern.permute.xlu0 0
      %6192 = vperm.xlu0 %6191, %v5945
      %v6193 = vpop.permute.xlu0 %6192
      %6196 = vset.pattern.permute.xlu0 0
      %6197 = vperm.xlu0 %6196, %v5947
      %v6198 = vpop.permute.xlu0 %6197
      %6201 = vset.pattern.permute.xlu0 0
      %6202 = vperm.xlu0 %6201, %v5949
      %v6203 = vpop.permute.xlu0 %6202
      %6206 = vset.pattern.permute.xlu0 0
      %6207 = vperm.xlu0 %6206, %v5951
      %v6208 = vpop.permute.xlu0 %6207
      %6211 = vset.pattern.permute.xlu0 0
      %6212 = vperm.xlu0 %6211, %v5953
      %v6213 = vpop.permute.xlu0 %6212
      %6216 = vset.pattern.permute.xlu0 0
      %6217 = vperm.xlu0 %6216, %v5955
      %v6218 = vpop.permute.xlu0 %6217
      %6221 = vset.pattern.permute.xlu0 0
      %6222 = vperm.xlu0 %6221, %v5957
      %v6223 = vpop.permute.xlu0 %6222
      %6226 = vset.pattern.permute.xlu0 0
      %6227 = vperm.xlu0 %6226, %v5959
      %v6228 = vpop.permute.xlu0 %6227
      %6231 = vset.pattern.permute.xlu0 0
      %6232 = vperm.xlu0 %6231, %v5961
      %v6233 = vpop.permute.xlu0 %6232
      %6236 = vset.pattern.permute.xlu0 0
      %6237 = vperm.xlu0 %6236, %v5963
      %v6238 = vpop.permute.xlu0 %6237
      %6241 = vset.pattern.permute.xlu0 0
      %6242 = vperm.xlu0 %6241, %v5965
      %v6243 = vpop.permute.xlu0 %6242
      %6246 = vset.pattern.permute.xlu0 0
      %6247 = vperm.xlu0 %6246, %v5967
      %v6248 = vpop.permute.xlu0 %6247
      %6251 = vset.pattern.permute.xlu0 0
      %6252 = vperm.xlu0 %6251, %v5969
      %v6253 = vpop.permute.xlu0 %6252
      %6256 = vset.pattern.permute.xlu0 0
      %6257 = vperm.xlu0 %6256, %v5971
      %v6258 = vpop.permute.xlu0 %6257
      %6261 = vset.pattern.permute.xlu0 0
      %6262 = vperm.xlu0 %6261, %v5973
      %v6263 = vpop.permute.xlu0 %6262
      %6266 = vset.pattern.permute.xlu0 0
      %6267 = vperm.xlu0 %6266, %v5975
      %v6268 = vpop.permute.xlu0 %6267
      %6271 = vset.pattern.permute.xlu0 0
      %6272 = vperm.xlu0 %6271, %v5977
      %v6273 = vpop.permute.xlu0 %6272
      %6276 = vset.pattern.permute.xlu0 0
      %6277 = vperm.xlu0 %6276, %v5979
      %v6278 = vpop.permute.xlu0 %6277
      %6281 = vset.pattern.permute.xlu0 0
      %6282 = vperm.xlu0 %6281, %v5981
      %v6283 = vpop.permute.xlu0 %6282
      %6286 = vset.pattern.permute.xlu0 0
      %6287 = vperm.xlu0 %6286, %v5983
      %v6288 = vpop.permute.xlu0 %6287
      %6291 = vset.pattern.permute.xlu0 0
      %6292 = vperm.xlu0 %6291, %v5985
      %v6293 = vpop.permute.xlu0 %6292
      %6296 = vset.pattern.permute.xlu0 0
      %6297 = vperm.xlu0 %6296, %v5987
      %v6298 = vpop.permute.xlu0 %6297
      %6301 = vset.pattern.permute.xlu0 0
      %6302 = vperm.xlu0 %6301, %v5989
      %v6303 = vpop.permute.xlu0 %6302
      %6306 = vset.pattern.permute.xlu0 0
      %6307 = vperm.xlu0 %6306, %v5991
      %v6308 = vpop.permute.xlu0 %6307
      %6311 = vset.pattern.permute.xlu0 0
      %6312 = vperm.xlu0 %6311, %v5993
      %v6313 = vpop.permute.xlu0 %6312
      %6316 = vset.pattern.permute.xlu0 0
      %6317 = vperm.xlu0 %6316, %v5995
      %v6318 = vpop.permute.xlu0 %6317
      %v6320 = vadd.f32 %v5999, %v6003
      %v6321 = vadd.f32 %v5999, %v6008
      %v6322 = vadd.f32 %v5999, %v6013
      %v6323 = vadd.f32 %v5999, %v6018
      %v6324 = vadd.f32 %v5999, %v6023
      %v6325 = vadd.f32 %v5999, %v6028
      %v6326 = vadd.f32 %v5999, %v6033
      %v6327 = vadd.f32 %v5999, %v6038
      %v6328 = vadd.f32 %v5999, %v6043
      %v6329 = vadd.f32 %v5999, %v6048
      %v6330 = vadd.f32 %v5999, %v6053
      %v6331 = vadd.f32 %v5999, %v6058
      %v6332 = vadd.f32 %v5999, %v6063
      %v6333 = vadd.f32 %v5999, %v6068
      %v6334 = vadd.f32 %v5999, %v6073
      %v6335 = vadd.f32 %v5999, %v6078
      %v6336 = vadd.f32 %v5999, %v6083
      %v6337 = vadd.f32 %v5999, %v6088
      %v6338 = vadd.f32 %v5999, %v6093
      %v6339 = vadd.f32 %v5999, %v6098
      %v6340 = vadd.f32 %v5999, %v6103
      %v6341 = vadd.f32 %v5999, %v6108
      %v6342 = vadd.f32 %v5999, %v6113
      %v6343 = vadd.f32 %v5999, %v6118
      %v6344 = vadd.f32 %v5999, %v6123
      %v6345 = vadd.f32 %v5999, %v6128
      %v6346 = vadd.f32 %v5999, %v6133
      %v6347 = vadd.f32 %v5999, %v6138
      %v6348 = vadd.f32 %v5999, %v6143
      %v6349 = vadd.f32 %v5999, %v6148
      %v6350 = vadd.f32 %v5999, %v6153
      %v6351 = vadd.f32 %v5999, %v6158
      %v6352 = vadd.f32 %v5999, %v6163
      %v6353 = vadd.f32 %v5999, %v6168
      %v6354 = vadd.f32 %v5999, %v6173
      %v6355 = vadd.f32 %v5999, %v6178
      %v6356 = vadd.f32 %v5999, %v6183
      %v6357 = vadd.f32 %v5999, %v6188
      %v6358 = vadd.f32 %v5999, %v6193
      %v6359 = vadd.f32 %v5999, %v6198
      %v6360 = vadd.f32 %v5999, %v6203
      %v6361 = vadd.f32 %v5999, %v6208
      %v6362 = vadd.f32 %v5999, %v6213
      %v6363 = vadd.f32 %v5999, %v6218
      %v6364 = vadd.f32 %v5999, %v6223
      %v6365 = vadd.f32 %v5999, %v6228
      %v6366 = vadd.f32 %v5999, %v6233
      %v6367 = vadd.f32 %v5999, %v6238
      %v6368 = vadd.f32 %v5999, %v6243
      %v6369 = vadd.f32 %v5999, %v6248
      %v6370 = vadd.f32 %v5999, %v6253
      %v6371 = vadd.f32 %v5999, %v6258
      %v6372 = vadd.f32 %v5999, %v6263
      %v6373 = vadd.f32 %v5999, %v6268
      %v6374 = vadd.f32 %v5999, %v6273
      %v6375 = vadd.f32 %v5999, %v6278
      %v6376 = vadd.f32 %v5999, %v6283
      %v6377 = vadd.f32 %v5999, %v6288
      %v6378 = vadd.f32 %v5999, %v6293
      %v6379 = vadd.f32 %v5999, %v6298
      %v6380 = vadd.f32 %v5999, %v6303
      %v6381 = vadd.f32 %v5999, %v6308
      %v6382 = vadd.f32 %v5999, %v6313
      %v6383 = vadd.f32 %v5999, %v6318
      %v6384 = vmul.f32 %v5183, %v6320
      %v6385 = vmul.f32 %v5184, %v6321
      %v6386 = vmul.f32 %v5185, %v6322
      %v6387 = vmul.f32 %v5186, %v6323
      %v6388 = vmul.f32 %v5187, %v6324
      %v6389 = vmul.f32 %v5188, %v6325
      %v6390 = vmul.f32 %v5189, %v6326
      %v6391 = vmul.f32 %v5190, %v6327
      %v6392 = vmul.f32 %v5191, %v6328
      %v6393 = vmul.f32 %v5192, %v6329
      %v6394 = vmul.f32 %v5193, %v6330
      %v6395 = vmul.f32 %v5194, %v6331
      %v6396 = vmul.f32 %v5195, %v6332
      %v6397 = vmul.f32 %v5196, %v6333
      %v6398 = vmul.f32 %v5197, %v6334
      %v6399 = vmul.f32 %v5198, %v6335
      %v6400 = vmul.f32 %v5199, %v6336
      %v6401 = vmul.f32 %v5200, %v6337
      %v6402 = vmul.f32 %v5201, %v6338
      %v6403 = vmul.f32 %v5202, %v6339
      %v6404 = vmul.f32 %v5203, %v6340
      %v6405 = vmul.f32 %v5204, %v6341
      %v6406 = vmul.f32 %v5205, %v6342
      %v6407 = vmul.f32 %v5206, %v6343
      %v6408 = vmul.f32 %v5207, %v6344
      %v6409 = vmul.f32 %v5208, %v6345
      %v6410 = vmul.f32 %v5209, %v6346
      %v6411 = vmul.f32 %v5210, %v6347
      %v6412 = vmul.f32 %v5211, %v6348
      %v6413 = vmul.f32 %v5212, %v6349
      %v6414 = vmul.f32 %v5213, %v6350
      %v6415 = vmul.f32 %v5214, %v6351
      %v6416 = vmul.f32 %v5215, %v6352
      %v6417 = vmul.f32 %v5216, %v6353
      %v6418 = vmul.f32 %v5217, %v6354
      %v6419 = vmul.f32 %v5218, %v6355
      %v6420 = vmul.f32 %v5219, %v6356
      %v6421 = vmul.f32 %v5220, %v6357
      %v6422 = vmul.f32 %v5221, %v6358
      %v6423 = vmul.f32 %v5222, %v6359
      %v6424 = vmul.f32 %v5223, %v6360
      %v6425 = vmul.f32 %v5224, %v6361
      %v6426 = vmul.f32 %v5225, %v6362
      %v6427 = vmul.f32 %v5226, %v6363
      %v6428 = vmul.f32 %v5227, %v6364
      %v6429 = vmul.f32 %v5228, %v6365
      %v6430 = vmul.f32 %v5229, %v6366
      %v6431 = vmul.f32 %v5230, %v6367
      %v6432 = vmul.f32 %v5231, %v6368
      %v6433 = vmul.f32 %v5232, %v6369
      %v6434 = vmul.f32 %v5233, %v6370
      %v6435 = vmul.f32 %v5234, %v6371
      %v6436 = vmul.f32 %v5235, %v6372
      %v6437 = vmul.f32 %v5236, %v6373
      %v6438 = vmul.f32 %v5237, %v6374
      %v6439 = vmul.f32 %v5238, %v6375
      %v6440 = vmul.f32 %v5239, %v6376
      %v6441 = vmul.f32 %v5240, %v6377
      %v6442 = vmul.f32 %v5241, %v6378
      %v6443 = vmul.f32 %v5242, %v6379
      %v6444 = vmul.f32 %v5243, %v6380
      %v6445 = vmul.f32 %v5244, %v6381
      %v6446 = vmul.f32 %v5245, %v6382
      %v6447 = vmul.f32 %v5246, %v6383
      %v6448 = vld [vmem:[%s5 + $0x2] sm:$0x1]
      %v6449 = vlaneseq
      %v6450 = vshrl.u32 %v6449, 7
      %v6451 = vsub.s32 0, %v6450
      %v6452 = vrot.slane %v6448, %v6451
      %v6453 = vmul.f32 %v1094, %v6452
      %v6454 = vmul.f32 %v1095, %v6452
      %v6455 = vmul.f32 %v1096, %v6452
      %v6456 = vmul.f32 %v1097, %v6452
      %v6457 = vmul.f32 %v1098, %v6452
      %v6458 = vmul.f32 %v1099, %v6452
      %v6459 = vmul.f32 %v1100, %v6452
      %v6460 = vmul.f32 %v1101, %v6452
      %v6461 = vmul.f32 %v1102, %v6452
      %v6462 = vmul.f32 %v1103, %v6452
      %v6463 = vmul.f32 %v1104, %v6452
      %v6464 = vmul.f32 %v1105, %v6452
      %v6465 = vmul.f32 %v1106, %v6452
      %v6466 = vmul.f32 %v1107, %v6452
      %v6467 = vmul.f32 %v1108, %v6452
      %v6468 = vmul.f32 %v1109, %v6452
      %v6469 = vmul.f32 %v1110, %v6452
      %v6470 = vmul.f32 %v1111, %v6452
      %v6471 = vmul.f32 %v1112, %v6452
      %v6472 = vmul.f32 %v1113, %v6452
      %v6473 = vmul.f32 %v1114, %v6452
      %v6474 = vmul.f32 %v1115, %v6452
      %v6475 = vmul.f32 %v1116, %v6452
      %v6476 = vmul.f32 %v1117, %v6452
      %v6477 = vmul.f32 %v1118, %v6452
      %v6478 = vmul.f32 %v1119, %v6452
      %v6479 = vmul.f32 %v1120, %v6452
      %v6480 = vmul.f32 %v1121, %v6452
      %v6481 = vmul.f32 %v1122, %v6452
      %v6482 = vmul.f32 %v1123, %v6452
      %v6483 = vmul.f32 %v1124, %v6452
      %v6484 = vmul.f32 %v1125, %v6452
      %v6485 = vmul.f32 %v1126, %v6452
      %v6486 = vmul.f32 %v1127, %v6452
      %v6487 = vmul.f32 %v1128, %v6452
      %v6488 = vmul.f32 %v1129, %v6452
      %v6489 = vmul.f32 %v1130, %v6452
      %v6490 = vmul.f32 %v1131, %v6452
      %v6491 = vmul.f32 %v1132, %v6452
      %v6492 = vmul.f32 %v1133, %v6452
      %v6493 = vmul.f32 %v1134, %v6452
      %v6494 = vmul.f32 %v1135, %v6452
      %v6495 = vmul.f32 %v1136, %v6452
      %v6496 = vmul.f32 %v1137, %v6452
      %v6497 = vmul.f32 %v1138, %v6452
      %v6498 = vmul.f32 %v1139, %v6452
      %v6499 = vmul.f32 %v1140, %v6452
      %v6500 = vmul.f32 %v1141, %v6452
      %v6501 = vmul.f32 %v1142, %v6452
      %v6502 = vmul.f32 %v1143, %v6452
      %v6503 = vmul.f32 %v1144, %v6452
      %v6504 = vmul.f32 %v1145, %v6452
      %v6505 = vmul.f32 %v1146, %v6452
      %v6506 = vmul.f32 %v1147, %v6452
      %v6507 = vmul.f32 %v1148, %v6452
      %v6508 = vmul.f32 %v1149, %v6452
      %v6509 = vmul.f32 %v1150, %v6452
      %v6510 = vmul.f32 %v1151, %v6452
      %v6511 = vmul.f32 %v1152, %v6452
      %v6512 = vmul.f32 %v1153, %v6452
      %v6513 = vmul.f32 %v1154, %v6452
      %v6514 = vmul.f32 %v1155, %v6452
      %v6515 = vmul.f32 %v1156, %v6452
      %v6516 = vmul.f32 %v1157, %v6452
      %6517 = vadd.xlane.f32.xlu0 %v6453
      %v6518 = vpop.xlane.xlu0 %6517
      %6519 = vadd.xlane.f32.xlu0 %v6454
      %v6520 = vpop.xlane.xlu0 %6519
      %6521 = vadd.xlane.f32.xlu0 %v6455
      %v6522 = vpop.xlane.xlu0 %6521
      %6523 = vadd.xlane.f32.xlu0 %v6456
      %v6524 = vpop.xlane.xlu0 %6523
      %6525 = vadd.xlane.f32.xlu0 %v6457
      %v6526 = vpop.xlane.xlu0 %6525
      %6527 = vadd.xlane.f32.xlu0 %v6458
      %v6528 = vpop.xlane.xlu0 %6527
      %6529 = vadd.xlane.f32.xlu0 %v6459
      %v6530 = vpop.xlane.xlu0 %6529
      %6531 = vadd.xlane.f32.xlu0 %v6460
      %v6532 = vpop.xlane.xlu0 %6531
      %6533 = vadd.xlane.f32.xlu0 %v6461
      %v6534 = vpop.xlane.xlu0 %6533
      %6535 = vadd.xlane.f32.xlu0 %v6462
      %v6536 = vpop.xlane.xlu0 %6535
      %6537 = vadd.xlane.f32.xlu0 %v6463
      %v6538 = vpop.xlane.xlu0 %6537
      %6539 = vadd.xlane.f32.xlu0 %v6464
      %v6540 = vpop.xlane.xlu0 %6539
      %6541 = vadd.xlane.f32.xlu0 %v6465
      %v6542 = vpop.xlane.xlu0 %6541
      %6543 = vadd.xlane.f32.xlu0 %v6466
      %v6544 = vpop.xlane.xlu0 %6543
      %6545 = vadd.xlane.f32.xlu0 %v6467
      %v6546 = vpop.xlane.xlu0 %6545
      %6547 = vadd.xlane.f32.xlu0 %v6468
      %v6548 = vpop.xlane.xlu0 %6547
      %6549 = vadd.xlane.f32.xlu0 %v6469
      %v6550 = vpop.xlane.xlu0 %6549
      %6551 = vadd.xlane.f32.xlu0 %v6470
      %v6552 = vpop.xlane.xlu0 %6551
      %6553 = vadd.xlane.f32.xlu0 %v6471
      %v6554 = vpop.xlane.xlu0 %6553
      %6555 = vadd.xlane.f32.xlu0 %v6472
      %v6556 = vpop.xlane.xlu0 %6555
      %6557 = vadd.xlane.f32.xlu0 %v6473
      %v6558 = vpop.xlane.xlu0 %6557
      %6559 = vadd.xlane.f32.xlu0 %v6474
      %v6560 = vpop.xlane.xlu0 %6559
      %6561 = vadd.xlane.f32.xlu0 %v6475
      %v6562 = vpop.xlane.xlu0 %6561
      %6563 = vadd.xlane.f32.xlu0 %v6476
      %v6564 = vpop.xlane.xlu0 %6563
      %6565 = vadd.xlane.f32.xlu0 %v6477
      %v6566 = vpop.xlane.xlu0 %6565
      %6567 = vadd.xlane.f32.xlu0 %v6478
      %v6568 = vpop.xlane.xlu0 %6567
      %6569 = vadd.xlane.f32.xlu0 %v6479
      %v6570 = vpop.xlane.xlu0 %6569
      %6571 = vadd.xlane.f32.xlu0 %v6480
      %v6572 = vpop.xlane.xlu0 %6571
      %6573 = vadd.xlane.f32.xlu0 %v6481
      %v6574 = vpop.xlane.xlu0 %6573
      %6575 = vadd.xlane.f32.xlu0 %v6482
      %v6576 = vpop.xlane.xlu0 %6575
      %6577 = vadd.xlane.f32.xlu0 %v6483
      %v6578 = vpop.xlane.xlu0 %6577
      %6579 = vadd.xlane.f32.xlu0 %v6484
      %v6580 = vpop.xlane.xlu0 %6579
      %6581 = vadd.xlane.f32.xlu0 %v6485
      %v6582 = vpop.xlane.xlu0 %6581
      %6583 = vadd.xlane.f32.xlu0 %v6486
      %v6584 = vpop.xlane.xlu0 %6583
      %6585 = vadd.xlane.f32.xlu0 %v6487
      %v6586 = vpop.xlane.xlu0 %6585
      %6587 = vadd.xlane.f32.xlu0 %v6488
      %v6588 = vpop.xlane.xlu0 %6587
      %6589 = vadd.xlane.f32.xlu0 %v6489
      %v6590 = vpop.xlane.xlu0 %6589
      %6591 = vadd.xlane.f32.xlu0 %v6490
      %v6592 = vpop.xlane.xlu0 %6591
      %6593 = vadd.xlane.f32.xlu0 %v6491
      %v6594 = vpop.xlane.xlu0 %6593
      %6595 = vadd.xlane.f32.xlu0 %v6492
      %v6596 = vpop.xlane.xlu0 %6595
      %6597 = vadd.xlane.f32.xlu0 %v6493
      %v6598 = vpop.xlane.xlu0 %6597
      %6599 = vadd.xlane.f32.xlu0 %v6494
      %v6600 = vpop.xlane.xlu0 %6599
      %6601 = vadd.xlane.f32.xlu0 %v6495
      %v6602 = vpop.xlane.xlu0 %6601
      %6603 = vadd.xlane.f32.xlu0 %v6496
      %v6604 = vpop.xlane.xlu0 %6603
      %6605 = vadd.xlane.f32.xlu0 %v6497
      %v6606 = vpop.xlane.xlu0 %6605
      %6607 = vadd.xlane.f32.xlu0 %v6498
      %v6608 = vpop.xlane.xlu0 %6607
      %6609 = vadd.xlane.f32.xlu0 %v6499
      %v6610 = vpop.xlane.xlu0 %6609
      %6611 = vadd.xlane.f32.xlu0 %v6500
      %v6612 = vpop.xlane.xlu0 %6611
      %6613 = vadd.xlane.f32.xlu0 %v6501
      %v6614 = vpop.xlane.xlu0 %6613
      %6615 = vadd.xlane.f32.xlu0 %v6502
      %v6616 = vpop.xlane.xlu0 %6615
      %6617 = vadd.xlane.f32.xlu0 %v6503
      %v6618 = vpop.xlane.xlu0 %6617
      %6619 = vadd.xlane.f32.xlu0 %v6504
      %v6620 = vpop.xlane.xlu0 %6619
      %6621 = vadd.xlane.f32.xlu0 %v6505
      %v6622 = vpop.xlane.xlu0 %6621
      %6623 = vadd.xlane.f32.xlu0 %v6506
      %v6624 = vpop.xlane.xlu0 %6623
      %6625 = vadd.xlane.f32.xlu0 %v6507
      %v6626 = vpop.xlane.xlu0 %6625
      %6627 = vadd.xlane.f32.xlu0 %v6508
      %v6628 = vpop.xlane.xlu0 %6627
      %6629 = vadd.xlane.f32.xlu0 %v6509
      %v6630 = vpop.xlane.xlu0 %6629
      %6631 = vadd.xlane.f32.xlu0 %v6510
      %v6632 = vpop.xlane.xlu0 %6631
      %6633 = vadd.xlane.f32.xlu0 %v6511
      %v6634 = vpop.xlane.xlu0 %6633
      %6635 = vadd.xlane.f32.xlu0 %v6512
      %v6636 = vpop.xlane.xlu0 %6635
      %6637 = vadd.xlane.f32.xlu0 %v6513
      %v6638 = vpop.xlane.xlu0 %6637
      %6639 = vadd.xlane.f32.xlu0 %v6514
      %v6640 = vpop.xlane.xlu0 %6639
      %6641 = vadd.xlane.f32.xlu0 %v6515
      %v6642 = vpop.xlane.xlu0 %6641
      %6643 = vadd.xlane.f32.xlu0 %v6516
      %v6644 = vpop.xlane.xlu0 %6643
      %v6645 = vld [vmem:[%s5 + $0x3] sm:$0x1]
      %v6646 = vlaneseq
      %v6647 = vshrl.u32 %v6646, 7
      %v6648 = vsub.s32 0, %v6647
      %v6649 = vrot.slane %v6645, %v6648
      %v6650 = vadd.f32 %v6518, %v6649
      %v6651 = vadd.f32 %v6520, %v6649
      %v6652 = vadd.f32 %v6522, %v6649
      %v6653 = vadd.f32 %v6524, %v6649
      %v6654 = vadd.f32 %v6526, %v6649
      %v6655 = vadd.f32 %v6528, %v6649
      %v6656 = vadd.f32 %v6530, %v6649
      %v6657 = vadd.f32 %v6532, %v6649
      %v6658 = vadd.f32 %v6534, %v6649
      %v6659 = vadd.f32 %v6536, %v6649
      %v6660 = vadd.f32 %v6538, %v6649
      %v6661 = vadd.f32 %v6540, %v6649
      %v6662 = vadd.f32 %v6542, %v6649
      %v6663 = vadd.f32 %v6544, %v6649
      %v6664 = vadd.f32 %v6546, %v6649
      %v6665 = vadd.f32 %v6548, %v6649
      %v6666 = vadd.f32 %v6550, %v6649
      %v6667 = vadd.f32 %v6552, %v6649
      %v6668 = vadd.f32 %v6554, %v6649
      %v6669 = vadd.f32 %v6556, %v6649
      %v6670 = vadd.f32 %v6558, %v6649
      %v6671 = vadd.f32 %v6560, %v6649
      %v6672 = vadd.f32 %v6562, %v6649
      %v6673 = vadd.f32 %v6564, %v6649
      %v6674 = vadd.f32 %v6566, %v6649
      %v6675 = vadd.f32 %v6568, %v6649
      %v6676 = vadd.f32 %v6570, %v6649
      %v6677 = vadd.f32 %v6572, %v6649
      %v6678 = vadd.f32 %v6574, %v6649
      %v6679 = vadd.f32 %v6576, %v6649
      %v6680 = vadd.f32 %v6578, %v6649
      %v6681 = vadd.f32 %v6580, %v6649
      %v6682 = vadd.f32 %v6582, %v6649
      %v6683 = vadd.f32 %v6584, %v6649
      %v6684 = vadd.f32 %v6586, %v6649
      %v6685 = vadd.f32 %v6588, %v6649
      %v6686 = vadd.f32 %v6590, %v6649
      %v6687 = vadd.f32 %v6592, %v6649
      %v6688 = vadd.f32 %v6594, %v6649
      %v6689 = vadd.f32 %v6596, %v6649
      %v6690 = vadd.f32 %v6598, %v6649
      %v6691 = vadd.f32 %v6600, %v6649
      %v6692 = vadd.f32 %v6602, %v6649
      %v6693 = vadd.f32 %v6604, %v6649
      %v6694 = vadd.f32 %v6606, %v6649
      %v6695 = vadd.f32 %v6608, %v6649
      %v6696 = vadd.f32 %v6610, %v6649
      %v6697 = vadd.f32 %v6612, %v6649
      %v6698 = vadd.f32 %v6614, %v6649
      %v6699 = vadd.f32 %v6616, %v6649
      %v6700 = vadd.f32 %v6618, %v6649
      %v6701 = vadd.f32 %v6620, %v6649
      %v6702 = vadd.f32 %v6622, %v6649
      %v6703 = vadd.f32 %v6624, %v6649
      %v6704 = vadd.f32 %v6626, %v6649
      %v6705 = vadd.f32 %v6628, %v6649
      %v6706 = vadd.f32 %v6630, %v6649
      %v6707 = vadd.f32 %v6632, %v6649
      %v6708 = vadd.f32 %v6634, %v6649
      %v6709 = vadd.f32 %v6636, %v6649
      %v6710 = vadd.f32 %v6638, %v6649
      %v6711 = vadd.f32 %v6640, %v6649
      %v6712 = vadd.f32 %v6642, %v6649
      %v6713 = vadd.f32 %v6644, %v6649
      %v6714 = vld [vmem:[%s5 + $0x6] sm:$0x1]
      %v6715 = vlaneseq
      %v6716 = vshrl.u32 %v6715, 7
      %v6717 = vsub.s32 0, %v6716
      %v6718 = vrot.slane %v6714, %v6717
      %v6719 = vmul.f32 %v1778, %v6718
      %v6720 = vmul.f32 %v1779, %v6718
      %v6721 = vmul.f32 %v1780, %v6718
      %v6722 = vmul.f32 %v1781, %v6718
      %v6723 = vmul.f32 %v1782, %v6718
      %v6724 = vmul.f32 %v1783, %v6718
      %v6725 = vmul.f32 %v1784, %v6718
      %v6726 = vmul.f32 %v1785, %v6718
      %v6727 = vmul.f32 %v1786, %v6718
      %v6728 = vmul.f32 %v1787, %v6718
      %v6729 = vmul.f32 %v1788, %v6718
      %v6730 = vmul.f32 %v1789, %v6718
      %v6731 = vmul.f32 %v1790, %v6718
      %v6732 = vmul.f32 %v1791, %v6718
      %v6733 = vmul.f32 %v1792, %v6718
      %v6734 = vmul.f32 %v1793, %v6718
      %v6735 = vmul.f32 %v1794, %v6718
      %v6736 = vmul.f32 %v1795, %v6718
      %v6737 = vmul.f32 %v1796, %v6718
      %v6738 = vmul.f32 %v1797, %v6718
      %v6739 = vmul.f32 %v1798, %v6718
      %v6740 = vmul.f32 %v1799, %v6718
      %v6741 = vmul.f32 %v1800, %v6718
      %v6742 = vmul.f32 %v1801, %v6718
      %v6743 = vmul.f32 %v1802, %v6718
      %v6744 = vmul.f32 %v1803, %v6718
      %v6745 = vmul.f32 %v1804, %v6718
      %v6746 = vmul.f32 %v1805, %v6718
      %v6747 = vmul.f32 %v1806, %v6718
      %v6748 = vmul.f32 %v1807, %v6718
      %v6749 = vmul.f32 %v1808, %v6718
      %v6750 = vmul.f32 %v1809, %v6718
      %v6751 = vmul.f32 %v1810, %v6718
      %v6752 = vmul.f32 %v1811, %v6718
      %v6753 = vmul.f32 %v1812, %v6718
      %v6754 = vmul.f32 %v1813, %v6718
      %v6755 = vmul.f32 %v1814, %v6718
      %v6756 = vmul.f32 %v1815, %v6718
      %v6757 = vmul.f32 %v1816, %v6718
      %v6758 = vmul.f32 %v1817, %v6718
      %v6759 = vmul.f32 %v1818, %v6718
      %v6760 = vmul.f32 %v1819, %v6718
      %v6761 = vmul.f32 %v1820, %v6718
      %v6762 = vmul.f32 %v1821, %v6718
      %v6763 = vmul.f32 %v1822, %v6718
      %v6764 = vmul.f32 %v1823, %v6718
      %v6765 = vmul.f32 %v1824, %v6718
      %v6766 = vmul.f32 %v1825, %v6718
      %v6767 = vmul.f32 %v1826, %v6718
      %v6768 = vmul.f32 %v1827, %v6718
      %v6769 = vmul.f32 %v1828, %v6718
      %v6770 = vmul.f32 %v1829, %v6718
      %v6771 = vmul.f32 %v1830, %v6718
      %v6772 = vmul.f32 %v1831, %v6718
      %v6773 = vmul.f32 %v1832, %v6718
      %v6774 = vmul.f32 %v1833, %v6718
      %v6775 = vmul.f32 %v1834, %v6718
      %v6776 = vmul.f32 %v1835, %v6718
      %v6777 = vmul.f32 %v1836, %v6718
      %v6778 = vmul.f32 %v1837, %v6718
      %v6779 = vmul.f32 %v1838, %v6718
      %v6780 = vmul.f32 %v1839, %v6718
      %v6781 = vmul.f32 %v1840, %v6718
      %v6782 = vmul.f32 %v1841, %v6718
      %6783 = vadd.xlane.f32.xlu0 %v6719
      %v6784 = vpop.xlane.xlu0 %6783
      %6785 = vadd.xlane.f32.xlu0 %v6720
      %v6786 = vpop.xlane.xlu0 %6785
      %6787 = vadd.xlane.f32.xlu0 %v6721
      %v6788 = vpop.xlane.xlu0 %6787
      %6789 = vadd.xlane.f32.xlu0 %v6722
      %v6790 = vpop.xlane.xlu0 %6789
      %6791 = vadd.xlane.f32.xlu0 %v6723
      %v6792 = vpop.xlane.xlu0 %6791
      %6793 = vadd.xlane.f32.xlu0 %v6724
      %v6794 = vpop.xlane.xlu0 %6793
      %6795 = vadd.xlane.f32.xlu0 %v6725
      %v6796 = vpop.xlane.xlu0 %6795
      %6797 = vadd.xlane.f32.xlu0 %v6726
      %v6798 = vpop.xlane.xlu0 %6797
      %6799 = vadd.xlane.f32.xlu0 %v6727
      %v6800 = vpop.xlane.xlu0 %6799
      %6801 = vadd.xlane.f32.xlu0 %v6728
      %v6802 = vpop.xlane.xlu0 %6801
      %6803 = vadd.xlane.f32.xlu0 %v6729
      %v6804 = vpop.xlane.xlu0 %6803
      %6805 = vadd.xlane.f32.xlu0 %v6730
      %v6806 = vpop.xlane.xlu0 %6805
      %6807 = vadd.xlane.f32.xlu0 %v6731
      %v6808 = vpop.xlane.xlu0 %6807
      %6809 = vadd.xlane.f32.xlu0 %v6732
      %v6810 = vpop.xlane.xlu0 %6809
      %6811 = vadd.xlane.f32.xlu0 %v6733
      %v6812 = vpop.xlane.xlu0 %6811
      %6813 = vadd.xlane.f32.xlu0 %v6734
      %v6814 = vpop.xlane.xlu0 %6813
      %6815 = vadd.xlane.f32.xlu0 %v6735
      %v6816 = vpop.xlane.xlu0 %6815
      %6817 = vadd.xlane.f32.xlu0 %v6736
      %v6818 = vpop.xlane.xlu0 %6817
      %6819 = vadd.xlane.f32.xlu0 %v6737
      %v6820 = vpop.xlane.xlu0 %6819
      %6821 = vadd.xlane.f32.xlu0 %v6738
      %v6822 = vpop.xlane.xlu0 %6821
      %6823 = vadd.xlane.f32.xlu0 %v6739
      %v6824 = vpop.xlane.xlu0 %6823
      %6825 = vadd.xlane.f32.xlu0 %v6740
      %v6826 = vpop.xlane.xlu0 %6825
      %6827 = vadd.xlane.f32.xlu0 %v6741
      %v6828 = vpop.xlane.xlu0 %6827
      %6829 = vadd.xlane.f32.xlu0 %v6742
      %v6830 = vpop.xlane.xlu0 %6829
      %6831 = vadd.xlane.f32.xlu0 %v6743
      %v6832 = vpop.xlane.xlu0 %6831
      %6833 = vadd.xlane.f32.xlu0 %v6744
      %v6834 = vpop.xlane.xlu0 %6833
      %6835 = vadd.xlane.f32.xlu0 %v6745
      %v6836 = vpop.xlane.xlu0 %6835
      %6837 = vadd.xlane.f32.xlu0 %v6746
      %v6838 = vpop.xlane.xlu0 %6837
      %6839 = vadd.xlane.f32.xlu0 %v6747
      %v6840 = vpop.xlane.xlu0 %6839
      %6841 = vadd.xlane.f32.xlu0 %v6748
      %v6842 = vpop.xlane.xlu0 %6841
      %6843 = vadd.xlane.f32.xlu0 %v6749
      %v6844 = vpop.xlane.xlu0 %6843
      %6845 = vadd.xlane.f32.xlu0 %v6750
      %v6846 = vpop.xlane.xlu0 %6845
      %6847 = vadd.xlane.f32.xlu0 %v6751
      %v6848 = vpop.xlane.xlu0 %6847
      %6849 = vadd.xlane.f32.xlu0 %v6752
      %v6850 = vpop.xlane.xlu0 %6849
      %6851 = vadd.xlane.f32.xlu0 %v6753
      %v6852 = vpop.xlane.xlu0 %6851
      %6853 = vadd.xlane.f32.xlu0 %v6754
      %v6854 = vpop.xlane.xlu0 %6853
      %6855 = vadd.xlane.f32.xlu0 %v6755
      %v6856 = vpop.xlane.xlu0 %6855
      %6857 = vadd.xlane.f32.xlu0 %v6756
      %v6858 = vpop.xlane.xlu0 %6857
      %6859 = vadd.xlane.f32.xlu0 %v6757
      %v6860 = vpop.xlane.xlu0 %6859
      %6861 = vadd.xlane.f32.xlu0 %v6758
      %v6862 = vpop.xlane.xlu0 %6861
      %6863 = vadd.xlane.f32.xlu0 %v6759
      %v6864 = vpop.xlane.xlu0 %6863
      %6865 = vadd.xlane.f32.xlu0 %v6760
      %v6866 = vpop.xlane.xlu0 %6865
      %6867 = vadd.xlane.f32.xlu0 %v6761
      %v6868 = vpop.xlane.xlu0 %6867
      %6869 = vadd.xlane.f32.xlu0 %v6762
      %v6870 = vpop.xlane.xlu0 %6869
      %6871 = vadd.xlane.f32.xlu0 %v6763
      %v6872 = vpop.xlane.xlu0 %6871
      %6873 = vadd.xlane.f32.xlu0 %v6764
      %v6874 = vpop.xlane.xlu0 %6873
      %6875 = vadd.xlane.f32.xlu0 %v6765
      %v6876 = vpop.xlane.xlu0 %6875
      %6877 = vadd.xlane.f32.xlu0 %v6766
      %v6878 = vpop.xlane.xlu0 %6877
      %6879 = vadd.xlane.f32.xlu0 %v6767
      %v6880 = vpop.xlane.xlu0 %6879
      %6881 = vadd.xlane.f32.xlu0 %v6768
      %v6882 = vpop.xlane.xlu0 %6881
      %6883 = vadd.xlane.f32.xlu0 %v6769
      %v6884 = vpop.xlane.xlu0 %6883
      %6885 = vadd.xlane.f32.xlu0 %v6770
      %v6886 = vpop.xlane.xlu0 %6885
      %6887 = vadd.xlane.f32.xlu0 %v6771
      %v6888 = vpop.xlane.xlu0 %6887
      %6889 = vadd.xlane.f32.xlu0 %v6772
      %v6890 = vpop.xlane.xlu0 %6889
      %6891 = vadd.xlane.f32.xlu0 %v6773
      %v6892 = vpop.xlane.xlu0 %6891
      %6893 = vadd.xlane.f32.xlu0 %v6774
      %v6894 = vpop.xlane.xlu0 %6893
      %6895 = vadd.xlane.f32.xlu0 %v6775
      %v6896 = vpop.xlane.xlu0 %6895
      %6897 = vadd.xlane.f32.xlu0 %v6776
      %v6898 = vpop.xlane.xlu0 %6897
      %6899 = vadd.xlane.f32.xlu0 %v6777
      %v6900 = vpop.xlane.xlu0 %6899
      %6901 = vadd.xlane.f32.xlu0 %v6778
      %v6902 = vpop.xlane.xlu0 %6901
      %6903 = vadd.xlane.f32.xlu0 %v6779
      %v6904 = vpop.xlane.xlu0 %6903
      %6905 = vadd.xlane.f32.xlu0 %v6780
      %v6906 = vpop.xlane.xlu0 %6905
      %6907 = vadd.xlane.f32.xlu0 %v6781
      %v6908 = vpop.xlane.xlu0 %6907
      %6909 = vadd.xlane.f32.xlu0 %v6782
      %v6910 = vpop.xlane.xlu0 %6909
      %v6911 = vld [vmem:[%s5 + $0x7] sm:$0x1]
      %v6912 = vlaneseq
      %v6913 = vshrl.u32 %v6912, 7
      %v6914 = vsub.s32 0, %v6913
      %v6915 = vrot.slane %v6911, %v6914
      %v6916 = vadd.f32 %v6784, %v6915
      %v6917 = vadd.f32 %v6786, %v6915
      %v6918 = vadd.f32 %v6788, %v6915
      %v6919 = vadd.f32 %v6790, %v6915
      %v6920 = vadd.f32 %v6792, %v6915
      %v6921 = vadd.f32 %v6794, %v6915
      %v6922 = vadd.f32 %v6796, %v6915
      %v6923 = vadd.f32 %v6798, %v6915
      %v6924 = vadd.f32 %v6800, %v6915
      %v6925 = vadd.f32 %v6802, %v6915
      %v6926 = vadd.f32 %v6804, %v6915
      %v6927 = vadd.f32 %v6806, %v6915
      %v6928 = vadd.f32 %v6808, %v6915
      %v6929 = vadd.f32 %v6810, %v6915
      %v6930 = vadd.f32 %v6812, %v6915
      %v6931 = vadd.f32 %v6814, %v6915
      %v6932 = vadd.f32 %v6816, %v6915
      %v6933 = vadd.f32 %v6818, %v6915
      %v6934 = vadd.f32 %v6820, %v6915
      %v6935 = vadd.f32 %v6822, %v6915
      %v6936 = vadd.f32 %v6824, %v6915
      %v6937 = vadd.f32 %v6826, %v6915
      %v6938 = vadd.f32 %v6828, %v6915
      %v6939 = vadd.f32 %v6830, %v6915
      %v6940 = vadd.f32 %v6832, %v6915
      %v6941 = vadd.f32 %v6834, %v6915
      %v6942 = vadd.f32 %v6836, %v6915
      %v6943 = vadd.f32 %v6838, %v6915
      %v6944 = vadd.f32 %v6840, %v6915
      %v6945 = vadd.f32 %v6842, %v6915
      %v6946 = vadd.f32 %v6844, %v6915
      %v6947 = vadd.f32 %v6846, %v6915
      %v6948 = vadd.f32 %v6848, %v6915
      %v6949 = vadd.f32 %v6850, %v6915
      %v6950 = vadd.f32 %v6852, %v6915
      %v6951 = vadd.f32 %v6854, %v6915
      %v6952 = vadd.f32 %v6856, %v6915
      %v6953 = vadd.f32 %v6858, %v6915
      %v6954 = vadd.f32 %v6860, %v6915
      %v6955 = vadd.f32 %v6862, %v6915
      %v6956 = vadd.f32 %v6864, %v6915
      %v6957 = vadd.f32 %v6866, %v6915
      %v6958 = vadd.f32 %v6868, %v6915
      %v6959 = vadd.f32 %v6870, %v6915
      %v6960 = vadd.f32 %v6872, %v6915
      %v6961 = vadd.f32 %v6874, %v6915
      %v6962 = vadd.f32 %v6876, %v6915
      %v6963 = vadd.f32 %v6878, %v6915
      %v6964 = vadd.f32 %v6880, %v6915
      %v6965 = vadd.f32 %v6882, %v6915
      %v6966 = vadd.f32 %v6884, %v6915
      %v6967 = vadd.f32 %v6886, %v6915
      %v6968 = vadd.f32 %v6888, %v6915
      %v6969 = vadd.f32 %v6890, %v6915
      %v6970 = vadd.f32 %v6892, %v6915
      %v6971 = vadd.f32 %v6894, %v6915
      %v6972 = vadd.f32 %v6896, %v6915
      %v6973 = vadd.f32 %v6898, %v6915
      %v6974 = vadd.f32 %v6900, %v6915
      %v6975 = vadd.f32 %v6902, %v6915
      %v6976 = vadd.f32 %v6904, %v6915
      %v6977 = vadd.f32 %v6906, %v6915
      %v6978 = vadd.f32 %v6908, %v6915
      %v6979 = vadd.f32 %v6910, %v6915
      %v6980 = vld [vmem:[%s5 + $0x13] sm:$0x1]
      %v6981 = vlaneseq
      %v6982 = vshrl.u32 %v6981, 7
      %v6983 = vsub.s32 0, %v6982
      %v6984 = vrot.slane %v6980, %v6983
      %v6985 = vmul.f32 %v6384, %v6984
      %v6986 = vmul.f32 %v6385, %v6984
      %v6987 = vmul.f32 %v6386, %v6984
      %v6988 = vmul.f32 %v6387, %v6984
      %v6989 = vmul.f32 %v6388, %v6984
      %v6990 = vmul.f32 %v6389, %v6984
      %v6991 = vmul.f32 %v6390, %v6984
      %v6992 = vmul.f32 %v6391, %v6984
      %v6993 = vmul.f32 %v6392, %v6984
      %v6994 = vmul.f32 %v6393, %v6984
      %v6995 = vmul.f32 %v6394, %v6984
      %v6996 = vmul.f32 %v6395, %v6984
      %v6997 = vmul.f32 %v6396, %v6984
      %v6998 = vmul.f32 %v6397, %v6984
      %v6999 = vmul.f32 %v6398, %v6984
      %v7000 = vmul.f32 %v6399, %v6984
      %v7001 = vmul.f32 %v6400, %v6984
      %v7002 = vmul.f32 %v6401, %v6984
      %v7003 = vmul.f32 %v6402, %v6984
      %v7004 = vmul.f32 %v6403, %v6984
      %v7005 = vmul.f32 %v6404, %v6984
      %v7006 = vmul.f32 %v6405, %v6984
      %v7007 = vmul.f32 %v6406, %v6984
      %v7008 = vmul.f32 %v6407, %v6984
      %v7009 = vmul.f32 %v6408, %v6984
      %v7010 = vmul.f32 %v6409, %v6984
      %v7011 = vmul.f32 %v6410, %v6984
      %v7012 = vmul.f32 %v6411, %v6984
      %v7013 = vmul.f32 %v6412, %v6984
      %v7014 = vmul.f32 %v6413, %v6984
      %v7015 = vmul.f32 %v6414, %v6984
      %v7016 = vmul.f32 %v6415, %v6984
      %v7017 = vmul.f32 %v6416, %v6984
      %v7018 = vmul.f32 %v6417, %v6984
      %v7019 = vmul.f32 %v6418, %v6984
      %v7020 = vmul.f32 %v6419, %v6984
      %v7021 = vmul.f32 %v6420, %v6984
      %v7022 = vmul.f32 %v6421, %v6984
      %v7023 = vmul.f32 %v6422, %v6984
      %v7024 = vmul.f32 %v6423, %v6984
      %v7025 = vmul.f32 %v6424, %v6984
      %v7026 = vmul.f32 %v6425, %v6984
      %v7027 = vmul.f32 %v6426, %v6984
      %v7028 = vmul.f32 %v6427, %v6984
      %v7029 = vmul.f32 %v6428, %v6984
      %v7030 = vmul.f32 %v6429, %v6984
      %v7031 = vmul.f32 %v6430, %v6984
      %v7032 = vmul.f32 %v6431, %v6984
      %v7033 = vmul.f32 %v6432, %v6984
      %v7034 = vmul.f32 %v6433, %v6984
      %v7035 = vmul.f32 %v6434, %v6984
      %v7036 = vmul.f32 %v6435, %v6984
      %v7037 = vmul.f32 %v6436, %v6984
      %v7038 = vmul.f32 %v6437, %v6984
      %v7039 = vmul.f32 %v6438, %v6984
      %v7040 = vmul.f32 %v6439, %v6984
      %v7041 = vmul.f32 %v6440, %v6984
      %v7042 = vmul.f32 %v6441, %v6984
      %v7043 = vmul.f32 %v6442, %v6984
      %v7044 = vmul.f32 %v6443, %v6984
      %v7045 = vmul.f32 %v6444, %v6984
      %v7046 = vmul.f32 %v6445, %v6984
      %v7047 = vmul.f32 %v6446, %v6984
      %v7048 = vmul.f32 %v6447, %v6984
      %7049 = vadd.xlane.f32.xlu0 %v6985
      %v7050 = vpop.xlane.xlu0 %7049
      %7051 = vadd.xlane.f32.xlu0 %v6986
      %v7052 = vpop.xlane.xlu0 %7051
      %7053 = vadd.xlane.f32.xlu0 %v6987
      %v7054 = vpop.xlane.xlu0 %7053
      %7055 = vadd.xlane.f32.xlu0 %v6988
      %v7056 = vpop.xlane.xlu0 %7055
      %7057 = vadd.xlane.f32.xlu0 %v6989
      %v7058 = vpop.xlane.xlu0 %7057
      %7059 = vadd.xlane.f32.xlu0 %v6990
      %v7060 = vpop.xlane.xlu0 %7059
      %7061 = vadd.xlane.f32.xlu0 %v6991
      %v7062 = vpop.xlane.xlu0 %7061
      %7063 = vadd.xlane.f32.xlu0 %v6992
      %v7064 = vpop.xlane.xlu0 %7063
      %7065 = vadd.xlane.f32.xlu0 %v6993
      %v7066 = vpop.xlane.xlu0 %7065
      %7067 = vadd.xlane.f32.xlu0 %v6994
      %v7068 = vpop.xlane.xlu0 %7067
      %7069 = vadd.xlane.f32.xlu0 %v6995
      %v7070 = vpop.xlane.xlu0 %7069
      %7071 = vadd.xlane.f32.xlu0 %v6996
      %v7072 = vpop.xlane.xlu0 %7071
      %7073 = vadd.xlane.f32.xlu0 %v6997
      %v7074 = vpop.xlane.xlu0 %7073
      %7075 = vadd.xlane.f32.xlu0 %v6998
      %v7076 = vpop.xlane.xlu0 %7075
      %7077 = vadd.xlane.f32.xlu0 %v6999
      %v7078 = vpop.xlane.xlu0 %7077
      %7079 = vadd.xlane.f32.xlu0 %v7000
      %v7080 = vpop.xlane.xlu0 %7079
      %7081 = vadd.xlane.f32.xlu0 %v7001
      %v7082 = vpop.xlane.xlu0 %7081
      %7083 = vadd.xlane.f32.xlu0 %v7002
      %v7084 = vpop.xlane.xlu0 %7083
      %7085 = vadd.xlane.f32.xlu0 %v7003
      %v7086 = vpop.xlane.xlu0 %7085
      %7087 = vadd.xlane.f32.xlu0 %v7004
      %v7088 = vpop.xlane.xlu0 %7087
      %7089 = vadd.xlane.f32.xlu0 %v7005
      %v7090 = vpop.xlane.xlu0 %7089
      %7091 = vadd.xlane.f32.xlu0 %v7006
      %v7092 = vpop.xlane.xlu0 %7091
      %7093 = vadd.xlane.f32.xlu0 %v7007
      %v7094 = vpop.xlane.xlu0 %7093
      %7095 = vadd.xlane.f32.xlu0 %v7008
      %v7096 = vpop.xlane.xlu0 %7095
      %7097 = vadd.xlane.f32.xlu0 %v7009
      %v7098 = vpop.xlane.xlu0 %7097
      %7099 = vadd.xlane.f32.xlu0 %v7010
      %v7100 = vpop.xlane.xlu0 %7099
      %7101 = vadd.xlane.f32.xlu0 %v7011
      %v7102 = vpop.xlane.xlu0 %7101
      %7103 = vadd.xlane.f32.xlu0 %v7012
      %v7104 = vpop.xlane.xlu0 %7103
      %7105 = vadd.xlane.f32.xlu0 %v7013
      %v7106 = vpop.xlane.xlu0 %7105
      %7107 = vadd.xlane.f32.xlu0 %v7014
      %v7108 = vpop.xlane.xlu0 %7107
      %7109 = vadd.xlane.f32.xlu0 %v7015
      %v7110 = vpop.xlane.xlu0 %7109
      %7111 = vadd.xlane.f32.xlu0 %v7016
      %v7112 = vpop.xlane.xlu0 %7111
      %7113 = vadd.xlane.f32.xlu0 %v7017
      %v7114 = vpop.xlane.xlu0 %7113
      %7115 = vadd.xlane.f32.xlu0 %v7018
      %v7116 = vpop.xlane.xlu0 %7115
      %7117 = vadd.xlane.f32.xlu0 %v7019
      %v7118 = vpop.xlane.xlu0 %7117
      %7119 = vadd.xlane.f32.xlu0 %v7020
      %v7120 = vpop.xlane.xlu0 %7119
      %7121 = vadd.xlane.f32.xlu0 %v7021
      %v7122 = vpop.xlane.xlu0 %7121
      %7123 = vadd.xlane.f32.xlu0 %v7022
      %v7124 = vpop.xlane.xlu0 %7123
      %7125 = vadd.xlane.f32.xlu0 %v7023
      %v7126 = vpop.xlane.xlu0 %7125
      %7127 = vadd.xlane.f32.xlu0 %v7024
      %v7128 = vpop.xlane.xlu0 %7127
      %7129 = vadd.xlane.f32.xlu0 %v7025
      %v7130 = vpop.xlane.xlu0 %7129
      %7131 = vadd.xlane.f32.xlu0 %v7026
      %v7132 = vpop.xlane.xlu0 %7131
      %7133 = vadd.xlane.f32.xlu0 %v7027
      %v7134 = vpop.xlane.xlu0 %7133
      %7135 = vadd.xlane.f32.xlu0 %v7028
      %v7136 = vpop.xlane.xlu0 %7135
      %7137 = vadd.xlane.f32.xlu0 %v7029
      %v7138 = vpop.xlane.xlu0 %7137
      %7139 = vadd.xlane.f32.xlu0 %v7030
      %v7140 = vpop.xlane.xlu0 %7139
      %7141 = vadd.xlane.f32.xlu0 %v7031
      %v7142 = vpop.xlane.xlu0 %7141
      %7143 = vadd.xlane.f32.xlu0 %v7032
      %v7144 = vpop.xlane.xlu0 %7143
      %7145 = vadd.xlane.f32.xlu0 %v7033
      %v7146 = vpop.xlane.xlu0 %7145
      %7147 = vadd.xlane.f32.xlu0 %v7034
      %v7148 = vpop.xlane.xlu0 %7147
      %7149 = vadd.xlane.f32.xlu0 %v7035
      %v7150 = vpop.xlane.xlu0 %7149
      %7151 = vadd.xlane.f32.xlu0 %v7036
      %v7152 = vpop.xlane.xlu0 %7151
      %7153 = vadd.xlane.f32.xlu0 %v7037
      %v7154 = vpop.xlane.xlu0 %7153
      %7155 = vadd.xlane.f32.xlu0 %v7038
      %v7156 = vpop.xlane.xlu0 %7155
      %7157 = vadd.xlane.f32.xlu0 %v7039
      %v7158 = vpop.xlane.xlu0 %7157
      %7159 = vadd.xlane.f32.xlu0 %v7040
      %v7160 = vpop.xlane.xlu0 %7159
      %7161 = vadd.xlane.f32.xlu0 %v7041
      %v7162 = vpop.xlane.xlu0 %7161
      %7163 = vadd.xlane.f32.xlu0 %v7042
      %v7164 = vpop.xlane.xlu0 %7163
      %7165 = vadd.xlane.f32.xlu0 %v7043
      %v7166 = vpop.xlane.xlu0 %7165
      %7167 = vadd.xlane.f32.xlu0 %v7044
      %v7168 = vpop.xlane.xlu0 %7167
      %7169 = vadd.xlane.f32.xlu0 %v7045
      %v7170 = vpop.xlane.xlu0 %7169
      %7171 = vadd.xlane.f32.xlu0 %v7046
      %v7172 = vpop.xlane.xlu0 %7171
      %7173 = vadd.xlane.f32.xlu0 %v7047
      %v7174 = vpop.xlane.xlu0 %7173
      %7175 = vadd.xlane.f32.xlu0 %v7048
      %v7176 = vpop.xlane.xlu0 %7175
      %v7177 = vld [vmem:[%s5 + $0x14] sm:$0x1]
      %v7178 = vlaneseq
      %v7179 = vshrl.u32 %v7178, 7
      %v7180 = vsub.s32 0, %v7179
      %v7181 = vrot.slane %v7177, %v7180
      %v7182 = vadd.f32 %v7050, %v7181
      %v7183 = vadd.f32 %v7052, %v7181
      %v7184 = vadd.f32 %v7054, %v7181
      %v7185 = vadd.f32 %v7056, %v7181
      %v7186 = vadd.f32 %v7058, %v7181
      %v7187 = vadd.f32 %v7060, %v7181
      %v7188 = vadd.f32 %v7062, %v7181
      %v7189 = vadd.f32 %v7064, %v7181
      %v7190 = vadd.f32 %v7066, %v7181
      %v7191 = vadd.f32 %v7068, %v7181
      %v7192 = vadd.f32 %v7070, %v7181
      %v7193 = vadd.f32 %v7072, %v7181
      %v7194 = vadd.f32 %v7074, %v7181
      %v7195 = vadd.f32 %v7076, %v7181
      %v7196 = vadd.f32 %v7078, %v7181
      %v7197 = vadd.f32 %v7080, %v7181
      %v7198 = vadd.f32 %v7082, %v7181
      %v7199 = vadd.f32 %v7084, %v7181
      %v7200 = vadd.f32 %v7086, %v7181
      %v7201 = vadd.f32 %v7088, %v7181
      %v7202 = vadd.f32 %v7090, %v7181
      %v7203 = vadd.f32 %v7092, %v7181
      %v7204 = vadd.f32 %v7094, %v7181
      %v7205 = vadd.f32 %v7096, %v7181
      %v7206 = vadd.f32 %v7098, %v7181
      %v7207 = vadd.f32 %v7100, %v7181
      %v7208 = vadd.f32 %v7102, %v7181
      %v7209 = vadd.f32 %v7104, %v7181
      %v7210 = vadd.f32 %v7106, %v7181
      %v7211 = vadd.f32 %v7108, %v7181
      %v7212 = vadd.f32 %v7110, %v7181
      %v7213 = vadd.f32 %v7112, %v7181
      %v7214 = vadd.f32 %v7114, %v7181
      %v7215 = vadd.f32 %v7116, %v7181
      %v7216 = vadd.f32 %v7118, %v7181
      %v7217 = vadd.f32 %v7120, %v7181
      %v7218 = vadd.f32 %v7122, %v7181
      %v7219 = vadd.f32 %v7124, %v7181
      %v7220 = vadd.f32 %v7126, %v7181
      %v7221 = vadd.f32 %v7128, %v7181
      %v7222 = vadd.f32 %v7130, %v7181
      %v7223 = vadd.f32 %v7132, %v7181
      %v7224 = vadd.f32 %v7134, %v7181
      %v7225 = vadd.f32 %v7136, %v7181
      %v7226 = vadd.f32 %v7138, %v7181
      %v7227 = vadd.f32 %v7140, %v7181
      %v7228 = vadd.f32 %v7142, %v7181
      %v7229 = vadd.f32 %v7144, %v7181
      %v7230 = vadd.f32 %v7146, %v7181
      %v7231 = vadd.f32 %v7148, %v7181
      %v7232 = vadd.f32 %v7150, %v7181
      %v7233 = vadd.f32 %v7152, %v7181
      %v7234 = vadd.f32 %v7154, %v7181
      %v7235 = vadd.f32 %v7156, %v7181
      %v7236 = vadd.f32 %v7158, %v7181
      %v7237 = vadd.f32 %v7160, %v7181
      %v7238 = vadd.f32 %v7162, %v7181
      %v7239 = vadd.f32 %v7164, %v7181
      %v7240 = vadd.f32 %v7166, %v7181
      %v7241 = vadd.f32 %v7168, %v7181
      %v7242 = vadd.f32 %v7170, %v7181
      %v7243 = vadd.f32 %v7172, %v7181
      %v7244 = vadd.f32 %v7174, %v7181
      %v7245 = vadd.f32 %v7176, %v7181
      %v7246 = vld [vmem:[%s7] sm:$0xf]
      %v7247 = vld [vmem:[%s7 + $0x4] sm:$0xf]
      %v7248 = vld [vmem:[%s7 + $0x8] sm:$0xf]
      %v7249 = vld [vmem:[%s7 + $0xc] sm:$0xf]
      %v7250 = vld [vmem:[%s7 + $0x10] sm:$0xf]
      %v7251 = vld [vmem:[%s7 + $0x14] sm:$0xf]
      %v7252 = vld [vmem:[%s7 + $0x18] sm:$0xf]
      %v7253 = vld [vmem:[%s7 + $0x1c] sm:$0xf]
      %v7254 = vld [vmem:[%s7 + $0x20] sm:$0xf]
      %v7255 = vld [vmem:[%s7 + $0x24] sm:$0xf]
      %v7256 = vld [vmem:[%s7 + $0x28] sm:$0xf]
      %v7257 = vld [vmem:[%s7 + $0x2c] sm:$0xf]
      %v7258 = vld [vmem:[%s7 + $0x30] sm:$0xf]
      %v7259 = vld [vmem:[%s7 + $0x34] sm:$0xf]
      %v7260 = vld [vmem:[%s7 + $0x38] sm:$0xf]
      %v7261 = vld [vmem:[%s7 + $0x3c] sm:$0xf]
      %v7262 = vld [vmem:[%s7 + $0x40] sm:$0xf]
      %v7263 = vld [vmem:[%s7 + $0x44] sm:$0xf]
      %v7264 = vld [vmem:[%s7 + $0x48] sm:$0xf]
      %v7265 = vld [vmem:[%s7 + $0x4c] sm:$0xf]
      %v7266 = vld [vmem:[%s7 + $0x50] sm:$0xf]
      %v7267 = vld [vmem:[%s7 + $0x54] sm:$0xf]
      %v7268 = vld [vmem:[%s7 + $0x58] sm:$0xf]
      %v7269 = vld [vmem:[%s7 + $0x5c] sm:$0xf]
      %v7270 = vld [vmem:[%s7 + $0x60] sm:$0xf]
      %v7271 = vld [vmem:[%s7 + $0x64] sm:$0xf]
      %v7272 = vld [vmem:[%s7 + $0x68] sm:$0xf]
      %v7273 = vld [vmem:[%s7 + $0x6c] sm:$0xf]
      %v7274 = vld [vmem:[%s7 + $0x70] sm:$0xf]
      %v7275 = vld [vmem:[%s7 + $0x74] sm:$0xf]
      %v7276 = vld [vmem:[%s7 + $0x78] sm:$0xf]
      %v7277 = vld [vmem:[%s7 + $0x7c] sm:$0xf]
      %v7278 = vld [vmem:[%s7 + $0x80] sm:$0xf]
      %v7279 = vld [vmem:[%s7 + $0x84] sm:$0xf]
      %v7280 = vld [vmem:[%s7 + $0x88] sm:$0xf]
      %v7281 = vld [vmem:[%s7 + $0x8c] sm:$0xf]
      %v7282 = vld [vmem:[%s7 + $0x90] sm:$0xf]
      %v7283 = vld [vmem:[%s7 + $0x94] sm:$0xf]
      %v7284 = vld [vmem:[%s7 + $0x98] sm:$0xf]
      %v7285 = vld [vmem:[%s7 + $0x9c] sm:$0xf]
      %v7286 = vld [vmem:[%s7 + $0xa0] sm:$0xf]
      %v7287 = vld [vmem:[%s7 + $0xa4] sm:$0xf]
      %v7288 = vld [vmem:[%s7 + $0xa8] sm:$0xf]
      %v7289 = vld [vmem:[%s7 + $0xac] sm:$0xf]
      %v7290 = vld [vmem:[%s7 + $0xb0] sm:$0xf]
      %v7291 = vld [vmem:[%s7 + $0xb4] sm:$0xf]
      %v7292 = vld [vmem:[%s7 + $0xb8] sm:$0xf]
      %v7293 = vld [vmem:[%s7 + $0xbc] sm:$0xf]
      %v7294 = vld [vmem:[%s7 + $0xc0] sm:$0xf]
      %v7295 = vld [vmem:[%s7 + $0xc4] sm:$0xf]
      %v7296 = vld [vmem:[%s7 + $0xc8] sm:$0xf]
      %v7297 = vld [vmem:[%s7 + $0xcc] sm:$0xf]
      %v7298 = vld [vmem:[%s7 + $0xd0] sm:$0xf]
      %v7299 = vld [vmem:[%s7 + $0xd4] sm:$0xf]
      %v7300 = vld [vmem:[%s7 + $0xd8] sm:$0xf]
      %v7301 = vld [vmem:[%s7 + $0xdc] sm:$0xf]
      %v7302 = vld [vmem:[%s7 + $0xe0] sm:$0xf]
      %v7303 = vld [vmem:[%s7 + $0xe4] sm:$0xf]
      %v7304 = vld [vmem:[%s7 + $0xe8] sm:$0xf]
      %v7305 = vld [vmem:[%s7 + $0xec] sm:$0xf]
      %v7306 = vld [vmem:[%s7 + $0xf0] sm:$0xf]
      %v7307 = vld [vmem:[%s7 + $0xf4] sm:$0xf]
      %v7308 = vld [vmem:[%s7 + $0xf8] sm:$0xf]
      %v7309 = vld [vmem:[%s7 + $0xfc] sm:$0xf]
      %v7310 = vpack.c.bf16 %v6651, %v6650
      %v7311 = vpack.c.bf16 %v6653, %v6652
      %v7312 = vpack.c.bf16 %v6655, %v6654
      %v7313 = vpack.c.bf16 %v6657, %v6656
      %v7314 = vpack.c.bf16 %v6659, %v6658
      %v7315 = vpack.c.bf16 %v6661, %v6660
      %v7316 = vpack.c.bf16 %v6663, %v6662
      %v7317 = vpack.c.bf16 %v6665, %v6664
      %v7318 = vpack.c.bf16 %v6667, %v6666
      %v7319 = vpack.c.bf16 %v6669, %v6668
      %v7320 = vpack.c.bf16 %v6671, %v6670
      %v7321 = vpack.c.bf16 %v6673, %v6672
      %v7322 = vpack.c.bf16 %v6675, %v6674
      %v7323 = vpack.c.bf16 %v6677, %v6676
      %v7324 = vpack.c.bf16 %v6679, %v6678
      %v7325 = vpack.c.bf16 %v6681, %v6680
      %v7326 = vpack.c.bf16 %v6683, %v6682
      %v7327 = vpack.c.bf16 %v6685, %v6684
      %v7328 = vpack.c.bf16 %v6687, %v6686
      %v7329 = vpack.c.bf16 %v6689, %v6688
      %v7330 = vpack.c.bf16 %v6691, %v6690
      %v7331 = vpack.c.bf16 %v6693, %v6692
      %v7332 = vpack.c.bf16 %v6695, %v6694
      %v7333 = vpack.c.bf16 %v6697, %v6696
      %v7334 = vpack.c.bf16 %v6699, %v6698
      %v7335 = vpack.c.bf16 %v6701, %v6700
      %v7336 = vpack.c.bf16 %v6703, %v6702
      %v7337 = vpack.c.bf16 %v6705, %v6704
      %v7338 = vpack.c.bf16 %v6707, %v6706
      %v7339 = vpack.c.bf16 %v6709, %v6708
      %v7340 = vpack.c.bf16 %v6711, %v6710
      %v7341 = vpack.c.bf16 %v6713, %v6712
      %7343 = vset.pattern.permute.xlu0 0
      %7344 = vperm.xlu0 %7343, %v7310
      %v7345 = vpop.permute.xlu0 %7344
      %7348 = vset.pattern.permute.xlu0 0
      %7349 = vperm.xlu0 %7348, %v7311
      %v7350 = vpop.permute.xlu0 %7349
      %7353 = vset.pattern.permute.xlu0 0
      %7354 = vperm.xlu0 %7353, %v7312
      %v7355 = vpop.permute.xlu0 %7354
      %7358 = vset.pattern.permute.xlu0 0
      %7359 = vperm.xlu0 %7358, %v7313
      %v7360 = vpop.permute.xlu0 %7359
      %7363 = vset.pattern.permute.xlu0 0
      %7364 = vperm.xlu0 %7363, %v7314
      %v7365 = vpop.permute.xlu0 %7364
      %7368 = vset.pattern.permute.xlu0 0
      %7369 = vperm.xlu0 %7368, %v7315
      %v7370 = vpop.permute.xlu0 %7369
      %7373 = vset.pattern.permute.xlu0 0
      %7374 = vperm.xlu0 %7373, %v7316
      %v7375 = vpop.permute.xlu0 %7374
      %7378 = vset.pattern.permute.xlu0 0
      %7379 = vperm.xlu0 %7378, %v7317
      %v7380 = vpop.permute.xlu0 %7379
      %7383 = vset.pattern.permute.xlu0 0
      %7384 = vperm.xlu0 %7383, %v7318
      %v7385 = vpop.permute.xlu0 %7384
      %7388 = vset.pattern.permute.xlu0 0
      %7389 = vperm.xlu0 %7388, %v7319
      %v7390 = vpop.permute.xlu0 %7389
      %7393 = vset.pattern.permute.xlu0 0
      %7394 = vperm.xlu0 %7393, %v7320
      %v7395 = vpop.permute.xlu0 %7394
      %7398 = vset.pattern.permute.xlu0 0
      %7399 = vperm.xlu0 %7398, %v7321
      %v7400 = vpop.permute.xlu0 %7399
      %7403 = vset.pattern.permute.xlu0 0
      %7404 = vperm.xlu0 %7403, %v7322
      %v7405 = vpop.permute.xlu0 %7404
      %7408 = vset.pattern.permute.xlu0 0
      %7409 = vperm.xlu0 %7408, %v7323
      %v7410 = vpop.permute.xlu0 %7409
      %7413 = vset.pattern.permute.xlu0 0
      %7414 = vperm.xlu0 %7413, %v7324
      %v7415 = vpop.permute.xlu0 %7414
      %7418 = vset.pattern.permute.xlu0 0
      %7419 = vperm.xlu0 %7418, %v7325
      %v7420 = vpop.permute.xlu0 %7419
      %7423 = vset.pattern.permute.xlu0 0
      %7424 = vperm.xlu0 %7423, %v7326
      %v7425 = vpop.permute.xlu0 %7424
      %7428 = vset.pattern.permute.xlu0 0
      %7429 = vperm.xlu0 %7428, %v7327
      %v7430 = vpop.permute.xlu0 %7429
      %7433 = vset.pattern.permute.xlu0 0
      %7434 = vperm.xlu0 %7433, %v7328
      %v7435 = vpop.permute.xlu0 %7434
      %7438 = vset.pattern.permute.xlu0 0
      %7439 = vperm.xlu0 %7438, %v7329
      %v7440 = vpop.permute.xlu0 %7439
      %7443 = vset.pattern.permute.xlu0 0
      %7444 = vperm.xlu0 %7443, %v7330
      %v7445 = vpop.permute.xlu0 %7444
      %7448 = vset.pattern.permute.xlu0 0
      %7449 = vperm.xlu0 %7448, %v7331
      %v7450 = vpop.permute.xlu0 %7449
      %7453 = vset.pattern.permute.xlu0 0
      %7454 = vperm.xlu0 %7453, %v7332
      %v7455 = vpop.permute.xlu0 %7454
      %7458 = vset.pattern.permute.xlu0 0
      %7459 = vperm.xlu0 %7458, %v7333
      %v7460 = vpop.permute.xlu0 %7459
      %7463 = vset.pattern.permute.xlu0 0
      %7464 = vperm.xlu0 %7463, %v7334
      %v7465 = vpop.permute.xlu0 %7464
      %7468 = vset.pattern.permute.xlu0 0
      %7469 = vperm.xlu0 %7468, %v7335
      %v7470 = vpop.permute.xlu0 %7469
      %7473 = vset.pattern.permute.xlu0 0
      %7474 = vperm.xlu0 %7473, %v7336
      %v7475 = vpop.permute.xlu0 %7474
      %7478 = vset.pattern.permute.xlu0 0
      %7479 = vperm.xlu0 %7478, %v7337
      %v7480 = vpop.permute.xlu0 %7479
      %7483 = vset.pattern.permute.xlu0 0
      %7484 = vperm.xlu0 %7483, %v7338
      %v7485 = vpop.permute.xlu0 %7484
      %7488 = vset.pattern.permute.xlu0 0
      %7489 = vperm.xlu0 %7488, %v7339
      %v7490 = vpop.permute.xlu0 %7489
      %7493 = vset.pattern.permute.xlu0 0
      %7494 = vperm.xlu0 %7493, %v7340
      %v7495 = vpop.permute.xlu0 %7494
      %7498 = vset.pattern.permute.xlu0 0
      %7499 = vperm.xlu0 %7498, %v7341
      %v7500 = vpop.permute.xlu0 %7499
      %v7566 = vunpack.c.l.b16 %v7246
      %v7567 = vunpack.c.l.b16 %v7247
      %v7568 = vunpack.c.l.b16 %v7248
      %v7569 = vunpack.c.l.b16 %v7249
      %v7570 = vunpack.c.l.b16 %v7250
      %v7571 = vunpack.c.l.b16 %v7251
      %v7572 = vunpack.c.l.b16 %v7252
      %v7573 = vunpack.c.l.b16 %v7253
      %v7574 = vunpack.c.l.b16 %v7254
      %v7575 = vunpack.c.l.b16 %v7255
      %v7576 = vunpack.c.l.b16 %v7256
      %v7577 = vunpack.c.l.b16 %v7257
      %v7578 = vunpack.c.l.b16 %v7258
      %v7579 = vunpack.c.l.b16 %v7259
      %v7580 = vunpack.c.l.b16 %v7260
      %v7581 = vunpack.c.l.b16 %v7261
      %v7582 = vunpack.c.l.b16 %v7262
      %v7583 = vunpack.c.l.b16 %v7263
      %v7584 = vunpack.c.l.b16 %v7264
      %v7585 = vunpack.c.l.b16 %v7265
      %v7586 = vunpack.c.l.b16 %v7266
      %v7587 = vunpack.c.l.b16 %v7267
      %v7588 = vunpack.c.l.b16 %v7268
      %v7589 = vunpack.c.l.b16 %v7269
      %v7590 = vunpack.c.l.b16 %v7270
      %v7591 = vunpack.c.l.b16 %v7271
      %v7592 = vunpack.c.l.b16 %v7272
      %v7593 = vunpack.c.l.b16 %v7273
      %v7594 = vunpack.c.l.b16 %v7274
      %v7595 = vunpack.c.l.b16 %v7275
      %v7596 = vunpack.c.l.b16 %v7276
      %v7597 = vunpack.c.l.b16 %v7277
      %v7598 = vunpack.c.l.b16 %v7278
      %v7599 = vunpack.c.l.b16 %v7279
      %v7600 = vunpack.c.l.b16 %v7280
      %v7601 = vunpack.c.l.b16 %v7281
      %v7602 = vunpack.c.l.b16 %v7282
      %v7603 = vunpack.c.l.b16 %v7283
      %v7604 = vunpack.c.l.b16 %v7284
      %v7605 = vunpack.c.l.b16 %v7285
      %v7606 = vunpack.c.l.b16 %v7286
      %v7607 = vunpack.c.l.b16 %v7287
      %v7608 = vunpack.c.l.b16 %v7288
      %v7609 = vunpack.c.l.b16 %v7289
      %v7610 = vunpack.c.l.b16 %v7290
      %v7611 = vunpack.c.l.b16 %v7291
      %v7612 = vunpack.c.l.b16 %v7292
      %v7613 = vunpack.c.l.b16 %v7293
      %v7614 = vunpack.c.l.b16 %v7294
      %v7615 = vunpack.c.l.b16 %v7295
      %v7616 = vunpack.c.l.b16 %v7296
      %v7617 = vunpack.c.l.b16 %v7297
      %v7618 = vunpack.c.l.b16 %v7298
      %v7619 = vunpack.c.l.b16 %v7299
      %v7620 = vunpack.c.l.b16 %v7300
      %v7621 = vunpack.c.l.b16 %v7301
      %v7622 = vunpack.c.l.b16 %v7302
      %v7623 = vunpack.c.l.b16 %v7303
      %v7624 = vunpack.c.l.b16 %v7304
      %v7625 = vunpack.c.l.b16 %v7305
      %v7626 = vunpack.c.l.b16 %v7306
      %v7627 = vunpack.c.l.b16 %v7307
      %v7628 = vunpack.c.l.b16 %v7308
      %v7629 = vunpack.c.l.b16 %v7309
      %v7630 = vpack.c.b16 %v7567, %v7566
      %v7631 = vpack.c.b16 %v7569, %v7568
      %v7632 = vpack.c.b16 %v7571, %v7570
      %v7633 = vpack.c.b16 %v7573, %v7572
      %v7634 = vpack.c.b16 %v7575, %v7574
      %v7635 = vpack.c.b16 %v7577, %v7576
      %v7636 = vpack.c.b16 %v7579, %v7578
      %v7637 = vpack.c.b16 %v7581, %v7580
      %v7638 = vpack.c.b16 %v7583, %v7582
      %v7639 = vpack.c.b16 %v7585, %v7584
      %v7640 = vpack.c.b16 %v7587, %v7586
      %v7641 = vpack.c.b16 %v7589, %v7588
      %v7642 = vpack.c.b16 %v7591, %v7590
      %v7643 = vpack.c.b16 %v7593, %v7592
      %v7644 = vpack.c.b16 %v7595, %v7594
      %v7645 = vpack.c.b16 %v7597, %v7596
      %v7646 = vpack.c.b16 %v7599, %v7598
      %v7647 = vpack.c.b16 %v7601, %v7600
      %v7648 = vpack.c.b16 %v7603, %v7602
      %v7649 = vpack.c.b16 %v7605, %v7604
      %v7650 = vpack.c.b16 %v7607, %v7606
      %v7651 = vpack.c.b16 %v7609, %v7608
      %v7652 = vpack.c.b16 %v7611, %v7610
      %v7653 = vpack.c.b16 %v7613, %v7612
      %v7654 = vpack.c.b16 %v7615, %v7614
      %v7655 = vpack.c.b16 %v7617, %v7616
      %v7656 = vpack.c.b16 %v7619, %v7618
      %v7657 = vpack.c.b16 %v7621, %v7620
      %v7658 = vpack.c.b16 %v7623, %v7622
      %v7659 = vpack.c.b16 %v7625, %v7624
      %v7660 = vpack.c.b16 %v7627, %v7626
      %v7661 = vpack.c.b16 %v7629, %v7628
      %v7694 = vmul.bf16 %v7345, %v7630
      %v7695 = vmul.bf16 %v7350, %v7631
      %v7696 = vmul.bf16 %v7355, %v7632
      %v7697 = vmul.bf16 %v7360, %v7633
      %v7698 = vmul.bf16 %v7365, %v7634
      %v7699 = vmul.bf16 %v7370, %v7635
      %v7700 = vmul.bf16 %v7375, %v7636
      %v7701 = vmul.bf16 %v7380, %v7637
      %v7702 = vmul.bf16 %v7385, %v7638
      %v7703 = vmul.bf16 %v7390, %v7639
      %v7704 = vmul.bf16 %v7395, %v7640
      %v7705 = vmul.bf16 %v7400, %v7641
      %v7706 = vmul.bf16 %v7405, %v7642
      %v7707 = vmul.bf16 %v7410, %v7643
      %v7708 = vmul.bf16 %v7415, %v7644
      %v7709 = vmul.bf16 %v7420, %v7645
      %v7710 = vmul.bf16 %v7425, %v7646
      %v7711 = vmul.bf16 %v7430, %v7647
      %v7712 = vmul.bf16 %v7435, %v7648
      %v7713 = vmul.bf16 %v7440, %v7649
      %v7714 = vmul.bf16 %v7445, %v7650
      %v7715 = vmul.bf16 %v7450, %v7651
      %v7716 = vmul.bf16 %v7455, %v7652
      %v7717 = vmul.bf16 %v7460, %v7653
      %v7718 = vmul.bf16 %v7465, %v7654
      %v7719 = vmul.bf16 %v7470, %v7655
      %v7720 = vmul.bf16 %v7475, %v7656
      %v7721 = vmul.bf16 %v7480, %v7657
      %v7722 = vmul.bf16 %v7485, %v7658
      %v7723 = vmul.bf16 %v7490, %v7659
      %v7724 = vmul.bf16 %v7495, %v7660
      %v7725 = vmul.bf16 %v7500, %v7661
      %v7726 = vpack.c.bf16 %v6917, %v6916
      %v7727 = vpack.c.bf16 %v6919, %v6918
      %v7728 = vpack.c.bf16 %v6921, %v6920
      %v7729 = vpack.c.bf16 %v6923, %v6922
      %v7730 = vpack.c.bf16 %v6925, %v6924
      %v7731 = vpack.c.bf16 %v6927, %v6926
      %v7732 = vpack.c.bf16 %v6929, %v6928
      %v7733 = vpack.c.bf16 %v6931, %v6930
      %v7734 = vpack.c.bf16 %v6933, %v6932
      %v7735 = vpack.c.bf16 %v6935, %v6934
      %v7736 = vpack.c.bf16 %v6937, %v6936
      %v7737 = vpack.c.bf16 %v6939, %v6938
      %v7738 = vpack.c.bf16 %v6941, %v6940
      %v7739 = vpack.c.bf16 %v6943, %v6942
      %v7740 = vpack.c.bf16 %v6945, %v6944
      %v7741 = vpack.c.bf16 %v6947, %v6946
      %v7742 = vpack.c.bf16 %v6949, %v6948
      %v7743 = vpack.c.bf16 %v6951, %v6950
      %v7744 = vpack.c.bf16 %v6953, %v6952
      %v7745 = vpack.c.bf16 %v6955, %v6954
      %v7746 = vpack.c.bf16 %v6957, %v6956
      %v7747 = vpack.c.bf16 %v6959, %v6958
      %v7748 = vpack.c.bf16 %v6961, %v6960
      %v7749 = vpack.c.bf16 %v6963, %v6962
      %v7750 = vpack.c.bf16 %v6965, %v6964
      %v7751 = vpack.c.bf16 %v6967, %v6966
      %v7752 = vpack.c.bf16 %v6969, %v6968
      %v7753 = vpack.c.bf16 %v6971, %v6970
      %v7754 = vpack.c.bf16 %v6973, %v6972
      %v7755 = vpack.c.bf16 %v6975, %v6974
      %v7756 = vpack.c.bf16 %v6977, %v6976
      %v7757 = vpack.c.bf16 %v6979, %v6978
      %7759 = vset.pattern.permute.xlu0 0
      %7760 = vperm.xlu0 %7759, %v7726
      %v7761 = vpop.permute.xlu0 %7760
      %7764 = vset.pattern.permute.xlu0 0
      %7765 = vperm.xlu0 %7764, %v7727
      %v7766 = vpop.permute.xlu0 %7765
      %7769 = vset.pattern.permute.xlu0 0
      %7770 = vperm.xlu0 %7769, %v7728
      %v7771 = vpop.permute.xlu0 %7770
      %7774 = vset.pattern.permute.xlu0 0
      %7775 = vperm.xlu0 %7774, %v7729
      %v7776 = vpop.permute.xlu0 %7775
      %7779 = vset.pattern.permute.xlu0 0
      %7780 = vperm.xlu0 %7779, %v7730
      %v7781 = vpop.permute.xlu0 %7780
      %7784 = vset.pattern.permute.xlu0 0
      %7785 = vperm.xlu0 %7784, %v7731
      %v7786 = vpop.permute.xlu0 %7785
      %7789 = vset.pattern.permute.xlu0 0
      %7790 = vperm.xlu0 %7789, %v7732
      %v7791 = vpop.permute.xlu0 %7790
      %7794 = vset.pattern.permute.xlu0 0
      %7795 = vperm.xlu0 %7794, %v7733
      %v7796 = vpop.permute.xlu0 %7795
      %7799 = vset.pattern.permute.xlu0 0
      %7800 = vperm.xlu0 %7799, %v7734
      %v7801 = vpop.permute.xlu0 %7800
      %7804 = vset.pattern.permute.xlu0 0
      %7805 = vperm.xlu0 %7804, %v7735
      %v7806 = vpop.permute.xlu0 %7805
      %7809 = vset.pattern.permute.xlu0 0
      %7810 = vperm.xlu0 %7809, %v7736
      %v7811 = vpop.permute.xlu0 %7810
      %7814 = vset.pattern.permute.xlu0 0
      %7815 = vperm.xlu0 %7814, %v7737
      %v7816 = vpop.permute.xlu0 %7815
      %7819 = vset.pattern.permute.xlu0 0
      %7820 = vperm.xlu0 %7819, %v7738
      %v7821 = vpop.permute.xlu0 %7820
      %7824 = vset.pattern.permute.xlu0 0
      %7825 = vperm.xlu0 %7824, %v7739
      %v7826 = vpop.permute.xlu0 %7825
      %7829 = vset.pattern.permute.xlu0 0
      %7830 = vperm.xlu0 %7829, %v7740
      %v7831 = vpop.permute.xlu0 %7830
      %7834 = vset.pattern.permute.xlu0 0
      %7835 = vperm.xlu0 %7834, %v7741
      %v7836 = vpop.permute.xlu0 %7835
      %7839 = vset.pattern.permute.xlu0 0
      %7840 = vperm.xlu0 %7839, %v7742
      %v7841 = vpop.permute.xlu0 %7840
      %7844 = vset.pattern.permute.xlu0 0
      %7845 = vperm.xlu0 %7844, %v7743
      %v7846 = vpop.permute.xlu0 %7845
      %7849 = vset.pattern.permute.xlu0 0
      %7850 = vperm.xlu0 %7849, %v7744
      %v7851 = vpop.permute.xlu0 %7850
      %7854 = vset.pattern.permute.xlu0 0
      %7855 = vperm.xlu0 %7854, %v7745
      %v7856 = vpop.permute.xlu0 %7855
      %7859 = vset.pattern.permute.xlu0 0
      %7860 = vperm.xlu0 %7859, %v7746
      %v7861 = vpop.permute.xlu0 %7860
      %7864 = vset.pattern.permute.xlu0 0
      %7865 = vperm.xlu0 %7864, %v7747
      %v7866 = vpop.permute.xlu0 %7865
      %7869 = vset.pattern.permute.xlu0 0
      %7870 = vperm.xlu0 %7869, %v7748
      %v7871 = vpop.permute.xlu0 %7870
      %7874 = vset.pattern.permute.xlu0 0
      %7875 = vperm.xlu0 %7874, %v7749
      %v7876 = vpop.permute.xlu0 %7875
      %7879 = vset.pattern.permute.xlu0 0
      %7880 = vperm.xlu0 %7879, %v7750
      %v7881 = vpop.permute.xlu0 %7880
      %7884 = vset.pattern.permute.xlu0 0
      %7885 = vperm.xlu0 %7884, %v7751
      %v7886 = vpop.permute.xlu0 %7885
      %7889 = vset.pattern.permute.xlu0 0
      %7890 = vperm.xlu0 %7889, %v7752
      %v7891 = vpop.permute.xlu0 %7890
      %7894 = vset.pattern.permute.xlu0 0
      %7895 = vperm.xlu0 %7894, %v7753
      %v7896 = vpop.permute.xlu0 %7895
      %7899 = vset.pattern.permute.xlu0 0
      %7900 = vperm.xlu0 %7899, %v7754
      %v7901 = vpop.permute.xlu0 %7900
      %7904 = vset.pattern.permute.xlu0 0
      %7905 = vperm.xlu0 %7904, %v7755
      %v7906 = vpop.permute.xlu0 %7905
      %7909 = vset.pattern.permute.xlu0 0
      %7910 = vperm.xlu0 %7909, %v7756
      %v7911 = vpop.permute.xlu0 %7910
      %7914 = vset.pattern.permute.xlu0 0
      %7915 = vperm.xlu0 %7914, %v7757
      %v7916 = vpop.permute.xlu0 %7915
      %v7918 = vmul.bf16 %v7761, %v7630
      %v7919 = vmul.bf16 %v7766, %v7631
      %v7920 = vmul.bf16 %v7771, %v7632
      %v7921 = vmul.bf16 %v7776, %v7633
      %v7922 = vmul.bf16 %v7781, %v7634
      %v7923 = vmul.bf16 %v7786, %v7635
      %v7924 = vmul.bf16 %v7791, %v7636
      %v7925 = vmul.bf16 %v7796, %v7637
      %v7926 = vmul.bf16 %v7801, %v7638
      %v7927 = vmul.bf16 %v7806, %v7639
      %v7928 = vmul.bf16 %v7811, %v7640
      %v7929 = vmul.bf16 %v7816, %v7641
      %v7930 = vmul.bf16 %v7821, %v7642
      %v7931 = vmul.bf16 %v7826, %v7643
      %v7932 = vmul.bf16 %v7831, %v7644
      %v7933 = vmul.bf16 %v7836, %v7645
      %v7934 = vmul.bf16 %v7841, %v7646
      %v7935 = vmul.bf16 %v7846, %v7647
      %v7936 = vmul.bf16 %v7851, %v7648
      %v7937 = vmul.bf16 %v7856, %v7649
      %v7938 = vmul.bf16 %v7861, %v7650
      %v7939 = vmul.bf16 %v7866, %v7651
      %v7940 = vmul.bf16 %v7871, %v7652
      %v7941 = vmul.bf16 %v7876, %v7653
      %v7942 = vmul.bf16 %v7881, %v7654
      %v7943 = vmul.bf16 %v7886, %v7655
      %v7944 = vmul.bf16 %v7891, %v7656
      %v7945 = vmul.bf16 %v7896, %v7657
      %v7946 = vmul.bf16 %v7901, %v7658
      %v7947 = vmul.bf16 %v7906, %v7659
      %v7948 = vmul.bf16 %v7911, %v7660
      %v7949 = vmul.bf16 %v7916, %v7661
      %v7950 = vpack.c.bf16 %v7183, %v7182
      %v7951 = vpack.c.bf16 %v7185, %v7184
      %v7952 = vpack.c.bf16 %v7187, %v7186
      %v7953 = vpack.c.bf16 %v7189, %v7188
      %v7954 = vpack.c.bf16 %v7191, %v7190
      %v7955 = vpack.c.bf16 %v7193, %v7192
      %v7956 = vpack.c.bf16 %v7195, %v7194
      %v7957 = vpack.c.bf16 %v7197, %v7196
      %v7958 = vpack.c.bf16 %v7199, %v7198
      %v7959 = vpack.c.bf16 %v7201, %v7200
      %v7960 = vpack.c.bf16 %v7203, %v7202
      %v7961 = vpack.c.bf16 %v7205, %v7204
      %v7962 = vpack.c.bf16 %v7207, %v7206
      %v7963 = vpack.c.bf16 %v7209, %v7208
      %v7964 = vpack.c.bf16 %v7211, %v7210
      %v7965 = vpack.c.bf16 %v7213, %v7212
      %v7966 = vpack.c.bf16 %v7215, %v7214
      %v7967 = vpack.c.bf16 %v7217, %v7216
      %v7968 = vpack.c.bf16 %v7219, %v7218
      %v7969 = vpack.c.bf16 %v7221, %v7220
      %v7970 = vpack.c.bf16 %v7223, %v7222
      %v7971 = vpack.c.bf16 %v7225, %v7224
      %v7972 = vpack.c.bf16 %v7227, %v7226
      %v7973 = vpack.c.bf16 %v7229, %v7228
      %v7974 = vpack.c.bf16 %v7231, %v7230
      %v7975 = vpack.c.bf16 %v7233, %v7232
      %v7976 = vpack.c.bf16 %v7235, %v7234
      %v7977 = vpack.c.bf16 %v7237, %v7236
      %v7978 = vpack.c.bf16 %v7239, %v7238
      %v7979 = vpack.c.bf16 %v7241, %v7240
      %v7980 = vpack.c.bf16 %v7243, %v7242
      %v7981 = vpack.c.bf16 %v7245, %v7244
      %7983 = vset.pattern.permute.xlu0 0
      %7984 = vperm.xlu0 %7983, %v7950
      %v7985 = vpop.permute.xlu0 %7984
      %7988 = vset.pattern.permute.xlu0 0
      %7989 = vperm.xlu0 %7988, %v7951
      %v7990 = vpop.permute.xlu0 %7989
      %7993 = vset.pattern.permute.xlu0 0
      %7994 = vperm.xlu0 %7993, %v7952
      %v7995 = vpop.permute.xlu0 %7994
      %7998 = vset.pattern.permute.xlu0 0
      %7999 = vperm.xlu0 %7998, %v7953
      %v8000 = vpop.permute.xlu0 %7999
      %8003 = vset.pattern.permute.xlu0 0
      %8004 = vperm.xlu0 %8003, %v7954
      %v8005 = vpop.permute.xlu0 %8004
      %8008 = vset.pattern.permute.xlu0 0
      %8009 = vperm.xlu0 %8008, %v7955
      %v8010 = vpop.permute.xlu0 %8009
      %8013 = vset.pattern.permute.xlu0 0
      %8014 = vperm.xlu0 %8013, %v7956
      %v8015 = vpop.permute.xlu0 %8014
      %8018 = vset.pattern.permute.xlu0 0
      %8019 = vperm.xlu0 %8018, %v7957
      %v8020 = vpop.permute.xlu0 %8019
      %8023 = vset.pattern.permute.xlu0 0
      %8024 = vperm.xlu0 %8023, %v7958
      %v8025 = vpop.permute.xlu0 %8024
      %8028 = vset.pattern.permute.xlu0 0
      %8029 = vperm.xlu0 %8028, %v7959
      %v8030 = vpop.permute.xlu0 %8029
      %8033 = vset.pattern.permute.xlu0 0
      %8034 = vperm.xlu0 %8033, %v7960
      %v8035 = vpop.permute.xlu0 %8034
      %8038 = vset.pattern.permute.xlu0 0
      %8039 = vperm.xlu0 %8038, %v7961
      %v8040 = vpop.permute.xlu0 %8039
      %8043 = vset.pattern.permute.xlu0 0
      %8044 = vperm.xlu0 %8043, %v7962
      %v8045 = vpop.permute.xlu0 %8044
      %8048 = vset.pattern.permute.xlu0 0
      %8049 = vperm.xlu0 %8048, %v7963
      %v8050 = vpop.permute.xlu0 %8049
      %8053 = vset.pattern.permute.xlu0 0
      %8054 = vperm.xlu0 %8053, %v7964
      %v8055 = vpop.permute.xlu0 %8054
      %8058 = vset.pattern.permute.xlu0 0
      %8059 = vperm.xlu0 %8058, %v7965
      %v8060 = vpop.permute.xlu0 %8059
      %8063 = vset.pattern.permute.xlu0 0
      %8064 = vperm.xlu0 %8063, %v7966
      %v8065 = vpop.permute.xlu0 %8064
      %8068 = vset.pattern.permute.xlu0 0
      %8069 = vperm.xlu0 %8068, %v7967
      %v8070 = vpop.permute.xlu0 %8069
      %8073 = vset.pattern.permute.xlu0 0
      %8074 = vperm.xlu0 %8073, %v7968
      %v8075 = vpop.permute.xlu0 %8074
      %8078 = vset.pattern.permute.xlu0 0
      %8079 = vperm.xlu0 %8078, %v7969
      %v8080 = vpop.permute.xlu0 %8079
      %8083 = vset.pattern.permute.xlu0 0
      %8084 = vperm.xlu0 %8083, %v7970
      %v8085 = vpop.permute.xlu0 %8084
      %8088 = vset.pattern.permute.xlu0 0
      %8089 = vperm.xlu0 %8088, %v7971
      %v8090 = vpop.permute.xlu0 %8089
      %8093 = vset.pattern.permute.xlu0 0
      %8094 = vperm.xlu0 %8093, %v7972
      %v8095 = vpop.permute.xlu0 %8094
      %8098 = vset.pattern.permute.xlu0 0
      %8099 = vperm.xlu0 %8098, %v7973
      %v8100 = vpop.permute.xlu0 %8099
      %8103 = vset.pattern.permute.xlu0 0
      %8104 = vperm.xlu0 %8103, %v7974
      %v8105 = vpop.permute.xlu0 %8104
      %8108 = vset.pattern.permute.xlu0 0
      %8109 = vperm.xlu0 %8108, %v7975
      %v8110 = vpop.permute.xlu0 %8109
      %8113 = vset.pattern.permute.xlu0 0
      %8114 = vperm.xlu0 %8113, %v7976
      %v8115 = vpop.permute.xlu0 %8114
      %8118 = vset.pattern.permute.xlu0 0
      %8119 = vperm.xlu0 %8118, %v7977
      %v8120 = vpop.permute.xlu0 %8119
      %8123 = vset.pattern.permute.xlu0 0
      %8124 = vperm.xlu0 %8123, %v7978
      %v8125 = vpop.permute.xlu0 %8124
      %8128 = vset.pattern.permute.xlu0 0
      %8129 = vperm.xlu0 %8128, %v7979
      %v8130 = vpop.permute.xlu0 %8129
      %8133 = vset.pattern.permute.xlu0 0
      %8134 = vperm.xlu0 %8133, %v7980
      %v8135 = vpop.permute.xlu0 %8134
      %8138 = vset.pattern.permute.xlu0 0
      %8139 = vperm.xlu0 %8138, %v7981
      %v8140 = vpop.permute.xlu0 %8139
      %v8142 = vmul.bf16 %v7985, %v7630
      %v8143 = vmul.bf16 %v7990, %v7631
      %v8144 = vmul.bf16 %v7995, %v7632
      %v8145 = vmul.bf16 %v8000, %v7633
      %v8146 = vmul.bf16 %v8005, %v7634
      %v8147 = vmul.bf16 %v8010, %v7635
      %v8148 = vmul.bf16 %v8015, %v7636
      %v8149 = vmul.bf16 %v8020, %v7637
      %v8150 = vmul.bf16 %v8025, %v7638
      %v8151 = vmul.bf16 %v8030, %v7639
      %v8152 = vmul.bf16 %v8035, %v7640
      %v8153 = vmul.bf16 %v8040, %v7641
      %v8154 = vmul.bf16 %v8045, %v7642
      %v8155 = vmul.bf16 %v8050, %v7643
      %v8156 = vmul.bf16 %v8055, %v7644
      %v8157 = vmul.bf16 %v8060, %v7645
      %v8158 = vmul.bf16 %v8065, %v7646
      %v8159 = vmul.bf16 %v8070, %v7647
      %v8160 = vmul.bf16 %v8075, %v7648
      %v8161 = vmul.bf16 %v8080, %v7649
      %v8162 = vmul.bf16 %v8085, %v7650
      %v8163 = vmul.bf16 %v8090, %v7651
      %v8164 = vmul.bf16 %v8095, %v7652
      %v8165 = vmul.bf16 %v8100, %v7653
      %v8166 = vmul.bf16 %v8105, %v7654
      %v8167 = vmul.bf16 %v8110, %v7655
      %v8168 = vmul.bf16 %v8115, %v7656
      %v8169 = vmul.bf16 %v8120, %v7657
      %v8170 = vmul.bf16 %v8125, %v7658
      %v8171 = vmul.bf16 %v8130, %v7659
      %v8172 = vmul.bf16 %v8135, %v7660
      %v8173 = vmul.bf16 %v8140, %v7661
      %v8174 = vld [vmem:[%s6] sm:$0xff]
      %v8175 = vld [vmem:[%s6 + $0x8] sm:$0xff]
      %v8176 = vld [vmem:[%s6 + $0x10] sm:$0xff]
      %v8177 = vld [vmem:[%s6 + $0x18] sm:$0xff]
      %v8178 = vld [vmem:[%s6 + $0x20] sm:$0xff]
      %v8179 = vld [vmem:[%s6 + $0x28] sm:$0xff]
      %v8180 = vld [vmem:[%s6 + $0x30] sm:$0xff]
      %v8181 = vld [vmem:[%s6 + $0x38] sm:$0xff]
      %v8182 = vld [vmem:[%s6 + $0x40] sm:$0xff]
      %v8183 = vld [vmem:[%s6 + $0x48] sm:$0xff]
      %v8184 = vld [vmem:[%s6 + $0x50] sm:$0xff]
      %v8185 = vld [vmem:[%s6 + $0x58] sm:$0xff]
      %v8186 = vld [vmem:[%s6 + $0x60] sm:$0xff]
      %v8187 = vld [vmem:[%s6 + $0x68] sm:$0xff]
      %v8188 = vld [vmem:[%s6 + $0x70] sm:$0xff]
      %v8189 = vld [vmem:[%s6 + $0x78] sm:$0xff]
      %v8206 = vunpack.c.l.b16 %v8174
      %v8207 = vunpack.c.h.b16 %v8174
      %v8208 = vunpack.c.l.b16 %v8175
      %v8209 = vunpack.c.h.b16 %v8175
      %v8210 = vunpack.c.l.b16 %v8176
      %v8211 = vunpack.c.h.b16 %v8176
      %v8212 = vunpack.c.l.b16 %v8177
      %v8213 = vunpack.c.h.b16 %v8177
      %v8214 = vunpack.c.l.b16 %v8178
      %v8215 = vunpack.c.h.b16 %v8178
      %v8216 = vunpack.c.l.b16 %v8179
      %v8217 = vunpack.c.h.b16 %v8179
      %v8218 = vunpack.c.l.b16 %v8180
      %v8219 = vunpack.c.h.b16 %v8180
      %v8220 = vunpack.c.l.b16 %v8181
      %v8221 = vunpack.c.h.b16 %v8181
      %v8222 = vunpack.c.l.b16 %v8182
      %v8223 = vunpack.c.h.b16 %v8182
      %v8224 = vunpack.c.l.b16 %v8183
      %v8225 = vunpack.c.h.b16 %v8183
      %v8226 = vunpack.c.l.b16 %v8184
      %v8227 = vunpack.c.h.b16 %v8184
      %v8228 = vunpack.c.l.b16 %v8185
      %v8229 = vunpack.c.h.b16 %v8185
      %v8230 = vunpack.c.l.b16 %v8186
      %v8231 = vunpack.c.h.b16 %v8186
      %v8232 = vunpack.c.l.b16 %v8187
      %v8233 = vunpack.c.h.b16 %v8187
      %v8234 = vunpack.c.l.b16 %v8188
      %v8235 = vunpack.c.h.b16 %v8188
      %v8236 = vunpack.c.l.b16 %v8189
      %v8237 = vunpack.c.h.b16 %v8189
      %v8238 = vpack.c.b16 %v8210, %v8206
      %v8239 = vpack.c.b16 %v8211, %v8207
      %v8240 = vpack.c.b16 %v8212, %v8208
      %v8241 = vpack.c.b16 %v8213, %v8209
      %v8242 = vpack.c.b16 %v8218, %v8214
      %v8243 = vpack.c.b16 %v8219, %v8215
      %v8244 = vpack.c.b16 %v8220, %v8216
      %v8245 = vpack.c.b16 %v8221, %v8217
      %v8246 = vpack.c.b16 %v8226, %v8222
      %v8247 = vpack.c.b16 %v8227, %v8223
      %v8248 = vpack.c.b16 %v8228, %v8224
      %v8249 = vpack.c.b16 %v8229, %v8225
      %v8250 = vpack.c.b16 %v8234, %v8230
      %v8251 = vpack.c.b16 %v8235, %v8231
      %v8252 = vpack.c.b16 %v8236, %v8232
      %v8253 = vpack.c.b16 %v8237, %v8233
      %8270 = vmatprep.subr.bf16.mxu0 %v7925
      %8271 = vmatpush1.bf16.msra.mxu0 %v7701
      %8272 = vmatprep.subr.bf16.mxu0 %v7924
      %8273 = vmatpush1.bf16.msra.mxu0 %v7700
      %8274 = vmatprep.subr.bf16.mxu0 %v7923
      %8275 = vmatpush1.bf16.msra.mxu0 %v7699
      %8276 = vmatprep.subr.bf16.mxu0 %v7922
      %8277 = vmatpush1.bf16.msra.mxu0 %v7698
      %8278 = vmatprep.subr.bf16.mxu0 %v7921
      %8279 = vmatpush1.bf16.msra.mxu0 %v7697
      %8280 = vmatprep.subr.bf16.mxu0 %v7920
      %8281 = vmatpush1.bf16.msra.mxu0 %v7696
      %8282 = vmatprep.subr.bf16.mxu0 %v7919
      %8283 = vmatpush1.bf16.msra.mxu0 %v7695
      %8284 = vmatprep.subr.bf16.mxu0 %v7918
      %8285 = vmatpush1.bf16.msra.mxu0 %v7694
      %8286 = vmatprep.subr.bf16.mxu0 %v7933
      %8287 = vmatpush2.bf16.msra.mxu0 %v7709
      %8288 = vmatprep.subr.bf16.mxu0 %v7932
      %8289 = vmatpush2.bf16.msra.mxu0 %v7708
      %8290 = vmatprep.subr.bf16.mxu0 %v7931
      %8291 = vmatpush2.bf16.msra.mxu0 %v7707
      %8292 = vmatprep.subr.bf16.mxu0 %v7930
      %8293 = vmatpush2.bf16.msra.mxu0 %v7706
      %8294 = vmatprep.subr.bf16.mxu0 %v7929
      %8295 = vmatpush2.bf16.msra.mxu0 %v7705
      %8296 = vmatprep.subr.bf16.mxu0 %v7928
      %8297 = vmatpush2.bf16.msra.mxu0 %v7704
      %8298 = vmatprep.subr.bf16.mxu0 %v7927
      %8299 = vmatpush2.bf16.msra.mxu0 %v7703
      %8300 = vmatprep.subr.bf16.mxu0 %v7926
      %8301 = vmatpush2.bf16.msra.mxu0 %v7702
      %8302 = vmatprep.mubr.bf16.mxu0 %v8239
      %8303 = vmatmul.mubr.bf16.gmra.mxu0 %v8238
      %v8304 = vpop.f32.mrf.mxu0
      %v8305 = vadd.f32 0.0, %v8304
      %v8306 = vpop.f32.mrf.mxu0
      %v8307 = vadd.f32 0.0, %v8306
      %v8308 = vpop.f32.mrf.mxu0
      %v8309 = vadd.f32 0.0, %v8308
      %v8310 = vpop.f32.mrf.mxu0
      %v8311 = vadd.f32 0.0, %v8310
      %8312 = vmatprep.mubr.bf16.mxu0 %v8243
      %8313 = vmatmul.mubr.bf16.gmra.mxu0 %v8242
      %v8314 = vpop.f32.mrf.mxu0
      %v8315 = vadd.f32 0.0, %v8314
      %v8316 = vpop.f32.mrf.mxu0
      %v8317 = vadd.f32 0.0, %v8316
      %v8318 = vpop.f32.mrf.mxu0
      %v8319 = vadd.f32 0.0, %v8318
      %v8320 = vpop.f32.mrf.mxu0
      %v8321 = vadd.f32 0.0, %v8320
      %8322 = vmatprep.mubr.bf16.mxu0 %v8247
      %8323 = vmatmul.mubr.bf16.gmra.mxu0 %v8246
      %v8324 = vpop.f32.mrf.mxu0
      %v8325 = vadd.f32 0.0, %v8324
      %v8326 = vpop.f32.mrf.mxu0
      %v8327 = vadd.f32 0.0, %v8326
      %v8328 = vpop.f32.mrf.mxu0
      %v8329 = vadd.f32 0.0, %v8328
      %v8330 = vpop.f32.mrf.mxu0
      %v8331 = vadd.f32 0.0, %v8330
      %8332 = vmatprep.mubr.bf16.mxu0 %v8251
      %8333 = vmatmul.mubr.bf16.gmra.mxu0 %v8250
      %v8334 = vpop.f32.mrf.mxu0
      %v8335 = vadd.f32 0.0, %v8334
      %v8336 = vpop.f32.mrf.mxu0
      %v8337 = vadd.f32 0.0, %v8336
      %v8338 = vpop.f32.mrf.mxu0
      %v8339 = vadd.f32 0.0, %v8338
      %v8340 = vpop.f32.mrf.mxu0
      %v8341 = vadd.f32 0.0, %v8340
      %8342 = vdwg.mxu0
      %8343 = vmatprep.subr.bf16.mxu0 %v7941
      %8344 = vmatpush1.bf16.msra.mxu0 %v7717
      %8345 = vmatprep.subr.bf16.mxu0 %v7940
      %8346 = vmatpush1.bf16.msra.mxu0 %v7716
      %8347 = vmatprep.subr.bf16.mxu0 %v7939
      %8348 = vmatpush1.bf16.msra.mxu0 %v7715
      %8349 = vmatprep.subr.bf16.mxu0 %v7938
      %8350 = vmatpush1.bf16.msra.mxu0 %v7714
      %8351 = vmatprep.subr.bf16.mxu0 %v7937
      %8352 = vmatpush1.bf16.msra.mxu0 %v7713
      %8353 = vmatprep.subr.bf16.mxu0 %v7936
      %8354 = vmatpush1.bf16.msra.mxu0 %v7712
      %8355 = vmatprep.subr.bf16.mxu0 %v7935
      %8356 = vmatpush1.bf16.msra.mxu0 %v7711
      %8357 = vmatprep.subr.bf16.mxu0 %v7934
      %8358 = vmatpush1.bf16.msra.mxu0 %v7710
      %8359 = vmatprep.subr.bf16.mxu0 %v7949
      %8360 = vmatpush2.bf16.msra.mxu0 %v7725
      %8361 = vmatprep.subr.bf16.mxu0 %v7948
      %8362 = vmatpush2.bf16.msra.mxu0 %v7724
      %8363 = vmatprep.subr.bf16.mxu0 %v7947
      %8364 = vmatpush2.bf16.msra.mxu0 %v7723
      %8365 = vmatprep.subr.bf16.mxu0 %v7946
      %8366 = vmatpush2.bf16.msra.mxu0 %v7722
      %8367 = vmatprep.subr.bf16.mxu0 %v7945
      %8368 = vmatpush2.bf16.msra.mxu0 %v7721
      %8369 = vmatprep.subr.bf16.mxu0 %v7944
      %8370 = vmatpush2.bf16.msra.mxu0 %v7720
      %8371 = vmatprep.subr.bf16.mxu0 %v7943
      %8372 = vmatpush2.bf16.msra.mxu0 %v7719
      %8373 = vmatprep.subr.bf16.mxu0 %v7942
      %8374 = vmatpush2.bf16.msra.mxu0 %v7718
      %8375 = vmatprep.mubr.bf16.mxu0 %v8241
      %8376 = vmatmul.mubr.bf16.gmra.mxu0 %v8240
      %v8377 = vpop.f32.mrf.mxu0
      %v8378 = vadd.f32 %v8305, %v8377
      %v8379 = vpop.f32.mrf.mxu0
      %v8380 = vadd.f32 %v8307, %v8379
      %v8381 = vpop.f32.mrf.mxu0
      %v8382 = vadd.f32 %v8309, %v8381
      %v8383 = vpop.f32.mrf.mxu0
      %v8384 = vadd.f32 %v8311, %v8383
      %8385 = vmatprep.mubr.bf16.mxu0 %v8245
      %8386 = vmatmul.mubr.bf16.gmra.mxu0 %v8244
      %v8387 = vpop.f32.mrf.mxu0
      %v8388 = vadd.f32 %v8315, %v8387
      %v8389 = vpop.f32.mrf.mxu0
      %v8390 = vadd.f32 %v8317, %v8389
      %v8391 = vpop.f32.mrf.mxu0
      %v8392 = vadd.f32 %v8319, %v8391
      %v8393 = vpop.f32.mrf.mxu0
      %v8394 = vadd.f32 %v8321, %v8393
      %8395 = vmatprep.mubr.bf16.mxu0 %v8249
      %8396 = vmatmul.mubr.bf16.gmra.mxu0 %v8248
      %v8397 = vpop.f32.mrf.mxu0
      %v8398 = vadd.f32 %v8325, %v8397
      %v8399 = vpop.f32.mrf.mxu0
      %v8400 = vadd.f32 %v8327, %v8399
      %v8401 = vpop.f32.mrf.mxu0
      %v8402 = vadd.f32 %v8329, %v8401
      %v8403 = vpop.f32.mrf.mxu0
      %v8404 = vadd.f32 %v8331, %v8403
      %8405 = vmatprep.mubr.bf16.mxu0 %v8253
      %8406 = vmatmul.mubr.bf16.gmra.mxu0 %v8252
      %v8407 = vpop.f32.mrf.mxu0
      %v8408 = vadd.f32 %v8335, %v8407
      %v8409 = vpop.f32.mrf.mxu0
      %v8410 = vadd.f32 %v8337, %v8409
      %v8411 = vpop.f32.mrf.mxu0
      %v8412 = vadd.f32 %v8339, %v8411
      %v8413 = vpop.f32.mrf.mxu0
      %v8414 = vadd.f32 %v8341, %v8413
      %8415 = vdwg.mxu0
      %8416 = vmatprep.subr.bf16.mxu0 0
      %8417 = vmatpush1.bf16.msra.mxu0 %v8149
      %8418 = vmatprep.subr.bf16.mxu0 0
      %8419 = vmatpush1.bf16.msra.mxu0 %v8148
      %8420 = vmatprep.subr.bf16.mxu0 0
      %8421 = vmatpush1.bf16.msra.mxu0 %v8147
      %8422 = vmatprep.subr.bf16.mxu0 0
      %8423 = vmatpush1.bf16.msra.mxu0 %v8146
      %8424 = vmatprep.subr.bf16.mxu0 0
      %8425 = vmatpush1.bf16.msra.mxu0 %v8145
      %8426 = vmatprep.subr.bf16.mxu0 0
      %8427 = vmatpush1.bf16.msra.mxu0 %v8144
      %8428 = vmatprep.subr.bf16.mxu0 0
      %8429 = vmatpush1.bf16.msra.mxu0 %v8143
      %8430 = vmatprep.subr.bf16.mxu0 0
      %8431 = vmatpush1.bf16.msra.mxu0 %v8142
      %8432 = vmatprep.subr.bf16.mxu0 0
      %8433 = vmatpush2.bf16.msra.mxu0 %v8157
      %8434 = vmatprep.subr.bf16.mxu0 0
      %8435 = vmatpush2.bf16.msra.mxu0 %v8156
      %8436 = vmatprep.subr.bf16.mxu0 0
      %8437 = vmatpush2.bf16.msra.mxu0 %v8155
      %8438 = vmatprep.subr.bf16.mxu0 0
      %8439 = vmatpush2.bf16.msra.mxu0 %v8154
      %8440 = vmatprep.subr.bf16.mxu0 0
      %8441 = vmatpush2.bf16.msra.mxu0 %v8153
      %8442 = vmatprep.subr.bf16.mxu0 0
      %8443 = vmatpush2.bf16.msra.mxu0 %v8152
      %8444 = vmatprep.subr.bf16.mxu0 0
      %8445 = vmatpush2.bf16.msra.mxu0 %v8151
      %8446 = vmatprep.subr.bf16.mxu0 0
      %8447 = vmatpush2.bf16.msra.mxu0 %v8150
      %8448 = vmatprep.mubr.bf16.mxu0 %v8239
      %8449 = vmatmul.mubr.bf16.gmra.mxu0 %v8238
      %v8450 = vpop.f32.mrf.mxu0
      %v8451 = vadd.f32 0.0, %v8450
      %v8452 = vpop.f32.mrf.mxu0
      %v8453 = vpop.f32.mrf.mxu0
      %v8454 = vadd.f32 0.0, %v8453
      %v8455 = vpop.f32.mrf.mxu0
      %8456 = vmatprep.mubr.bf16.mxu0 %v8243
      %8457 = vmatmul.mubr.bf16.gmra.mxu0 %v8242
      %v8458 = vpop.f32.mrf.mxu0
      %v8459 = vadd.f32 0.0, %v8458
      %v8460 = vpop.f32.mrf.mxu0
      %v8461 = vpop.f32.mrf.mxu0
      %v8462 = vadd.f32 0.0, %v8461
      %v8463 = vpop.f32.mrf.mxu0
      %8464 = vmatprep.mubr.bf16.mxu0 %v8247
      %8465 = vmatmul.mubr.bf16.gmra.mxu0 %v8246
      %v8466 = vpop.f32.mrf.mxu0
      %v8467 = vadd.f32 0.0, %v8466
      %v8468 = vpop.f32.mrf.mxu0
      %v8469 = vpop.f32.mrf.mxu0
      %v8470 = vadd.f32 0.0, %v8469
      %v8471 = vpop.f32.mrf.mxu0
      %8472 = vmatprep.mubr.bf16.mxu0 %v8251
      %8473 = vmatmul.mubr.bf16.gmra.mxu0 %v8250
      %v8474 = vpop.f32.mrf.mxu0
      %v8475 = vadd.f32 0.0, %v8474
      %v8476 = vpop.f32.mrf.mxu0
      %v8477 = vpop.f32.mrf.mxu0
      %v8478 = vadd.f32 0.0, %v8477
      %v8479 = vpop.f32.mrf.mxu0
      %8480 = vdwg.mxu0
      %8481 = vmatprep.subr.bf16.mxu0 0
      %8482 = vmatpush1.bf16.msra.mxu0 %v8165
      %8483 = vmatprep.subr.bf16.mxu0 0
      %8484 = vmatpush1.bf16.msra.mxu0 %v8164
      %8485 = vmatprep.subr.bf16.mxu0 0
      %8486 = vmatpush1.bf16.msra.mxu0 %v8163
      %8487 = vmatprep.subr.bf16.mxu0 0
      %8488 = vmatpush1.bf16.msra.mxu0 %v8162
      %8489 = vmatprep.subr.bf16.mxu0 0
      %8490 = vmatpush1.bf16.msra.mxu0 %v8161
      %8491 = vmatprep.subr.bf16.mxu0 0
      %8492 = vmatpush1.bf16.msra.mxu0 %v8160
      %8493 = vmatprep.subr.bf16.mxu0 0
      %8494 = vmatpush1.bf16.msra.mxu0 %v8159
      %8495 = vmatprep.subr.bf16.mxu0 0
      %8496 = vmatpush1.bf16.msra.mxu0 %v8158
      %8497 = vmatprep.subr.bf16.mxu0 0
      %8498 = vmatpush2.bf16.msra.mxu0 %v8173
      %8499 = vmatprep.subr.bf16.mxu0 0
      %8500 = vmatpush2.bf16.msra.mxu0 %v8172
      %8501 = vmatprep.subr.bf16.mxu0 0
      %8502 = vmatpush2.bf16.msra.mxu0 %v8171
      %8503 = vmatprep.subr.bf16.mxu0 0
      %8504 = vmatpush2.bf16.msra.mxu0 %v8170
      %8505 = vmatprep.subr.bf16.mxu0 0
      %8506 = vmatpush2.bf16.msra.mxu0 %v8169
      %8507 = vmatprep.subr.bf16.mxu0 0
      %8508 = vmatpush2.bf16.msra.mxu0 %v8168
      %8509 = vmatprep.subr.bf16.mxu0 0
      %8510 = vmatpush2.bf16.msra.mxu0 %v8167
      %8511 = vmatprep.subr.bf16.mxu0 0
      %8512 = vmatpush2.bf16.msra.mxu0 %v8166
      %8513 = vmatprep.mubr.bf16.mxu0 %v8241
      %8514 = vmatmul.mubr.bf16.gmra.mxu0 %v8240
      %v8515 = vpop.f32.mrf.mxu0
      %v8516 = vadd.f32 %v8451, %v8515
      %v8517 = vpop.f32.mrf.mxu0
      %v8518 = vpop.f32.mrf.mxu0
      %v8519 = vadd.f32 %v8454, %v8518
      %v8520 = vpop.f32.mrf.mxu0
      %8521 = vmatprep.mubr.bf16.mxu0 %v8245
      %8522 = vmatmul.mubr.bf16.gmra.mxu0 %v8244
      %v8523 = vpop.f32.mrf.mxu0
      %v8524 = vadd.f32 %v8459, %v8523
      %v8525 = vpop.f32.mrf.mxu0
      %v8526 = vpop.f32.mrf.mxu0
      %v8527 = vadd.f32 %v8462, %v8526
      %v8528 = vpop.f32.mrf.mxu0
      %8529 = vmatprep.mubr.bf16.mxu0 %v8249
      %8530 = vmatmul.mubr.bf16.gmra.mxu0 %v8248
      %v8531 = vpop.f32.mrf.mxu0
      %v8532 = vadd.f32 %v8467, %v8531
      %v8533 = vpop.f32.mrf.mxu0
      %v8534 = vpop.f32.mrf.mxu0
      %v8535 = vadd.f32 %v8470, %v8534
      %v8536 = vpop.f32.mrf.mxu0
      %8537 = vmatprep.mubr.bf16.mxu0 %v8253
      %8538 = vmatmul.mubr.bf16.gmra.mxu0 %v8252
      %v8539 = vpop.f32.mrf.mxu0
      %v8540 = vadd.f32 %v8475, %v8539
      %v8541 = vpop.f32.mrf.mxu0
      %v8542 = vpop.f32.mrf.mxu0
      %v8543 = vadd.f32 %v8478, %v8542
      %v8544 = vpop.f32.mrf.mxu0
      %8545 = vdwg.mxu0
      %8546 = vst [vmem:[%s345] sm:$0xff] %v8378
      %8547 = vst [vmem:[%s345 + $0x8] sm:$0xff] %v8380
      %8548 = vst [vmem:[%s345 + $0x10] sm:$0xff] %v8516
      %8549 = vst [vmem:[%s345 + $0x18] sm:$0xff] %v8382
      %8550 = vst [vmem:[%s345 + $0x20] sm:$0xff] %v8384
      %8551 = vst [vmem:[%s345 + $0x28] sm:$0xff] %v8519
      %8552 = vst [vmem:[%s345 + $0x30] sm:$0xff] %v8388
      %8553 = vst [vmem:[%s345 + $0x38] sm:$0xff] %v8390
      %8554 = vst [vmem:[%s345 + $0x40] sm:$0xff] %v8524
      %8555 = vst [vmem:[%s345 + $0x48] sm:$0xff] %v8392
      %8556 = vst [vmem:[%s345 + $0x50] sm:$0xff] %v8394
      %8557 = vst [vmem:[%s345 + $0x58] sm:$0xff] %v8527
      %8558 = vst [vmem:[%s345 + $0x60] sm:$0xff] %v8398
      %8559 = vst [vmem:[%s345 + $0x68] sm:$0xff] %v8400
      %8560 = vst [vmem:[%s345 + $0x70] sm:$0xff] %v8532
      %8561 = vst [vmem:[%s345 + $0x78] sm:$0xff] %v8402
      %8562 = vst [vmem:[%s345 + $0x80] sm:$0xff] %v8404
      %8563 = vst [vmem:[%s345 + $0x88] sm:$0xff] %v8535
      %8564 = vst [vmem:[%s345 + $0x90] sm:$0xff] %v8408
      %8565 = vst [vmem:[%s345 + $0x98] sm:$0xff] %v8410
      %8566 = vst [vmem:[%s345 + $0xa0] sm:$0xff] %v8540
      %8567 = vst [vmem:[%s345 + $0xa8] sm:$0xff] %v8412
      %8568 = vst [vmem:[%s345 + $0xb0] sm:$0xff] %v8414
      %8569 = vst [vmem:[%s345 + $0xb8] sm:$0xff] %v8543
      %p8570 = scmp.lt.s32.totalorder %s21, 1
      %s8571 = scalar_select %p8570, %s21, 1
      %s8572 = smul.addr %s8571, 64
      %s8573 = smul.addr %s8572, 4
      %s8574 = scalar_lea.vmem %s8, %s8573
      %p8575 = scmp.lt.s32.totalorder %s21, 1
      %s8576 = scalar_select %p8575, %s21, 1
      %s8577 = smul.addr %s8576, 24
      %s8578 = smul.addr %s8577, 8
      %s8579 = scalar_lea.vmem %s9, %s8578
      // Predicated region
      $region53: #{forward.3} parent=51 // pred_check
        %p8580 = pneg %p212
      $region54: #{forward.3} parent=51 // pred_check_branch
        %8582 = sbr.rel (%p8580) target = $region56
      $region55: #{forward.3} parent=51 // pred_region
        _
      $region56: #{forward.3} parent=51 // pred_fallthru
        _
      // Predicated region
      $region57: #{forward.3} parent=51 // pred_check
        %p8583 = pneg %p238
      $region58: #{forward.3} parent=51 // pred_check_branch
        %8585 = sbr.rel (%p8583) target = $region60
      $region59: #{forward.3} parent=51 // pred_region
        _
      $region60: #{forward.3} parent=51 // pred_fallthru
        _
    $region52: #{forward.3} parent=5 // pred_fallthru
      _
    %p8586 = scmp.le.s32.totalorder 2, %s16
    // Predicated region
    $region61: #{forward.3} parent=5 // pred_check
      %p8587 = pneg %p8586
    $region62: #{forward.3} parent=5 // pred_check_branch
      %8589 = sbr.rel (%p8587) target = $region64
    $region63: #{forward.3} parent=5 // pred_region
      %s8590 = ssub.s32 %s16, 2
      // Predicated region
      $region65: #{forward.3} parent=63 // pred_check
        %p8591 = pneg %p218
      $region66: #{forward.3} parent=63 // pred_check_branch
        %8593 = sbr.rel (%p8591) target = $region68
      $region67: #{forward.3} parent=63 // pred_region
        %p8594 = scmp.lt.s32.totalorder %s22, 1
        %s8595 = scalar_select %p8594, %s22, 1
        %s8596 = smul.addr %s8595, 64
        %s8597 = smul.addr %s8596, 4
        %s8598 = scalar_lea.vmem %s8, %s8597
      $region68: #{forward.3} parent=63 // pred_fallthru
        _
      // Predicated region
      $region69: #{forward.3} parent=63 // pred_check
        %p8599 = pneg %p244
      $region70: #{forward.3} parent=63 // pred_check_branch
        %8601 = sbr.rel (%p8599) target = $region72
      $region71: #{forward.3} parent=63 // pred_region
        %p8602 = scmp.lt.s32.totalorder %s22, 1
        %s8603 = scalar_select %p8602, %s22, 1
        %s8604 = smul.addr %s8603, 24
        %s8605 = smul.addr %s8604, 8
        %s8606 = scalar_lea.vmem %s9, %s8605
      $region72: #{forward.3} parent=63 // pred_fallthru
        _
    $region64: #{forward.3} parent=5 // pred_fallthru
      _
  $region6: #{forward.3} parent=0 // loop_footer
    %s20 = sadd.s32 1, %s16
  $region7: #{forward.3} parent=0 // loop_footer_branch
    %15 = sbr.rel target = $region3
  $region8: #{forward.3} parent=0 // loop_exit
    _

</llo_original>
